<compile_context>
chip_gen: v7x
topology: tpu7x:2x2x1
jax: 0.10.0
libtpu: 0.0.40
codegen_flags: <defaults>
</compile_context>

<pallas_src>
import functools

import jax
import jax.numpy as jnp
import numpy as np
from jax import lax
from jax.experimental import pallas as pl
from jax.experimental.pallas import tpu as pltpu

LN_EPS = 1e-5

PARAM_ORDER = (
    "sa_wq", "sa_wk", "sa_wv", "sa_bq", "sa_bk", "sa_bv", "sa_wo", "sa_bo",
    "ca_wq", "ca_wk", "ca_wv", "ca_bq", "ca_bk", "ca_bv", "ca_wo", "ca_bo",
    "ln1_g", "ln1_b", "ln2_g", "ln2_b", "ln3_g", "ln3_b",
    "ff_w1", "ff_b1", "ff_w2", "ff_b2",
)

# Weight matrices are passed to the kernel in bf16 (MXU-native, half the DMA);
# biases / LayerNorm params stay f32.
_BF16_PARAMS = frozenset(
    pre + s for pre in ("sa_", "ca_") for s in ("wq", "wk", "wv", "wo")
) | frozenset(("ff_w1", "ff_w2"))


def _decoder_layer_kernel(
    vis_ref, lan_ref,
    sa_wq, sa_wk, sa_wv, sa_bq, sa_bk, sa_bv, sa_wo, sa_bo,
    ca_wq, ca_wk, ca_wv, ca_bq, ca_bk, ca_bv, ca_wo, ca_bo,
    ln1_g, ln1_b, ln2_g, ln2_b, ln3_g, ln3_b,
    ff_w1, ff_b1, ff_w2, ff_b2,
    out_ref,
    *, nhead, batch,
):
  D = vis_ref.shape[1]
  S = vis_ref.shape[2]
  L = lan_ref.shape[2]
  hd = D // nhead
  scale = 1.0 / float(np.sqrt(hd))

  # Channels-first HBM layout -> token-major compute slabs, transposed in-VMEM
  # (wrapper does zero HBM transposes).
  x = jnp.concatenate([vis_ref[b].T for b in range(batch)], axis=0)    # (B*S, D)
  mem = jnp.concatenate([lan_ref[b].T for b in range(batch)], axis=0)  # (B*L, D)
  mem_bf = mem.astype(jnp.bfloat16)

  def layernorm(z, g_ref, b_ref):
    mu = jnp.mean(z, axis=-1, keepdims=True)
    var = jnp.mean((z - mu) ** 2, axis=-1, keepdims=True)
    return (z - mu) * lax.rsqrt(var + LN_EPS) * g_ref[...] + b_ref[...]

  def mha(q_bf, kv_bf, s_kv, wq, wk, wv, bq, bk, bv, wo, bo):
    # Projections on the batch-folded slabs (M = B*S or B*L), bf16 x bf16 -> f32.
    q = jnp.dot(q_bf, wq[...], preferred_element_type=jnp.float32) + bq[...]
    k = jnp.dot(kv_bf, wk[...], preferred_element_type=jnp.float32) + bk[...]
    v = jnp.dot(kv_bf, wv[...], preferred_element_type=jnp.float32) + bv[...]
    q = (q * scale).astype(jnp.bfloat16)      # 1/sqrt(hd) folded in once
    k = k.astype(jnp.bfloat16)
    v = v.astype(jnp.bfloat16)
    wo_v = wo[...]                            # (D, D) bf16
    outs = []
    for b in range(batch):                    # attention is block-diagonal in B
      qb = q[b * S:(b + 1) * S]
      kb = k[b * s_kv:(b + 1) * s_kv]
      vb = v[b * s_kv:(b + 1) * s_kv]
      acc = jnp.zeros((S, D), jnp.float32)
      for h in range(nhead):                  # static unroll; no head concat
        qh = qb[:, h * hd:(h + 1) * hd]
        kh = kb[:, h * hd:(h + 1) * hd]
        vh = vb[:, h * hd:(h + 1) * hd]
        s = lax.dot_general(qh, kh, (((1,), (1,)), ((), ())),
                            preferred_element_type=jnp.float32)   # (S, s_kv)
        s = s - jnp.max(s, axis=-1, keepdims=True)
        p = jnp.exp(s)
        p = p * pl.reciprocal(jnp.sum(p, axis=-1, keepdims=True), approx=True)
        oh = jnp.dot(p.astype(jnp.bfloat16), vh,
                     preferred_element_type=jnp.float32)          # (S, hd)
        # Fold this head's output through its slice of W_o and accumulate.
        acc = acc + jnp.dot(oh.astype(jnp.bfloat16),
                            wo_v[h * hd:(h + 1) * hd, :],
                            preferred_element_type=jnp.float32)
      outs.append(acc)
    o = jnp.concatenate(outs, axis=0)         # (B*S, D)
    return o + bo[...]

  # --- self-attention block + LN1 ---
  x_bf = x.astype(jnp.bfloat16)
  x = layernorm(
      x + mha(x_bf, x_bf, S,
              sa_wq, sa_wk, sa_wv, sa_bq, sa_bk, sa_bv, sa_wo, sa_bo),
      ln1_g, ln1_b)
  # --- cross-attention block + LN2 ---
  x_bf = x.astype(jnp.bfloat16)
  x = layernorm(
      x + mha(x_bf, mem_bf, L,
              ca_wq, ca_wk, ca_wv, ca_bq, ca_bk, ca_bv, ca_wo, ca_bo),
      ln2_g, ln2_b)
  # --- feedforward block (ReLU) + LN3 ---
  x_bf = x.astype(jnp.bfloat16)
  h1 = jnp.maximum(
      jnp.dot(x_bf, ff_w1[...], preferred_element_type=jnp.float32) + ff_b1[...],
      0.0)
  ff = jnp.dot(h1.astype(jnp.bfloat16), ff_w2[...],
               preferred_element_type=jnp.float32) + ff_b2[...]
  x = layernorm(x + ff, ln3_g, ln3_b)

  # Write back in channels-first (B, D, S) so the wrapper only needs a reshape.
  for b in range(batch):
    out_ref[b] = x[b * S:(b + 1) * S].T


def transformer_fusion(vis, lan_full, params, nhead):
  """vis: (B, D, W, H) NCHW;  lan_full: (B, D, L).  Returns (B, D, W, H)."""
  B, D, W, H = vis.shape
  S = W * H
  L = lan_full.shape[2]

  vis3 = vis.reshape(B, D, S)                 # free reshape, stays channels-first

  flat_params = []
  for name in PARAM_ORDER:
    p = params[name]
    if name in _BF16_PARAMS:
      p = p.astype(jnp.bfloat16)
    flat_params.append(p)

  def full_spec(shape):
    nd = len(shape)
    return pl.BlockSpec(shape, lambda i, _nd=nd: (0,) * _nd)

  in_specs = ([full_spec(vis3.shape), full_spec(lan_full.shape)]
              + [full_spec(p.shape) for p in flat_params])
  out_spec = full_spec((B, D, S))

  kernel = functools.partial(_decoder_layer_kernel, nhead=nhead, batch=B)

  out = pl.pallas_call(
      kernel,
      out_shape=jax.ShapeDtypeStruct((B, D, S), jnp.float32),
      grid_spec=pltpu.PrefetchScalarGridSpec(
          num_scalar_prefetch=0,
          grid=(1,),                          # whole batch in one step (B*S=128)
          in_specs=in_specs,
          out_specs=out_spec,
      ),
      compiler_params=pltpu.CompilerParams(
          dimension_semantics=("arbitrary",),
          vmem_limit_bytes=16 << 20,          # footprint is ~2 MiB; v7x-safe
      ),
  )(vis3, lan_full, *flat_params)

  return out.reshape(B, D, W, H)


def init_params(key, D, F):
  ks = jax.random.split(key, 26)
  ki = iter(ks)

  def w(shape, scale=0.05):
    return jax.random.normal(next(ki), shape, jnp.float32) * scale

  p = {}
  for pre in ("sa", "ca"):
    p[pre + "_wq"] = w((D, D))
    p[pre + "_wk"] = w((D, D))
    p[pre + "_wv"] = w((D, D))
    p[pre + "_bq"] = w((1, D), 0.01)
    p[pre + "_bk"] = w((1, D), 0.01)
    p[pre + "_bv"] = w((1, D), 0.01)
    p[pre + "_wo"] = w((D, D))
    p[pre + "_bo"] = w((1, D), 0.01)
  for i in (1, 2, 3):
    p[f"ln{i}_g"] = jnp.ones((1, D), jnp.float32)
    p[f"ln{i}_b"] = jnp.zeros((1, D), jnp.float32)
  p["ff_w1"] = w((D, F))
  p["ff_b1"] = w((1, F), 0.01)
  p["ff_w2"] = w((F, D))
  p["ff_b2"] = w((1, D), 0.01)
  return p


# ---------------- pure-JAX f32 reference (for correctness check) ----------------
def _ref_single(x, mem, p, nhead):
  D = x.shape[-1]
  hd = D // nhead
  scale = 1.0 / np.sqrt(hd)

  def mha(q_in, kv_in, pre):
    q = q_in @ p[pre + "_wq"] + p[pre + "_bq"][0]
    k = kv_in @ p[pre + "_wk"] + p[pre + "_bk"][0]
    v = kv_in @ p[pre + "_wv"] + p[pre + "_bv"][0]
    Sq, Lk = q.shape[0], k.shape[0]
    qh = q.reshape(Sq, nhead, hd).transpose(1, 0, 2) * scale
    kh = k.reshape(Lk, nhead, hd).transpose(1, 0, 2)
    vh = v.reshape(Lk, nhead, hd).transpose(1, 0, 2)
    att = jax.nn.softmax(jnp.einsum("hqd,hkd->hqk", qh, kh), axis=-1)
    o = jnp.einsum("hqk,hkd->hqd", att, vh).transpose(1, 0, 2).reshape(Sq, D)
    return o @ p[pre + "_wo"] + p[pre + "_bo"][0]

  def ln(z, g, b):
    mu = z.mean(-1, keepdims=True)
    var = ((z - mu) ** 2).mean(-1, keepdims=True)
    return (z - mu) / jnp.sqrt(var + LN_EPS) * g[0] + b[0]

  x = ln(x + mha(x, x, "sa"), p["ln1_g"], p["ln1_b"])
  x = ln(x + mha(x, mem, "ca"), p["ln2_g"], p["ln2_b"])
  h = jnp.maximum(x @ p["ff_w1"] + p["ff_b1"][0], 0.0)
  x = ln(x + h @ p["ff_w2"] + p["ff_b2"][0], p["ln3_g"], p["ln3_b"])
  return x


def reference(vis, lan_full, params, nhead):
  B, D, W, H = vis.shape
  x = vis.reshape(B, D, W * H).transpose(0, 2, 1)
  mem = lan_full.transpose(0, 2, 1)
  out = jax.vmap(lambda xb, mb: _ref_single(xb, mb, params, nhead))(x, mem)
  return out.transpose(0, 2, 1).reshape(B, D, W, H)


if __name__ == "__main__":
  # Small shapes consistent with the module: dim=32, nhead=4, spatial 8x8,
  # language sequence length 8; PyTorch default dim_feedforward=2048 kept.
  B, D, W, H, L = 2, 32, 8, 8, 8
  NHEAD, DFF = 4, 2048

  key = jax.random.PRNGKey(0)
  k_vis, k_lan, k_par = jax.random.split(key, 3)
  vis = jax.random.normal(k_vis, (B, D, W, H), jnp.float32)
  lan_full = jax.random.normal(k_lan, (B, D, L), jnp.float32)
  params = init_params(k_par, D, DFF)

  out = transformer_fusion(vis, lan_full, params, NHEAD)
  out = jax.block_until_ready(out)

  ref = jax.block_until_ready(reference(vis, lan_full, params, NHEAD))
  assert out.shape == (B, D, W, H)
  # bf16 matmul operands + approx reciprocal -> loosened (but still meaningful,
  # outputs are O(1) post-LayerNorm) tolerance vs the f32 reference.
  np.testing.assert_allclose(np.asarray(out), np.asarray(ref),
                             rtol=3e-2, atol=3e-2)
  print("KERNEL_OK")
</pallas_src>

<mosaic_0001>
module attributes {stable_mosaic.version = 11 : i64} {
  func.func @_decoder_layer_kernel(%arg0: i32, %arg1: memref<2x32x64xf32, #tpu.memory_space<vmem>>, %arg2: memref<2x32x8xf32, #tpu.memory_space<vmem>>, %arg3: memref<32x32xbf16, #tpu.memory_space<vmem>>, %arg4: memref<32x32xbf16, #tpu.memory_space<vmem>>, %arg5: memref<32x32xbf16, #tpu.memory_space<vmem>>, %arg6: memref<1x32xf32, #tpu.memory_space<vmem>>, %arg7: memref<1x32xf32, #tpu.memory_space<vmem>>, %arg8: memref<1x32xf32, #tpu.memory_space<vmem>>, %arg9: memref<32x32xbf16, #tpu.memory_space<vmem>>, %arg10: memref<1x32xf32, #tpu.memory_space<vmem>>, %arg11: memref<32x32xbf16, #tpu.memory_space<vmem>>, %arg12: memref<32x32xbf16, #tpu.memory_space<vmem>>, %arg13: memref<32x32xbf16, #tpu.memory_space<vmem>>, %arg14: memref<1x32xf32, #tpu.memory_space<vmem>>, %arg15: memref<1x32xf32, #tpu.memory_space<vmem>>, %arg16: memref<1x32xf32, #tpu.memory_space<vmem>>, %arg17: memref<32x32xbf16, #tpu.memory_space<vmem>>, %arg18: memref<1x32xf32, #tpu.memory_space<vmem>>, %arg19: memref<1x32xf32, #tpu.memory_space<vmem>>, %arg20: memref<1x32xf32, #tpu.memory_space<vmem>>, %arg21: memref<1x32xf32, #tpu.memory_space<vmem>>, %arg22: memref<1x32xf32, #tpu.memory_space<vmem>>, %arg23: memref<1x32xf32, #tpu.memory_space<vmem>>, %arg24: memref<1x32xf32, #tpu.memory_space<vmem>>, %arg25: memref<32x2048xbf16, #tpu.memory_space<vmem>>, %arg26: memref<1x2048xf32, #tpu.memory_space<vmem>>, %arg27: memref<2048x32xbf16, #tpu.memory_space<vmem>>, %arg28: memref<1x32xf32, #tpu.memory_space<vmem>>, %arg29: memref<2x32x64xf32, #tpu.memory_space<vmem>>) attributes {dimension_semantics = [#tpu.dimension_semantics<arbitrary>], iteration_bounds = array<i64: 1>, scalar_prefetch = 0 : i64, scratch_operands = 0 : i64, tpu.core_type = #tpu.core_type<tc>, window_params = [{pipeline_mode = #tpu.pipeline_mode<synchronous>, transform_indices = @transform_0, window_bounds = array<i64: 2, 32, 64>}, {pipeline_mode = #tpu.pipeline_mode<synchronous>, transform_indices = @transform_1, window_bounds = array<i64: 2, 32, 8>}, {pipeline_mode = #tpu.pipeline_mode<synchronous>, transform_indices = @transform_2, window_bounds = array<i64: 32, 32>}, {pipeline_mode = #tpu.pipeline_mode<synchronous>, transform_indices = @transform_3, window_bounds = array<i64: 32, 32>}, {pipeline_mode = #tpu.pipeline_mode<synchronous>, transform_indices = @transform_4, window_bounds = array<i64: 32, 32>}, {pipeline_mode = #tpu.pipeline_mode<synchronous>, transform_indices = @transform_5, window_bounds = array<i64: 1, 32>}, {pipeline_mode = #tpu.pipeline_mode<synchronous>, transform_indices = @transform_6, window_bounds = array<i64: 1, 32>}, {pipeline_mode = #tpu.pipeline_mode<synchronous>, transform_indices = @transform_7, window_bounds = array<i64: 1, 32>}, {pipeline_mode = #tpu.pipeline_mode<synchronous>, transform_indices = @transform_8, window_bounds = array<i64: 32, 32>}, {pipeline_mode = #tpu.pipeline_mode<synchronous>, transform_indices = @transform_9, window_bounds = array<i64: 1, 32>}, {pipeline_mode = #tpu.pipeline_mode<synchronous>, transform_indices = @transform_10, window_bounds = array<i64: 32, 32>}, {pipeline_mode = #tpu.pipeline_mode<synchronous>, transform_indices = @transform_11, window_bounds = array<i64: 32, 32>}, {pipeline_mode = #tpu.pipeline_mode<synchronous>, transform_indices = @transform_12, window_bounds = array<i64: 32, 32>}, {pipeline_mode = #tpu.pipeline_mode<synchronous>, transform_indices = @transform_13, window_bounds = array<i64: 1, 32>}, {pipeline_mode = #tpu.pipeline_mode<synchronous>, transform_indices = @transform_14, window_bounds = array<i64: 1, 32>}, {pipeline_mode = #tpu.pipeline_mode<synchronous>, transform_indices = @transform_15, window_bounds = array<i64: 1, 32>}, {pipeline_mode = #tpu.pipeline_mode<synchronous>, transform_indices = @transform_16, window_bounds = array<i64: 32, 32>}, {pipeline_mode = #tpu.pipeline_mode<synchronous>, transform_indices = @transform_17, window_bounds = array<i64: 1, 32>}, {pipeline_mode = #tpu.pipeline_mode<synchronous>, transform_indices = @transform_18, window_bounds = array<i64: 1, 32>}, {pipeline_mode = #tpu.pipeline_mode<synchronous>, transform_indices = @transform_19, window_bounds = array<i64: 1, 32>}, {pipeline_mode = #tpu.pipeline_mode<synchronous>, transform_indices = @transform_20, window_bounds = array<i64: 1, 32>}, {pipeline_mode = #tpu.pipeline_mode<synchronous>, transform_indices = @transform_21, window_bounds = array<i64: 1, 32>}, {pipeline_mode = #tpu.pipeline_mode<synchronous>, transform_indices = @transform_22, window_bounds = array<i64: 1, 32>}, {pipeline_mode = #tpu.pipeline_mode<synchronous>, transform_indices = @transform_23, window_bounds = array<i64: 1, 32>}, {pipeline_mode = #tpu.pipeline_mode<synchronous>, transform_indices = @transform_24, window_bounds = array<i64: 32, 2048>}, {pipeline_mode = #tpu.pipeline_mode<synchronous>, transform_indices = @transform_25, window_bounds = array<i64: 1, 2048>}, {pipeline_mode = #tpu.pipeline_mode<synchronous>, transform_indices = @transform_26, window_bounds = array<i64: 2048, 32>}, {pipeline_mode = #tpu.pipeline_mode<synchronous>, transform_indices = @transform_27, window_bounds = array<i64: 1, 32>}, {pipeline_mode = #tpu.pipeline_mode<synchronous>, transform_indices = @transform_28, window_bounds = array<i64: 2, 32, 64>}]} {
    %c0 = arith.constant 0 : index
    %c0_0 = arith.constant 0 : index
    %c0_1 = arith.constant 0 : index
    %0 = vector.load %arg1[%c0, %c0_0, %c0_1] : memref<2x32x64xf32, #tpu.memory_space<vmem>>, vector<1x32x64xf32>
    %1 = vector.shape_cast %0 : vector<1x32x64xf32> to vector<32x64xf32>
    %2 = tpu.transpose %1, [1, 0] : vector<32x64xf32> -> vector<64x32xf32>
    %c1 = arith.constant 1 : index
    %c0_2 = arith.constant 0 : index
    %c0_3 = arith.constant 0 : index
    %3 = vector.load %arg1[%c1, %c0_2, %c0_3] : memref<2x32x64xf32, #tpu.memory_space<vmem>>, vector<1x32x64xf32>
    %4 = vector.shape_cast %3 : vector<1x32x64xf32> to vector<32x64xf32>
    %5 = tpu.transpose %4, [1, 0] : vector<32x64xf32> -> vector<64x32xf32>
    %6 = tpu.concatenate %2, %5 in 0 : vector<64x32xf32>, vector<64x32xf32> -> vector<128x32xf32>
    %c0_4 = arith.constant 0 : index
    %c0_5 = arith.constant 0 : index
    %c0_6 = arith.constant 0 : index
    %7 = vector.load %arg2[%c0_4, %c0_5, %c0_6] : memref<2x32x8xf32, #tpu.memory_space<vmem>>, vector<1x32x8xf32>
    %8 = vector.shape_cast %7 : vector<1x32x8xf32> to vector<32x8xf32>
    %9 = tpu.transpose %8, [1, 0] : vector<32x8xf32> -> vector<8x32xf32>
    %c1_7 = arith.constant 1 : index
    %c0_8 = arith.constant 0 : index
    %c0_9 = arith.constant 0 : index
    %10 = vector.load %arg2[%c1_7, %c0_8, %c0_9] : memref<2x32x8xf32, #tpu.memory_space<vmem>>, vector<1x32x8xf32>
    %11 = vector.shape_cast %10 : vector<1x32x8xf32> to vector<32x8xf32>
    %12 = tpu.transpose %11, [1, 0] : vector<32x8xf32> -> vector<8x32xf32>
    %13 = tpu.concatenate %9, %12 in 0 : vector<8x32xf32>, vector<8x32xf32> -> vector<16x32xf32>
    %14 = arith.truncf %13 : vector<16x32xf32> to vector<16x32xbf16>
    %15 = arith.truncf %6 : vector<128x32xf32> to vector<128x32xbf16>
    %c0_10 = arith.constant 0 : index
    %c0_11 = arith.constant 0 : index
    %16 = vector.load %arg3[%c0_10, %c0_11] : memref<32x32xbf16, #tpu.memory_space<vmem>>, vector<32x32xbf16>
    %cst = arith.constant dense<0.000000e+00> : vector<128x32xf32>
    %17 = tpu.matmul %15, %16, %cst {dimension_numbers = #tpu.dot_dimension_numbers<[1], [0], [0], [1], [0, 0, 1, 1], [], []>} : vector<128x32xbf16>, vector<32x32xbf16>, vector<128x32xf32> -> vector<128x32xf32>
    %c0_12 = arith.constant 0 : index
    %c0_13 = arith.constant 0 : index
    %18 = vector.load %arg6[%c0_12, %c0_13] : memref<1x32xf32, #tpu.memory_space<vmem>>, vector<1x32xf32>
    %19 = vector.broadcast %18 : vector<1x32xf32> to vector<128x32xf32>
    %20 = arith.addf %17, %19 : vector<128x32xf32>
    %c0_14 = arith.constant 0 : index
    %c0_15 = arith.constant 0 : index
    %21 = vector.load %arg4[%c0_14, %c0_15] : memref<32x32xbf16, #tpu.memory_space<vmem>>, vector<32x32xbf16>
    %cst_16 = arith.constant dense<0.000000e+00> : vector<128x32xf32>
    %22 = tpu.matmul %15, %21, %cst_16 {dimension_numbers = #tpu.dot_dimension_numbers<[1], [0], [0], [1], [0, 0, 1, 1], [], []>} : vector<128x32xbf16>, vector<32x32xbf16>, vector<128x32xf32> -> vector<128x32xf32>
    %c0_17 = arith.constant 0 : index
    %c0_18 = arith.constant 0 : index
    %23 = vector.load %arg7[%c0_17, %c0_18] : memref<1x32xf32, #tpu.memory_space<vmem>>, vector<1x32xf32>
    %24 = vector.broadcast %23 : vector<1x32xf32> to vector<128x32xf32>
    %25 = arith.addf %22, %24 : vector<128x32xf32>
    %c0_19 = arith.constant 0 : index
    %c0_20 = arith.constant 0 : index
    %26 = vector.load %arg5[%c0_19, %c0_20] : memref<32x32xbf16, #tpu.memory_space<vmem>>, vector<32x32xbf16>
    %cst_21 = arith.constant dense<0.000000e+00> : vector<128x32xf32>
    %27 = tpu.matmul %15, %26, %cst_21 {dimension_numbers = #tpu.dot_dimension_numbers<[1], [0], [0], [1], [0, 0, 1, 1], [], []>} : vector<128x32xbf16>, vector<32x32xbf16>, vector<128x32xf32> -> vector<128x32xf32>
    %c0_22 = arith.constant 0 : index
    %c0_23 = arith.constant 0 : index
    %28 = vector.load %arg8[%c0_22, %c0_23] : memref<1x32xf32, #tpu.memory_space<vmem>>, vector<1x32xf32>
    %29 = vector.broadcast %28 : vector<1x32xf32> to vector<128x32xf32>
    %30 = arith.addf %27, %29 : vector<128x32xf32>
    %cst_24 = arith.constant 0.353553385 : f32
    %31 = vector.broadcast %cst_24 : f32 to vector<128x32xf32>
    %32 = arith.mulf %20, %31 : vector<128x32xf32>
    %33 = arith.truncf %32 : vector<128x32xf32> to vector<128x32xbf16>
    %34 = arith.truncf %25 : vector<128x32xf32> to vector<128x32xbf16>
    %35 = arith.truncf %30 : vector<128x32xf32> to vector<128x32xbf16>
    %c0_25 = arith.constant 0 : index
    %c0_26 = arith.constant 0 : index
    %36 = vector.load %arg9[%c0_25, %c0_26] : memref<32x32xbf16, #tpu.memory_space<vmem>>, vector<32x32xbf16>
    %37 = vector.extract_strided_slice %33 {offsets = [0, 0], sizes = [64, 32], strides = [1, 1]} : vector<128x32xbf16> to vector<64x32xbf16>
    %38 = vector.extract_strided_slice %34 {offsets = [0, 0], sizes = [64, 32], strides = [1, 1]} : vector<128x32xbf16> to vector<64x32xbf16>
    %39 = vector.extract_strided_slice %35 {offsets = [0, 0], sizes = [64, 32], strides = [1, 1]} : vector<128x32xbf16> to vector<64x32xbf16>
    %cst_27 = arith.constant 0.000000e+00 : f32
    %40 = vector.broadcast %cst_27 : f32 to vector<64x32xf32>
    %41 = vector.extract_strided_slice %37 {offsets = [0, 0], sizes = [64, 8], strides = [1, 1]} : vector<64x32xbf16> to vector<64x8xbf16>
    %42 = vector.extract_strided_slice %38 {offsets = [0, 0], sizes = [64, 8], strides = [1, 1]} : vector<64x32xbf16> to vector<64x8xbf16>
    %43 = vector.extract_strided_slice %39 {offsets = [0, 0], sizes = [64, 8], strides = [1, 1]} : vector<64x32xbf16> to vector<64x8xbf16>
    %cst_28 = arith.constant dense<0.000000e+00> : vector<64x64xf32>
    %44 = tpu.matmul %41, %42, %cst_28 {dimension_numbers = #tpu.dot_dimension_numbers<[1], [1], [0], [0], [0, 0, 1, 0], [], []>} : vector<64x8xbf16>, vector<64x8xbf16>, vector<64x64xf32> -> vector<64x64xf32>
    %cst_29 = arith.constant dense<0xFF800000> : vector<64xf32>
    %45 = vector.multi_reduction <maximumf>, %44, %cst_29 [1] : vector<64x64xf32> to vector<64xf32>
    %46 = vector.shape_cast %45 : vector<64xf32> to vector<64x1xf32>
    %47 = vector.broadcast %46 : vector<64x1xf32> to vector<64x64xf32>
    %48 = arith.subf %44, %47 : vector<64x64xf32>
    %49 = math.exp %48 : vector<64x64xf32>
    %cst_30 = arith.constant dense<0.000000e+00> : vector<64xf32>
    %50 = vector.multi_reduction <add>, %49, %cst_30 [1] : vector<64x64xf32> to vector<64xf32>
    %51 = vector.shape_cast %50 : vector<64xf32> to vector<64x1xf32>
    %52 = tpu.reciprocal %51 {approx = true} : vector<64x1xf32> -> vector<64x1xf32>
    %53 = vector.broadcast %52 : vector<64x1xf32> to vector<64x64xf32>
    %54 = arith.mulf %49, %53 : vector<64x64xf32>
    %55 = arith.truncf %54 : vector<64x64xf32> to vector<64x64xbf16>
    %cst_31 = arith.constant dense<0.000000e+00> : vector<64x8xf32>
    %56 = tpu.matmul %55, %43, %cst_31 {dimension_numbers = #tpu.dot_dimension_numbers<[1], [0], [0], [1], [0, 0, 1, 1], [], []>} : vector<64x64xbf16>, vector<64x8xbf16>, vector<64x8xf32> -> vector<64x8xf32>
    %57 = arith.truncf %56 : vector<64x8xf32> to vector<64x8xbf16>
    %58 = vector.extract_strided_slice %36 {offsets = [0, 0], sizes = [8, 32], strides = [1, 1]} : vector<32x32xbf16> to vector<8x32xbf16>
    %cst_32 = arith.constant dense<0.000000e+00> : vector<64x32xf32>
    %59 = tpu.matmul %57, %58, %cst_32 {dimension_numbers = #tpu.dot_dimension_numbers<[1], [0], [0], [1], [0, 0, 1, 1], [], []>} : vector<64x8xbf16>, vector<8x32xbf16>, vector<64x32xf32> -> vector<64x32xf32>
    %60 = arith.addf %40, %59 : vector<64x32xf32>
    %61 = vector.extract_strided_slice %37 {offsets = [0, 8], sizes = [64, 8], strides = [1, 1]} : vector<64x32xbf16> to vector<64x8xbf16>
    %62 = vector.extract_strided_slice %38 {offsets = [0, 8], sizes = [64, 8], strides = [1, 1]} : vector<64x32xbf16> to vector<64x8xbf16>
    %63 = vector.extract_strided_slice %39 {offsets = [0, 8], sizes = [64, 8], strides = [1, 1]} : vector<64x32xbf16> to vector<64x8xbf16>
    %cst_33 = arith.constant dense<0.000000e+00> : vector<64x64xf32>
    %64 = tpu.matmul %61, %62, %cst_33 {dimension_numbers = #tpu.dot_dimension_numbers<[1], [1], [0], [0], [0, 0, 1, 0], [], []>} : vector<64x8xbf16>, vector<64x8xbf16>, vector<64x64xf32> -> vector<64x64xf32>
    %cst_34 = arith.constant dense<0xFF800000> : vector<64xf32>
    %65 = vector.multi_reduction <maximumf>, %64, %cst_34 [1] : vector<64x64xf32> to vector<64xf32>
    %66 = vector.shape_cast %65 : vector<64xf32> to vector<64x1xf32>
    %67 = vector.broadcast %66 : vector<64x1xf32> to vector<64x64xf32>
    %68 = arith.subf %64, %67 : vector<64x64xf32>
    %69 = math.exp %68 : vector<64x64xf32>
    %cst_35 = arith.constant dense<0.000000e+00> : vector<64xf32>
    %70 = vector.multi_reduction <add>, %69, %cst_35 [1] : vector<64x64xf32> to vector<64xf32>
    %71 = vector.shape_cast %70 : vector<64xf32> to vector<64x1xf32>
    %72 = tpu.reciprocal %71 {approx = true} : vector<64x1xf32> -> vector<64x1xf32>
    %73 = vector.broadcast %72 : vector<64x1xf32> to vector<64x64xf32>
    %74 = arith.mulf %69, %73 : vector<64x64xf32>
    %75 = arith.truncf %74 : vector<64x64xf32> to vector<64x64xbf16>
    %cst_36 = arith.constant dense<0.000000e+00> : vector<64x8xf32>
    %76 = tpu.matmul %75, %63, %cst_36 {dimension_numbers = #tpu.dot_dimension_numbers<[1], [0], [0], [1], [0, 0, 1, 1], [], []>} : vector<64x64xbf16>, vector<64x8xbf16>, vector<64x8xf32> -> vector<64x8xf32>
    %77 = arith.truncf %76 : vector<64x8xf32> to vector<64x8xbf16>
    %78 = vector.extract_strided_slice %36 {offsets = [8, 0], sizes = [8, 32], strides = [1, 1]} : vector<32x32xbf16> to vector<8x32xbf16>
    %cst_37 = arith.constant dense<0.000000e+00> : vector<64x32xf32>
    %79 = tpu.matmul %77, %78, %cst_37 {dimension_numbers = #tpu.dot_dimension_numbers<[1], [0], [0], [1], [0, 0, 1, 1], [], []>} : vector<64x8xbf16>, vector<8x32xbf16>, vector<64x32xf32> -> vector<64x32xf32>
    %80 = arith.addf %60, %79 : vector<64x32xf32>
    %81 = vector.extract_strided_slice %37 {offsets = [0, 16], sizes = [64, 8], strides = [1, 1]} : vector<64x32xbf16> to vector<64x8xbf16>
    %82 = vector.extract_strided_slice %38 {offsets = [0, 16], sizes = [64, 8], strides = [1, 1]} : vector<64x32xbf16> to vector<64x8xbf16>
    %83 = vector.extract_strided_slice %39 {offsets = [0, 16], sizes = [64, 8], strides = [1, 1]} : vector<64x32xbf16> to vector<64x8xbf16>
    %cst_38 = arith.constant dense<0.000000e+00> : vector<64x64xf32>
    %84 = tpu.matmul %81, %82, %cst_38 {dimension_numbers = #tpu.dot_dimension_numbers<[1], [1], [0], [0], [0, 0, 1, 0], [], []>} : vector<64x8xbf16>, vector<64x8xbf16>, vector<64x64xf32> -> vector<64x64xf32>
    %cst_39 = arith.constant dense<0xFF800000> : vector<64xf32>
    %85 = vector.multi_reduction <maximumf>, %84, %cst_39 [1] : vector<64x64xf32> to vector<64xf32>
    %86 = vector.shape_cast %85 : vector<64xf32> to vector<64x1xf32>
    %87 = vector.broadcast %86 : vector<64x1xf32> to vector<64x64xf32>
    %88 = arith.subf %84, %87 : vector<64x64xf32>
    %89 = math.exp %88 : vector<64x64xf32>
    %cst_40 = arith.constant dense<0.000000e+00> : vector<64xf32>
    %90 = vector.multi_reduction <add>, %89, %cst_40 [1] : vector<64x64xf32> to vector<64xf32>
    %91 = vector.shape_cast %90 : vector<64xf32> to vector<64x1xf32>
    %92 = tpu.reciprocal %91 {approx = true} : vector<64x1xf32> -> vector<64x1xf32>
    %93 = vector.broadcast %92 : vector<64x1xf32> to vector<64x64xf32>
    %94 = arith.mulf %89, %93 : vector<64x64xf32>
    %95 = arith.truncf %94 : vector<64x64xf32> to vector<64x64xbf16>
    %cst_41 = arith.constant dense<0.000000e+00> : vector<64x8xf32>
    %96 = tpu.matmul %95, %83, %cst_41 {dimension_numbers = #tpu.dot_dimension_numbers<[1], [0], [0], [1], [0, 0, 1, 1], [], []>} : vector<64x64xbf16>, vector<64x8xbf16>, vector<64x8xf32> -> vector<64x8xf32>
    %97 = arith.truncf %96 : vector<64x8xf32> to vector<64x8xbf16>
    %98 = vector.extract_strided_slice %36 {offsets = [16, 0], sizes = [8, 32], strides = [1, 1]} : vector<32x32xbf16> to vector<8x32xbf16>
    %cst_42 = arith.constant dense<0.000000e+00> : vector<64x32xf32>
    %99 = tpu.matmul %97, %98, %cst_42 {dimension_numbers = #tpu.dot_dimension_numbers<[1], [0], [0], [1], [0, 0, 1, 1], [], []>} : vector<64x8xbf16>, vector<8x32xbf16>, vector<64x32xf32> -> vector<64x32xf32>
    %100 = arith.addf %80, %99 : vector<64x32xf32>
    %101 = vector.extract_strided_slice %37 {offsets = [0, 24], sizes = [64, 8], strides = [1, 1]} : vector<64x32xbf16> to vector<64x8xbf16>
    %102 = vector.extract_strided_slice %38 {offsets = [0, 24], sizes = [64, 8], strides = [1, 1]} : vector<64x32xbf16> to vector<64x8xbf16>
    %103 = vector.extract_strided_slice %39 {offsets = [0, 24], sizes = [64, 8], strides = [1, 1]} : vector<64x32xbf16> to vector<64x8xbf16>
    %cst_43 = arith.constant dense<0.000000e+00> : vector<64x64xf32>
    %104 = tpu.matmul %101, %102, %cst_43 {dimension_numbers = #tpu.dot_dimension_numbers<[1], [1], [0], [0], [0, 0, 1, 0], [], []>} : vector<64x8xbf16>, vector<64x8xbf16>, vector<64x64xf32> -> vector<64x64xf32>
    %cst_44 = arith.constant dense<0xFF800000> : vector<64xf32>
    %105 = vector.multi_reduction <maximumf>, %104, %cst_44 [1] : vector<64x64xf32> to vector<64xf32>
    %106 = vector.shape_cast %105 : vector<64xf32> to vector<64x1xf32>
    %107 = vector.broadcast %106 : vector<64x1xf32> to vector<64x64xf32>
    %108 = arith.subf %104, %107 : vector<64x64xf32>
    %109 = math.exp %108 : vector<64x64xf32>
    %cst_45 = arith.constant dense<0.000000e+00> : vector<64xf32>
    %110 = vector.multi_reduction <add>, %109, %cst_45 [1] : vector<64x64xf32> to vector<64xf32>
    %111 = vector.shape_cast %110 : vector<64xf32> to vector<64x1xf32>
    %112 = tpu.reciprocal %111 {approx = true} : vector<64x1xf32> -> vector<64x1xf32>
    %113 = vector.broadcast %112 : vector<64x1xf32> to vector<64x64xf32>
    %114 = arith.mulf %109, %113 : vector<64x64xf32>
    %115 = arith.truncf %114 : vector<64x64xf32> to vector<64x64xbf16>
    %cst_46 = arith.constant dense<0.000000e+00> : vector<64x8xf32>
    %116 = tpu.matmul %115, %103, %cst_46 {dimension_numbers = #tpu.dot_dimension_numbers<[1], [0], [0], [1], [0, 0, 1, 1], [], []>} : vector<64x64xbf16>, vector<64x8xbf16>, vector<64x8xf32> -> vector<64x8xf32>
    %117 = arith.truncf %116 : vector<64x8xf32> to vector<64x8xbf16>
    %118 = vector.extract_strided_slice %36 {offsets = [24, 0], sizes = [8, 32], strides = [1, 1]} : vector<32x32xbf16> to vector<8x32xbf16>
    %cst_47 = arith.constant dense<0.000000e+00> : vector<64x32xf32>
    %119 = tpu.matmul %117, %118, %cst_47 {dimension_numbers = #tpu.dot_dimension_numbers<[1], [0], [0], [1], [0, 0, 1, 1], [], []>} : vector<64x8xbf16>, vector<8x32xbf16>, vector<64x32xf32> -> vector<64x32xf32>
    %120 = arith.addf %100, %119 : vector<64x32xf32>
    %121 = vector.extract_strided_slice %33 {offsets = [64, 0], sizes = [64, 32], strides = [1, 1]} : vector<128x32xbf16> to vector<64x32xbf16>
    %122 = vector.extract_strided_slice %34 {offsets = [64, 0], sizes = [64, 32], strides = [1, 1]} : vector<128x32xbf16> to vector<64x32xbf16>
    %123 = vector.extract_strided_slice %35 {offsets = [64, 0], sizes = [64, 32], strides = [1, 1]} : vector<128x32xbf16> to vector<64x32xbf16>
    %cst_48 = arith.constant 0.000000e+00 : f32
    %124 = vector.broadcast %cst_48 : f32 to vector<64x32xf32>
    %125 = vector.extract_strided_slice %121 {offsets = [0, 0], sizes = [64, 8], strides = [1, 1]} : vector<64x32xbf16> to vector<64x8xbf16>
    %126 = vector.extract_strided_slice %122 {offsets = [0, 0], sizes = [64, 8], strides = [1, 1]} : vector<64x32xbf16> to vector<64x8xbf16>
    %127 = vector.extract_strided_slice %123 {offsets = [0, 0], sizes = [64, 8], strides = [1, 1]} : vector<64x32xbf16> to vector<64x8xbf16>
    %cst_49 = arith.constant dense<0.000000e+00> : vector<64x64xf32>
    %128 = tpu.matmul %125, %126, %cst_49 {dimension_numbers = #tpu.dot_dimension_numbers<[1], [1], [0], [0], [0, 0, 1, 0], [], []>} : vector<64x8xbf16>, vector<64x8xbf16>, vector<64x64xf32> -> vector<64x64xf32>
    %cst_50 = arith.constant dense<0xFF800000> : vector<64xf32>
    %129 = vector.multi_reduction <maximumf>, %128, %cst_50 [1] : vector<64x64xf32> to vector<64xf32>
    %130 = vector.shape_cast %129 : vector<64xf32> to vector<64x1xf32>
    %131 = vector.broadcast %130 : vector<64x1xf32> to vector<64x64xf32>
    %132 = arith.subf %128, %131 : vector<64x64xf32>
    %133 = math.exp %132 : vector<64x64xf32>
    %cst_51 = arith.constant dense<0.000000e+00> : vector<64xf32>
    %134 = vector.multi_reduction <add>, %133, %cst_51 [1] : vector<64x64xf32> to vector<64xf32>
    %135 = vector.shape_cast %134 : vector<64xf32> to vector<64x1xf32>
    %136 = tpu.reciprocal %135 {approx = true} : vector<64x1xf32> -> vector<64x1xf32>
    %137 = vector.broadcast %136 : vector<64x1xf32> to vector<64x64xf32>
    %138 = arith.mulf %133, %137 : vector<64x64xf32>
    %139 = arith.truncf %138 : vector<64x64xf32> to vector<64x64xbf16>
    %cst_52 = arith.constant dense<0.000000e+00> : vector<64x8xf32>
    %140 = tpu.matmul %139, %127, %cst_52 {dimension_numbers = #tpu.dot_dimension_numbers<[1], [0], [0], [1], [0, 0, 1, 1], [], []>} : vector<64x64xbf16>, vector<64x8xbf16>, vector<64x8xf32> -> vector<64x8xf32>
    %141 = arith.truncf %140 : vector<64x8xf32> to vector<64x8xbf16>
    %142 = vector.extract_strided_slice %36 {offsets = [0, 0], sizes = [8, 32], strides = [1, 1]} : vector<32x32xbf16> to vector<8x32xbf16>
    %cst_53 = arith.constant dense<0.000000e+00> : vector<64x32xf32>
    %143 = tpu.matmul %141, %142, %cst_53 {dimension_numbers = #tpu.dot_dimension_numbers<[1], [0], [0], [1], [0, 0, 1, 1], [], []>} : vector<64x8xbf16>, vector<8x32xbf16>, vector<64x32xf32> -> vector<64x32xf32>
    %144 = arith.addf %124, %143 : vector<64x32xf32>
    %145 = vector.extract_strided_slice %121 {offsets = [0, 8], sizes = [64, 8], strides = [1, 1]} : vector<64x32xbf16> to vector<64x8xbf16>
    %146 = vector.extract_strided_slice %122 {offsets = [0, 8], sizes = [64, 8], strides = [1, 1]} : vector<64x32xbf16> to vector<64x8xbf16>
    %147 = vector.extract_strided_slice %123 {offsets = [0, 8], sizes = [64, 8], strides = [1, 1]} : vector<64x32xbf16> to vector<64x8xbf16>
    %cst_54 = arith.constant dense<0.000000e+00> : vector<64x64xf32>
    %148 = tpu.matmul %145, %146, %cst_54 {dimension_numbers = #tpu.dot_dimension_numbers<[1], [1], [0], [0], [0, 0, 1, 0], [], []>} : vector<64x8xbf16>, vector<64x8xbf16>, vector<64x64xf32> -> vector<64x64xf32>
    %cst_55 = arith.constant dense<0xFF800000> : vector<64xf32>
    %149 = vector.multi_reduction <maximumf>, %148, %cst_55 [1] : vector<64x64xf32> to vector<64xf32>
    %150 = vector.shape_cast %149 : vector<64xf32> to vector<64x1xf32>
    %151 = vector.broadcast %150 : vector<64x1xf32> to vector<64x64xf32>
    %152 = arith.subf %148, %151 : vector<64x64xf32>
    %153 = math.exp %152 : vector<64x64xf32>
    %cst_56 = arith.constant dense<0.000000e+00> : vector<64xf32>
    %154 = vector.multi_reduction <add>, %153, %cst_56 [1] : vector<64x64xf32> to vector<64xf32>
    %155 = vector.shape_cast %154 : vector<64xf32> to vector<64x1xf32>
    %156 = tpu.reciprocal %155 {approx = true} : vector<64x1xf32> -> vector<64x1xf32>
    %157 = vector.broadcast %156 : vector<64x1xf32> to vector<64x64xf32>
    %158 = arith.mulf %153, %157 : vector<64x64xf32>
    %159 = arith.truncf %158 : vector<64x64xf32> to vector<64x64xbf16>
    %cst_57 = arith.constant dense<0.000000e+00> : vector<64x8xf32>
    %160 = tpu.matmul %159, %147, %cst_57 {dimension_numbers = #tpu.dot_dimension_numbers<[1], [0], [0], [1], [0, 0, 1, 1], [], []>} : vector<64x64xbf16>, vector<64x8xbf16>, vector<64x8xf32> -> vector<64x8xf32>
    %161 = arith.truncf %160 : vector<64x8xf32> to vector<64x8xbf16>
    %162 = vector.extract_strided_slice %36 {offsets = [8, 0], sizes = [8, 32], strides = [1, 1]} : vector<32x32xbf16> to vector<8x32xbf16>
    %cst_58 = arith.constant dense<0.000000e+00> : vector<64x32xf32>
    %163 = tpu.matmul %161, %162, %cst_58 {dimension_numbers = #tpu.dot_dimension_numbers<[1], [0], [0], [1], [0, 0, 1, 1], [], []>} : vector<64x8xbf16>, vector<8x32xbf16>, vector<64x32xf32> -> vector<64x32xf32>
    %164 = arith.addf %144, %163 : vector<64x32xf32>
    %165 = vector.extract_strided_slice %121 {offsets = [0, 16], sizes = [64, 8], strides = [1, 1]} : vector<64x32xbf16> to vector<64x8xbf16>
    %166 = vector.extract_strided_slice %122 {offsets = [0, 16], sizes = [64, 8], strides = [1, 1]} : vector<64x32xbf16> to vector<64x8xbf16>
    %167 = vector.extract_strided_slice %123 {offsets = [0, 16], sizes = [64, 8], strides = [1, 1]} : vector<64x32xbf16> to vector<64x8xbf16>
    %cst_59 = arith.constant dense<0.000000e+00> : vector<64x64xf32>
    %168 = tpu.matmul %165, %166, %cst_59 {dimension_numbers = #tpu.dot_dimension_numbers<[1], [1], [0], [0], [0, 0, 1, 0], [], []>} : vector<64x8xbf16>, vector<64x8xbf16>, vector<64x64xf32> -> vector<64x64xf32>
    %cst_60 = arith.constant dense<0xFF800000> : vector<64xf32>
    %169 = vector.multi_reduction <maximumf>, %168, %cst_60 [1] : vector<64x64xf32> to vector<64xf32>
    %170 = vector.shape_cast %169 : vector<64xf32> to vector<64x1xf32>
    %171 = vector.broadcast %170 : vector<64x1xf32> to vector<64x64xf32>
    %172 = arith.subf %168, %171 : vector<64x64xf32>
    %173 = math.exp %172 : vector<64x64xf32>
    %cst_61 = arith.constant dense<0.000000e+00> : vector<64xf32>
    %174 = vector.multi_reduction <add>, %173, %cst_61 [1] : vector<64x64xf32> to vector<64xf32>
    %175 = vector.shape_cast %174 : vector<64xf32> to vector<64x1xf32>
    %176 = tpu.reciprocal %175 {approx = true} : vector<64x1xf32> -> vector<64x1xf32>
    %177 = vector.broadcast %176 : vector<64x1xf32> to vector<64x64xf32>
    %178 = arith.mulf %173, %177 : vector<64x64xf32>
    %179 = arith.truncf %178 : vector<64x64xf32> to vector<64x64xbf16>
    %cst_62 = arith.constant dense<0.000000e+00> : vector<64x8xf32>
    %180 = tpu.matmul %179, %167, %cst_62 {dimension_numbers = #tpu.dot_dimension_numbers<[1], [0], [0], [1], [0, 0, 1, 1], [], []>} : vector<64x64xbf16>, vector<64x8xbf16>, vector<64x8xf32> -> vector<64x8xf32>
    %181 = arith.truncf %180 : vector<64x8xf32> to vector<64x8xbf16>
    %182 = vector.extract_strided_slice %36 {offsets = [16, 0], sizes = [8, 32], strides = [1, 1]} : vector<32x32xbf16> to vector<8x32xbf16>
    %cst_63 = arith.constant dense<0.000000e+00> : vector<64x32xf32>
    %183 = tpu.matmul %181, %182, %cst_63 {dimension_numbers = #tpu.dot_dimension_numbers<[1], [0], [0], [1], [0, 0, 1, 1], [], []>} : vector<64x8xbf16>, vector<8x32xbf16>, vector<64x32xf32> -> vector<64x32xf32>
    %184 = arith.addf %164, %183 : vector<64x32xf32>
    %185 = vector.extract_strided_slice %121 {offsets = [0, 24], sizes = [64, 8], strides = [1, 1]} : vector<64x32xbf16> to vector<64x8xbf16>
    %186 = vector.extract_strided_slice %122 {offsets = [0, 24], sizes = [64, 8], strides = [1, 1]} : vector<64x32xbf16> to vector<64x8xbf16>
    %187 = vector.extract_strided_slice %123 {offsets = [0, 24], sizes = [64, 8], strides = [1, 1]} : vector<64x32xbf16> to vector<64x8xbf16>
    %cst_64 = arith.constant dense<0.000000e+00> : vector<64x64xf32>
    %188 = tpu.matmul %185, %186, %cst_64 {dimension_numbers = #tpu.dot_dimension_numbers<[1], [1], [0], [0], [0, 0, 1, 0], [], []>} : vector<64x8xbf16>, vector<64x8xbf16>, vector<64x64xf32> -> vector<64x64xf32>
    %cst_65 = arith.constant dense<0xFF800000> : vector<64xf32>
    %189 = vector.multi_reduction <maximumf>, %188, %cst_65 [1] : vector<64x64xf32> to vector<64xf32>
    %190 = vector.shape_cast %189 : vector<64xf32> to vector<64x1xf32>
    %191 = vector.broadcast %190 : vector<64x1xf32> to vector<64x64xf32>
    %192 = arith.subf %188, %191 : vector<64x64xf32>
    %193 = math.exp %192 : vector<64x64xf32>
    %cst_66 = arith.constant dense<0.000000e+00> : vector<64xf32>
    %194 = vector.multi_reduction <add>, %193, %cst_66 [1] : vector<64x64xf32> to vector<64xf32>
    %195 = vector.shape_cast %194 : vector<64xf32> to vector<64x1xf32>
    %196 = tpu.reciprocal %195 {approx = true} : vector<64x1xf32> -> vector<64x1xf32>
    %197 = vector.broadcast %196 : vector<64x1xf32> to vector<64x64xf32>
    %198 = arith.mulf %193, %197 : vector<64x64xf32>
    %199 = arith.truncf %198 : vector<64x64xf32> to vector<64x64xbf16>
    %cst_67 = arith.constant dense<0.000000e+00> : vector<64x8xf32>
    %200 = tpu.matmul %199, %187, %cst_67 {dimension_numbers = #tpu.dot_dimension_numbers<[1], [0], [0], [1], [0, 0, 1, 1], [], []>} : vector<64x64xbf16>, vector<64x8xbf16>, vector<64x8xf32> -> vector<64x8xf32>
    %201 = arith.truncf %200 : vector<64x8xf32> to vector<64x8xbf16>
    %202 = vector.extract_strided_slice %36 {offsets = [24, 0], sizes = [8, 32], strides = [1, 1]} : vector<32x32xbf16> to vector<8x32xbf16>
    %cst_68 = arith.constant dense<0.000000e+00> : vector<64x32xf32>
    %203 = tpu.matmul %201, %202, %cst_68 {dimension_numbers = #tpu.dot_dimension_numbers<[1], [0], [0], [1], [0, 0, 1, 1], [], []>} : vector<64x8xbf16>, vector<8x32xbf16>, vector<64x32xf32> -> vector<64x32xf32>
    %204 = arith.addf %184, %203 : vector<64x32xf32>
    %205 = tpu.concatenate %120, %204 in 0 : vector<64x32xf32>, vector<64x32xf32> -> vector<128x32xf32>
    %c0_69 = arith.constant 0 : index
    %c0_70 = arith.constant 0 : index
    %206 = vector.load %arg10[%c0_69, %c0_70] : memref<1x32xf32, #tpu.memory_space<vmem>>, vector<1x32xf32>
    %207 = vector.broadcast %206 : vector<1x32xf32> to vector<128x32xf32>
    %208 = arith.addf %205, %207 : vector<128x32xf32>
    %209 = arith.addf %6, %208 : vector<128x32xf32>
    %cst_71 = arith.constant dense<0.000000e+00> : vector<128xf32>
    %210 = vector.multi_reduction <add>, %209, %cst_71 [1] : vector<128x32xf32> to vector<128xf32>
    %211 = vector.shape_cast %210 : vector<128xf32> to vector<128x1xf32>
    %cst_72 = arith.constant 3.200000e+01 : f32
    %212 = vector.broadcast %cst_72 : f32 to vector<128x1xf32>
    %213 = arith.divf %211, %212 : vector<128x1xf32>
    %214 = vector.broadcast %213 : vector<128x1xf32> to vector<128x32xf32>
    %215 = arith.subf %209, %214 : vector<128x32xf32>
    %216 = arith.mulf %215, %215 : vector<128x32xf32>
    %cst_73 = arith.constant dense<0.000000e+00> : vector<128xf32>
    %217 = vector.multi_reduction <add>, %216, %cst_73 [1] : vector<128x32xf32> to vector<128xf32>
    %218 = vector.shape_cast %217 : vector<128xf32> to vector<128x1xf32>
    %cst_74 = arith.constant 3.200000e+01 : f32
    %219 = vector.broadcast %cst_74 : f32 to vector<128x1xf32>
    %220 = arith.divf %218, %219 : vector<128x1xf32>
    %221 = vector.broadcast %213 : vector<128x1xf32> to vector<128x32xf32>
    %222 = arith.subf %209, %221 : vector<128x32xf32>
    %cst_75 = arith.constant 9.99999974E-6 : f32
    %223 = vector.broadcast %cst_75 : f32 to vector<128x1xf32>
    %224 = arith.addf %220, %223 : vector<128x1xf32>
    %225 = math.rsqrt %224 : vector<128x1xf32>
    %226 = vector.broadcast %225 : vector<128x1xf32> to vector<128x32xf32>
    %227 = arith.mulf %222, %226 : vector<128x32xf32>
    %c0_76 = arith.constant 0 : index
    %c0_77 = arith.constant 0 : index
    %228 = vector.load %arg19[%c0_76, %c0_77] : memref<1x32xf32, #tpu.memory_space<vmem>>, vector<1x32xf32>
    %229 = vector.broadcast %228 : vector<1x32xf32> to vector<128x32xf32>
    %230 = arith.mulf %227, %229 : vector<128x32xf32>
    %c0_78 = arith.constant 0 : index
    %c0_79 = arith.constant 0 : index
    %231 = vector.load %arg20[%c0_78, %c0_79] : memref<1x32xf32, #tpu.memory_space<vmem>>, vector<1x32xf32>
    %232 = vector.broadcast %231 : vector<1x32xf32> to vector<128x32xf32>
    %233 = arith.addf %230, %232 : vector<128x32xf32>
    %234 = arith.truncf %233 : vector<128x32xf32> to vector<128x32xbf16>
    %c0_80 = arith.constant 0 : index
    %c0_81 = arith.constant 0 : index
    %235 = vector.load %arg11[%c0_80, %c0_81] : memref<32x32xbf16, #tpu.memory_space<vmem>>, vector<32x32xbf16>
    %cst_82 = arith.constant dense<0.000000e+00> : vector<128x32xf32>
    %236 = tpu.matmul %234, %235, %cst_82 {dimension_numbers = #tpu.dot_dimension_numbers<[1], [0], [0], [1], [0, 0, 1, 1], [], []>} : vector<128x32xbf16>, vector<32x32xbf16>, vector<128x32xf32> -> vector<128x32xf32>
    %c0_83 = arith.constant 0 : index
    %c0_84 = arith.constant 0 : index
    %237 = vector.load %arg14[%c0_83, %c0_84] : memref<1x32xf32, #tpu.memory_space<vmem>>, vector<1x32xf32>
    %238 = vector.broadcast %237 : vector<1x32xf32> to vector<128x32xf32>
    %239 = arith.addf %236, %238 : vector<128x32xf32>
    %c0_85 = arith.constant 0 : index
    %c0_86 = arith.constant 0 : index
    %240 = vector.load %arg12[%c0_85, %c0_86] : memref<32x32xbf16, #tpu.memory_space<vmem>>, vector<32x32xbf16>
    %cst_87 = arith.constant dense<0.000000e+00> : vector<16x32xf32>
    %241 = tpu.matmul %14, %240, %cst_87 {dimension_numbers = #tpu.dot_dimension_numbers<[1], [0], [0], [1], [0, 0, 1, 1], [], []>} : vector<16x32xbf16>, vector<32x32xbf16>, vector<16x32xf32> -> vector<16x32xf32>
    %c0_88 = arith.constant 0 : index
    %c0_89 = arith.constant 0 : index
    %242 = vector.load %arg15[%c0_88, %c0_89] : memref<1x32xf32, #tpu.memory_space<vmem>>, vector<1x32xf32>
    %243 = vector.broadcast %242 : vector<1x32xf32> to vector<16x32xf32>
    %244 = arith.addf %241, %243 : vector<16x32xf32>
    %c0_90 = arith.constant 0 : index
    %c0_91 = arith.constant 0 : index
    %245 = vector.load %arg13[%c0_90, %c0_91] : memref<32x32xbf16, #tpu.memory_space<vmem>>, vector<32x32xbf16>
    %cst_92 = arith.constant dense<0.000000e+00> : vector<16x32xf32>
    %246 = tpu.matmul %14, %245, %cst_92 {dimension_numbers = #tpu.dot_dimension_numbers<[1], [0], [0], [1], [0, 0, 1, 1], [], []>} : vector<16x32xbf16>, vector<32x32xbf16>, vector<16x32xf32> -> vector<16x32xf32>
    %c0_93 = arith.constant 0 : index
    %c0_94 = arith.constant 0 : index
    %247 = vector.load %arg16[%c0_93, %c0_94] : memref<1x32xf32, #tpu.memory_space<vmem>>, vector<1x32xf32>
    %248 = vector.broadcast %247 : vector<1x32xf32> to vector<16x32xf32>
    %249 = arith.addf %246, %248 : vector<16x32xf32>
    %cst_95 = arith.constant 0.353553385 : f32
    %250 = vector.broadcast %cst_95 : f32 to vector<128x32xf32>
    %251 = arith.mulf %239, %250 : vector<128x32xf32>
    %252 = arith.truncf %251 : vector<128x32xf32> to vector<128x32xbf16>
    %253 = arith.truncf %244 : vector<16x32xf32> to vector<16x32xbf16>
    %254 = arith.truncf %249 : vector<16x32xf32> to vector<16x32xbf16>
    %c0_96 = arith.constant 0 : index
    %c0_97 = arith.constant 0 : index
    %255 = vector.load %arg17[%c0_96, %c0_97] : memref<32x32xbf16, #tpu.memory_space<vmem>>, vector<32x32xbf16>
    %256 = vector.extract_strided_slice %252 {offsets = [0, 0], sizes = [64, 32], strides = [1, 1]} : vector<128x32xbf16> to vector<64x32xbf16>
    %257 = vector.extract_strided_slice %253 {offsets = [0, 0], sizes = [8, 32], strides = [1, 1]} : vector<16x32xbf16> to vector<8x32xbf16>
    %258 = vector.extract_strided_slice %254 {offsets = [0, 0], sizes = [8, 32], strides = [1, 1]} : vector<16x32xbf16> to vector<8x32xbf16>
    %cst_98 = arith.constant 0.000000e+00 : f32
    %259 = vector.broadcast %cst_98 : f32 to vector<64x32xf32>
    %260 = vector.extract_strided_slice %256 {offsets = [0, 0], sizes = [64, 8], strides = [1, 1]} : vector<64x32xbf16> to vector<64x8xbf16>
    %261 = vector.extract_strided_slice %257 {offsets = [0, 0], sizes = [8, 8], strides = [1, 1]} : vector<8x32xbf16> to vector<8x8xbf16>
    %262 = vector.extract_strided_slice %258 {offsets = [0, 0], sizes = [8, 8], strides = [1, 1]} : vector<8x32xbf16> to vector<8x8xbf16>
    %cst_99 = arith.constant dense<0.000000e+00> : vector<64x8xf32>
    %263 = tpu.matmul %260, %261, %cst_99 {dimension_numbers = #tpu.dot_dimension_numbers<[1], [1], [0], [0], [0, 0, 1, 0], [], []>} : vector<64x8xbf16>, vector<8x8xbf16>, vector<64x8xf32> -> vector<64x8xf32>
    %cst_100 = arith.constant dense<0xFF800000> : vector<64xf32>
    %264 = vector.multi_reduction <maximumf>, %263, %cst_100 [1] : vector<64x8xf32> to vector<64xf32>
    %265 = vector.shape_cast %264 : vector<64xf32> to vector<64x1xf32>
    %266 = vector.broadcast %265 : vector<64x1xf32> to vector<64x8xf32>
    %267 = arith.subf %263, %266 : vector<64x8xf32>
    %268 = math.exp %267 : vector<64x8xf32>
    %cst_101 = arith.constant dense<0.000000e+00> : vector<64xf32>
    %269 = vector.multi_reduction <add>, %268, %cst_101 [1] : vector<64x8xf32> to vector<64xf32>
    %270 = vector.shape_cast %269 : vector<64xf32> to vector<64x1xf32>
    %271 = tpu.reciprocal %270 {approx = true} : vector<64x1xf32> -> vector<64x1xf32>
    %272 = vector.broadcast %271 : vector<64x1xf32> to vector<64x8xf32>
    %273 = arith.mulf %268, %272 : vector<64x8xf32>
    %274 = arith.truncf %273 : vector<64x8xf32> to vector<64x8xbf16>
    %cst_102 = arith.constant dense<0.000000e+00> : vector<64x8xf32>
    %275 = tpu.matmul %274, %262, %cst_102 {dimension_numbers = #tpu.dot_dimension_numbers<[1], [0], [0], [1], [0, 0, 1, 1], [], []>} : vector<64x8xbf16>, vector<8x8xbf16>, vector<64x8xf32> -> vector<64x8xf32>
    %276 = arith.truncf %275 : vector<64x8xf32> to vector<64x8xbf16>
    %277 = vector.extract_strided_slice %255 {offsets = [0, 0], sizes = [8, 32], strides = [1, 1]} : vector<32x32xbf16> to vector<8x32xbf16>
    %cst_103 = arith.constant dense<0.000000e+00> : vector<64x32xf32>
    %278 = tpu.matmul %276, %277, %cst_103 {dimension_numbers = #tpu.dot_dimension_numbers<[1], [0], [0], [1], [0, 0, 1, 1], [], []>} : vector<64x8xbf16>, vector<8x32xbf16>, vector<64x32xf32> -> vector<64x32xf32>
    %279 = arith.addf %259, %278 : vector<64x32xf32>
    %280 = vector.extract_strided_slice %256 {offsets = [0, 8], sizes = [64, 8], strides = [1, 1]} : vector<64x32xbf16> to vector<64x8xbf16>
    %281 = vector.extract_strided_slice %257 {offsets = [0, 8], sizes = [8, 8], strides = [1, 1]} : vector<8x32xbf16> to vector<8x8xbf16>
    %282 = vector.extract_strided_slice %258 {offsets = [0, 8], sizes = [8, 8], strides = [1, 1]} : vector<8x32xbf16> to vector<8x8xbf16>
    %cst_104 = arith.constant dense<0.000000e+00> : vector<64x8xf32>
    %283 = tpu.matmul %280, %281, %cst_104 {dimension_numbers = #tpu.dot_dimension_numbers<[1], [1], [0], [0], [0, 0, 1, 0], [], []>} : vector<64x8xbf16>, vector<8x8xbf16>, vector<64x8xf32> -> vector<64x8xf32>
    %cst_105 = arith.constant dense<0xFF800000> : vector<64xf32>
    %284 = vector.multi_reduction <maximumf>, %283, %cst_105 [1] : vector<64x8xf32> to vector<64xf32>
    %285 = vector.shape_cast %284 : vector<64xf32> to vector<64x1xf32>
    %286 = vector.broadcast %285 : vector<64x1xf32> to vector<64x8xf32>
    %287 = arith.subf %283, %286 : vector<64x8xf32>
    %288 = math.exp %287 : vector<64x8xf32>
    %cst_106 = arith.constant dense<0.000000e+00> : vector<64xf32>
    %289 = vector.multi_reduction <add>, %288, %cst_106 [1] : vector<64x8xf32> to vector<64xf32>
    %290 = vector.shape_cast %289 : vector<64xf32> to vector<64x1xf32>
    %291 = tpu.reciprocal %290 {approx = true} : vector<64x1xf32> -> vector<64x1xf32>
    %292 = vector.broadcast %291 : vector<64x1xf32> to vector<64x8xf32>
    %293 = arith.mulf %288, %292 : vector<64x8xf32>
    %294 = arith.truncf %293 : vector<64x8xf32> to vector<64x8xbf16>
    %cst_107 = arith.constant dense<0.000000e+00> : vector<64x8xf32>
    %295 = tpu.matmul %294, %282, %cst_107 {dimension_numbers = #tpu.dot_dimension_numbers<[1], [0], [0], [1], [0, 0, 1, 1], [], []>} : vector<64x8xbf16>, vector<8x8xbf16>, vector<64x8xf32> -> vector<64x8xf32>
    %296 = arith.truncf %295 : vector<64x8xf32> to vector<64x8xbf16>
    %297 = vector.extract_strided_slice %255 {offsets = [8, 0], sizes = [8, 32], strides = [1, 1]} : vector<32x32xbf16> to vector<8x32xbf16>
    %cst_108 = arith.constant dense<0.000000e+00> : vector<64x32xf32>
    %298 = tpu.matmul %296, %297, %cst_108 {dimension_numbers = #tpu.dot_dimension_numbers<[1], [0], [0], [1], [0, 0, 1, 1], [], []>} : vector<64x8xbf16>, vector<8x32xbf16>, vector<64x32xf32> -> vector<64x32xf32>
    %299 = arith.addf %279, %298 : vector<64x32xf32>
    %300 = vector.extract_strided_slice %256 {offsets = [0, 16], sizes = [64, 8], strides = [1, 1]} : vector<64x32xbf16> to vector<64x8xbf16>
    %301 = vector.extract_strided_slice %257 {offsets = [0, 16], sizes = [8, 8], strides = [1, 1]} : vector<8x32xbf16> to vector<8x8xbf16>
    %302 = vector.extract_strided_slice %258 {offsets = [0, 16], sizes = [8, 8], strides = [1, 1]} : vector<8x32xbf16> to vector<8x8xbf16>
    %cst_109 = arith.constant dense<0.000000e+00> : vector<64x8xf32>
    %303 = tpu.matmul %300, %301, %cst_109 {dimension_numbers = #tpu.dot_dimension_numbers<[1], [1], [0], [0], [0, 0, 1, 0], [], []>} : vector<64x8xbf16>, vector<8x8xbf16>, vector<64x8xf32> -> vector<64x8xf32>
    %cst_110 = arith.constant dense<0xFF800000> : vector<64xf32>
    %304 = vector.multi_reduction <maximumf>, %303, %cst_110 [1] : vector<64x8xf32> to vector<64xf32>
    %305 = vector.shape_cast %304 : vector<64xf32> to vector<64x1xf32>
    %306 = vector.broadcast %305 : vector<64x1xf32> to vector<64x8xf32>
    %307 = arith.subf %303, %306 : vector<64x8xf32>
    %308 = math.exp %307 : vector<64x8xf32>
    %cst_111 = arith.constant dense<0.000000e+00> : vector<64xf32>
    %309 = vector.multi_reduction <add>, %308, %cst_111 [1] : vector<64x8xf32> to vector<64xf32>
    %310 = vector.shape_cast %309 : vector<64xf32> to vector<64x1xf32>
    %311 = tpu.reciprocal %310 {approx = true} : vector<64x1xf32> -> vector<64x1xf32>
    %312 = vector.broadcast %311 : vector<64x1xf32> to vector<64x8xf32>
    %313 = arith.mulf %308, %312 : vector<64x8xf32>
    %314 = arith.truncf %313 : vector<64x8xf32> to vector<64x8xbf16>
    %cst_112 = arith.constant dense<0.000000e+00> : vector<64x8xf32>
    %315 = tpu.matmul %314, %302, %cst_112 {dimension_numbers = #tpu.dot_dimension_numbers<[1], [0], [0], [1], [0, 0, 1, 1], [], []>} : vector<64x8xbf16>, vector<8x8xbf16>, vector<64x8xf32> -> vector<64x8xf32>
    %316 = arith.truncf %315 : vector<64x8xf32> to vector<64x8xbf16>
    %317 = vector.extract_strided_slice %255 {offsets = [16, 0], sizes = [8, 32], strides = [1, 1]} : vector<32x32xbf16> to vector<8x32xbf16>
    %cst_113 = arith.constant dense<0.000000e+00> : vector<64x32xf32>
    %318 = tpu.matmul %316, %317, %cst_113 {dimension_numbers = #tpu.dot_dimension_numbers<[1], [0], [0], [1], [0, 0, 1, 1], [], []>} : vector<64x8xbf16>, vector<8x32xbf16>, vector<64x32xf32> -> vector<64x32xf32>
    %319 = arith.addf %299, %318 : vector<64x32xf32>
    %320 = vector.extract_strided_slice %256 {offsets = [0, 24], sizes = [64, 8], strides = [1, 1]} : vector<64x32xbf16> to vector<64x8xbf16>
    %321 = vector.extract_strided_slice %257 {offsets = [0, 24], sizes = [8, 8], strides = [1, 1]} : vector<8x32xbf16> to vector<8x8xbf16>
    %322 = vector.extract_strided_slice %258 {offsets = [0, 24], sizes = [8, 8], strides = [1, 1]} : vector<8x32xbf16> to vector<8x8xbf16>
    %cst_114 = arith.constant dense<0.000000e+00> : vector<64x8xf32>
    %323 = tpu.matmul %320, %321, %cst_114 {dimension_numbers = #tpu.dot_dimension_numbers<[1], [1], [0], [0], [0, 0, 1, 0], [], []>} : vector<64x8xbf16>, vector<8x8xbf16>, vector<64x8xf32> -> vector<64x8xf32>
    %cst_115 = arith.constant dense<0xFF800000> : vector<64xf32>
    %324 = vector.multi_reduction <maximumf>, %323, %cst_115 [1] : vector<64x8xf32> to vector<64xf32>
    %325 = vector.shape_cast %324 : vector<64xf32> to vector<64x1xf32>
    %326 = vector.broadcast %325 : vector<64x1xf32> to vector<64x8xf32>
    %327 = arith.subf %323, %326 : vector<64x8xf32>
    %328 = math.exp %327 : vector<64x8xf32>
    %cst_116 = arith.constant dense<0.000000e+00> : vector<64xf32>
    %329 = vector.multi_reduction <add>, %328, %cst_116 [1] : vector<64x8xf32> to vector<64xf32>
    %330 = vector.shape_cast %329 : vector<64xf32> to vector<64x1xf32>
    %331 = tpu.reciprocal %330 {approx = true} : vector<64x1xf32> -> vector<64x1xf32>
    %332 = vector.broadcast %331 : vector<64x1xf32> to vector<64x8xf32>
    %333 = arith.mulf %328, %332 : vector<64x8xf32>
    %334 = arith.truncf %333 : vector<64x8xf32> to vector<64x8xbf16>
    %cst_117 = arith.constant dense<0.000000e+00> : vector<64x8xf32>
    %335 = tpu.matmul %334, %322, %cst_117 {dimension_numbers = #tpu.dot_dimension_numbers<[1], [0], [0], [1], [0, 0, 1, 1], [], []>} : vector<64x8xbf16>, vector<8x8xbf16>, vector<64x8xf32> -> vector<64x8xf32>
    %336 = arith.truncf %335 : vector<64x8xf32> to vector<64x8xbf16>
    %337 = vector.extract_strided_slice %255 {offsets = [24, 0], sizes = [8, 32], strides = [1, 1]} : vector<32x32xbf16> to vector<8x32xbf16>
    %cst_118 = arith.constant dense<0.000000e+00> : vector<64x32xf32>
    %338 = tpu.matmul %336, %337, %cst_118 {dimension_numbers = #tpu.dot_dimension_numbers<[1], [0], [0], [1], [0, 0, 1, 1], [], []>} : vector<64x8xbf16>, vector<8x32xbf16>, vector<64x32xf32> -> vector<64x32xf32>
    %339 = arith.addf %319, %338 : vector<64x32xf32>
    %340 = vector.extract_strided_slice %252 {offsets = [64, 0], sizes = [64, 32], strides = [1, 1]} : vector<128x32xbf16> to vector<64x32xbf16>
    %341 = vector.extract_strided_slice %253 {offsets = [8, 0], sizes = [8, 32], strides = [1, 1]} : vector<16x32xbf16> to vector<8x32xbf16>
    %342 = vector.extract_strided_slice %254 {offsets = [8, 0], sizes = [8, 32], strides = [1, 1]} : vector<16x32xbf16> to vector<8x32xbf16>
    %cst_119 = arith.constant 0.000000e+00 : f32
    %343 = vector.broadcast %cst_119 : f32 to vector<64x32xf32>
    %344 = vector.extract_strided_slice %340 {offsets = [0, 0], sizes = [64, 8], strides = [1, 1]} : vector<64x32xbf16> to vector<64x8xbf16>
    %345 = vector.extract_strided_slice %341 {offsets = [0, 0], sizes = [8, 8], strides = [1, 1]} : vector<8x32xbf16> to vector<8x8xbf16>
    %346 = vector.extract_strided_slice %342 {offsets = [0, 0], sizes = [8, 8], strides = [1, 1]} : vector<8x32xbf16> to vector<8x8xbf16>
    %cst_120 = arith.constant dense<0.000000e+00> : vector<64x8xf32>
    %347 = tpu.matmul %344, %345, %cst_120 {dimension_numbers = #tpu.dot_dimension_numbers<[1], [1], [0], [0], [0, 0, 1, 0], [], []>} : vector<64x8xbf16>, vector<8x8xbf16>, vector<64x8xf32> -> vector<64x8xf32>
    %cst_121 = arith.constant dense<0xFF800000> : vector<64xf32>
    %348 = vector.multi_reduction <maximumf>, %347, %cst_121 [1] : vector<64x8xf32> to vector<64xf32>
    %349 = vector.shape_cast %348 : vector<64xf32> to vector<64x1xf32>
    %350 = vector.broadcast %349 : vector<64x1xf32> to vector<64x8xf32>
    %351 = arith.subf %347, %350 : vector<64x8xf32>
    %352 = math.exp %351 : vector<64x8xf32>
    %cst_122 = arith.constant dense<0.000000e+00> : vector<64xf32>
    %353 = vector.multi_reduction <add>, %352, %cst_122 [1] : vector<64x8xf32> to vector<64xf32>
    %354 = vector.shape_cast %353 : vector<64xf32> to vector<64x1xf32>
    %355 = tpu.reciprocal %354 {approx = true} : vector<64x1xf32> -> vector<64x1xf32>
    %356 = vector.broadcast %355 : vector<64x1xf32> to vector<64x8xf32>
    %357 = arith.mulf %352, %356 : vector<64x8xf32>
    %358 = arith.truncf %357 : vector<64x8xf32> to vector<64x8xbf16>
    %cst_123 = arith.constant dense<0.000000e+00> : vector<64x8xf32>
    %359 = tpu.matmul %358, %346, %cst_123 {dimension_numbers = #tpu.dot_dimension_numbers<[1], [0], [0], [1], [0, 0, 1, 1], [], []>} : vector<64x8xbf16>, vector<8x8xbf16>, vector<64x8xf32> -> vector<64x8xf32>
    %360 = arith.truncf %359 : vector<64x8xf32> to vector<64x8xbf16>
    %361 = vector.extract_strided_slice %255 {offsets = [0, 0], sizes = [8, 32], strides = [1, 1]} : vector<32x32xbf16> to vector<8x32xbf16>
    %cst_124 = arith.constant dense<0.000000e+00> : vector<64x32xf32>
    %362 = tpu.matmul %360, %361, %cst_124 {dimension_numbers = #tpu.dot_dimension_numbers<[1], [0], [0], [1], [0, 0, 1, 1], [], []>} : vector<64x8xbf16>, vector<8x32xbf16>, vector<64x32xf32> -> vector<64x32xf32>
    %363 = arith.addf %343, %362 : vector<64x32xf32>
    %364 = vector.extract_strided_slice %340 {offsets = [0, 8], sizes = [64, 8], strides = [1, 1]} : vector<64x32xbf16> to vector<64x8xbf16>
    %365 = vector.extract_strided_slice %341 {offsets = [0, 8], sizes = [8, 8], strides = [1, 1]} : vector<8x32xbf16> to vector<8x8xbf16>
    %366 = vector.extract_strided_slice %342 {offsets = [0, 8], sizes = [8, 8], strides = [1, 1]} : vector<8x32xbf16> to vector<8x8xbf16>
    %cst_125 = arith.constant dense<0.000000e+00> : vector<64x8xf32>
    %367 = tpu.matmul %364, %365, %cst_125 {dimension_numbers = #tpu.dot_dimension_numbers<[1], [1], [0], [0], [0, 0, 1, 0], [], []>} : vector<64x8xbf16>, vector<8x8xbf16>, vector<64x8xf32> -> vector<64x8xf32>
    %cst_126 = arith.constant dense<0xFF800000> : vector<64xf32>
    %368 = vector.multi_reduction <maximumf>, %367, %cst_126 [1] : vector<64x8xf32> to vector<64xf32>
    %369 = vector.shape_cast %368 : vector<64xf32> to vector<64x1xf32>
    %370 = vector.broadcast %369 : vector<64x1xf32> to vector<64x8xf32>
    %371 = arith.subf %367, %370 : vector<64x8xf32>
    %372 = math.exp %371 : vector<64x8xf32>
    %cst_127 = arith.constant dense<0.000000e+00> : vector<64xf32>
    %373 = vector.multi_reduction <add>, %372, %cst_127 [1] : vector<64x8xf32> to vector<64xf32>
    %374 = vector.shape_cast %373 : vector<64xf32> to vector<64x1xf32>
    %375 = tpu.reciprocal %374 {approx = true} : vector<64x1xf32> -> vector<64x1xf32>
    %376 = vector.broadcast %375 : vector<64x1xf32> to vector<64x8xf32>
    %377 = arith.mulf %372, %376 : vector<64x8xf32>
    %378 = arith.truncf %377 : vector<64x8xf32> to vector<64x8xbf16>
    %cst_128 = arith.constant dense<0.000000e+00> : vector<64x8xf32>
    %379 = tpu.matmul %378, %366, %cst_128 {dimension_numbers = #tpu.dot_dimension_numbers<[1], [0], [0], [1], [0, 0, 1, 1], [], []>} : vector<64x8xbf16>, vector<8x8xbf16>, vector<64x8xf32> -> vector<64x8xf32>
    %380 = arith.truncf %379 : vector<64x8xf32> to vector<64x8xbf16>
    %381 = vector.extract_strided_slice %255 {offsets = [8, 0], sizes = [8, 32], strides = [1, 1]} : vector<32x32xbf16> to vector<8x32xbf16>
    %cst_129 = arith.constant dense<0.000000e+00> : vector<64x32xf32>
    %382 = tpu.matmul %380, %381, %cst_129 {dimension_numbers = #tpu.dot_dimension_numbers<[1], [0], [0], [1], [0, 0, 1, 1], [], []>} : vector<64x8xbf16>, vector<8x32xbf16>, vector<64x32xf32> -> vector<64x32xf32>
    %383 = arith.addf %363, %382 : vector<64x32xf32>
    %384 = vector.extract_strided_slice %340 {offsets = [0, 16], sizes = [64, 8], strides = [1, 1]} : vector<64x32xbf16> to vector<64x8xbf16>
    %385 = vector.extract_strided_slice %341 {offsets = [0, 16], sizes = [8, 8], strides = [1, 1]} : vector<8x32xbf16> to vector<8x8xbf16>
    %386 = vector.extract_strided_slice %342 {offsets = [0, 16], sizes = [8, 8], strides = [1, 1]} : vector<8x32xbf16> to vector<8x8xbf16>
    %cst_130 = arith.constant dense<0.000000e+00> : vector<64x8xf32>
    %387 = tpu.matmul %384, %385, %cst_130 {dimension_numbers = #tpu.dot_dimension_numbers<[1], [1], [0], [0], [0, 0, 1, 0], [], []>} : vector<64x8xbf16>, vector<8x8xbf16>, vector<64x8xf32> -> vector<64x8xf32>
    %cst_131 = arith.constant dense<0xFF800000> : vector<64xf32>
    %388 = vector.multi_reduction <maximumf>, %387, %cst_131 [1] : vector<64x8xf32> to vector<64xf32>
    %389 = vector.shape_cast %388 : vector<64xf32> to vector<64x1xf32>
    %390 = vector.broadcast %389 : vector<64x1xf32> to vector<64x8xf32>
    %391 = arith.subf %387, %390 : vector<64x8xf32>
    %392 = math.exp %391 : vector<64x8xf32>
    %cst_132 = arith.constant dense<0.000000e+00> : vector<64xf32>
    %393 = vector.multi_reduction <add>, %392, %cst_132 [1] : vector<64x8xf32> to vector<64xf32>
    %394 = vector.shape_cast %393 : vector<64xf32> to vector<64x1xf32>
    %395 = tpu.reciprocal %394 {approx = true} : vector<64x1xf32> -> vector<64x1xf32>
    %396 = vector.broadcast %395 : vector<64x1xf32> to vector<64x8xf32>
    %397 = arith.mulf %392, %396 : vector<64x8xf32>
    %398 = arith.truncf %397 : vector<64x8xf32> to vector<64x8xbf16>
    %cst_133 = arith.constant dense<0.000000e+00> : vector<64x8xf32>
    %399 = tpu.matmul %398, %386, %cst_133 {dimension_numbers = #tpu.dot_dimension_numbers<[1], [0], [0], [1], [0, 0, 1, 1], [], []>} : vector<64x8xbf16>, vector<8x8xbf16>, vector<64x8xf32> -> vector<64x8xf32>
    %400 = arith.truncf %399 : vector<64x8xf32> to vector<64x8xbf16>
    %401 = vector.extract_strided_slice %255 {offsets = [16, 0], sizes = [8, 32], strides = [1, 1]} : vector<32x32xbf16> to vector<8x32xbf16>
    %cst_134 = arith.constant dense<0.000000e+00> : vector<64x32xf32>
    %402 = tpu.matmul %400, %401, %cst_134 {dimension_numbers = #tpu.dot_dimension_numbers<[1], [0], [0], [1], [0, 0, 1, 1], [], []>} : vector<64x8xbf16>, vector<8x32xbf16>, vector<64x32xf32> -> vector<64x32xf32>
    %403 = arith.addf %383, %402 : vector<64x32xf32>
    %404 = vector.extract_strided_slice %340 {offsets = [0, 24], sizes = [64, 8], strides = [1, 1]} : vector<64x32xbf16> to vector<64x8xbf16>
    %405 = vector.extract_strided_slice %341 {offsets = [0, 24], sizes = [8, 8], strides = [1, 1]} : vector<8x32xbf16> to vector<8x8xbf16>
    %406 = vector.extract_strided_slice %342 {offsets = [0, 24], sizes = [8, 8], strides = [1, 1]} : vector<8x32xbf16> to vector<8x8xbf16>
    %cst_135 = arith.constant dense<0.000000e+00> : vector<64x8xf32>
    %407 = tpu.matmul %404, %405, %cst_135 {dimension_numbers = #tpu.dot_dimension_numbers<[1], [1], [0], [0], [0, 0, 1, 0], [], []>} : vector<64x8xbf16>, vector<8x8xbf16>, vector<64x8xf32> -> vector<64x8xf32>
    %cst_136 = arith.constant dense<0xFF800000> : vector<64xf32>
    %408 = vector.multi_reduction <maximumf>, %407, %cst_136 [1] : vector<64x8xf32> to vector<64xf32>
    %409 = vector.shape_cast %408 : vector<64xf32> to vector<64x1xf32>
    %410 = vector.broadcast %409 : vector<64x1xf32> to vector<64x8xf32>
    %411 = arith.subf %407, %410 : vector<64x8xf32>
    %412 = math.exp %411 : vector<64x8xf32>
    %cst_137 = arith.constant dense<0.000000e+00> : vector<64xf32>
    %413 = vector.multi_reduction <add>, %412, %cst_137 [1] : vector<64x8xf32> to vector<64xf32>
    %414 = vector.shape_cast %413 : vector<64xf32> to vector<64x1xf32>
    %415 = tpu.reciprocal %414 {approx = true} : vector<64x1xf32> -> vector<64x1xf32>
    %416 = vector.broadcast %415 : vector<64x1xf32> to vector<64x8xf32>
    %417 = arith.mulf %412, %416 : vector<64x8xf32>
    %418 = arith.truncf %417 : vector<64x8xf32> to vector<64x8xbf16>
    %cst_138 = arith.constant dense<0.000000e+00> : vector<64x8xf32>
    %419 = tpu.matmul %418, %406, %cst_138 {dimension_numbers = #tpu.dot_dimension_numbers<[1], [0], [0], [1], [0, 0, 1, 1], [], []>} : vector<64x8xbf16>, vector<8x8xbf16>, vector<64x8xf32> -> vector<64x8xf32>
    %420 = arith.truncf %419 : vector<64x8xf32> to vector<64x8xbf16>
    %421 = vector.extract_strided_slice %255 {offsets = [24, 0], sizes = [8, 32], strides = [1, 1]} : vector<32x32xbf16> to vector<8x32xbf16>
    %cst_139 = arith.constant dense<0.000000e+00> : vector<64x32xf32>
    %422 = tpu.matmul %420, %421, %cst_139 {dimension_numbers = #tpu.dot_dimension_numbers<[1], [0], [0], [1], [0, 0, 1, 1], [], []>} : vector<64x8xbf16>, vector<8x32xbf16>, vector<64x32xf32> -> vector<64x32xf32>
    %423 = arith.addf %403, %422 : vector<64x32xf32>
    %424 = tpu.concatenate %339, %423 in 0 : vector<64x32xf32>, vector<64x32xf32> -> vector<128x32xf32>
    %c0_140 = arith.constant 0 : index
    %c0_141 = arith.constant 0 : index
    %425 = vector.load %arg18[%c0_140, %c0_141] : memref<1x32xf32, #tpu.memory_space<vmem>>, vector<1x32xf32>
    %426 = vector.broadcast %425 : vector<1x32xf32> to vector<128x32xf32>
    %427 = arith.addf %424, %426 : vector<128x32xf32>
    %428 = arith.addf %233, %427 : vector<128x32xf32>
    %cst_142 = arith.constant dense<0.000000e+00> : vector<128xf32>
    %429 = vector.multi_reduction <add>, %428, %cst_142 [1] : vector<128x32xf32> to vector<128xf32>
    %430 = vector.shape_cast %429 : vector<128xf32> to vector<128x1xf32>
    %cst_143 = arith.constant 3.200000e+01 : f32
    %431 = vector.broadcast %cst_143 : f32 to vector<128x1xf32>
    %432 = arith.divf %430, %431 : vector<128x1xf32>
    %433 = vector.broadcast %432 : vector<128x1xf32> to vector<128x32xf32>
    %434 = arith.subf %428, %433 : vector<128x32xf32>
    %435 = arith.mulf %434, %434 : vector<128x32xf32>
    %cst_144 = arith.constant dense<0.000000e+00> : vector<128xf32>
    %436 = vector.multi_reduction <add>, %435, %cst_144 [1] : vector<128x32xf32> to vector<128xf32>
    %437 = vector.shape_cast %436 : vector<128xf32> to vector<128x1xf32>
    %cst_145 = arith.constant 3.200000e+01 : f32
    %438 = vector.broadcast %cst_145 : f32 to vector<128x1xf32>
    %439 = arith.divf %437, %438 : vector<128x1xf32>
    %440 = vector.broadcast %432 : vector<128x1xf32> to vector<128x32xf32>
    %441 = arith.subf %428, %440 : vector<128x32xf32>
    %cst_146 = arith.constant 9.99999974E-6 : f32
    %442 = vector.broadcast %cst_146 : f32 to vector<128x1xf32>
    %443 = arith.addf %439, %442 : vector<128x1xf32>
    %444 = math.rsqrt %443 : vector<128x1xf32>
    %445 = vector.broadcast %444 : vector<128x1xf32> to vector<128x32xf32>
    %446 = arith.mulf %441, %445 : vector<128x32xf32>
    %c0_147 = arith.constant 0 : index
    %c0_148 = arith.constant 0 : index
    %447 = vector.load %arg21[%c0_147, %c0_148] : memref<1x32xf32, #tpu.memory_space<vmem>>, vector<1x32xf32>
    %448 = vector.broadcast %447 : vector<1x32xf32> to vector<128x32xf32>
    %449 = arith.mulf %446, %448 : vector<128x32xf32>
    %c0_149 = arith.constant 0 : index
    %c0_150 = arith.constant 0 : index
    %450 = vector.load %arg22[%c0_149, %c0_150] : memref<1x32xf32, #tpu.memory_space<vmem>>, vector<1x32xf32>
    %451 = vector.broadcast %450 : vector<1x32xf32> to vector<128x32xf32>
    %452 = arith.addf %449, %451 : vector<128x32xf32>
    %453 = arith.truncf %452 : vector<128x32xf32> to vector<128x32xbf16>
    %c0_151 = arith.constant 0 : index
    %c0_152 = arith.constant 0 : index
    %454 = vector.load %arg25[%c0_151, %c0_152] : memref<32x2048xbf16, #tpu.memory_space<vmem>>, vector<32x2048xbf16>
    %cst_153 = arith.constant dense<0.000000e+00> : vector<128x2048xf32>
    %455 = tpu.matmul %453, %454, %cst_153 {dimension_numbers = #tpu.dot_dimension_numbers<[1], [0], [0], [1], [0, 0, 1, 1], [], []>} : vector<128x32xbf16>, vector<32x2048xbf16>, vector<128x2048xf32> -> vector<128x2048xf32>
    %c0_154 = arith.constant 0 : index
    %c0_155 = arith.constant 0 : index
    %456 = vector.load %arg26[%c0_154, %c0_155] : memref<1x2048xf32, #tpu.memory_space<vmem>>, vector<1x2048xf32>
    %457 = vector.broadcast %456 : vector<1x2048xf32> to vector<128x2048xf32>
    %458 = arith.addf %455, %457 : vector<128x2048xf32>
    %cst_156 = arith.constant 0.000000e+00 : f32
    %459 = vector.broadcast %cst_156 : f32 to vector<128x2048xf32>
    %460 = arith.maximumf %458, %459 : vector<128x2048xf32>
    %461 = arith.truncf %460 : vector<128x2048xf32> to vector<128x2048xbf16>
    %c0_157 = arith.constant 0 : index
    %c0_158 = arith.constant 0 : index
    %462 = vector.load %arg27[%c0_157, %c0_158] : memref<2048x32xbf16, #tpu.memory_space<vmem>>, vector<2048x32xbf16>
    %cst_159 = arith.constant dense<0.000000e+00> : vector<128x32xf32>
    %463 = tpu.matmul %461, %462, %cst_159 {dimension_numbers = #tpu.dot_dimension_numbers<[1], [0], [0], [1], [0, 0, 1, 1], [], []>} : vector<128x2048xbf16>, vector<2048x32xbf16>, vector<128x32xf32> -> vector<128x32xf32>
    %c0_160 = arith.constant 0 : index
    %c0_161 = arith.constant 0 : index
    %464 = vector.load %arg28[%c0_160, %c0_161] : memref<1x32xf32, #tpu.memory_space<vmem>>, vector<1x32xf32>
    %465 = vector.broadcast %464 : vector<1x32xf32> to vector<128x32xf32>
    %466 = arith.addf %463, %465 : vector<128x32xf32>
    %467 = arith.addf %452, %466 : vector<128x32xf32>
    %cst_162 = arith.constant dense<0.000000e+00> : vector<128xf32>
    %468 = vector.multi_reduction <add>, %467, %cst_162 [1] : vector<128x32xf32> to vector<128xf32>
    %469 = vector.shape_cast %468 : vector<128xf32> to vector<128x1xf32>
    %cst_163 = arith.constant 3.200000e+01 : f32
    %470 = vector.broadcast %cst_163 : f32 to vector<128x1xf32>
    %471 = arith.divf %469, %470 : vector<128x1xf32>
    %472 = vector.broadcast %471 : vector<128x1xf32> to vector<128x32xf32>
    %473 = arith.subf %467, %472 : vector<128x32xf32>
    %474 = arith.mulf %473, %473 : vector<128x32xf32>
    %cst_164 = arith.constant dense<0.000000e+00> : vector<128xf32>
    %475 = vector.multi_reduction <add>, %474, %cst_164 [1] : vector<128x32xf32> to vector<128xf32>
    %476 = vector.shape_cast %475 : vector<128xf32> to vector<128x1xf32>
    %cst_165 = arith.constant 3.200000e+01 : f32
    %477 = vector.broadcast %cst_165 : f32 to vector<128x1xf32>
    %478 = arith.divf %476, %477 : vector<128x1xf32>
    %479 = vector.broadcast %471 : vector<128x1xf32> to vector<128x32xf32>
    %480 = arith.subf %467, %479 : vector<128x32xf32>
    %cst_166 = arith.constant 9.99999974E-6 : f32
    %481 = vector.broadcast %cst_166 : f32 to vector<128x1xf32>
    %482 = arith.addf %478, %481 : vector<128x1xf32>
    %483 = math.rsqrt %482 : vector<128x1xf32>
    %484 = vector.broadcast %483 : vector<128x1xf32> to vector<128x32xf32>
    %485 = arith.mulf %480, %484 : vector<128x32xf32>
    %c0_167 = arith.constant 0 : index
    %c0_168 = arith.constant 0 : index
    %486 = vector.load %arg23[%c0_167, %c0_168] : memref<1x32xf32, #tpu.memory_space<vmem>>, vector<1x32xf32>
    %487 = vector.broadcast %486 : vector<1x32xf32> to vector<128x32xf32>
    %488 = arith.mulf %485, %487 : vector<128x32xf32>
    %c0_169 = arith.constant 0 : index
    %c0_170 = arith.constant 0 : index
    %489 = vector.load %arg24[%c0_169, %c0_170] : memref<1x32xf32, #tpu.memory_space<vmem>>, vector<1x32xf32>
    %490 = vector.broadcast %489 : vector<1x32xf32> to vector<128x32xf32>
    %491 = arith.addf %488, %490 : vector<128x32xf32>
    %492 = vector.extract_strided_slice %491 {offsets = [0, 0], sizes = [64, 32], strides = [1, 1]} : vector<128x32xf32> to vector<64x32xf32>
    %493 = tpu.transpose %492, [1, 0] : vector<64x32xf32> -> vector<32x64xf32>
    %c0_171 = arith.constant 0 : index
    %c0_172 = arith.constant 0 : index
    %c0_173 = arith.constant 0 : index
    %494 = vector.load %arg29[%c0_171, %c0_172, %c0_173] : memref<2x32x64xf32, #tpu.memory_space<vmem>>, vector<1x32x64xf32>
    %495 = vector.shape_cast %494 : vector<1x32x64xf32> to vector<32x64xf32>
    %496 = vector.shape_cast %493 : vector<32x64xf32> to vector<1x32x64xf32>
    tpu.vector_store %arg29[%c0_171, %c0_172, %c0_173], %496 {strides = array<i32>} : memref<2x32x64xf32, #tpu.memory_space<vmem>>, vector<1x32x64xf32>,
    %497 = vector.extract_strided_slice %491 {offsets = [64, 0], sizes = [64, 32], strides = [1, 1]} : vector<128x32xf32> to vector<64x32xf32>
    %498 = tpu.transpose %497, [1, 0] : vector<64x32xf32> -> vector<32x64xf32>
    %c1_174 = arith.constant 1 : index
    %c0_175 = arith.constant 0 : index
    %c0_176 = arith.constant 0 : index
    %499 = vector.load %arg29[%c1_174, %c0_175, %c0_176] : memref<2x32x64xf32, #tpu.memory_space<vmem>>, vector<1x32x64xf32>
    %500 = vector.shape_cast %499 : vector<1x32x64xf32> to vector<32x64xf32>
    %501 = vector.shape_cast %498 : vector<32x64xf32> to vector<1x32x64xf32>
    tpu.vector_store %arg29[%c1_174, %c0_175, %c0_176], %501 {strides = array<i32>} : memref<2x32x64xf32, #tpu.memory_space<vmem>>, vector<1x32x64xf32>,
    return
  }
  func.func @transform_0(%arg0: i32) -> (i32, i32, i32) {
    %c0_i32 = arith.constant 0 : i32
    %c0_i32_0 = arith.constant 0 : i32
    %c0_i32_1 = arith.constant 0 : i32
    %c0_i32_2 = arith.constant 0 : i32
    return %c0_i32, %c0_i32_0, %c0_i32_1 : i32, i32, i32
  }
  func.func @transform_1(%arg0: i32) -> (i32, i32, i32) {
    %c0_i32 = arith.constant 0 : i32
    %c0_i32_0 = arith.constant 0 : i32
    %c0_i32_1 = arith.constant 0 : i32
    %c0_i32_2 = arith.constant 0 : i32
    return %c0_i32, %c0_i32_0, %c0_i32_1 : i32, i32, i32
  }
  func.func @transform_2(%arg0: i32) -> (i32, i32) {
    %c0_i32 = arith.constant 0 : i32
    %c0_i32_0 = arith.constant 0 : i32
    %c0_i32_1 = arith.constant 0 : i32
    return %c0_i32, %c0_i32_0 : i32, i32
  }
  func.func @transform_3(%arg0: i32) -> (i32, i32) {
    %c0_i32 = arith.constant 0 : i32
    %c0_i32_0 = arith.constant 0 : i32
    %c0_i32_1 = arith.constant 0 : i32
    return %c0_i32, %c0_i32_0 : i32, i32
  }
  func.func @transform_4(%arg0: i32) -> (i32, i32) {
    %c0_i32 = arith.constant 0 : i32
    %c0_i32_0 = arith.constant 0 : i32
    %c0_i32_1 = arith.constant 0 : i32
    return %c0_i32, %c0_i32_0 : i32, i32
  }
  func.func @transform_5(%arg0: i32) -> (i32, i32) {
    %c0_i32 = arith.constant 0 : i32
    %c0_i32_0 = arith.constant 0 : i32
    %c0_i32_1 = arith.constant 0 : i32
    return %c0_i32, %c0_i32_0 : i32, i32
  }
  func.func @transform_6(%arg0: i32) -> (i32, i32) {
    %c0_i32 = arith.constant 0 : i32
    %c0_i32_0 = arith.constant 0 : i32
    %c0_i32_1 = arith.constant 0 : i32
    return %c0_i32, %c0_i32_0 : i32, i32
  }
  func.func @transform_7(%arg0: i32) -> (i32, i32) {
    %c0_i32 = arith.constant 0 : i32
    %c0_i32_0 = arith.constant 0 : i32
    %c0_i32_1 = arith.constant 0 : i32
    return %c0_i32, %c0_i32_0 : i32, i32
  }
  func.func @transform_8(%arg0: i32) -> (i32, i32) {
    %c0_i32 = arith.constant 0 : i32
    %c0_i32_0 = arith.constant 0 : i32
    %c0_i32_1 = arith.constant 0 : i32
    return %c0_i32, %c0_i32_0 : i32, i32
  }
  func.func @transform_9(%arg0: i32) -> (i32, i32) {
    %c0_i32 = arith.constant 0 : i32
    %c0_i32_0 = arith.constant 0 : i32
    %c0_i32_1 = arith.constant 0 : i32
    return %c0_i32, %c0_i32_0 : i32, i32
  }
  func.func @transform_10(%arg0: i32) -> (i32, i32) {
    %c0_i32 = arith.constant 0 : i32
    %c0_i32_0 = arith.constant 0 : i32
    %c0_i32_1 = arith.constant 0 : i32
    return %c0_i32, %c0_i32_0 : i32, i32
  }
  func.func @transform_11(%arg0: i32) -> (i32, i32) {
    %c0_i32 = arith.constant 0 : i32
    %c0_i32_0 = arith.constant 0 : i32
    %c0_i32_1 = arith.constant 0 : i32
    return %c0_i32, %c0_i32_0 : i32, i32
  }
  func.func @transform_12(%arg0: i32) -> (i32, i32) {
    %c0_i32 = arith.constant 0 : i32
    %c0_i32_0 = arith.constant 0 : i32
    %c0_i32_1 = arith.constant 0 : i32
    return %c0_i32, %c0_i32_0 : i32, i32
  }
  func.func @transform_13(%arg0: i32) -> (i32, i32) {
    %c0_i32 = arith.constant 0 : i32
    %c0_i32_0 = arith.constant 0 : i32
    %c0_i32_1 = arith.constant 0 : i32
    return %c0_i32, %c0_i32_0 : i32, i32
  }
  func.func @transform_14(%arg0: i32) -> (i32, i32) {
    %c0_i32 = arith.constant 0 : i32
    %c0_i32_0 = arith.constant 0 : i32
    %c0_i32_1 = arith.constant 0 : i32
    return %c0_i32, %c0_i32_0 : i32, i32
  }
  func.func @transform_15(%arg0: i32) -> (i32, i32) {
    %c0_i32 = arith.constant 0 : i32
    %c0_i32_0 = arith.constant 0 : i32
    %c0_i32_1 = arith.constant 0 : i32
    return %c0_i32, %c0_i32_0 : i32, i32
  }
  func.func @transform_16(%arg0: i32) -> (i32, i32) {
    %c0_i32 = arith.constant 0 : i32
    %c0_i32_0 = arith.constant 0 : i32
    %c0_i32_1 = arith.constant 0 : i32
    return %c0_i32, %c0_i32_0 : i32, i32
  }
  func.func @transform_17(%arg0: i32) -> (i32, i32) {
    %c0_i32 = arith.constant 0 : i32
    %c0_i32_0 = arith.constant 0 : i32
    %c0_i32_1 = arith.constant 0 : i32
    return %c0_i32, %c0_i32_0 : i32, i32
  }
  func.func @transform_18(%arg0: i32) -> (i32, i32) {
    %c0_i32 = arith.constant 0 : i32
    %c0_i32_0 = arith.constant 0 : i32
    %c0_i32_1 = arith.constant 0 : i32
    return %c0_i32, %c0_i32_0 : i32, i32
  }
  func.func @transform_19(%arg0: i32) -> (i32, i32) {
    %c0_i32 = arith.constant 0 : i32
    %c0_i32_0 = arith.constant 0 : i32
    %c0_i32_1 = arith.constant 0 : i32
    return %c0_i32, %c0_i32_0 : i32, i32
  }
  func.func @transform_20(%arg0: i32) -> (i32, i32) {
    %c0_i32 = arith.constant 0 : i32
    %c0_i32_0 = arith.constant 0 : i32
    %c0_i32_1 = arith.constant 0 : i32
    return %c0_i32, %c0_i32_0 : i32, i32
  }
  func.func @transform_21(%arg0: i32) -> (i32, i32) {
    %c0_i32 = arith.constant 0 : i32
    %c0_i32_0 = arith.constant 0 : i32
    %c0_i32_1 = arith.constant 0 : i32
    return %c0_i32, %c0_i32_0 : i32, i32
  }
  func.func @transform_22(%arg0: i32) -> (i32, i32) {
    %c0_i32 = arith.constant 0 : i32
    %c0_i32_0 = arith.constant 0 : i32
    %c0_i32_1 = arith.constant 0 : i32
    return %c0_i32, %c0_i32_0 : i32, i32
  }
  func.func @transform_23(%arg0: i32) -> (i32, i32) {
    %c0_i32 = arith.constant 0 : i32
    %c0_i32_0 = arith.constant 0 : i32
    %c0_i32_1 = arith.constant 0 : i32
    return %c0_i32, %c0_i32_0 : i32, i32
  }
  func.func @transform_24(%arg0: i32) -> (i32, i32) {
    %c0_i32 = arith.constant 0 : i32
    %c0_i32_0 = arith.constant 0 : i32
    %c0_i32_1 = arith.constant 0 : i32
    return %c0_i32, %c0_i32_0 : i32, i32
  }
  func.func @transform_25(%arg0: i32) -> (i32, i32) {
    %c0_i32 = arith.constant 0 : i32
    %c0_i32_0 = arith.constant 0 : i32
    %c0_i32_1 = arith.constant 0 : i32
    return %c0_i32, %c0_i32_0 : i32, i32
  }
  func.func @transform_26(%arg0: i32) -> (i32, i32) {
    %c0_i32 = arith.constant 0 : i32
    %c0_i32_0 = arith.constant 0 : i32
    %c0_i32_1 = arith.constant 0 : i32
    return %c0_i32, %c0_i32_0 : i32, i32
  }
  func.func @transform_27(%arg0: i32) -> (i32, i32) {
    %c0_i32 = arith.constant 0 : i32
    %c0_i32_0 = arith.constant 0 : i32
    %c0_i32_1 = arith.constant 0 : i32
    return %c0_i32, %c0_i32_0 : i32, i32
  }
  func.func @transform_28(%arg0: i32) -> (i32, i32, i32) {
    %c0_i32 = arith.constant 0 : i32
    %c0_i32_0 = arith.constant 0 : i32
    %c0_i32_1 = arith.constant 0 : i32
    %c0_i32_2 = arith.constant 0 : i32
    return %c0_i32, %c0_i32_0, %c0_i32_1 : i32, i32, i32
  }
}

</mosaic_0001>

<llo_original>
// kernel: tpu_custom_call.1
$region0: #{tpu_custom_call.1}
  #allocation0 [shape = 'u32[]', space=smem, size = 0x4, offset = 0x4, fixed_abs, tag = 'smem constant byte address 0x4 - core index']
  #allocation1 [shape = 'u32[144,128]{1,0:T(1,128)}', space=vmem, size = 0x12000, scoped, tag = 'internal scratch']
  %s0 = inlined_call_operand.vmem [shape: f32[2,32,64], index: 0, kind: input, shape index: {}]
  %s1 = inlined_call_operand.vmem [shape: f32[2,32,8], index: 1, kind: input, shape index: {}]
  %s2 = inlined_call_operand.vmem [shape: bf16[32,32], index: 2, kind: input, shape index: {}]
  %s3 = inlined_call_operand.vmem [shape: bf16[32,32], index: 3, kind: input, shape index: {}]
  %s4 = inlined_call_operand.vmem [shape: bf16[32,32], index: 4, kind: input, shape index: {}]
  %s5 = inlined_call_operand.vmem [shape: f32[1,32], index: 5, kind: input, shape index: {}]
  %s6 = inlined_call_operand.vmem [shape: f32[1,32], index: 6, kind: input, shape index: {}]
  %s7 = inlined_call_operand.vmem [shape: f32[1,32], index: 7, kind: input, shape index: {}]
  %s8 = inlined_call_operand.vmem [shape: bf16[32,32], index: 8, kind: input, shape index: {}]
  %s9 = inlined_call_operand.vmem [shape: f32[1,32], index: 9, kind: input, shape index: {}]
  %s10 = inlined_call_operand.vmem [shape: bf16[32,32], index: 10, kind: input, shape index: {}]
  %s11 = inlined_call_operand.vmem [shape: bf16[32,32], index: 11, kind: input, shape index: {}]
  %s12 = inlined_call_operand.vmem [shape: bf16[32,32], index: 12, kind: input, shape index: {}]
  %s13 = inlined_call_operand.vmem [shape: f32[1,32], index: 13, kind: input, shape index: {}]
  %s14 = inlined_call_operand.vmem [shape: f32[1,32], index: 14, kind: input, shape index: {}]
  %s15 = inlined_call_operand.vmem [shape: f32[1,32], index: 15, kind: input, shape index: {}]
  %s16 = inlined_call_operand.vmem [shape: bf16[32,32], index: 16, kind: input, shape index: {}]
  %s17 = inlined_call_operand.vmem [shape: f32[1,32], index: 17, kind: input, shape index: {}]
  %s18 = inlined_call_operand.vmem [shape: f32[1,32], index: 18, kind: input, shape index: {}]
  %s19 = inlined_call_operand.vmem [shape: f32[1,32], index: 19, kind: input, shape index: {}]
  %s20 = inlined_call_operand.vmem [shape: f32[1,32], index: 20, kind: input, shape index: {}]
  %s21 = inlined_call_operand.vmem [shape: f32[1,32], index: 21, kind: input, shape index: {}]
  %s22 = inlined_call_operand.vmem [shape: f32[1,32], index: 22, kind: input, shape index: {}]
  %s23 = inlined_call_operand.vmem [shape: f32[1,32], index: 23, kind: input, shape index: {}]
  %s24 = inlined_call_operand.vmem [shape: bf16[32,2048], index: 24, kind: input, shape index: {}]
  %s25 = inlined_call_operand.vmem [shape: f32[1,2048], index: 25, kind: input, shape index: {}]
  %s26 = inlined_call_operand.vmem [shape: bf16[2048,32], index: 26, kind: input, shape index: {}]
  %s27 = inlined_call_operand.vmem [shape: f32[1,32], index: 27, kind: input, shape index: {}]
  %s28 = inlined_call_operand.hbm [shape: f32[2,32,64], index: 28, kind: output, shape index: {}]
  %s29 = sld [smem:[#allocation0]]
  $region122: #{tpu_custom_call.1} parent=0
    _
  %s31 = ssub.s32 1, %s29
  %s32 = scalar_select 0, %s31, %s29
  $region1: #{tpu_custom_call.1} parent=0
    #allocation2 [shape = 'u8[32768]{0}', space=vmem, size = 0x8000, scoped, tag = 'output window, operand 0, single buffered']
    #allocation3 [shape = 's32[1]{0}', space=sflag, size = 0x4, scoped, tag = 'scoped memory for tpu_custom_call.1']
    %33 = vsyncpa [#allocation3], 0
    // Predicated region
    $region2: #{tpu_custom_call.1} parent=1 // pred_check
      _
    $region3: #{tpu_custom_call.1} parent=1 // pred_check_branch
      %35 = sbr.rel (0) target = $region5
    $region4: #{tpu_custom_call.1} parent=1 // pred_region
      _
    $region5: #{tpu_custom_call.1} parent=1 // pred_fallthru
      _
    // Predicated region
    $region6: #{tpu_custom_call.1} parent=1 // pred_check
      _
    $region7: #{tpu_custom_call.1} parent=1 // pred_check_branch
      %37 = sbr.rel (0) target = $region9
    $region8: #{tpu_custom_call.1} parent=1 // pred_region
      _
    $region9: #{tpu_custom_call.1} parent=1 // pred_fallthru
      _
    // Predicated region
    $region10: #{tpu_custom_call.1} parent=1 // pred_check
      _
    $region11: #{tpu_custom_call.1} parent=1 // pred_check_branch
      %39 = sbr.rel (0) target = $region13
    $region12: #{tpu_custom_call.1} parent=1 // pred_region
      _
    $region13: #{tpu_custom_call.1} parent=1 // pred_fallthru
      _
    // Predicated region
    $region14: #{tpu_custom_call.1} parent=1 // pred_check
      _
    $region15: #{tpu_custom_call.1} parent=1 // pred_check_branch
      %41 = sbr.rel (0) target = $region17
    $region16: #{tpu_custom_call.1} parent=1 // pred_region
      _
    $region17: #{tpu_custom_call.1} parent=1 // pred_fallthru
      _
    // Predicated region
    $region18: #{tpu_custom_call.1} parent=1 // pred_check
      _
    $region19: #{tpu_custom_call.1} parent=1 // pred_check_branch
      %43 = sbr.rel (0) target = $region21
    $region20: #{tpu_custom_call.1} parent=1 // pred_region
      _
    $region21: #{tpu_custom_call.1} parent=1 // pred_fallthru
      _
    // Predicated region
    $region22: #{tpu_custom_call.1} parent=1 // pred_check
      _
    $region23: #{tpu_custom_call.1} parent=1 // pred_check_branch
      %45 = sbr.rel (0) target = $region25
    $region24: #{tpu_custom_call.1} parent=1 // pred_region
      _
    $region25: #{tpu_custom_call.1} parent=1 // pred_fallthru
      _
    // Predicated region
    $region26: #{tpu_custom_call.1} parent=1 // pred_check
      _
    $region27: #{tpu_custom_call.1} parent=1 // pred_check_branch
      %47 = sbr.rel (0) target = $region29
    $region28: #{tpu_custom_call.1} parent=1 // pred_region
      _
    $region29: #{tpu_custom_call.1} parent=1 // pred_fallthru
      _
    // Predicated region
    $region30: #{tpu_custom_call.1} parent=1 // pred_check
      _
    $region31: #{tpu_custom_call.1} parent=1 // pred_check_branch
      %49 = sbr.rel (0) target = $region33
    $region32: #{tpu_custom_call.1} parent=1 // pred_region
      _
    $region33: #{tpu_custom_call.1} parent=1 // pred_fallthru
      _
    // Predicated region
    $region34: #{tpu_custom_call.1} parent=1 // pred_check
      _
    $region35: #{tpu_custom_call.1} parent=1 // pred_check_branch
      %51 = sbr.rel (0) target = $region37
    $region36: #{tpu_custom_call.1} parent=1 // pred_region
      _
    $region37: #{tpu_custom_call.1} parent=1 // pred_fallthru
      _
    // Predicated region
    $region38: #{tpu_custom_call.1} parent=1 // pred_check
      _
    $region39: #{tpu_custom_call.1} parent=1 // pred_check_branch
      %53 = sbr.rel (0) target = $region41
    $region40: #{tpu_custom_call.1} parent=1 // pred_region
      _
    $region41: #{tpu_custom_call.1} parent=1 // pred_fallthru
      _
    // Predicated region
    $region42: #{tpu_custom_call.1} parent=1 // pred_check
      _
    $region43: #{tpu_custom_call.1} parent=1 // pred_check_branch
      %55 = sbr.rel (0) target = $region45
    $region44: #{tpu_custom_call.1} parent=1 // pred_region
      _
    $region45: #{tpu_custom_call.1} parent=1 // pred_fallthru
      _
    // Predicated region
    $region46: #{tpu_custom_call.1} parent=1 // pred_check
      _
    $region47: #{tpu_custom_call.1} parent=1 // pred_check_branch
      %57 = sbr.rel (0) target = $region49
    $region48: #{tpu_custom_call.1} parent=1 // pred_region
      _
    $region49: #{tpu_custom_call.1} parent=1 // pred_fallthru
      _
    // Predicated region
    $region50: #{tpu_custom_call.1} parent=1 // pred_check
      _
    $region51: #{tpu_custom_call.1} parent=1 // pred_check_branch
      %59 = sbr.rel (0) target = $region53
    $region52: #{tpu_custom_call.1} parent=1 // pred_region
      _
    $region53: #{tpu_custom_call.1} parent=1 // pred_fallthru
      _
    // Predicated region
    $region54: #{tpu_custom_call.1} parent=1 // pred_check
      _
    $region55: #{tpu_custom_call.1} parent=1 // pred_check_branch
      %61 = sbr.rel (0) target = $region57
    $region56: #{tpu_custom_call.1} parent=1 // pred_region
      _
    $region57: #{tpu_custom_call.1} parent=1 // pred_fallthru
      _
    // Predicated region
    $region58: #{tpu_custom_call.1} parent=1 // pred_check
      _
    $region59: #{tpu_custom_call.1} parent=1 // pred_check_branch
      %63 = sbr.rel (0) target = $region61
    $region60: #{tpu_custom_call.1} parent=1 // pred_region
      _
    $region61: #{tpu_custom_call.1} parent=1 // pred_fallthru
      _
    // Predicated region
    $region62: #{tpu_custom_call.1} parent=1 // pred_check
      _
    $region63: #{tpu_custom_call.1} parent=1 // pred_check_branch
      %65 = sbr.rel (0) target = $region65
    $region64: #{tpu_custom_call.1} parent=1 // pred_region
      _
    $region65: #{tpu_custom_call.1} parent=1 // pred_fallthru
      _
    // Predicated region
    $region66: #{tpu_custom_call.1} parent=1 // pred_check
      _
    $region67: #{tpu_custom_call.1} parent=1 // pred_check_branch
      %67 = sbr.rel (0) target = $region69
    $region68: #{tpu_custom_call.1} parent=1 // pred_region
      _
    $region69: #{tpu_custom_call.1} parent=1 // pred_fallthru
      _
    // Predicated region
    $region70: #{tpu_custom_call.1} parent=1 // pred_check
      _
    $region71: #{tpu_custom_call.1} parent=1 // pred_check_branch
      %69 = sbr.rel (0) target = $region73
    $region72: #{tpu_custom_call.1} parent=1 // pred_region
      _
    $region73: #{tpu_custom_call.1} parent=1 // pred_fallthru
      _
    // Predicated region
    $region74: #{tpu_custom_call.1} parent=1 // pred_check
      _
    $region75: #{tpu_custom_call.1} parent=1 // pred_check_branch
      %71 = sbr.rel (0) target = $region77
    $region76: #{tpu_custom_call.1} parent=1 // pred_region
      _
    $region77: #{tpu_custom_call.1} parent=1 // pred_fallthru
      _
    // Predicated region
    $region78: #{tpu_custom_call.1} parent=1 // pred_check
      _
    $region79: #{tpu_custom_call.1} parent=1 // pred_check_branch
      %73 = sbr.rel (0) target = $region81
    $region80: #{tpu_custom_call.1} parent=1 // pred_region
      _
    $region81: #{tpu_custom_call.1} parent=1 // pred_fallthru
      _
    // Predicated region
    $region82: #{tpu_custom_call.1} parent=1 // pred_check
      _
    $region83: #{tpu_custom_call.1} parent=1 // pred_check_branch
      %75 = sbr.rel (0) target = $region85
    $region84: #{tpu_custom_call.1} parent=1 // pred_region
      _
    $region85: #{tpu_custom_call.1} parent=1 // pred_fallthru
      _
    // Predicated region
    $region86: #{tpu_custom_call.1} parent=1 // pred_check
      _
    $region87: #{tpu_custom_call.1} parent=1 // pred_check_branch
      %77 = sbr.rel (0) target = $region89
    $region88: #{tpu_custom_call.1} parent=1 // pred_region
      _
    $region89: #{tpu_custom_call.1} parent=1 // pred_fallthru
      _
    // Predicated region
    $region90: #{tpu_custom_call.1} parent=1 // pred_check
      _
    $region91: #{tpu_custom_call.1} parent=1 // pred_check_branch
      %79 = sbr.rel (0) target = $region93
    $region92: #{tpu_custom_call.1} parent=1 // pred_region
      _
    $region93: #{tpu_custom_call.1} parent=1 // pred_fallthru
      _
    // Predicated region
    $region94: #{tpu_custom_call.1} parent=1 // pred_check
      _
    $region95: #{tpu_custom_call.1} parent=1 // pred_check_branch
      %81 = sbr.rel (0) target = $region97
    $region96: #{tpu_custom_call.1} parent=1 // pred_region
      _
    $region97: #{tpu_custom_call.1} parent=1 // pred_fallthru
      _
    // Predicated region
    $region98: #{tpu_custom_call.1} parent=1 // pred_check
      _
    $region99: #{tpu_custom_call.1} parent=1 // pred_check_branch
      %83 = sbr.rel (0) target = $region101
    $region100: #{tpu_custom_call.1} parent=1 // pred_region
      _
    $region101: #{tpu_custom_call.1} parent=1 // pred_fallthru
      _
    // Predicated region
    $region102: #{tpu_custom_call.1} parent=1 // pred_check
      _
    $region103: #{tpu_custom_call.1} parent=1 // pred_check_branch
      %85 = sbr.rel (0) target = $region105
    $region104: #{tpu_custom_call.1} parent=1 // pred_region
      _
    $region105: #{tpu_custom_call.1} parent=1 // pred_fallthru
      _
    // Predicated region
    $region106: #{tpu_custom_call.1} parent=1 // pred_check
      _
    $region107: #{tpu_custom_call.1} parent=1 // pred_check_branch
      %87 = sbr.rel (0) target = $region109
    $region108: #{tpu_custom_call.1} parent=1 // pred_region
      _
    $region109: #{tpu_custom_call.1} parent=1 // pred_fallthru
      _
    // Predicated region
    $region110: #{tpu_custom_call.1} parent=1 // pred_check
      _
    $region111: #{tpu_custom_call.1} parent=1 // pred_check_branch
      %89 = sbr.rel (0) target = $region113
    $region112: #{tpu_custom_call.1} parent=1 // pred_region
      _
    $region113: #{tpu_custom_call.1} parent=1 // pred_fallthru
      _
    %v91 = vld [vmem:[%s0] sm:$0xff]
    %v92 = vld [vmem:[%s0 + $0x8] sm:$0xff]
    %v93 = vld [vmem:[%s0 + $0x10] sm:$0xff]
    %v94 = vld [vmem:[%s0 + $0x18] sm:$0xff]
    %95 = vxpose.xlu0.b32.start [1/16] %v91, 128
    %96 = vxpose.xlu0.b32.cont [2/16] %v92, 128
    %97 = vxpose.xlu0.b32.cont [3/16] %v93, 128
    %98 = vxpose.xlu0.b32.cont [4/16] %v94, 128
    %99 = vxpose.xlu0.b32.cont [5/16] 0.0, 128
    %100 = vxpose.xlu0.b32.cont [6/16] 0.0, 128
    %101 = vxpose.xlu0.b32.cont [7/16] 0.0, 128
    %102 = vxpose.xlu0.b32.cont [8/16] 0.0, 128
    %103 = vxpose.xlu0.b32.cont [9/16] 0.0, 128
    %104 = vxpose.xlu0.b32.cont [10/16] 0.0, 128
    %105 = vxpose.xlu0.b32.cont [11/16] 0.0, 128
    %106 = vxpose.xlu0.b32.cont [12/16] 0.0, 128
    %107 = vxpose.xlu0.b32.cont [13/16] 0.0, 128
    %108 = vxpose.xlu0.b32.cont [14/16] 0.0, 128
    %109 = vxpose.xlu0.b32.cont [15/16] 0.0, 128
    %110 = vxpose.xlu0.b32.end [16/16] 0.0, 128
    %v111 = vpop.trf.xlu0
    %v112 = vpop.trf.xlu0
    %v113 = vpop.trf.xlu0
    %v114 = vpop.trf.xlu0
    %v115 = vpop.trf.xlu0
    %v116 = vpop.trf.xlu0
    %v117 = vpop.trf.xlu0
    %v118 = vpop.trf.xlu0
    %v119 = vpop.trf.xlu0
    %v120 = vpop.trf.xlu0
    %v121 = vpop.trf.xlu0
    %v122 = vpop.trf.xlu0
    %v123 = vpop.trf.xlu0
    %v124 = vpop.trf.xlu0
    %v125 = vpop.trf.xlu0
    %v126 = vpop.trf.xlu0
    %s127 = scalar_lea.vmem %s0, 32
    %v128 = vld [vmem:[%s127] sm:$0xff]
    %v129 = vld [vmem:[%s127 + $0x8] sm:$0xff]
    %v130 = vld [vmem:[%s127 + $0x10] sm:$0xff]
    %v131 = vld [vmem:[%s127 + $0x18] sm:$0xff]
    %132 = vxpose.xlu0.b32.start [1/16] %v128, 128
    %133 = vxpose.xlu0.b32.cont [2/16] %v129, 128
    %134 = vxpose.xlu0.b32.cont [3/16] %v130, 128
    %135 = vxpose.xlu0.b32.cont [4/16] %v131, 128
    %136 = vxpose.xlu0.b32.cont [5/16] 0.0, 128
    %137 = vxpose.xlu0.b32.cont [6/16] 0.0, 128
    %138 = vxpose.xlu0.b32.cont [7/16] 0.0, 128
    %139 = vxpose.xlu0.b32.cont [8/16] 0.0, 128
    %140 = vxpose.xlu0.b32.cont [9/16] 0.0, 128
    %141 = vxpose.xlu0.b32.cont [10/16] 0.0, 128
    %142 = vxpose.xlu0.b32.cont [11/16] 0.0, 128
    %143 = vxpose.xlu0.b32.cont [12/16] 0.0, 128
    %144 = vxpose.xlu0.b32.cont [13/16] 0.0, 128
    %145 = vxpose.xlu0.b32.cont [14/16] 0.0, 128
    %146 = vxpose.xlu0.b32.cont [15/16] 0.0, 128
    %147 = vxpose.xlu0.b32.end [16/16] 0.0, 128
    %v148 = vpop.trf.xlu0
    %v149 = vpop.trf.xlu0
    %v150 = vpop.trf.xlu0
    %v151 = vpop.trf.xlu0
    %v152 = vpop.trf.xlu0
    %v153 = vpop.trf.xlu0
    %v154 = vpop.trf.xlu0
    %v155 = vpop.trf.xlu0
    %v156 = vpop.trf.xlu0
    %v157 = vpop.trf.xlu0
    %v158 = vpop.trf.xlu0
    %v159 = vpop.trf.xlu0
    %v160 = vpop.trf.xlu0
    %v161 = vpop.trf.xlu0
    %v162 = vpop.trf.xlu0
    %v163 = vpop.trf.xlu0
    %v164 = vld [vmem:[%s1] sm:$0xff]
    %v165 = vld [vmem:[%s1 + $0x8] sm:$0xff]
    %v166 = vld [vmem:[%s1 + $0x10] sm:$0xff]
    %v167 = vld [vmem:[%s1 + $0x18] sm:$0xff]
    %168 = vxpose.xlu0.b32.start [1/16] %v164, 128
    %169 = vxpose.xlu0.b32.cont [2/16] %v165, 128
    %170 = vxpose.xlu0.b32.cont [3/16] %v166, 128
    %171 = vxpose.xlu0.b32.cont [4/16] %v167, 128
    %172 = vxpose.xlu0.b32.cont [5/16] 0.0, 128
    %173 = vxpose.xlu0.b32.cont [6/16] 0.0, 128
    %174 = vxpose.xlu0.b32.cont [7/16] 0.0, 128
    %175 = vxpose.xlu0.b32.cont [8/16] 0.0, 128
    %176 = vxpose.xlu0.b32.cont [9/16] 0.0, 128
    %177 = vxpose.xlu0.b32.cont [10/16] 0.0, 128
    %178 = vxpose.xlu0.b32.cont [11/16] 0.0, 128
    %179 = vxpose.xlu0.b32.cont [12/16] 0.0, 128
    %180 = vxpose.xlu0.b32.cont [13/16] 0.0, 128
    %181 = vxpose.xlu0.b32.cont [14/16] 0.0, 128
    %182 = vxpose.xlu0.b32.cont [15/16] 0.0, 128
    %183 = vxpose.xlu0.b32.end [16/16] 0.0, 128
    %v184 = vpop.trf.xlu0
    %v185 = vpop.trf.xlu0
    %v186 = vpop.trf.xlu0
    %v187 = vpop.trf.xlu0
    %v188 = vpop.trf.xlu0
    %v189 = vpop.trf.xlu0
    %v190 = vpop.trf.xlu0
    %v191 = vpop.trf.xlu0
    %v192 = vpop.trf.xlu0
    %v193 = vpop.trf.xlu0
    %v194 = vpop.trf.xlu0
    %v195 = vpop.trf.xlu0
    %v196 = vpop.trf.xlu0
    %v197 = vpop.trf.xlu0
    %v198 = vpop.trf.xlu0
    %v199 = vpop.trf.xlu0
    %s200 = scalar_lea.vmem %s1, 32
    %v201 = vld [vmem:[%s200] sm:$0xff]
    %v202 = vld [vmem:[%s200 + $0x8] sm:$0xff]
    %v203 = vld [vmem:[%s200 + $0x10] sm:$0xff]
    %v204 = vld [vmem:[%s200 + $0x18] sm:$0xff]
    %205 = vxpose.xlu0.b32.start [1/16] %v201, 128
    %206 = vxpose.xlu0.b32.cont [2/16] %v202, 128
    %207 = vxpose.xlu0.b32.cont [3/16] %v203, 128
    %208 = vxpose.xlu0.b32.cont [4/16] %v204, 128
    %209 = vxpose.xlu0.b32.cont [5/16] 0.0, 128
    %210 = vxpose.xlu0.b32.cont [6/16] 0.0, 128
    %211 = vxpose.xlu0.b32.cont [7/16] 0.0, 128
    %212 = vxpose.xlu0.b32.cont [8/16] 0.0, 128
    %213 = vxpose.xlu0.b32.cont [9/16] 0.0, 128
    %214 = vxpose.xlu0.b32.cont [10/16] 0.0, 128
    %215 = vxpose.xlu0.b32.cont [11/16] 0.0, 128
    %216 = vxpose.xlu0.b32.cont [12/16] 0.0, 128
    %217 = vxpose.xlu0.b32.cont [13/16] 0.0, 128
    %218 = vxpose.xlu0.b32.cont [14/16] 0.0, 128
    %219 = vxpose.xlu0.b32.cont [15/16] 0.0, 128
    %220 = vxpose.xlu0.b32.end [16/16] 0.0, 128
    %v221 = vpop.trf.xlu0
    %v222 = vpop.trf.xlu0
    %v223 = vpop.trf.xlu0
    %v224 = vpop.trf.xlu0
    %v225 = vpop.trf.xlu0
    %v226 = vpop.trf.xlu0
    %v227 = vpop.trf.xlu0
    %v228 = vpop.trf.xlu0
    %v229 = vpop.trf.xlu0
    %v230 = vpop.trf.xlu0
    %v231 = vpop.trf.xlu0
    %v232 = vpop.trf.xlu0
    %v233 = vpop.trf.xlu0
    %v234 = vpop.trf.xlu0
    %v235 = vpop.trf.xlu0
    %v236 = vpop.trf.xlu0
    %v237 = vpack.c.bf16 %v221, %v184
    %v238 = vpack.c.bf16 %v112, %v111
    %v239 = vpack.c.bf16 %v114, %v113
    %v240 = vpack.c.bf16 %v116, %v115
    %v241 = vpack.c.bf16 %v118, %v117
    %v242 = vpack.c.bf16 %v149, %v148
    %v243 = vpack.c.bf16 %v151, %v150
    %v244 = vpack.c.bf16 %v153, %v152
    %v245 = vpack.c.bf16 %v155, %v154
    %v246 = vld [vmem:[%s2] sm:$0xf]
    %v247 = vld [vmem:[%s2 + $0x4] sm:$0xf]
    %v248 = vld [vmem:[%s2 + $0x8] sm:$0xf]
    %v249 = vld [vmem:[%s2 + $0xc] sm:$0xf]
    %v250 = vld [vmem:[%s5] sm:$0x1]
    %v252 = vlaneseq
    %v253 = vshrl.u32 %v252, 7
    %v254 = vsub.s32 0, %v253
    %v255 = vrot.slane %v250, %v254
    %v261 = vunpack.c.l.b16 %v246
    %v262 = vunpack.c.l.b16 %v247
    %v263 = vunpack.c.l.b16 %v248
    %v264 = vunpack.c.l.b16 %v249
    %v265 = vpack.c.b16 %v262, %v261
    %v266 = vpack.c.b16 %v264, %v263
    %vm269 = vcmask 261120
    %v271 = vsel %vm269, %v238, 0
    %v274 = vsel %vm269, %v239, 0
    %v277 = vsel %vm269, %v240, 0
    %v280 = vsel %vm269, %v241, 0
    %v283 = vsel %vm269, %v242, 0
    %v286 = vsel %vm269, %v243, 0
    %v289 = vsel %vm269, %v244, 0
    %v292 = vsel %vm269, %v245, 0
    %294 = vmatprep.subr.bf16.mxu0 0
    %295 = vmatpush1.bf16.msra.mxu0 %v265
    %296 = vmatprep.subr.bf16.mxu0 0
    %297 = vmatpush1.bf16.msra.mxu0 %v266
    %298 = vmatprep.subr.bf16.mxu0 0
    %299 = vmatpush1.bf16.msra.mxu0 0
    %300 = vmatprep.subr.bf16.mxu0 0
    %301 = vmatpush1.bf16.msra.mxu0 0
    %302 = vmatprep.subr.bf16.mxu0 0
    %303 = vmatpush1.bf16.msra.mxu0 0
    %304 = vmatprep.subr.bf16.mxu0 0
    %305 = vmatpush1.bf16.msra.mxu0 0
    %306 = vmatprep.subr.bf16.mxu0 0
    %307 = vmatpush1.bf16.msra.mxu0 0
    %308 = vmatprep.subr.bf16.mxu0 0
    %309 = vmatpush1.bf16.msra.mxu0 0
    %310 = vmatprep.subr.bf16.mxu0 0
    %311 = vmatpush1.bf16.msra.mxu0 0
    %312 = vmatprep.subr.bf16.mxu0 0
    %313 = vmatpush1.bf16.msra.mxu0 0
    %314 = vmatprep.subr.bf16.mxu0 0
    %315 = vmatpush1.bf16.msra.mxu0 0
    %316 = vmatprep.subr.bf16.mxu0 0
    %317 = vmatpush1.bf16.msra.mxu0 0
    %318 = vmatprep.subr.bf16.mxu0 0
    %319 = vmatpush1.bf16.msra.mxu0 0
    %320 = vmatprep.subr.bf16.mxu0 0
    %321 = vmatpush1.bf16.msra.mxu0 0
    %322 = vmatprep.subr.bf16.mxu0 0
    %323 = vmatpush1.bf16.msra.mxu0 0
    %324 = vmatprep.subr.bf16.mxu0 0
    %325 = vmatpush1.bf16.msra.mxu0 0
    %326 = vmatprep.mubr.bf16.mxu0 0
    %327 = vmatmul.mubr.bf16.gmra.mrb[0].mxu0 %v271
    %v328 = vpop.f32.mrb[0].mxu0
    %v329 = vadd.f32 %v255, %v328
    %v330 = vpop.f32.mrb[0].mxu0
    %v331 = vpop.f32.mrb[0].mxu0
    %v332 = vadd.f32 %v255, %v331
    %v333 = vpop.f32.mrb[0].mxu0
    %334 = vmatprep.mubr.bf16.mxu0 0
    %335 = vmatmul.mubr.bf16.gmra.mrb[0].mxu0 %v274
    %v336 = vpop.f32.mrb[0].mxu0
    %v337 = vadd.f32 %v255, %v336
    %v338 = vpop.f32.mrb[0].mxu0
    %v339 = vpop.f32.mrb[0].mxu0
    %v340 = vadd.f32 %v255, %v339
    %v341 = vpop.f32.mrb[0].mxu0
    %342 = vmatprep.mubr.bf16.mxu0 0
    %343 = vmatmul.mubr.bf16.gmra.mrb[0].mxu0 %v277
    %v344 = vpop.f32.mrb[0].mxu0
    %v345 = vadd.f32 %v255, %v344
    %v346 = vpop.f32.mrb[0].mxu0
    %v347 = vpop.f32.mrb[0].mxu0
    %v348 = vadd.f32 %v255, %v347
    %v349 = vpop.f32.mrb[0].mxu0
    %350 = vmatprep.mubr.bf16.mxu0 0
    %351 = vmatmul.mubr.bf16.gmra.mrb[0].mxu0 %v280
    %v352 = vpop.f32.mrb[0].mxu0
    %v353 = vadd.f32 %v255, %v352
    %v354 = vpop.f32.mrb[0].mxu0
    %v355 = vpop.f32.mrb[0].mxu0
    %v356 = vadd.f32 %v255, %v355
    %v357 = vpop.f32.mrb[0].mxu0
    %358 = vmatprep.mubr.bf16.mxu0 0
    %359 = vmatmul.mubr.bf16.gmra.mrb[0].mxu0 %v283
    %v360 = vpop.f32.mrb[0].mxu0
    %v361 = vadd.f32 %v255, %v360
    %v362 = vpop.f32.mrb[0].mxu0
    %v363 = vpop.f32.mrb[0].mxu0
    %v364 = vadd.f32 %v255, %v363
    %v365 = vpop.f32.mrb[0].mxu0
    %366 = vmatprep.mubr.bf16.mxu0 0
    %367 = vmatmul.mubr.bf16.gmra.mrb[0].mxu0 %v286
    %v368 = vpop.f32.mrb[0].mxu0
    %v369 = vadd.f32 %v255, %v368
    %v370 = vpop.f32.mrb[0].mxu0
    %v371 = vpop.f32.mrb[0].mxu0
    %v372 = vadd.f32 %v255, %v371
    %v373 = vpop.f32.mrb[0].mxu0
    %374 = vmatprep.mubr.bf16.mxu0 0
    %375 = vmatmul.mubr.bf16.gmra.mrb[0].mxu0 %v289
    %v376 = vpop.f32.mrb[0].mxu0
    %v377 = vadd.f32 %v255, %v376
    %v378 = vpop.f32.mrb[0].mxu0
    %v379 = vpop.f32.mrb[0].mxu0
    %v380 = vadd.f32 %v255, %v379
    %v381 = vpop.f32.mrb[0].mxu0
    %382 = vmatprep.mubr.bf16.mxu0 0
    %383 = vmatmul.mubr.bf16.gmra.mrb[0].mxu0 %v292
    %v384 = vpop.f32.mrb[0].mxu0
    %v385 = vadd.f32 %v255, %v384
    %v386 = vpop.f32.mrb[0].mxu0
    %v387 = vpop.f32.mrb[0].mxu0
    %v388 = vadd.f32 %v255, %v387
    %v389 = vpop.f32.mrb[0].mxu0
    %390 = vdwg.mxu0
    %v391 = vld [vmem:[%s3] sm:$0xf]
    %v392 = vld [vmem:[%s3 + $0x4] sm:$0xf]
    %v393 = vld [vmem:[%s3 + $0x8] sm:$0xf]
    %v394 = vld [vmem:[%s3 + $0xc] sm:$0xf]
    %v395 = vld [vmem:[%s6] sm:$0x1]
    %v397 = vlaneseq
    %v398 = vshrl.u32 %v397, 7
    %v399 = vsub.s32 0, %v398
    %v400 = vrot.slane %v395, %v399
    %v406 = vunpack.c.l.b16 %v391
    %v407 = vunpack.c.l.b16 %v392
    %v408 = vunpack.c.l.b16 %v393
    %v409 = vunpack.c.l.b16 %v394
    %v410 = vpack.c.b16 %v407, %v406
    %v411 = vpack.c.b16 %v409, %v408
    %414 = vmatprep.subr.bf16.mxu0 0
    %415 = vmatpush1.bf16.msra.mxu0 %v410
    %416 = vmatprep.subr.bf16.mxu0 0
    %417 = vmatpush1.bf16.msra.mxu0 %v411
    %418 = vmatprep.subr.bf16.mxu0 0
    %419 = vmatpush1.bf16.msra.mxu0 0
    %420 = vmatprep.subr.bf16.mxu0 0
    %421 = vmatpush1.bf16.msra.mxu0 0
    %422 = vmatprep.subr.bf16.mxu0 0
    %423 = vmatpush1.bf16.msra.mxu0 0
    %424 = vmatprep.subr.bf16.mxu0 0
    %425 = vmatpush1.bf16.msra.mxu0 0
    %426 = vmatprep.subr.bf16.mxu0 0
    %427 = vmatpush1.bf16.msra.mxu0 0
    %428 = vmatprep.subr.bf16.mxu0 0
    %429 = vmatpush1.bf16.msra.mxu0 0
    %430 = vmatprep.subr.bf16.mxu0 0
    %431 = vmatpush1.bf16.msra.mxu0 0
    %432 = vmatprep.subr.bf16.mxu0 0
    %433 = vmatpush1.bf16.msra.mxu0 0
    %434 = vmatprep.subr.bf16.mxu0 0
    %435 = vmatpush1.bf16.msra.mxu0 0
    %436 = vmatprep.subr.bf16.mxu0 0
    %437 = vmatpush1.bf16.msra.mxu0 0
    %438 = vmatprep.subr.bf16.mxu0 0
    %439 = vmatpush1.bf16.msra.mxu0 0
    %440 = vmatprep.subr.bf16.mxu0 0
    %441 = vmatpush1.bf16.msra.mxu0 0
    %442 = vmatprep.subr.bf16.mxu0 0
    %443 = vmatpush1.bf16.msra.mxu0 0
    %444 = vmatprep.subr.bf16.mxu0 0
    %445 = vmatpush1.bf16.msra.mxu0 0
    %446 = vmatprep.mubr.bf16.mxu0 0
    %447 = vmatmul.mubr.bf16.gmra.mrb[0].mxu0 %v271
    %v448 = vpop.f32.mrb[0].mxu0
    %v449 = vadd.f32 %v400, %v448
    %v450 = vpop.f32.mrb[0].mxu0
    %v451 = vpop.f32.mrb[0].mxu0
    %v452 = vadd.f32 %v400, %v451
    %v453 = vpop.f32.mrb[0].mxu0
    %454 = vmatprep.mubr.bf16.mxu0 0
    %455 = vmatmul.mubr.bf16.gmra.mrb[0].mxu0 %v274
    %v456 = vpop.f32.mrb[0].mxu0
    %v457 = vadd.f32 %v400, %v456
    %v458 = vpop.f32.mrb[0].mxu0
    %v459 = vpop.f32.mrb[0].mxu0
    %v460 = vadd.f32 %v400, %v459
    %v461 = vpop.f32.mrb[0].mxu0
    %462 = vmatprep.mubr.bf16.mxu0 0
    %463 = vmatmul.mubr.bf16.gmra.mrb[0].mxu0 %v277
    %v464 = vpop.f32.mrb[0].mxu0
    %v465 = vadd.f32 %v400, %v464
    %v466 = vpop.f32.mrb[0].mxu0
    %v467 = vpop.f32.mrb[0].mxu0
    %v468 = vadd.f32 %v400, %v467
    %v469 = vpop.f32.mrb[0].mxu0
    %470 = vmatprep.mubr.bf16.mxu0 0
    %471 = vmatmul.mubr.bf16.gmra.mrb[0].mxu0 %v280
    %v472 = vpop.f32.mrb[0].mxu0
    %v473 = vadd.f32 %v400, %v472
    %v474 = vpop.f32.mrb[0].mxu0
    %v475 = vpop.f32.mrb[0].mxu0
    %v476 = vadd.f32 %v400, %v475
    %v477 = vpop.f32.mrb[0].mxu0
    %478 = vmatprep.mubr.bf16.mxu0 0
    %479 = vmatmul.mubr.bf16.gmra.mrb[0].mxu0 %v283
    %v480 = vpop.f32.mrb[0].mxu0
    %v481 = vadd.f32 %v400, %v480
    %v482 = vpop.f32.mrb[0].mxu0
    %v483 = vpop.f32.mrb[0].mxu0
    %v484 = vadd.f32 %v400, %v483
    %v485 = vpop.f32.mrb[0].mxu0
    %486 = vmatprep.mubr.bf16.mxu0 0
    %487 = vmatmul.mubr.bf16.gmra.mrb[0].mxu0 %v286
    %v488 = vpop.f32.mrb[0].mxu0
    %v489 = vadd.f32 %v400, %v488
    %v490 = vpop.f32.mrb[0].mxu0
    %v491 = vpop.f32.mrb[0].mxu0
    %v492 = vadd.f32 %v400, %v491
    %v493 = vpop.f32.mrb[0].mxu0
    %494 = vmatprep.mubr.bf16.mxu0 0
    %495 = vmatmul.mubr.bf16.gmra.mrb[0].mxu0 %v289
    %v496 = vpop.f32.mrb[0].mxu0
    %v497 = vadd.f32 %v400, %v496
    %v498 = vpop.f32.mrb[0].mxu0
    %v499 = vpop.f32.mrb[0].mxu0
    %v500 = vadd.f32 %v400, %v499
    %v501 = vpop.f32.mrb[0].mxu0
    %502 = vmatprep.mubr.bf16.mxu0 0
    %503 = vmatmul.mubr.bf16.gmra.mrb[0].mxu0 %v292
    %v504 = vpop.f32.mrb[0].mxu0
    %v505 = vadd.f32 %v400, %v504
    %v506 = vpop.f32.mrb[0].mxu0
    %v507 = vpop.f32.mrb[0].mxu0
    %v508 = vadd.f32 %v400, %v507
    %v509 = vpop.f32.mrb[0].mxu0
    %510 = vdwg.mxu0
    %v511 = vld [vmem:[%s4] sm:$0xf]
    %v512 = vld [vmem:[%s4 + $0x4] sm:$0xf]
    %v513 = vld [vmem:[%s4 + $0x8] sm:$0xf]
    %v514 = vld [vmem:[%s4 + $0xc] sm:$0xf]
    %v515 = vld [vmem:[%s7] sm:$0x1]
    %v517 = vlaneseq
    %v518 = vshrl.u32 %v517, 7
    %v519 = vsub.s32 0, %v518
    %v520 = vrot.slane %v515, %v519
    %v526 = vunpack.c.l.b16 %v511
    %v527 = vunpack.c.l.b16 %v512
    %v528 = vunpack.c.l.b16 %v513
    %v529 = vunpack.c.l.b16 %v514
    %v530 = vpack.c.b16 %v527, %v526
    %v531 = vpack.c.b16 %v529, %v528
    %534 = vmatprep.subr.bf16.mxu0 0
    %535 = vmatpush1.bf16.msra.mxu0 %v530
    %536 = vmatprep.subr.bf16.mxu0 0
    %537 = vmatpush1.bf16.msra.mxu0 %v531
    %538 = vmatprep.subr.bf16.mxu0 0
    %539 = vmatpush1.bf16.msra.mxu0 0
    %540 = vmatprep.subr.bf16.mxu0 0
    %541 = vmatpush1.bf16.msra.mxu0 0
    %542 = vmatprep.subr.bf16.mxu0 0
    %543 = vmatpush1.bf16.msra.mxu0 0
    %544 = vmatprep.subr.bf16.mxu0 0
    %545 = vmatpush1.bf16.msra.mxu0 0
    %546 = vmatprep.subr.bf16.mxu0 0
    %547 = vmatpush1.bf16.msra.mxu0 0
    %548 = vmatprep.subr.bf16.mxu0 0
    %549 = vmatpush1.bf16.msra.mxu0 0
    %550 = vmatprep.subr.bf16.mxu0 0
    %551 = vmatpush1.bf16.msra.mxu0 0
    %552 = vmatprep.subr.bf16.mxu0 0
    %553 = vmatpush1.bf16.msra.mxu0 0
    %554 = vmatprep.subr.bf16.mxu0 0
    %555 = vmatpush1.bf16.msra.mxu0 0
    %556 = vmatprep.subr.bf16.mxu0 0
    %557 = vmatpush1.bf16.msra.mxu0 0
    %558 = vmatprep.subr.bf16.mxu0 0
    %559 = vmatpush1.bf16.msra.mxu0 0
    %560 = vmatprep.subr.bf16.mxu0 0
    %561 = vmatpush1.bf16.msra.mxu0 0
    %562 = vmatprep.subr.bf16.mxu0 0
    %563 = vmatpush1.bf16.msra.mxu0 0
    %564 = vmatprep.subr.bf16.mxu0 0
    %565 = vmatpush1.bf16.msra.mxu0 0
    %566 = vmatprep.mubr.bf16.mxu0 0
    %567 = vmatmul.mubr.bf16.gmra.mrb[0].mxu0 %v271
    %v568 = vpop.f32.mrb[0].mxu0
    %v569 = vadd.f32 %v520, %v568
    %v570 = vpop.f32.mrb[0].mxu0
    %v571 = vpop.f32.mrb[0].mxu0
    %v572 = vadd.f32 %v520, %v571
    %v573 = vpop.f32.mrb[0].mxu0
    %574 = vmatprep.mubr.bf16.mxu0 0
    %575 = vmatmul.mubr.bf16.gmra.mrb[0].mxu0 %v274
    %v576 = vpop.f32.mrb[0].mxu0
    %v577 = vadd.f32 %v520, %v576
    %v578 = vpop.f32.mrb[0].mxu0
    %v579 = vpop.f32.mrb[0].mxu0
    %v580 = vadd.f32 %v520, %v579
    %v581 = vpop.f32.mrb[0].mxu0
    %582 = vmatprep.mubr.bf16.mxu0 0
    %583 = vmatmul.mubr.bf16.gmra.mrb[0].mxu0 %v277
    %v584 = vpop.f32.mrb[0].mxu0
    %v585 = vadd.f32 %v520, %v584
    %v586 = vpop.f32.mrb[0].mxu0
    %v587 = vpop.f32.mrb[0].mxu0
    %v588 = vadd.f32 %v520, %v587
    %v589 = vpop.f32.mrb[0].mxu0
    %590 = vmatprep.mubr.bf16.mxu0 0
    %591 = vmatmul.mubr.bf16.gmra.mrb[0].mxu0 %v280
    %v592 = vpop.f32.mrb[0].mxu0
    %v593 = vadd.f32 %v520, %v592
    %v594 = vpop.f32.mrb[0].mxu0
    %v595 = vpop.f32.mrb[0].mxu0
    %v596 = vadd.f32 %v520, %v595
    %v597 = vpop.f32.mrb[0].mxu0
    %598 = vmatprep.mubr.bf16.mxu0 0
    %599 = vmatmul.mubr.bf16.gmra.mrb[0].mxu0 %v283
    %v600 = vpop.f32.mrb[0].mxu0
    %v601 = vadd.f32 %v520, %v600
    %v602 = vpop.f32.mrb[0].mxu0
    %v603 = vpop.f32.mrb[0].mxu0
    %v604 = vadd.f32 %v520, %v603
    %v605 = vpop.f32.mrb[0].mxu0
    %606 = vmatprep.mubr.bf16.mxu0 0
    %607 = vmatmul.mubr.bf16.gmra.mrb[0].mxu0 %v286
    %v608 = vpop.f32.mrb[0].mxu0
    %v609 = vadd.f32 %v520, %v608
    %v610 = vpop.f32.mrb[0].mxu0
    %v611 = vpop.f32.mrb[0].mxu0
    %v612 = vadd.f32 %v520, %v611
    %v613 = vpop.f32.mrb[0].mxu0
    %614 = vmatprep.mubr.bf16.mxu0 0
    %615 = vmatmul.mubr.bf16.gmra.mrb[0].mxu0 %v289
    %v616 = vpop.f32.mrb[0].mxu0
    %v617 = vadd.f32 %v520, %v616
    %v618 = vpop.f32.mrb[0].mxu0
    %v619 = vpop.f32.mrb[0].mxu0
    %v620 = vadd.f32 %v520, %v619
    %v621 = vpop.f32.mrb[0].mxu0
    %622 = vmatprep.mubr.bf16.mxu0 0
    %623 = vmatmul.mubr.bf16.gmra.mrb[0].mxu0 %v292
    %v624 = vpop.f32.mrb[0].mxu0
    %v625 = vadd.f32 %v520, %v624
    %v626 = vpop.f32.mrb[0].mxu0
    %v627 = vpop.f32.mrb[0].mxu0
    %v628 = vadd.f32 %v520, %v627
    %v629 = vpop.f32.mrb[0].mxu0
    %630 = vdwg.mxu0
    %v631 = vmul.f32 %v329, 0.35355338
    %v632 = vmul.f32 %v332, 0.35355338
    %v633 = vmul.f32 %v337, 0.35355338
    %v634 = vmul.f32 %v340, 0.35355338
    %v635 = vmul.f32 %v345, 0.35355338
    %v636 = vmul.f32 %v348, 0.35355338
    %v637 = vmul.f32 %v353, 0.35355338
    %v638 = vmul.f32 %v356, 0.35355338
    %v639 = vmul.f32 %v361, 0.35355338
    %v640 = vmul.f32 %v364, 0.35355338
    %v641 = vmul.f32 %v369, 0.35355338
    %v642 = vmul.f32 %v372, 0.35355338
    %v643 = vmul.f32 %v377, 0.35355338
    %v644 = vmul.f32 %v380, 0.35355338
    %v645 = vmul.f32 %v385, 0.35355338
    %v646 = vmul.f32 %v388, 0.35355338
    %v647 = vpack.c.bf16 %v632, %v631
    %v648 = vpack.c.bf16 %v634, %v633
    %v649 = vpack.c.bf16 %v636, %v635
    %v650 = vpack.c.bf16 %v638, %v637
    %v651 = vpack.c.bf16 %v640, %v639
    %v652 = vpack.c.bf16 %v642, %v641
    %v653 = vpack.c.bf16 %v644, %v643
    %v654 = vpack.c.bf16 %v646, %v645
    %v655 = vpack.c.bf16 %v452, %v449
    %v656 = vpack.c.bf16 %v460, %v457
    %v657 = vpack.c.bf16 %v468, %v465
    %v658 = vpack.c.bf16 %v476, %v473
    %v659 = vpack.c.bf16 %v484, %v481
    %v660 = vpack.c.bf16 %v492, %v489
    %v661 = vpack.c.bf16 %v500, %v497
    %v662 = vpack.c.bf16 %v508, %v505
    %v663 = vpack.c.bf16 %v572, %v569
    %v664 = vpack.c.bf16 %v580, %v577
    %v665 = vpack.c.bf16 %v588, %v585
    %v666 = vpack.c.bf16 %v596, %v593
    %v667 = vpack.c.bf16 %v604, %v601
    %v668 = vpack.c.bf16 %v612, %v609
    %v669 = vpack.c.bf16 %v620, %v617
    %v670 = vpack.c.bf16 %v628, %v625
    %v671 = vld [vmem:[%s8] sm:$0xf]
    %v672 = vld [vmem:[%s8 + $0x4] sm:$0xf]
    %v673 = vld [vmem:[%s8 + $0x8] sm:$0xf]
    %v674 = vld [vmem:[%s8 + $0xc] sm:$0xf]
    %vm675 = vcmask 64512
    %v677 = vsel %vm675, %v647, 0
    %v680 = vsel %vm675, %v648, 0
    %v683 = vsel %vm675, %v649, 0
    %v686 = vsel %vm675, %v650, 0
    %v689 = vsel %vm675, %v655, 0
    %v692 = vsel %vm675, %v656, 0
    %v695 = vsel %vm675, %v657, 0
    %v698 = vsel %vm675, %v658, 0
    %700 = vmatprep.subr.bf16.mxu0 0
    %701 = vmatpush1.bf16.xpose.msra.mxu0 %v689
    %702 = vmatprep.subr.bf16.mxu0 0
    %703 = vmatpush1.bf16.xpose.msra.mxu0 %v692
    %704 = vmatprep.subr.bf16.mxu0 0
    %705 = vmatpush1.bf16.xpose.msra.mxu0 %v695
    %706 = vmatprep.subr.bf16.mxu0 0
    %707 = vmatpush1.bf16.xpose.msra.mxu0 %v698
    %708 = vmatprep.subr.bf16.mxu0 0
    %709 = vmatpush1.bf16.xpose.msra.mxu0 0
    %710 = vmatprep.subr.bf16.mxu0 0
    %711 = vmatpush1.bf16.xpose.msra.mxu0 0
    %712 = vmatprep.subr.bf16.mxu0 0
    %713 = vmatpush1.bf16.xpose.msra.mxu0 0
    %714 = vmatprep.subr.bf16.mxu0 0
    %715 = vmatpush1.bf16.xpose.msra.mxu0 0
    %716 = vmatprep.subr.bf16.mxu0 0
    %717 = vmatpush1.bf16.xpose.msra.mxu0 0
    %718 = vmatprep.subr.bf16.mxu0 0
    %719 = vmatpush1.bf16.xpose.msra.mxu0 0
    %720 = vmatprep.subr.bf16.mxu0 0
    %721 = vmatpush1.bf16.xpose.msra.mxu0 0
    %722 = vmatprep.subr.bf16.mxu0 0
    %723 = vmatpush1.bf16.xpose.msra.mxu0 0
    %724 = vmatprep.subr.bf16.mxu0 0
    %725 = vmatpush1.bf16.xpose.msra.mxu0 0
    %726 = vmatprep.subr.bf16.mxu0 0
    %727 = vmatpush1.bf16.xpose.msra.mxu0 0
    %728 = vmatprep.subr.bf16.mxu0 0
    %729 = vmatpush1.bf16.xpose.msra.mxu0 0
    %730 = vmatprep.subr.bf16.mxu0 0
    %731 = vmatpush1.bf16.xpose.msra.mxu0 0
    %732 = vmatprep.mubr.bf16.mxu0 0
    %733 = vmatmul.mubr.bf16.gmra.mrb[0].mxu0 %v677
    %v734 = vpop.f32.mrb[0].mxu0
    %v735 = vadd.f32 0.0, %v734
    %v736 = vpop.f32.mrb[0].mxu0
    %v737 = vpop.f32.mrb[0].mxu0
    %v738 = vadd.f32 0.0, %v737
    %v739 = vpop.f32.mrb[0].mxu0
    %740 = vmatprep.mubr.bf16.mxu0 0
    %741 = vmatmul.mubr.bf16.gmra.mrb[0].mxu0 %v680
    %v742 = vpop.f32.mrb[0].mxu0
    %v743 = vadd.f32 0.0, %v742
    %v744 = vpop.f32.mrb[0].mxu0
    %v745 = vpop.f32.mrb[0].mxu0
    %v746 = vadd.f32 0.0, %v745
    %v747 = vpop.f32.mrb[0].mxu0
    %748 = vmatprep.mubr.bf16.mxu0 0
    %749 = vmatmul.mubr.bf16.gmra.mrb[0].mxu0 %v683
    %v750 = vpop.f32.mrb[0].mxu0
    %v751 = vadd.f32 0.0, %v750
    %v752 = vpop.f32.mrb[0].mxu0
    %v753 = vpop.f32.mrb[0].mxu0
    %v754 = vadd.f32 0.0, %v753
    %v755 = vpop.f32.mrb[0].mxu0
    %756 = vmatprep.mubr.bf16.mxu0 0
    %757 = vmatmul.mubr.bf16.gmra.mrb[0].mxu0 %v686
    %v758 = vpop.f32.mrb[0].mxu0
    %v759 = vadd.f32 0.0, %v758
    %v760 = vpop.f32.mrb[0].mxu0
    %v761 = vpop.f32.mrb[0].mxu0
    %v762 = vadd.f32 0.0, %v761
    %v763 = vpop.f32.mrb[0].mxu0
    %764 = vdwg.mxu0
    %vm765 = vcmask 523264
    %v766 = vsel %vm765, %v735, -inf
    %767 = vmax.xlane.f32.xlu0 %v766
    %v768 = vpop.xlane.xlu0 %767
    %v769 = vsel %vm765, %v738, -inf
    %770 = vmax.xlane.f32.xlu0 %v769
    %v771 = vpop.xlane.xlu0 %770
    %v772 = vsel %vm765, %v743, -inf
    %773 = vmax.xlane.f32.xlu0 %v772
    %v774 = vpop.xlane.xlu0 %773
    %v775 = vsel %vm765, %v746, -inf
    %776 = vmax.xlane.f32.xlu0 %v775
    %v777 = vpop.xlane.xlu0 %776
    %v778 = vsel %vm765, %v751, -inf
    %779 = vmax.xlane.f32.xlu0 %v778
    %v780 = vpop.xlane.xlu0 %779
    %v781 = vsel %vm765, %v754, -inf
    %782 = vmax.xlane.f32.xlu0 %v781
    %v783 = vpop.xlane.xlu0 %782
    %v784 = vsel %vm765, %v759, -inf
    %785 = vmax.xlane.f32.xlu0 %v784
    %v786 = vpop.xlane.xlu0 %785
    %v787 = vsel %vm765, %v762, -inf
    %788 = vmax.xlane.f32.xlu0 %v787
    %v789 = vpop.xlane.xlu0 %788
    %v790 = vsub.f32 %v735, %v768
    %v791 = vsub.f32 %v738, %v771
    %v792 = vsub.f32 %v743, %v774
    %v793 = vsub.f32 %v746, %v777
    %v794 = vsub.f32 %v751, %v780
    %v795 = vsub.f32 %v754, %v783
    %v796 = vsub.f32 %v759, %v786
    %v797 = vsub.f32 %v762, %v789
    %v798 = vmul.f32 %v790, 1.442695
    %v799 = vpow.pop %v798
    %v800 = vmul.f32 %v791, 1.442695
    %v801 = vpow.pop %v800
    %v802 = vmul.f32 %v792, 1.442695
    %v803 = vpow.pop %v802
    %v804 = vmul.f32 %v793, 1.442695
    %v805 = vpow.pop %v804
    %v806 = vmul.f32 %v794, 1.442695
    %v807 = vpow.pop %v806
    %v808 = vmul.f32 %v795, 1.442695
    %v809 = vpow.pop %v808
    %v810 = vmul.f32 %v796, 1.442695
    %v811 = vpow.pop %v810
    %v812 = vmul.f32 %v797, 1.442695
    %v813 = vpow.pop %v812
    %v814 = vsel %vm765, %v799, 0.0
    %815 = vadd.xlane.f32.xlu0 %v814
    %v816 = vpop.xlane.xlu0 %815
    %v817 = vsel %vm765, %v801, 0.0
    %818 = vadd.xlane.f32.xlu0 %v817
    %v819 = vpop.xlane.xlu0 %818
    %v820 = vsel %vm765, %v803, 0.0
    %821 = vadd.xlane.f32.xlu0 %v820
    %v822 = vpop.xlane.xlu0 %821
    %v823 = vsel %vm765, %v805, 0.0
    %824 = vadd.xlane.f32.xlu0 %v823
    %v825 = vpop.xlane.xlu0 %824
    %v826 = vsel %vm765, %v807, 0.0
    %827 = vadd.xlane.f32.xlu0 %v826
    %v828 = vpop.xlane.xlu0 %827
    %v829 = vsel %vm765, %v809, 0.0
    %830 = vadd.xlane.f32.xlu0 %v829
    %v831 = vpop.xlane.xlu0 %830
    %v832 = vsel %vm765, %v811, 0.0
    %833 = vadd.xlane.f32.xlu0 %v832
    %v834 = vpop.xlane.xlu0 %833
    %v835 = vsel %vm765, %v813, 0.0
    %836 = vadd.xlane.f32.xlu0 %v835
    %v837 = vpop.xlane.xlu0 %836
    %v838 = vrcp.pop %v816
    %v839 = vrcp.pop %v819
    %v840 = vrcp.pop %v822
    %v841 = vrcp.pop %v825
    %v842 = vrcp.pop %v828
    %v843 = vrcp.pop %v831
    %v844 = vrcp.pop %v834
    %v845 = vrcp.pop %v837
    %v846 = vmul.f32 %v799, %v838
    %v847 = vmul.f32 %v801, %v839
    %v848 = vmul.f32 %v803, %v840
    %v849 = vmul.f32 %v805, %v841
    %v850 = vmul.f32 %v807, %v842
    %v851 = vmul.f32 %v809, %v843
    %v852 = vmul.f32 %v811, %v844
    %v853 = vmul.f32 %v813, %v845
    %v854 = vpack.c.bf16 %v847, %v846
    %v855 = vpack.c.bf16 %v849, %v848
    %v856 = vpack.c.bf16 %v851, %v850
    %v857 = vpack.c.bf16 %v853, %v852
    %v859 = vsel %vm765, %v854, 0
    %v862 = vsel %vm765, %v855, 0
    %v865 = vsel %vm765, %v856, 0
    %v868 = vsel %vm765, %v857, 0
    %870 = vmatprep.subr.bf16.mxu0 0
    %871 = vmatpush1.bf16.msra.mxu0 %v663
    %872 = vmatprep.subr.bf16.mxu0 0
    %873 = vmatpush1.bf16.msra.mxu0 %v664
    %874 = vmatprep.subr.bf16.mxu0 0
    %875 = vmatpush1.bf16.msra.mxu0 %v665
    %876 = vmatprep.subr.bf16.mxu0 0
    %877 = vmatpush1.bf16.msra.mxu0 %v666
    %878 = vmatprep.subr.bf16.mxu0 0
    %879 = vmatpush1.bf16.msra.mxu0 0
    %880 = vmatprep.subr.bf16.mxu0 0
    %881 = vmatpush1.bf16.msra.mxu0 0
    %882 = vmatprep.subr.bf16.mxu0 0
    %883 = vmatpush1.bf16.msra.mxu0 0
    %884 = vmatprep.subr.bf16.mxu0 0
    %885 = vmatpush1.bf16.msra.mxu0 0
    %886 = vmatprep.subr.bf16.mxu0 0
    %887 = vmatpush1.bf16.msra.mxu0 0
    %888 = vmatprep.subr.bf16.mxu0 0
    %889 = vmatpush1.bf16.msra.mxu0 0
    %890 = vmatprep.subr.bf16.mxu0 0
    %891 = vmatpush1.bf16.msra.mxu0 0
    %892 = vmatprep.subr.bf16.mxu0 0
    %893 = vmatpush1.bf16.msra.mxu0 0
    %894 = vmatprep.subr.bf16.mxu0 0
    %895 = vmatpush1.bf16.msra.mxu0 0
    %896 = vmatprep.subr.bf16.mxu0 0
    %897 = vmatpush1.bf16.msra.mxu0 0
    %898 = vmatprep.subr.bf16.mxu0 0
    %899 = vmatpush1.bf16.msra.mxu0 0
    %900 = vmatprep.subr.bf16.mxu0 0
    %901 = vmatpush1.bf16.msra.mxu0 0
    %902 = vmatprep.mubr.bf16.mxu0 0
    %903 = vmatmul.mubr.bf16.gmra.mrb[0].mxu0 %v859
    %v904 = vpop.f32.mrb[0].mxu0
    %v905 = vadd.f32 0.0, %v904
    %v906 = vpop.f32.mrb[0].mxu0
    %v907 = vpop.f32.mrb[0].mxu0
    %v908 = vadd.f32 0.0, %v907
    %v909 = vpop.f32.mrb[0].mxu0
    %910 = vmatprep.mubr.bf16.mxu0 0
    %911 = vmatmul.mubr.bf16.gmra.mrb[0].mxu0 %v862
    %v912 = vpop.f32.mrb[0].mxu0
    %v913 = vadd.f32 0.0, %v912
    %v914 = vpop.f32.mrb[0].mxu0
    %v915 = vpop.f32.mrb[0].mxu0
    %v916 = vadd.f32 0.0, %v915
    %v917 = vpop.f32.mrb[0].mxu0
    %918 = vmatprep.mubr.bf16.mxu0 0
    %919 = vmatmul.mubr.bf16.gmra.mrb[0].mxu0 %v865
    %v920 = vpop.f32.mrb[0].mxu0
    %v921 = vadd.f32 0.0, %v920
    %v922 = vpop.f32.mrb[0].mxu0
    %v923 = vpop.f32.mrb[0].mxu0
    %v924 = vadd.f32 0.0, %v923
    %v925 = vpop.f32.mrb[0].mxu0
    %926 = vmatprep.mubr.bf16.mxu0 0
    %927 = vmatmul.mubr.bf16.gmra.mrb[0].mxu0 %v868
    %v928 = vpop.f32.mrb[0].mxu0
    %v929 = vadd.f32 0.0, %v928
    %v930 = vpop.f32.mrb[0].mxu0
    %v931 = vpop.f32.mrb[0].mxu0
    %v932 = vadd.f32 0.0, %v931
    %v933 = vpop.f32.mrb[0].mxu0
    %934 = vdwg.mxu0
    %v935 = vpack.c.bf16 %v908, %v905
    %v936 = vpack.c.bf16 %v916, %v913
    %v937 = vpack.c.bf16 %v924, %v921
    %v938 = vpack.c.bf16 %v932, %v929
    %943 = vrot.lane.b32.xlu0 %v647, 120
    %v944 = vpop.permute.xlu0 %943
    %945 = vrot.lane.b32.xlu0 %v648, 120
    %v946 = vpop.permute.xlu0 %945
    %947 = vrot.lane.b32.xlu0 %v649, 120
    %v948 = vpop.permute.xlu0 %947
    %949 = vrot.lane.b32.xlu0 %v650, 120
    %v950 = vpop.permute.xlu0 %949
    %955 = vrot.lane.b32.xlu0 %v655, 120
    %v956 = vpop.permute.xlu0 %955
    %957 = vrot.lane.b32.xlu0 %v656, 120
    %v958 = vpop.permute.xlu0 %957
    %959 = vrot.lane.b32.xlu0 %v657, 120
    %v960 = vpop.permute.xlu0 %959
    %961 = vrot.lane.b32.xlu0 %v658, 120
    %v962 = vpop.permute.xlu0 %961
    %v964 = vsel %vm675, %v944, 0
    %v967 = vsel %vm675, %v946, 0
    %v970 = vsel %vm675, %v948, 0
    %v973 = vsel %vm675, %v950, 0
    %v976 = vsel %vm675, %v956, 0
    %v979 = vsel %vm675, %v958, 0
    %v982 = vsel %vm675, %v960, 0
    %v985 = vsel %vm675, %v962, 0
    %987 = vmatprep.subr.bf16.mxu0 0
    %988 = vmatpush1.bf16.xpose.msra.mxu0 %v976
    %989 = vmatprep.subr.bf16.mxu0 0
    %990 = vmatpush1.bf16.xpose.msra.mxu0 %v979
    %991 = vmatprep.subr.bf16.mxu0 0
    %992 = vmatpush1.bf16.xpose.msra.mxu0 %v982
    %993 = vmatprep.subr.bf16.mxu0 0
    %994 = vmatpush1.bf16.xpose.msra.mxu0 %v985
    %995 = vmatprep.subr.bf16.mxu0 0
    %996 = vmatpush1.bf16.xpose.msra.mxu0 0
    %997 = vmatprep.subr.bf16.mxu0 0
    %998 = vmatpush1.bf16.xpose.msra.mxu0 0
    %999 = vmatprep.subr.bf16.mxu0 0
    %1000 = vmatpush1.bf16.xpose.msra.mxu0 0
    %1001 = vmatprep.subr.bf16.mxu0 0
    %1002 = vmatpush1.bf16.xpose.msra.mxu0 0
    %1003 = vmatprep.subr.bf16.mxu0 0
    %1004 = vmatpush1.bf16.xpose.msra.mxu0 0
    %1005 = vmatprep.subr.bf16.mxu0 0
    %1006 = vmatpush1.bf16.xpose.msra.mxu0 0
    %1007 = vmatprep.subr.bf16.mxu0 0
    %1008 = vmatpush1.bf16.xpose.msra.mxu0 0
    %1009 = vmatprep.subr.bf16.mxu0 0
    %1010 = vmatpush1.bf16.xpose.msra.mxu0 0
    %1011 = vmatprep.subr.bf16.mxu0 0
    %1012 = vmatpush1.bf16.xpose.msra.mxu0 0
    %1013 = vmatprep.subr.bf16.mxu0 0
    %1014 = vmatpush1.bf16.xpose.msra.mxu0 0
    %1015 = vmatprep.subr.bf16.mxu0 0
    %1016 = vmatpush1.bf16.xpose.msra.mxu0 0
    %1017 = vmatprep.subr.bf16.mxu0 0
    %1018 = vmatpush1.bf16.xpose.msra.mxu0 0
    %1019 = vmatprep.mubr.bf16.mxu0 0
    %1020 = vmatmul.mubr.bf16.gmra.mrb[0].mxu0 %v964
    %v1021 = vpop.f32.mrb[0].mxu0
    %v1022 = vadd.f32 0.0, %v1021
    %v1023 = vpop.f32.mrb[0].mxu0
    %v1024 = vpop.f32.mrb[0].mxu0
    %v1025 = vadd.f32 0.0, %v1024
    %v1026 = vpop.f32.mrb[0].mxu0
    %1027 = vmatprep.mubr.bf16.mxu0 0
    %1028 = vmatmul.mubr.bf16.gmra.mrb[0].mxu0 %v967
    %v1029 = vpop.f32.mrb[0].mxu0
    %v1030 = vadd.f32 0.0, %v1029
    %v1031 = vpop.f32.mrb[0].mxu0
    %v1032 = vpop.f32.mrb[0].mxu0
    %v1033 = vadd.f32 0.0, %v1032
    %v1034 = vpop.f32.mrb[0].mxu0
    %1035 = vmatprep.mubr.bf16.mxu0 0
    %1036 = vmatmul.mubr.bf16.gmra.mrb[0].mxu0 %v970
    %v1037 = vpop.f32.mrb[0].mxu0
    %v1038 = vadd.f32 0.0, %v1037
    %v1039 = vpop.f32.mrb[0].mxu0
    %v1040 = vpop.f32.mrb[0].mxu0
    %v1041 = vadd.f32 0.0, %v1040
    %v1042 = vpop.f32.mrb[0].mxu0
    %1043 = vmatprep.mubr.bf16.mxu0 0
    %1044 = vmatmul.mubr.bf16.gmra.mrb[0].mxu0 %v973
    %v1045 = vpop.f32.mrb[0].mxu0
    %v1046 = vadd.f32 0.0, %v1045
    %v1047 = vpop.f32.mrb[0].mxu0
    %v1048 = vpop.f32.mrb[0].mxu0
    %v1049 = vadd.f32 0.0, %v1048
    %v1050 = vpop.f32.mrb[0].mxu0
    %1051 = vdwg.mxu0
    %v1052 = vsel %vm765, %v1022, -inf
    %1053 = vmax.xlane.f32.xlu0 %v1052
    %v1054 = vpop.xlane.xlu0 %1053
    %v1055 = vsel %vm765, %v1025, -inf
    %1056 = vmax.xlane.f32.xlu0 %v1055
    %v1057 = vpop.xlane.xlu0 %1056
    %v1058 = vsel %vm765, %v1030, -inf
    %1059 = vmax.xlane.f32.xlu0 %v1058
    %v1060 = vpop.xlane.xlu0 %1059
    %v1061 = vsel %vm765, %v1033, -inf
    %1062 = vmax.xlane.f32.xlu0 %v1061
    %v1063 = vpop.xlane.xlu0 %1062
    %v1064 = vsel %vm765, %v1038, -inf
    %1065 = vmax.xlane.f32.xlu0 %v1064
    %v1066 = vpop.xlane.xlu0 %1065
    %v1067 = vsel %vm765, %v1041, -inf
    %1068 = vmax.xlane.f32.xlu0 %v1067
    %v1069 = vpop.xlane.xlu0 %1068
    %v1070 = vsel %vm765, %v1046, -inf
    %1071 = vmax.xlane.f32.xlu0 %v1070
    %v1072 = vpop.xlane.xlu0 %1071
    %v1073 = vsel %vm765, %v1049, -inf
    %1074 = vmax.xlane.f32.xlu0 %v1073
    %v1075 = vpop.xlane.xlu0 %1074
    %v1076 = vsub.f32 %v1022, %v1054
    %v1077 = vsub.f32 %v1025, %v1057
    %v1078 = vsub.f32 %v1030, %v1060
    %v1079 = vsub.f32 %v1033, %v1063
    %v1080 = vsub.f32 %v1038, %v1066
    %v1081 = vsub.f32 %v1041, %v1069
    %v1082 = vsub.f32 %v1046, %v1072
    %v1083 = vsub.f32 %v1049, %v1075
    %v1084 = vmul.f32 %v1076, 1.442695
    %v1085 = vpow.pop %v1084
    %v1086 = vmul.f32 %v1077, 1.442695
    %v1087 = vpow.pop %v1086
    %v1088 = vmul.f32 %v1078, 1.442695
    %v1089 = vpow.pop %v1088
    %v1090 = vmul.f32 %v1079, 1.442695
    %v1091 = vpow.pop %v1090
    %v1092 = vmul.f32 %v1080, 1.442695
    %v1093 = vpow.pop %v1092
    %v1094 = vmul.f32 %v1081, 1.442695
    %v1095 = vpow.pop %v1094
    %v1096 = vmul.f32 %v1082, 1.442695
    %v1097 = vpow.pop %v1096
    %v1098 = vmul.f32 %v1083, 1.442695
    %v1099 = vpow.pop %v1098
    %v1100 = vsel %vm765, %v1085, 0.0
    %1101 = vadd.xlane.f32.xlu0 %v1100
    %v1102 = vpop.xlane.xlu0 %1101
    %v1103 = vsel %vm765, %v1087, 0.0
    %1104 = vadd.xlane.f32.xlu0 %v1103
    %v1105 = vpop.xlane.xlu0 %1104
    %v1106 = vsel %vm765, %v1089, 0.0
    %1107 = vadd.xlane.f32.xlu0 %v1106
    %v1108 = vpop.xlane.xlu0 %1107
    %v1109 = vsel %vm765, %v1091, 0.0
    %1110 = vadd.xlane.f32.xlu0 %v1109
    %v1111 = vpop.xlane.xlu0 %1110
    %v1112 = vsel %vm765, %v1093, 0.0
    %1113 = vadd.xlane.f32.xlu0 %v1112
    %v1114 = vpop.xlane.xlu0 %1113
    %v1115 = vsel %vm765, %v1095, 0.0
    %1116 = vadd.xlane.f32.xlu0 %v1115
    %v1117 = vpop.xlane.xlu0 %1116
    %v1118 = vsel %vm765, %v1097, 0.0
    %1119 = vadd.xlane.f32.xlu0 %v1118
    %v1120 = vpop.xlane.xlu0 %1119
    %v1121 = vsel %vm765, %v1099, 0.0
    %1122 = vadd.xlane.f32.xlu0 %v1121
    %v1123 = vpop.xlane.xlu0 %1122
    %v1124 = vrcp.pop %v1102
    %v1125 = vrcp.pop %v1105
    %v1126 = vrcp.pop %v1108
    %v1127 = vrcp.pop %v1111
    %v1128 = vrcp.pop %v1114
    %v1129 = vrcp.pop %v1117
    %v1130 = vrcp.pop %v1120
    %v1131 = vrcp.pop %v1123
    %v1132 = vmul.f32 %v1085, %v1124
    %v1133 = vmul.f32 %v1087, %v1125
    %v1134 = vmul.f32 %v1089, %v1126
    %v1135 = vmul.f32 %v1091, %v1127
    %v1136 = vmul.f32 %v1093, %v1128
    %v1137 = vmul.f32 %v1095, %v1129
    %v1138 = vmul.f32 %v1097, %v1130
    %v1139 = vmul.f32 %v1099, %v1131
    %v1140 = vpack.c.bf16 %v1133, %v1132
    %v1141 = vpack.c.bf16 %v1135, %v1134
    %v1142 = vpack.c.bf16 %v1137, %v1136
    %v1143 = vpack.c.bf16 %v1139, %v1138
    %1148 = vrot.lane.b32.xlu0 %v663, 120
    %v1149 = vpop.permute.xlu0 %1148
    %1150 = vrot.lane.b32.xlu0 %v664, 120
    %v1151 = vpop.permute.xlu0 %1150
    %1152 = vrot.lane.b32.xlu0 %v665, 120
    %v1153 = vpop.permute.xlu0 %1152
    %1154 = vrot.lane.b32.xlu0 %v666, 120
    %v1155 = vpop.permute.xlu0 %1154
    %v1161 = vsel %vm765, %v1140, 0
    %v1164 = vsel %vm765, %v1141, 0
    %v1167 = vsel %vm765, %v1142, 0
    %v1170 = vsel %vm765, %v1143, 0
    %1172 = vmatprep.subr.bf16.mxu0 0
    %1173 = vmatpush1.bf16.msra.mxu0 %v1149
    %1174 = vmatprep.subr.bf16.mxu0 0
    %1175 = vmatpush1.bf16.msra.mxu0 %v1151
    %1176 = vmatprep.subr.bf16.mxu0 0
    %1177 = vmatpush1.bf16.msra.mxu0 %v1153
    %1178 = vmatprep.subr.bf16.mxu0 0
    %1179 = vmatpush1.bf16.msra.mxu0 %v1155
    %1180 = vmatprep.subr.bf16.mxu0 0
    %1181 = vmatpush1.bf16.msra.mxu0 0
    %1182 = vmatprep.subr.bf16.mxu0 0
    %1183 = vmatpush1.bf16.msra.mxu0 0
    %1184 = vmatprep.subr.bf16.mxu0 0
    %1185 = vmatpush1.bf16.msra.mxu0 0
    %1186 = vmatprep.subr.bf16.mxu0 0
    %1187 = vmatpush1.bf16.msra.mxu0 0
    %1188 = vmatprep.subr.bf16.mxu0 0
    %1189 = vmatpush1.bf16.msra.mxu0 0
    %1190 = vmatprep.subr.bf16.mxu0 0
    %1191 = vmatpush1.bf16.msra.mxu0 0
    %1192 = vmatprep.subr.bf16.mxu0 0
    %1193 = vmatpush1.bf16.msra.mxu0 0
    %1194 = vmatprep.subr.bf16.mxu0 0
    %1195 = vmatpush1.bf16.msra.mxu0 0
    %1196 = vmatprep.subr.bf16.mxu0 0
    %1197 = vmatpush1.bf16.msra.mxu0 0
    %1198 = vmatprep.subr.bf16.mxu0 0
    %1199 = vmatpush1.bf16.msra.mxu0 0
    %1200 = vmatprep.subr.bf16.mxu0 0
    %1201 = vmatpush1.bf16.msra.mxu0 0
    %1202 = vmatprep.subr.bf16.mxu0 0
    %1203 = vmatpush1.bf16.msra.mxu0 0
    %1204 = vmatprep.mubr.bf16.mxu0 0
    %1205 = vmatmul.mubr.bf16.gmra.mrb[0].mxu0 %v1161
    %v1206 = vpop.f32.mrb[0].mxu0
    %v1207 = vadd.f32 0.0, %v1206
    %v1208 = vpop.f32.mrb[0].mxu0
    %v1209 = vpop.f32.mrb[0].mxu0
    %v1210 = vadd.f32 0.0, %v1209
    %v1211 = vpop.f32.mrb[0].mxu0
    %1212 = vmatprep.mubr.bf16.mxu0 0
    %1213 = vmatmul.mubr.bf16.gmra.mrb[0].mxu0 %v1164
    %v1214 = vpop.f32.mrb[0].mxu0
    %v1215 = vadd.f32 0.0, %v1214
    %v1216 = vpop.f32.mrb[0].mxu0
    %v1217 = vpop.f32.mrb[0].mxu0
    %v1218 = vadd.f32 0.0, %v1217
    %v1219 = vpop.f32.mrb[0].mxu0
    %1220 = vmatprep.mubr.bf16.mxu0 0
    %1221 = vmatmul.mubr.bf16.gmra.mrb[0].mxu0 %v1167
    %v1222 = vpop.f32.mrb[0].mxu0
    %v1223 = vadd.f32 0.0, %v1222
    %v1224 = vpop.f32.mrb[0].mxu0
    %v1225 = vpop.f32.mrb[0].mxu0
    %v1226 = vadd.f32 0.0, %v1225
    %v1227 = vpop.f32.mrb[0].mxu0
    %1228 = vmatprep.mubr.bf16.mxu0 0
    %1229 = vmatmul.mubr.bf16.gmra.mrb[0].mxu0 %v1170
    %v1230 = vpop.f32.mrb[0].mxu0
    %v1231 = vadd.f32 0.0, %v1230
    %v1232 = vpop.f32.mrb[0].mxu0
    %v1233 = vpop.f32.mrb[0].mxu0
    %v1234 = vadd.f32 0.0, %v1233
    %v1235 = vpop.f32.mrb[0].mxu0
    %1236 = vdwg.mxu0
    %v1237 = vpack.c.bf16 %v1210, %v1207
    %v1238 = vpack.c.bf16 %v1218, %v1215
    %v1239 = vpack.c.bf16 %v1226, %v1223
    %v1240 = vpack.c.bf16 %v1234, %v1231
    %v1242 = vsel %vm675, %v1237, 0
    %v1245 = vsel %vm675, %v1238, 0
    %v1248 = vsel %vm675, %v1239, 0
    %v1251 = vsel %vm675, %v1240, 0
    %vm1253 = vcmask 1043456
    %v1255 = vsel %vm1253, %v672, 0
    %1257 = vmatprep.subr.bf16.mxu0 0
    %1258 = vmatpush1.bf16.msra.mxu0 %v1255
    %1259 = vmatprep.subr.bf16.mxu0 0
    %1260 = vmatpush1.bf16.msra.mxu0 0
    %1261 = vmatprep.subr.bf16.mxu0 0
    %1262 = vmatpush1.bf16.msra.mxu0 0
    %1263 = vmatprep.subr.bf16.mxu0 0
    %1264 = vmatpush1.bf16.msra.mxu0 0
    %1265 = vmatprep.subr.bf16.mxu0 0
    %1266 = vmatpush1.bf16.msra.mxu0 0
    %1267 = vmatprep.subr.bf16.mxu0 0
    %1268 = vmatpush1.bf16.msra.mxu0 0
    %1269 = vmatprep.subr.bf16.mxu0 0
    %1270 = vmatpush1.bf16.msra.mxu0 0
    %1271 = vmatprep.subr.bf16.mxu0 0
    %1272 = vmatpush1.bf16.msra.mxu0 0
    %1273 = vmatprep.subr.bf16.mxu0 0
    %1274 = vmatpush1.bf16.msra.mxu0 0
    %1275 = vmatprep.subr.bf16.mxu0 0
    %1276 = vmatpush1.bf16.msra.mxu0 0
    %1277 = vmatprep.subr.bf16.mxu0 0
    %1278 = vmatpush1.bf16.msra.mxu0 0
    %1279 = vmatprep.subr.bf16.mxu0 0
    %1280 = vmatpush1.bf16.msra.mxu0 0
    %1281 = vmatprep.subr.bf16.mxu0 0
    %1282 = vmatpush1.bf16.msra.mxu0 0
    %1283 = vmatprep.subr.bf16.mxu0 0
    %1284 = vmatpush1.bf16.msra.mxu0 0
    %1285 = vmatprep.subr.bf16.mxu0 0
    %1286 = vmatpush1.bf16.msra.mxu0 0
    %1287 = vmatprep.subr.bf16.mxu0 0
    %1288 = vmatpush1.bf16.msra.mxu0 0
    %1289 = vmatprep.mubr.bf16.mxu0 0
    %1290 = vmatmul.mubr.bf16.gmra.mrb[0].mxu0 %v1242
    %v1291 = vpop.f32.mrb[0].mxu0
    %v1292 = vadd.f32 0.0, %v1291
    %v1293 = vpop.f32.mrb[0].mxu0
    %v1294 = vpop.f32.mrb[0].mxu0
    %v1295 = vadd.f32 0.0, %v1294
    %v1296 = vpop.f32.mrb[0].mxu0
    %1297 = vmatprep.mubr.bf16.mxu0 0
    %1298 = vmatmul.mubr.bf16.gmra.mrb[0].mxu0 %v1245
    %v1299 = vpop.f32.mrb[0].mxu0
    %v1300 = vadd.f32 0.0, %v1299
    %v1301 = vpop.f32.mrb[0].mxu0
    %v1302 = vpop.f32.mrb[0].mxu0
    %v1303 = vadd.f32 0.0, %v1302
    %v1304 = vpop.f32.mrb[0].mxu0
    %1305 = vmatprep.mubr.bf16.mxu0 0
    %1306 = vmatmul.mubr.bf16.gmra.mrb[0].mxu0 %v1248
    %v1307 = vpop.f32.mrb[0].mxu0
    %v1308 = vadd.f32 0.0, %v1307
    %v1309 = vpop.f32.mrb[0].mxu0
    %v1310 = vpop.f32.mrb[0].mxu0
    %v1311 = vadd.f32 0.0, %v1310
    %v1312 = vpop.f32.mrb[0].mxu0
    %1313 = vmatprep.mubr.bf16.mxu0 0
    %1314 = vmatmul.mubr.bf16.gmra.mrb[0].mxu0 %v1251
    %v1315 = vpop.f32.mrb[0].mxu0
    %v1316 = vadd.f32 0.0, %v1315
    %v1317 = vpop.f32.mrb[0].mxu0
    %v1318 = vpop.f32.mrb[0].mxu0
    %v1319 = vadd.f32 0.0, %v1318
    %v1320 = vpop.f32.mrb[0].mxu0
    %1321 = vdwg.mxu0
    %v1323 = vsel %vm675, %v935, 0
    %v1326 = vsel %vm675, %v936, 0
    %v1329 = vsel %vm675, %v937, 0
    %v1332 = vsel %vm675, %v938, 0
    %v1335 = vsel %vm1253, %v671, 0
    %1337 = vmatprep.subr.bf16.mxu0 0
    %1338 = vmatpush1.bf16.msra.mxu0 %v1335
    %1339 = vmatprep.subr.bf16.mxu0 0
    %1340 = vmatpush1.bf16.msra.mxu0 0
    %1341 = vmatprep.subr.bf16.mxu0 0
    %1342 = vmatpush1.bf16.msra.mxu0 0
    %1343 = vmatprep.subr.bf16.mxu0 0
    %1344 = vmatpush1.bf16.msra.mxu0 0
    %1345 = vmatprep.subr.bf16.mxu0 0
    %1346 = vmatpush1.bf16.msra.mxu0 0
    %1347 = vmatprep.subr.bf16.mxu0 0
    %1348 = vmatpush1.bf16.msra.mxu0 0
    %1349 = vmatprep.subr.bf16.mxu0 0
    %1350 = vmatpush1.bf16.msra.mxu0 0
    %1351 = vmatprep.subr.bf16.mxu0 0
    %1352 = vmatpush1.bf16.msra.mxu0 0
    %1353 = vmatprep.subr.bf16.mxu0 0
    %1354 = vmatpush1.bf16.msra.mxu0 0
    %1355 = vmatprep.subr.bf16.mxu0 0
    %1356 = vmatpush1.bf16.msra.mxu0 0
    %1357 = vmatprep.subr.bf16.mxu0 0
    %1358 = vmatpush1.bf16.msra.mxu0 0
    %1359 = vmatprep.subr.bf16.mxu0 0
    %1360 = vmatpush1.bf16.msra.mxu0 0
    %1361 = vmatprep.subr.bf16.mxu0 0
    %1362 = vmatpush1.bf16.msra.mxu0 0
    %1363 = vmatprep.subr.bf16.mxu0 0
    %1364 = vmatpush1.bf16.msra.mxu0 0
    %1365 = vmatprep.subr.bf16.mxu0 0
    %1366 = vmatpush1.bf16.msra.mxu0 0
    %1367 = vmatprep.subr.bf16.mxu0 0
    %1368 = vmatpush1.bf16.msra.mxu0 0
    %1369 = vmatprep.mubr.bf16.mxu0 0
    %1370 = vmatmul.mubr.bf16.gmra.mrb[0].mxu0 %v1323
    %v1371 = vpop.f32.mrb[0].mxu0
    %v1372 = vadd.f32 %v1292, %v1371
    %v1373 = vpop.f32.mrb[0].mxu0
    %v1374 = vpop.f32.mrb[0].mxu0
    %v1375 = vadd.f32 %v1295, %v1374
    %v1376 = vpop.f32.mrb[0].mxu0
    %1377 = vmatprep.mubr.bf16.mxu0 0
    %1378 = vmatmul.mubr.bf16.gmra.mrb[0].mxu0 %v1326
    %v1379 = vpop.f32.mrb[0].mxu0
    %v1380 = vadd.f32 %v1300, %v1379
    %v1381 = vpop.f32.mrb[0].mxu0
    %v1382 = vpop.f32.mrb[0].mxu0
    %v1383 = vadd.f32 %v1303, %v1382
    %v1384 = vpop.f32.mrb[0].mxu0
    %1385 = vmatprep.mubr.bf16.mxu0 0
    %1386 = vmatmul.mubr.bf16.gmra.mrb[0].mxu0 %v1329
    %v1387 = vpop.f32.mrb[0].mxu0
    %v1388 = vadd.f32 %v1308, %v1387
    %v1389 = vpop.f32.mrb[0].mxu0
    %v1390 = vpop.f32.mrb[0].mxu0
    %v1391 = vadd.f32 %v1311, %v1390
    %v1392 = vpop.f32.mrb[0].mxu0
    %1393 = vmatprep.mubr.bf16.mxu0 0
    %1394 = vmatmul.mubr.bf16.gmra.mrb[0].mxu0 %v1332
    %v1395 = vpop.f32.mrb[0].mxu0
    %v1396 = vadd.f32 %v1316, %v1395
    %v1397 = vpop.f32.mrb[0].mxu0
    %v1398 = vpop.f32.mrb[0].mxu0
    %v1399 = vadd.f32 %v1319, %v1398
    %v1400 = vpop.f32.mrb[0].mxu0
    %1401 = vdwg.mxu0
    %1402 = vrot.lane.b32.xlu0 %v647, 112
    %v1403 = vpop.permute.xlu0 %1402
    %1404 = vrot.lane.b32.xlu0 %v648, 112
    %v1405 = vpop.permute.xlu0 %1404
    %1406 = vrot.lane.b32.xlu0 %v649, 112
    %v1407 = vpop.permute.xlu0 %1406
    %1408 = vrot.lane.b32.xlu0 %v650, 112
    %v1409 = vpop.permute.xlu0 %1408
    %1410 = vrot.lane.b32.xlu0 %v655, 112
    %v1411 = vpop.permute.xlu0 %1410
    %1412 = vrot.lane.b32.xlu0 %v656, 112
    %v1413 = vpop.permute.xlu0 %1412
    %1414 = vrot.lane.b32.xlu0 %v657, 112
    %v1415 = vpop.permute.xlu0 %1414
    %1416 = vrot.lane.b32.xlu0 %v658, 112
    %v1417 = vpop.permute.xlu0 %1416
    %v1419 = vsel %vm675, %v1403, 0
    %v1422 = vsel %vm675, %v1405, 0
    %v1425 = vsel %vm675, %v1407, 0
    %v1428 = vsel %vm675, %v1409, 0
    %v1431 = vsel %vm675, %v1411, 0
    %v1434 = vsel %vm675, %v1413, 0
    %v1437 = vsel %vm675, %v1415, 0
    %v1440 = vsel %vm675, %v1417, 0
    %1442 = vmatprep.subr.bf16.mxu0 0
    %1443 = vmatpush1.bf16.xpose.msra.mxu0 %v1431
    %1444 = vmatprep.subr.bf16.mxu0 0
    %1445 = vmatpush1.bf16.xpose.msra.mxu0 %v1434
    %1446 = vmatprep.subr.bf16.mxu0 0
    %1447 = vmatpush1.bf16.xpose.msra.mxu0 %v1437
    %1448 = vmatprep.subr.bf16.mxu0 0
    %1449 = vmatpush1.bf16.xpose.msra.mxu0 %v1440
    %1450 = vmatprep.subr.bf16.mxu0 0
    %1451 = vmatpush1.bf16.xpose.msra.mxu0 0
    %1452 = vmatprep.subr.bf16.mxu0 0
    %1453 = vmatpush1.bf16.xpose.msra.mxu0 0
    %1454 = vmatprep.subr.bf16.mxu0 0
    %1455 = vmatpush1.bf16.xpose.msra.mxu0 0
    %1456 = vmatprep.subr.bf16.mxu0 0
    %1457 = vmatpush1.bf16.xpose.msra.mxu0 0
    %1458 = vmatprep.subr.bf16.mxu0 0
    %1459 = vmatpush1.bf16.xpose.msra.mxu0 0
    %1460 = vmatprep.subr.bf16.mxu0 0
    %1461 = vmatpush1.bf16.xpose.msra.mxu0 0
    %1462 = vmatprep.subr.bf16.mxu0 0
    %1463 = vmatpush1.bf16.xpose.msra.mxu0 0
    %1464 = vmatprep.subr.bf16.mxu0 0
    %1465 = vmatpush1.bf16.xpose.msra.mxu0 0
    %1466 = vmatprep.subr.bf16.mxu0 0
    %1467 = vmatpush1.bf16.xpose.msra.mxu0 0
    %1468 = vmatprep.subr.bf16.mxu0 0
    %1469 = vmatpush1.bf16.xpose.msra.mxu0 0
    %1470 = vmatprep.subr.bf16.mxu0 0
    %1471 = vmatpush1.bf16.xpose.msra.mxu0 0
    %1472 = vmatprep.subr.bf16.mxu0 0
    %1473 = vmatpush1.bf16.xpose.msra.mxu0 0
    %1474 = vmatprep.mubr.bf16.mxu0 0
    %1475 = vmatmul.mubr.bf16.gmra.mrb[0].mxu0 %v1419
    %v1476 = vpop.f32.mrb[0].mxu0
    %v1477 = vadd.f32 0.0, %v1476
    %v1478 = vpop.f32.mrb[0].mxu0
    %v1479 = vpop.f32.mrb[0].mxu0
    %v1480 = vadd.f32 0.0, %v1479
    %v1481 = vpop.f32.mrb[0].mxu0
    %1482 = vmatprep.mubr.bf16.mxu0 0
    %1483 = vmatmul.mubr.bf16.gmra.mrb[0].mxu0 %v1422
    %v1484 = vpop.f32.mrb[0].mxu0
    %v1485 = vadd.f32 0.0, %v1484
    %v1486 = vpop.f32.mrb[0].mxu0
    %v1487 = vpop.f32.mrb[0].mxu0
    %v1488 = vadd.f32 0.0, %v1487
    %v1489 = vpop.f32.mrb[0].mxu0
    %1490 = vmatprep.mubr.bf16.mxu0 0
    %1491 = vmatmul.mubr.bf16.gmra.mrb[0].mxu0 %v1425
    %v1492 = vpop.f32.mrb[0].mxu0
    %v1493 = vadd.f32 0.0, %v1492
    %v1494 = vpop.f32.mrb[0].mxu0
    %v1495 = vpop.f32.mrb[0].mxu0
    %v1496 = vadd.f32 0.0, %v1495
    %v1497 = vpop.f32.mrb[0].mxu0
    %1498 = vmatprep.mubr.bf16.mxu0 0
    %1499 = vmatmul.mubr.bf16.gmra.mrb[0].mxu0 %v1428
    %v1500 = vpop.f32.mrb[0].mxu0
    %v1501 = vadd.f32 0.0, %v1500
    %v1502 = vpop.f32.mrb[0].mxu0
    %v1503 = vpop.f32.mrb[0].mxu0
    %v1504 = vadd.f32 0.0, %v1503
    %v1505 = vpop.f32.mrb[0].mxu0
    %1506 = vdwg.mxu0
    %v1507 = vsel %vm765, %v1477, -inf
    %1508 = vmax.xlane.f32.xlu0 %v1507
    %v1509 = vpop.xlane.xlu0 %1508
    %v1510 = vsel %vm765, %v1480, -inf
    %1511 = vmax.xlane.f32.xlu0 %v1510
    %v1512 = vpop.xlane.xlu0 %1511
    %v1513 = vsel %vm765, %v1485, -inf
    %1514 = vmax.xlane.f32.xlu0 %v1513
    %v1515 = vpop.xlane.xlu0 %1514
    %v1516 = vsel %vm765, %v1488, -inf
    %1517 = vmax.xlane.f32.xlu0 %v1516
    %v1518 = vpop.xlane.xlu0 %1517
    %v1519 = vsel %vm765, %v1493, -inf
    %1520 = vmax.xlane.f32.xlu0 %v1519
    %v1521 = vpop.xlane.xlu0 %1520
    %v1522 = vsel %vm765, %v1496, -inf
    %1523 = vmax.xlane.f32.xlu0 %v1522
    %v1524 = vpop.xlane.xlu0 %1523
    %v1525 = vsel %vm765, %v1501, -inf
    %1526 = vmax.xlane.f32.xlu0 %v1525
    %v1527 = vpop.xlane.xlu0 %1526
    %v1528 = vsel %vm765, %v1504, -inf
    %1529 = vmax.xlane.f32.xlu0 %v1528
    %v1530 = vpop.xlane.xlu0 %1529
    %v1531 = vsub.f32 %v1477, %v1509
    %v1532 = vsub.f32 %v1480, %v1512
    %v1533 = vsub.f32 %v1485, %v1515
    %v1534 = vsub.f32 %v1488, %v1518
    %v1535 = vsub.f32 %v1493, %v1521
    %v1536 = vsub.f32 %v1496, %v1524
    %v1537 = vsub.f32 %v1501, %v1527
    %v1538 = vsub.f32 %v1504, %v1530
    %v1539 = vmul.f32 %v1531, 1.442695
    %v1540 = vpow.pop %v1539
    %v1541 = vmul.f32 %v1532, 1.442695
    %v1542 = vpow.pop %v1541
    %v1543 = vmul.f32 %v1533, 1.442695
    %v1544 = vpow.pop %v1543
    %v1545 = vmul.f32 %v1534, 1.442695
    %v1546 = vpow.pop %v1545
    %v1547 = vmul.f32 %v1535, 1.442695
    %v1548 = vpow.pop %v1547
    %v1549 = vmul.f32 %v1536, 1.442695
    %v1550 = vpow.pop %v1549
    %v1551 = vmul.f32 %v1537, 1.442695
    %v1552 = vpow.pop %v1551
    %v1553 = vmul.f32 %v1538, 1.442695
    %v1554 = vpow.pop %v1553
    %v1555 = vsel %vm765, %v1540, 0.0
    %1556 = vadd.xlane.f32.xlu0 %v1555
    %v1557 = vpop.xlane.xlu0 %1556
    %v1558 = vsel %vm765, %v1542, 0.0
    %1559 = vadd.xlane.f32.xlu0 %v1558
    %v1560 = vpop.xlane.xlu0 %1559
    %v1561 = vsel %vm765, %v1544, 0.0
    %1562 = vadd.xlane.f32.xlu0 %v1561
    %v1563 = vpop.xlane.xlu0 %1562
    %v1564 = vsel %vm765, %v1546, 0.0
    %1565 = vadd.xlane.f32.xlu0 %v1564
    %v1566 = vpop.xlane.xlu0 %1565
    %v1567 = vsel %vm765, %v1548, 0.0
    %1568 = vadd.xlane.f32.xlu0 %v1567
    %v1569 = vpop.xlane.xlu0 %1568
    %v1570 = vsel %vm765, %v1550, 0.0
    %1571 = vadd.xlane.f32.xlu0 %v1570
    %v1572 = vpop.xlane.xlu0 %1571
    %v1573 = vsel %vm765, %v1552, 0.0
    %1574 = vadd.xlane.f32.xlu0 %v1573
    %v1575 = vpop.xlane.xlu0 %1574
    %v1576 = vsel %vm765, %v1554, 0.0
    %1577 = vadd.xlane.f32.xlu0 %v1576
    %v1578 = vpop.xlane.xlu0 %1577
    %v1579 = vrcp.pop %v1557
    %v1580 = vrcp.pop %v1560
    %v1581 = vrcp.pop %v1563
    %v1582 = vrcp.pop %v1566
    %v1583 = vrcp.pop %v1569
    %v1584 = vrcp.pop %v1572
    %v1585 = vrcp.pop %v1575
    %v1586 = vrcp.pop %v1578
    %v1587 = vmul.f32 %v1540, %v1579
    %v1588 = vmul.f32 %v1542, %v1580
    %v1589 = vmul.f32 %v1544, %v1581
    %v1590 = vmul.f32 %v1546, %v1582
    %v1591 = vmul.f32 %v1548, %v1583
    %v1592 = vmul.f32 %v1550, %v1584
    %v1593 = vmul.f32 %v1552, %v1585
    %v1594 = vmul.f32 %v1554, %v1586
    %v1595 = vpack.c.bf16 %v1588, %v1587
    %v1596 = vpack.c.bf16 %v1590, %v1589
    %v1597 = vpack.c.bf16 %v1592, %v1591
    %v1598 = vpack.c.bf16 %v1594, %v1593
    %1599 = vrot.lane.b32.xlu0 %v663, 112
    %v1600 = vpop.permute.xlu0 %1599
    %1601 = vrot.lane.b32.xlu0 %v664, 112
    %v1602 = vpop.permute.xlu0 %1601
    %1603 = vrot.lane.b32.xlu0 %v665, 112
    %v1604 = vpop.permute.xlu0 %1603
    %1605 = vrot.lane.b32.xlu0 %v666, 112
    %v1606 = vpop.permute.xlu0 %1605
    %v1612 = vsel %vm765, %v1595, 0
    %v1615 = vsel %vm765, %v1596, 0
    %v1618 = vsel %vm765, %v1597, 0
    %v1621 = vsel %vm765, %v1598, 0
    %1623 = vmatprep.subr.bf16.mxu0 0
    %1624 = vmatpush1.bf16.msra.mxu0 %v1600
    %1625 = vmatprep.subr.bf16.mxu0 0
    %1626 = vmatpush1.bf16.msra.mxu0 %v1602
    %1627 = vmatprep.subr.bf16.mxu0 0
    %1628 = vmatpush1.bf16.msra.mxu0 %v1604
    %1629 = vmatprep.subr.bf16.mxu0 0
    %1630 = vmatpush1.bf16.msra.mxu0 %v1606
    %1631 = vmatprep.subr.bf16.mxu0 0
    %1632 = vmatpush1.bf16.msra.mxu0 0
    %1633 = vmatprep.subr.bf16.mxu0 0
    %1634 = vmatpush1.bf16.msra.mxu0 0
    %1635 = vmatprep.subr.bf16.mxu0 0
    %1636 = vmatpush1.bf16.msra.mxu0 0
    %1637 = vmatprep.subr.bf16.mxu0 0
    %1638 = vmatpush1.bf16.msra.mxu0 0
    %1639 = vmatprep.subr.bf16.mxu0 0
    %1640 = vmatpush1.bf16.msra.mxu0 0
    %1641 = vmatprep.subr.bf16.mxu0 0
    %1642 = vmatpush1.bf16.msra.mxu0 0
    %1643 = vmatprep.subr.bf16.mxu0 0
    %1644 = vmatpush1.bf16.msra.mxu0 0
    %1645 = vmatprep.subr.bf16.mxu0 0
    %1646 = vmatpush1.bf16.msra.mxu0 0
    %1647 = vmatprep.subr.bf16.mxu0 0
    %1648 = vmatpush1.bf16.msra.mxu0 0
    %1649 = vmatprep.subr.bf16.mxu0 0
    %1650 = vmatpush1.bf16.msra.mxu0 0
    %1651 = vmatprep.subr.bf16.mxu0 0
    %1652 = vmatpush1.bf16.msra.mxu0 0
    %1653 = vmatprep.subr.bf16.mxu0 0
    %1654 = vmatpush1.bf16.msra.mxu0 0
    %1655 = vmatprep.mubr.bf16.mxu0 0
    %1656 = vmatmul.mubr.bf16.gmra.mrb[0].mxu0 %v1612
    %v1657 = vpop.f32.mrb[0].mxu0
    %v1658 = vadd.f32 0.0, %v1657
    %v1659 = vpop.f32.mrb[0].mxu0
    %v1660 = vpop.f32.mrb[0].mxu0
    %v1661 = vadd.f32 0.0, %v1660
    %v1662 = vpop.f32.mrb[0].mxu0
    %1663 = vmatprep.mubr.bf16.mxu0 0
    %1664 = vmatmul.mubr.bf16.gmra.mrb[0].mxu0 %v1615
    %v1665 = vpop.f32.mrb[0].mxu0
    %v1666 = vadd.f32 0.0, %v1665
    %v1667 = vpop.f32.mrb[0].mxu0
    %v1668 = vpop.f32.mrb[0].mxu0
    %v1669 = vadd.f32 0.0, %v1668
    %v1670 = vpop.f32.mrb[0].mxu0
    %1671 = vmatprep.mubr.bf16.mxu0 0
    %1672 = vmatmul.mubr.bf16.gmra.mrb[0].mxu0 %v1618
    %v1673 = vpop.f32.mrb[0].mxu0
    %v1674 = vadd.f32 0.0, %v1673
    %v1675 = vpop.f32.mrb[0].mxu0
    %v1676 = vpop.f32.mrb[0].mxu0
    %v1677 = vadd.f32 0.0, %v1676
    %v1678 = vpop.f32.mrb[0].mxu0
    %1679 = vmatprep.mubr.bf16.mxu0 0
    %1680 = vmatmul.mubr.bf16.gmra.mrb[0].mxu0 %v1621
    %v1681 = vpop.f32.mrb[0].mxu0
    %v1682 = vadd.f32 0.0, %v1681
    %v1683 = vpop.f32.mrb[0].mxu0
    %v1684 = vpop.f32.mrb[0].mxu0
    %v1685 = vadd.f32 0.0, %v1684
    %v1686 = vpop.f32.mrb[0].mxu0
    %1687 = vdwg.mxu0
    %v1688 = vpack.c.bf16 %v1661, %v1658
    %v1689 = vpack.c.bf16 %v1669, %v1666
    %v1690 = vpack.c.bf16 %v1677, %v1674
    %v1691 = vpack.c.bf16 %v1685, %v1682
    %v1693 = vsel %vm675, %v1688, 0
    %v1696 = vsel %vm675, %v1689, 0
    %v1699 = vsel %vm675, %v1690, 0
    %v1702 = vsel %vm675, %v1691, 0
    %v1705 = vsel %vm1253, %v673, 0
    %1707 = vmatprep.subr.bf16.mxu0 0
    %1708 = vmatpush1.bf16.msra.mxu0 %v1705
    %1709 = vmatprep.subr.bf16.mxu0 0
    %1710 = vmatpush1.bf16.msra.mxu0 0
    %1711 = vmatprep.subr.bf16.mxu0 0
    %1712 = vmatpush1.bf16.msra.mxu0 0
    %1713 = vmatprep.subr.bf16.mxu0 0
    %1714 = vmatpush1.bf16.msra.mxu0 0
    %1715 = vmatprep.subr.bf16.mxu0 0
    %1716 = vmatpush1.bf16.msra.mxu0 0
    %1717 = vmatprep.subr.bf16.mxu0 0
    %1718 = vmatpush1.bf16.msra.mxu0 0
    %1719 = vmatprep.subr.bf16.mxu0 0
    %1720 = vmatpush1.bf16.msra.mxu0 0
    %1721 = vmatprep.subr.bf16.mxu0 0
    %1722 = vmatpush1.bf16.msra.mxu0 0
    %1723 = vmatprep.subr.bf16.mxu0 0
    %1724 = vmatpush1.bf16.msra.mxu0 0
    %1725 = vmatprep.subr.bf16.mxu0 0
    %1726 = vmatpush1.bf16.msra.mxu0 0
    %1727 = vmatprep.subr.bf16.mxu0 0
    %1728 = vmatpush1.bf16.msra.mxu0 0
    %1729 = vmatprep.subr.bf16.mxu0 0
    %1730 = vmatpush1.bf16.msra.mxu0 0
    %1731 = vmatprep.subr.bf16.mxu0 0
    %1732 = vmatpush1.bf16.msra.mxu0 0
    %1733 = vmatprep.subr.bf16.mxu0 0
    %1734 = vmatpush1.bf16.msra.mxu0 0
    %1735 = vmatprep.subr.bf16.mxu0 0
    %1736 = vmatpush1.bf16.msra.mxu0 0
    %1737 = vmatprep.subr.bf16.mxu0 0
    %1738 = vmatpush1.bf16.msra.mxu0 0
    %1739 = vmatprep.mubr.bf16.mxu0 0
    %1740 = vmatmul.mubr.bf16.gmra.mrb[0].mxu0 %v1693
    %v1741 = vpop.f32.mrb[0].mxu0
    %v1742 = vadd.f32 0.0, %v1741
    %v1743 = vpop.f32.mrb[0].mxu0
    %v1744 = vpop.f32.mrb[0].mxu0
    %v1745 = vadd.f32 0.0, %v1744
    %v1746 = vpop.f32.mrb[0].mxu0
    %1747 = vmatprep.mubr.bf16.mxu0 0
    %1748 = vmatmul.mubr.bf16.gmra.mrb[0].mxu0 %v1696
    %v1749 = vpop.f32.mrb[0].mxu0
    %v1750 = vadd.f32 0.0, %v1749
    %v1751 = vpop.f32.mrb[0].mxu0
    %v1752 = vpop.f32.mrb[0].mxu0
    %v1753 = vadd.f32 0.0, %v1752
    %v1754 = vpop.f32.mrb[0].mxu0
    %1755 = vmatprep.mubr.bf16.mxu0 0
    %1756 = vmatmul.mubr.bf16.gmra.mrb[0].mxu0 %v1699
    %v1757 = vpop.f32.mrb[0].mxu0
    %v1758 = vadd.f32 0.0, %v1757
    %v1759 = vpop.f32.mrb[0].mxu0
    %v1760 = vpop.f32.mrb[0].mxu0
    %v1761 = vadd.f32 0.0, %v1760
    %v1762 = vpop.f32.mrb[0].mxu0
    %1763 = vmatprep.mubr.bf16.mxu0 0
    %1764 = vmatmul.mubr.bf16.gmra.mrb[0].mxu0 %v1702
    %v1765 = vpop.f32.mrb[0].mxu0
    %v1766 = vadd.f32 0.0, %v1765
    %v1767 = vpop.f32.mrb[0].mxu0
    %v1768 = vpop.f32.mrb[0].mxu0
    %v1769 = vadd.f32 0.0, %v1768
    %v1770 = vpop.f32.mrb[0].mxu0
    %1771 = vdwg.mxu0
    %v1772 = vadd.f32 %v1372, %v1742
    %v1773 = vadd.f32 %v1375, %v1745
    %v1774 = vadd.f32 %v1380, %v1750
    %v1775 = vadd.f32 %v1383, %v1753
    %v1776 = vadd.f32 %v1388, %v1758
    %v1777 = vadd.f32 %v1391, %v1761
    %v1778 = vadd.f32 %v1396, %v1766
    %v1779 = vadd.f32 %v1399, %v1769
    %1780 = vrot.lane.b32.xlu0 %v647, 104
    %v1781 = vpop.permute.xlu0 %1780
    %1782 = vrot.lane.b32.xlu0 %v648, 104
    %v1783 = vpop.permute.xlu0 %1782
    %1784 = vrot.lane.b32.xlu0 %v649, 104
    %v1785 = vpop.permute.xlu0 %1784
    %1786 = vrot.lane.b32.xlu0 %v650, 104
    %v1787 = vpop.permute.xlu0 %1786
    %1788 = vrot.lane.b32.xlu0 %v655, 104
    %v1789 = vpop.permute.xlu0 %1788
    %1790 = vrot.lane.b32.xlu0 %v656, 104
    %v1791 = vpop.permute.xlu0 %1790
    %1792 = vrot.lane.b32.xlu0 %v657, 104
    %v1793 = vpop.permute.xlu0 %1792
    %1794 = vrot.lane.b32.xlu0 %v658, 104
    %v1795 = vpop.permute.xlu0 %1794
    %v1797 = vsel %vm675, %v1781, 0
    %v1800 = vsel %vm675, %v1783, 0
    %v1803 = vsel %vm675, %v1785, 0
    %v1806 = vsel %vm675, %v1787, 0
    %v1809 = vsel %vm675, %v1789, 0
    %v1812 = vsel %vm675, %v1791, 0
    %v1815 = vsel %vm675, %v1793, 0
    %v1818 = vsel %vm675, %v1795, 0
    %1820 = vmatprep.subr.bf16.mxu0 0
    %1821 = vmatpush1.bf16.xpose.msra.mxu0 %v1809
    %1822 = vmatprep.subr.bf16.mxu0 0
    %1823 = vmatpush1.bf16.xpose.msra.mxu0 %v1812
    %1824 = vmatprep.subr.bf16.mxu0 0
    %1825 = vmatpush1.bf16.xpose.msra.mxu0 %v1815
    %1826 = vmatprep.subr.bf16.mxu0 0
    %1827 = vmatpush1.bf16.xpose.msra.mxu0 %v1818
    %1828 = vmatprep.subr.bf16.mxu0 0
    %1829 = vmatpush1.bf16.xpose.msra.mxu0 0
    %1830 = vmatprep.subr.bf16.mxu0 0
    %1831 = vmatpush1.bf16.xpose.msra.mxu0 0
    %1832 = vmatprep.subr.bf16.mxu0 0
    %1833 = vmatpush1.bf16.xpose.msra.mxu0 0
    %1834 = vmatprep.subr.bf16.mxu0 0
    %1835 = vmatpush1.bf16.xpose.msra.mxu0 0
    %1836 = vmatprep.subr.bf16.mxu0 0
    %1837 = vmatpush1.bf16.xpose.msra.mxu0 0
    %1838 = vmatprep.subr.bf16.mxu0 0
    %1839 = vmatpush1.bf16.xpose.msra.mxu0 0
    %1840 = vmatprep.subr.bf16.mxu0 0
    %1841 = vmatpush1.bf16.xpose.msra.mxu0 0
    %1842 = vmatprep.subr.bf16.mxu0 0
    %1843 = vmatpush1.bf16.xpose.msra.mxu0 0
    %1844 = vmatprep.subr.bf16.mxu0 0
    %1845 = vmatpush1.bf16.xpose.msra.mxu0 0
    %1846 = vmatprep.subr.bf16.mxu0 0
    %1847 = vmatpush1.bf16.xpose.msra.mxu0 0
    %1848 = vmatprep.subr.bf16.mxu0 0
    %1849 = vmatpush1.bf16.xpose.msra.mxu0 0
    %1850 = vmatprep.subr.bf16.mxu0 0
    %1851 = vmatpush1.bf16.xpose.msra.mxu0 0
    %1852 = vmatprep.mubr.bf16.mxu0 0
    %1853 = vmatmul.mubr.bf16.gmra.mrb[0].mxu0 %v1797
    %v1854 = vpop.f32.mrb[0].mxu0
    %v1855 = vadd.f32 0.0, %v1854
    %v1856 = vpop.f32.mrb[0].mxu0
    %v1857 = vpop.f32.mrb[0].mxu0
    %v1858 = vadd.f32 0.0, %v1857
    %v1859 = vpop.f32.mrb[0].mxu0
    %1860 = vmatprep.mubr.bf16.mxu0 0
    %1861 = vmatmul.mubr.bf16.gmra.mrb[0].mxu0 %v1800
    %v1862 = vpop.f32.mrb[0].mxu0
    %v1863 = vadd.f32 0.0, %v1862
    %v1864 = vpop.f32.mrb[0].mxu0
    %v1865 = vpop.f32.mrb[0].mxu0
    %v1866 = vadd.f32 0.0, %v1865
    %v1867 = vpop.f32.mrb[0].mxu0
    %1868 = vmatprep.mubr.bf16.mxu0 0
    %1869 = vmatmul.mubr.bf16.gmra.mrb[0].mxu0 %v1803
    %v1870 = vpop.f32.mrb[0].mxu0
    %v1871 = vadd.f32 0.0, %v1870
    %v1872 = vpop.f32.mrb[0].mxu0
    %v1873 = vpop.f32.mrb[0].mxu0
    %v1874 = vadd.f32 0.0, %v1873
    %v1875 = vpop.f32.mrb[0].mxu0
    %1876 = vmatprep.mubr.bf16.mxu0 0
    %1877 = vmatmul.mubr.bf16.gmra.mrb[0].mxu0 %v1806
    %v1878 = vpop.f32.mrb[0].mxu0
    %v1879 = vadd.f32 0.0, %v1878
    %v1880 = vpop.f32.mrb[0].mxu0
    %v1881 = vpop.f32.mrb[0].mxu0
    %v1882 = vadd.f32 0.0, %v1881
    %v1883 = vpop.f32.mrb[0].mxu0
    %1884 = vdwg.mxu0
    %v1885 = vsel %vm765, %v1855, -inf
    %1886 = vmax.xlane.f32.xlu0 %v1885
    %v1887 = vpop.xlane.xlu0 %1886
    %v1888 = vsel %vm765, %v1858, -inf
    %1889 = vmax.xlane.f32.xlu0 %v1888
    %v1890 = vpop.xlane.xlu0 %1889
    %v1891 = vsel %vm765, %v1863, -inf
    %1892 = vmax.xlane.f32.xlu0 %v1891
    %v1893 = vpop.xlane.xlu0 %1892
    %v1894 = vsel %vm765, %v1866, -inf
    %1895 = vmax.xlane.f32.xlu0 %v1894
    %v1896 = vpop.xlane.xlu0 %1895
    %v1897 = vsel %vm765, %v1871, -inf
    %1898 = vmax.xlane.f32.xlu0 %v1897
    %v1899 = vpop.xlane.xlu0 %1898
    %v1900 = vsel %vm765, %v1874, -inf
    %1901 = vmax.xlane.f32.xlu0 %v1900
    %v1902 = vpop.xlane.xlu0 %1901
    %v1903 = vsel %vm765, %v1879, -inf
    %1904 = vmax.xlane.f32.xlu0 %v1903
    %v1905 = vpop.xlane.xlu0 %1904
    %v1906 = vsel %vm765, %v1882, -inf
    %1907 = vmax.xlane.f32.xlu0 %v1906
    %v1908 = vpop.xlane.xlu0 %1907
    %v1909 = vsub.f32 %v1855, %v1887
    %v1910 = vsub.f32 %v1858, %v1890
    %v1911 = vsub.f32 %v1863, %v1893
    %v1912 = vsub.f32 %v1866, %v1896
    %v1913 = vsub.f32 %v1871, %v1899
    %v1914 = vsub.f32 %v1874, %v1902
    %v1915 = vsub.f32 %v1879, %v1905
    %v1916 = vsub.f32 %v1882, %v1908
    %v1917 = vmul.f32 %v1909, 1.442695
    %v1918 = vpow.pop %v1917
    %v1919 = vmul.f32 %v1910, 1.442695
    %v1920 = vpow.pop %v1919
    %v1921 = vmul.f32 %v1911, 1.442695
    %v1922 = vpow.pop %v1921
    %v1923 = vmul.f32 %v1912, 1.442695
    %v1924 = vpow.pop %v1923
    %v1925 = vmul.f32 %v1913, 1.442695
    %v1926 = vpow.pop %v1925
    %v1927 = vmul.f32 %v1914, 1.442695
    %v1928 = vpow.pop %v1927
    %v1929 = vmul.f32 %v1915, 1.442695
    %v1930 = vpow.pop %v1929
    %v1931 = vmul.f32 %v1916, 1.442695
    %v1932 = vpow.pop %v1931
    %v1933 = vsel %vm765, %v1918, 0.0
    %1934 = vadd.xlane.f32.xlu0 %v1933
    %v1935 = vpop.xlane.xlu0 %1934
    %v1936 = vsel %vm765, %v1920, 0.0
    %1937 = vadd.xlane.f32.xlu0 %v1936
    %v1938 = vpop.xlane.xlu0 %1937
    %v1939 = vsel %vm765, %v1922, 0.0
    %1940 = vadd.xlane.f32.xlu0 %v1939
    %v1941 = vpop.xlane.xlu0 %1940
    %v1942 = vsel %vm765, %v1924, 0.0
    %1943 = vadd.xlane.f32.xlu0 %v1942
    %v1944 = vpop.xlane.xlu0 %1943
    %v1945 = vsel %vm765, %v1926, 0.0
    %1946 = vadd.xlane.f32.xlu0 %v1945
    %v1947 = vpop.xlane.xlu0 %1946
    %v1948 = vsel %vm765, %v1928, 0.0
    %1949 = vadd.xlane.f32.xlu0 %v1948
    %v1950 = vpop.xlane.xlu0 %1949
    %v1951 = vsel %vm765, %v1930, 0.0
    %1952 = vadd.xlane.f32.xlu0 %v1951
    %v1953 = vpop.xlane.xlu0 %1952
    %v1954 = vsel %vm765, %v1932, 0.0
    %1955 = vadd.xlane.f32.xlu0 %v1954
    %v1956 = vpop.xlane.xlu0 %1955
    %v1957 = vrcp.pop %v1935
    %v1958 = vrcp.pop %v1938
    %v1959 = vrcp.pop %v1941
    %v1960 = vrcp.pop %v1944
    %v1961 = vrcp.pop %v1947
    %v1962 = vrcp.pop %v1950
    %v1963 = vrcp.pop %v1953
    %v1964 = vrcp.pop %v1956
    %v1965 = vmul.f32 %v1918, %v1957
    %v1966 = vmul.f32 %v1920, %v1958
    %v1967 = vmul.f32 %v1922, %v1959
    %v1968 = vmul.f32 %v1924, %v1960
    %v1969 = vmul.f32 %v1926, %v1961
    %v1970 = vmul.f32 %v1928, %v1962
    %v1971 = vmul.f32 %v1930, %v1963
    %v1972 = vmul.f32 %v1932, %v1964
    %v1973 = vpack.c.bf16 %v1966, %v1965
    %v1974 = vpack.c.bf16 %v1968, %v1967
    %v1975 = vpack.c.bf16 %v1970, %v1969
    %v1976 = vpack.c.bf16 %v1972, %v1971
    %1977 = vrot.lane.b32.xlu0 %v663, 104
    %v1978 = vpop.permute.xlu0 %1977
    %1979 = vrot.lane.b32.xlu0 %v664, 104
    %v1980 = vpop.permute.xlu0 %1979
    %1981 = vrot.lane.b32.xlu0 %v665, 104
    %v1982 = vpop.permute.xlu0 %1981
    %1983 = vrot.lane.b32.xlu0 %v666, 104
    %v1984 = vpop.permute.xlu0 %1983
    %v1990 = vsel %vm765, %v1973, 0
    %v1993 = vsel %vm765, %v1974, 0
    %v1996 = vsel %vm765, %v1975, 0
    %v1999 = vsel %vm765, %v1976, 0
    %2001 = vmatprep.subr.bf16.mxu0 0
    %2002 = vmatpush1.bf16.msra.mxu0 %v1978
    %2003 = vmatprep.subr.bf16.mxu0 0
    %2004 = vmatpush1.bf16.msra.mxu0 %v1980
    %2005 = vmatprep.subr.bf16.mxu0 0
    %2006 = vmatpush1.bf16.msra.mxu0 %v1982
    %2007 = vmatprep.subr.bf16.mxu0 0
    %2008 = vmatpush1.bf16.msra.mxu0 %v1984
    %2009 = vmatprep.subr.bf16.mxu0 0
    %2010 = vmatpush1.bf16.msra.mxu0 0
    %2011 = vmatprep.subr.bf16.mxu0 0
    %2012 = vmatpush1.bf16.msra.mxu0 0
    %2013 = vmatprep.subr.bf16.mxu0 0
    %2014 = vmatpush1.bf16.msra.mxu0 0
    %2015 = vmatprep.subr.bf16.mxu0 0
    %2016 = vmatpush1.bf16.msra.mxu0 0
    %2017 = vmatprep.subr.bf16.mxu0 0
    %2018 = vmatpush1.bf16.msra.mxu0 0
    %2019 = vmatprep.subr.bf16.mxu0 0
    %2020 = vmatpush1.bf16.msra.mxu0 0
    %2021 = vmatprep.subr.bf16.mxu0 0
    %2022 = vmatpush1.bf16.msra.mxu0 0
    %2023 = vmatprep.subr.bf16.mxu0 0
    %2024 = vmatpush1.bf16.msra.mxu0 0
    %2025 = vmatprep.subr.bf16.mxu0 0
    %2026 = vmatpush1.bf16.msra.mxu0 0
    %2027 = vmatprep.subr.bf16.mxu0 0
    %2028 = vmatpush1.bf16.msra.mxu0 0
    %2029 = vmatprep.subr.bf16.mxu0 0
    %2030 = vmatpush1.bf16.msra.mxu0 0
    %2031 = vmatprep.subr.bf16.mxu0 0
    %2032 = vmatpush1.bf16.msra.mxu0 0
    %2033 = vmatprep.mubr.bf16.mxu0 0
    %2034 = vmatmul.mubr.bf16.gmra.mrb[0].mxu0 %v1990
    %v2035 = vpop.f32.mrb[0].mxu0
    %v2036 = vadd.f32 0.0, %v2035
    %v2037 = vpop.f32.mrb[0].mxu0
    %v2038 = vpop.f32.mrb[0].mxu0
    %v2039 = vadd.f32 0.0, %v2038
    %v2040 = vpop.f32.mrb[0].mxu0
    %2041 = vmatprep.mubr.bf16.mxu0 0
    %2042 = vmatmul.mubr.bf16.gmra.mrb[0].mxu0 %v1993
    %v2043 = vpop.f32.mrb[0].mxu0
    %v2044 = vadd.f32 0.0, %v2043
    %v2045 = vpop.f32.mrb[0].mxu0
    %v2046 = vpop.f32.mrb[0].mxu0
    %v2047 = vadd.f32 0.0, %v2046
    %v2048 = vpop.f32.mrb[0].mxu0
    %2049 = vmatprep.mubr.bf16.mxu0 0
    %2050 = vmatmul.mubr.bf16.gmra.mrb[0].mxu0 %v1996
    %v2051 = vpop.f32.mrb[0].mxu0
    %v2052 = vadd.f32 0.0, %v2051
    %v2053 = vpop.f32.mrb[0].mxu0
    %v2054 = vpop.f32.mrb[0].mxu0
    %v2055 = vadd.f32 0.0, %v2054
    %v2056 = vpop.f32.mrb[0].mxu0
    %2057 = vmatprep.mubr.bf16.mxu0 0
    %2058 = vmatmul.mubr.bf16.gmra.mrb[0].mxu0 %v1999
    %v2059 = vpop.f32.mrb[0].mxu0
    %v2060 = vadd.f32 0.0, %v2059
    %v2061 = vpop.f32.mrb[0].mxu0
    %v2062 = vpop.f32.mrb[0].mxu0
    %v2063 = vadd.f32 0.0, %v2062
    %v2064 = vpop.f32.mrb[0].mxu0
    %2065 = vdwg.mxu0
    %v2066 = vpack.c.bf16 %v2039, %v2036
    %v2067 = vpack.c.bf16 %v2047, %v2044
    %v2068 = vpack.c.bf16 %v2055, %v2052
    %v2069 = vpack.c.bf16 %v2063, %v2060
    %v2071 = vsel %vm675, %v2066, 0
    %v2074 = vsel %vm675, %v2067, 0
    %v2077 = vsel %vm675, %v2068, 0
    %v2080 = vsel %vm675, %v2069, 0
    %v2083 = vsel %vm1253, %v674, 0
    %2085 = vmatprep.subr.bf16.mxu0 0
    %2086 = vmatpush1.bf16.msra.mxu0 %v2083
    %2087 = vmatprep.subr.bf16.mxu0 0
    %2088 = vmatpush1.bf16.msra.mxu0 0
    %2089 = vmatprep.subr.bf16.mxu0 0
    %2090 = vmatpush1.bf16.msra.mxu0 0
    %2091 = vmatprep.subr.bf16.mxu0 0
    %2092 = vmatpush1.bf16.msra.mxu0 0
    %2093 = vmatprep.subr.bf16.mxu0 0
    %2094 = vmatpush1.bf16.msra.mxu0 0
    %2095 = vmatprep.subr.bf16.mxu0 0
    %2096 = vmatpush1.bf16.msra.mxu0 0
    %2097 = vmatprep.subr.bf16.mxu0 0
    %2098 = vmatpush1.bf16.msra.mxu0 0
    %2099 = vmatprep.subr.bf16.mxu0 0
    %2100 = vmatpush1.bf16.msra.mxu0 0
    %2101 = vmatprep.subr.bf16.mxu0 0
    %2102 = vmatpush1.bf16.msra.mxu0 0
    %2103 = vmatprep.subr.bf16.mxu0 0
    %2104 = vmatpush1.bf16.msra.mxu0 0
    %2105 = vmatprep.subr.bf16.mxu0 0
    %2106 = vmatpush1.bf16.msra.mxu0 0
    %2107 = vmatprep.subr.bf16.mxu0 0
    %2108 = vmatpush1.bf16.msra.mxu0 0
    %2109 = vmatprep.subr.bf16.mxu0 0
    %2110 = vmatpush1.bf16.msra.mxu0 0
    %2111 = vmatprep.subr.bf16.mxu0 0
    %2112 = vmatpush1.bf16.msra.mxu0 0
    %2113 = vmatprep.subr.bf16.mxu0 0
    %2114 = vmatpush1.bf16.msra.mxu0 0
    %2115 = vmatprep.subr.bf16.mxu0 0
    %2116 = vmatpush1.bf16.msra.mxu0 0
    %2117 = vmatprep.mubr.bf16.mxu0 0
    %2118 = vmatmul.mubr.bf16.gmra.mrb[0].mxu0 %v2071
    %v2119 = vpop.f32.mrb[0].mxu0
    %v2120 = vadd.f32 0.0, %v2119
    %v2121 = vpop.f32.mrb[0].mxu0
    %v2122 = vpop.f32.mrb[0].mxu0
    %v2123 = vadd.f32 0.0, %v2122
    %v2124 = vpop.f32.mrb[0].mxu0
    %2125 = vmatprep.mubr.bf16.mxu0 0
    %2126 = vmatmul.mubr.bf16.gmra.mrb[0].mxu0 %v2074
    %v2127 = vpop.f32.mrb[0].mxu0
    %v2128 = vadd.f32 0.0, %v2127
    %v2129 = vpop.f32.mrb[0].mxu0
    %v2130 = vpop.f32.mrb[0].mxu0
    %v2131 = vadd.f32 0.0, %v2130
    %v2132 = vpop.f32.mrb[0].mxu0
    %2133 = vmatprep.mubr.bf16.mxu0 0
    %2134 = vmatmul.mubr.bf16.gmra.mrb[0].mxu0 %v2077
    %v2135 = vpop.f32.mrb[0].mxu0
    %v2136 = vadd.f32 0.0, %v2135
    %v2137 = vpop.f32.mrb[0].mxu0
    %v2138 = vpop.f32.mrb[0].mxu0
    %v2139 = vadd.f32 0.0, %v2138
    %v2140 = vpop.f32.mrb[0].mxu0
    %2141 = vmatprep.mubr.bf16.mxu0 0
    %2142 = vmatmul.mubr.bf16.gmra.mrb[0].mxu0 %v2080
    %v2143 = vpop.f32.mrb[0].mxu0
    %v2144 = vadd.f32 0.0, %v2143
    %v2145 = vpop.f32.mrb[0].mxu0
    %v2146 = vpop.f32.mrb[0].mxu0
    %v2147 = vadd.f32 0.0, %v2146
    %v2148 = vpop.f32.mrb[0].mxu0
    %2149 = vdwg.mxu0
    %v2150 = vadd.f32 %v1772, %v2120
    %v2151 = vadd.f32 %v1773, %v2123
    %v2152 = vadd.f32 %v1774, %v2128
    %v2153 = vadd.f32 %v1775, %v2131
    %v2154 = vadd.f32 %v1776, %v2136
    %v2155 = vadd.f32 %v1777, %v2139
    %v2156 = vadd.f32 %v1778, %v2144
    %v2157 = vadd.f32 %v1779, %v2147
    %v2159 = vsel %vm675, %v651, 0
    %v2162 = vsel %vm675, %v652, 0
    %v2165 = vsel %vm675, %v653, 0
    %v2168 = vsel %vm675, %v654, 0
    %v2171 = vsel %vm675, %v659, 0
    %v2174 = vsel %vm675, %v660, 0
    %v2177 = vsel %vm675, %v661, 0
    %v2180 = vsel %vm675, %v662, 0
    %2182 = vmatprep.subr.bf16.mxu0 0
    %2183 = vmatpush1.bf16.xpose.msra.mxu0 %v2171
    %2184 = vmatprep.subr.bf16.mxu0 0
    %2185 = vmatpush1.bf16.xpose.msra.mxu0 %v2174
    %2186 = vmatprep.subr.bf16.mxu0 0
    %2187 = vmatpush1.bf16.xpose.msra.mxu0 %v2177
    %2188 = vmatprep.subr.bf16.mxu0 0
    %2189 = vmatpush1.bf16.xpose.msra.mxu0 %v2180
    %2190 = vmatprep.subr.bf16.mxu0 0
    %2191 = vmatpush1.bf16.xpose.msra.mxu0 0
    %2192 = vmatprep.subr.bf16.mxu0 0
    %2193 = vmatpush1.bf16.xpose.msra.mxu0 0
    %2194 = vmatprep.subr.bf16.mxu0 0
    %2195 = vmatpush1.bf16.xpose.msra.mxu0 0
    %2196 = vmatprep.subr.bf16.mxu0 0
    %2197 = vmatpush1.bf16.xpose.msra.mxu0 0
    %2198 = vmatprep.subr.bf16.mxu0 0
    %2199 = vmatpush1.bf16.xpose.msra.mxu0 0
    %2200 = vmatprep.subr.bf16.mxu0 0
    %2201 = vmatpush1.bf16.xpose.msra.mxu0 0
    %2202 = vmatprep.subr.bf16.mxu0 0
    %2203 = vmatpush1.bf16.xpose.msra.mxu0 0
    %2204 = vmatprep.subr.bf16.mxu0 0
    %2205 = vmatpush1.bf16.xpose.msra.mxu0 0
    %2206 = vmatprep.subr.bf16.mxu0 0
    %2207 = vmatpush1.bf16.xpose.msra.mxu0 0
    %2208 = vmatprep.subr.bf16.mxu0 0
    %2209 = vmatpush1.bf16.xpose.msra.mxu0 0
    %2210 = vmatprep.subr.bf16.mxu0 0
    %2211 = vmatpush1.bf16.xpose.msra.mxu0 0
    %2212 = vmatprep.subr.bf16.mxu0 0
    %2213 = vmatpush1.bf16.xpose.msra.mxu0 0
    %2214 = vmatprep.mubr.bf16.mxu0 0
    %2215 = vmatmul.mubr.bf16.gmra.mrb[0].mxu0 %v2159
    %v2216 = vpop.f32.mrb[0].mxu0
    %v2217 = vadd.f32 0.0, %v2216
    %v2218 = vpop.f32.mrb[0].mxu0
    %v2219 = vpop.f32.mrb[0].mxu0
    %v2220 = vadd.f32 0.0, %v2219
    %v2221 = vpop.f32.mrb[0].mxu0
    %2222 = vmatprep.mubr.bf16.mxu0 0
    %2223 = vmatmul.mubr.bf16.gmra.mrb[0].mxu0 %v2162
    %v2224 = vpop.f32.mrb[0].mxu0
    %v2225 = vadd.f32 0.0, %v2224
    %v2226 = vpop.f32.mrb[0].mxu0
    %v2227 = vpop.f32.mrb[0].mxu0
    %v2228 = vadd.f32 0.0, %v2227
    %v2229 = vpop.f32.mrb[0].mxu0
    %2230 = vmatprep.mubr.bf16.mxu0 0
    %2231 = vmatmul.mubr.bf16.gmra.mrb[0].mxu0 %v2165
    %v2232 = vpop.f32.mrb[0].mxu0
    %v2233 = vadd.f32 0.0, %v2232
    %v2234 = vpop.f32.mrb[0].mxu0
    %v2235 = vpop.f32.mrb[0].mxu0
    %v2236 = vadd.f32 0.0, %v2235
    %v2237 = vpop.f32.mrb[0].mxu0
    %2238 = vmatprep.mubr.bf16.mxu0 0
    %2239 = vmatmul.mubr.bf16.gmra.mrb[0].mxu0 %v2168
    %v2240 = vpop.f32.mrb[0].mxu0
    %v2241 = vadd.f32 0.0, %v2240
    %v2242 = vpop.f32.mrb[0].mxu0
    %v2243 = vpop.f32.mrb[0].mxu0
    %v2244 = vadd.f32 0.0, %v2243
    %v2245 = vpop.f32.mrb[0].mxu0
    %2246 = vdwg.mxu0
    %v2247 = vsel %vm765, %v2217, -inf
    %2248 = vmax.xlane.f32.xlu0 %v2247
    %v2249 = vpop.xlane.xlu0 %2248
    %v2250 = vsel %vm765, %v2220, -inf
    %2251 = vmax.xlane.f32.xlu0 %v2250
    %v2252 = vpop.xlane.xlu0 %2251
    %v2253 = vsel %vm765, %v2225, -inf
    %2254 = vmax.xlane.f32.xlu0 %v2253
    %v2255 = vpop.xlane.xlu0 %2254
    %v2256 = vsel %vm765, %v2228, -inf
    %2257 = vmax.xlane.f32.xlu0 %v2256
    %v2258 = vpop.xlane.xlu0 %2257
    %v2259 = vsel %vm765, %v2233, -inf
    %2260 = vmax.xlane.f32.xlu0 %v2259
    %v2261 = vpop.xlane.xlu0 %2260
    %v2262 = vsel %vm765, %v2236, -inf
    %2263 = vmax.xlane.f32.xlu0 %v2262
    %v2264 = vpop.xlane.xlu0 %2263
    %v2265 = vsel %vm765, %v2241, -inf
    %2266 = vmax.xlane.f32.xlu0 %v2265
    %v2267 = vpop.xlane.xlu0 %2266
    %v2268 = vsel %vm765, %v2244, -inf
    %2269 = vmax.xlane.f32.xlu0 %v2268
    %v2270 = vpop.xlane.xlu0 %2269
    %v2271 = vsub.f32 %v2217, %v2249
    %v2272 = vsub.f32 %v2220, %v2252
    %v2273 = vsub.f32 %v2225, %v2255
    %v2274 = vsub.f32 %v2228, %v2258
    %v2275 = vsub.f32 %v2233, %v2261
    %v2276 = vsub.f32 %v2236, %v2264
    %v2277 = vsub.f32 %v2241, %v2267
    %v2278 = vsub.f32 %v2244, %v2270
    %v2279 = vmul.f32 %v2271, 1.442695
    %v2280 = vpow.pop %v2279
    %v2281 = vmul.f32 %v2272, 1.442695
    %v2282 = vpow.pop %v2281
    %v2283 = vmul.f32 %v2273, 1.442695
    %v2284 = vpow.pop %v2283
    %v2285 = vmul.f32 %v2274, 1.442695
    %v2286 = vpow.pop %v2285
    %v2287 = vmul.f32 %v2275, 1.442695
    %v2288 = vpow.pop %v2287
    %v2289 = vmul.f32 %v2276, 1.442695
    %v2290 = vpow.pop %v2289
    %v2291 = vmul.f32 %v2277, 1.442695
    %v2292 = vpow.pop %v2291
    %v2293 = vmul.f32 %v2278, 1.442695
    %v2294 = vpow.pop %v2293
    %v2295 = vsel %vm765, %v2280, 0.0
    %2296 = vadd.xlane.f32.xlu0 %v2295
    %v2297 = vpop.xlane.xlu0 %2296
    %v2298 = vsel %vm765, %v2282, 0.0
    %2299 = vadd.xlane.f32.xlu0 %v2298
    %v2300 = vpop.xlane.xlu0 %2299
    %v2301 = vsel %vm765, %v2284, 0.0
    %2302 = vadd.xlane.f32.xlu0 %v2301
    %v2303 = vpop.xlane.xlu0 %2302
    %v2304 = vsel %vm765, %v2286, 0.0
    %2305 = vadd.xlane.f32.xlu0 %v2304
    %v2306 = vpop.xlane.xlu0 %2305
    %v2307 = vsel %vm765, %v2288, 0.0
    %2308 = vadd.xlane.f32.xlu0 %v2307
    %v2309 = vpop.xlane.xlu0 %2308
    %v2310 = vsel %vm765, %v2290, 0.0
    %2311 = vadd.xlane.f32.xlu0 %v2310
    %v2312 = vpop.xlane.xlu0 %2311
    %v2313 = vsel %vm765, %v2292, 0.0
    %2314 = vadd.xlane.f32.xlu0 %v2313
    %v2315 = vpop.xlane.xlu0 %2314
    %v2316 = vsel %vm765, %v2294, 0.0
    %2317 = vadd.xlane.f32.xlu0 %v2316
    %v2318 = vpop.xlane.xlu0 %2317
    %v2319 = vrcp.pop %v2297
    %v2320 = vrcp.pop %v2300
    %v2321 = vrcp.pop %v2303
    %v2322 = vrcp.pop %v2306
    %v2323 = vrcp.pop %v2309
    %v2324 = vrcp.pop %v2312
    %v2325 = vrcp.pop %v2315
    %v2326 = vrcp.pop %v2318
    %v2327 = vmul.f32 %v2280, %v2319
    %v2328 = vmul.f32 %v2282, %v2320
    %v2329 = vmul.f32 %v2284, %v2321
    %v2330 = vmul.f32 %v2286, %v2322
    %v2331 = vmul.f32 %v2288, %v2323
    %v2332 = vmul.f32 %v2290, %v2324
    %v2333 = vmul.f32 %v2292, %v2325
    %v2334 = vmul.f32 %v2294, %v2326
    %v2335 = vpack.c.bf16 %v2328, %v2327
    %v2336 = vpack.c.bf16 %v2330, %v2329
    %v2337 = vpack.c.bf16 %v2332, %v2331
    %v2338 = vpack.c.bf16 %v2334, %v2333
    %v2340 = vsel %vm765, %v2335, 0
    %v2343 = vsel %vm765, %v2336, 0
    %v2346 = vsel %vm765, %v2337, 0
    %v2349 = vsel %vm765, %v2338, 0
    %2351 = vmatprep.subr.bf16.mxu0 0
    %2352 = vmatpush1.bf16.msra.mxu0 %v667
    %2353 = vmatprep.subr.bf16.mxu0 0
    %2354 = vmatpush1.bf16.msra.mxu0 %v668
    %2355 = vmatprep.subr.bf16.mxu0 0
    %2356 = vmatpush1.bf16.msra.mxu0 %v669
    %2357 = vmatprep.subr.bf16.mxu0 0
    %2358 = vmatpush1.bf16.msra.mxu0 %v670
    %2359 = vmatprep.subr.bf16.mxu0 0
    %2360 = vmatpush1.bf16.msra.mxu0 0
    %2361 = vmatprep.subr.bf16.mxu0 0
    %2362 = vmatpush1.bf16.msra.mxu0 0
    %2363 = vmatprep.subr.bf16.mxu0 0
    %2364 = vmatpush1.bf16.msra.mxu0 0
    %2365 = vmatprep.subr.bf16.mxu0 0
    %2366 = vmatpush1.bf16.msra.mxu0 0
    %2367 = vmatprep.subr.bf16.mxu0 0
    %2368 = vmatpush1.bf16.msra.mxu0 0
    %2369 = vmatprep.subr.bf16.mxu0 0
    %2370 = vmatpush1.bf16.msra.mxu0 0
    %2371 = vmatprep.subr.bf16.mxu0 0
    %2372 = vmatpush1.bf16.msra.mxu0 0
    %2373 = vmatprep.subr.bf16.mxu0 0
    %2374 = vmatpush1.bf16.msra.mxu0 0
    %2375 = vmatprep.subr.bf16.mxu0 0
    %2376 = vmatpush1.bf16.msra.mxu0 0
    %2377 = vmatprep.subr.bf16.mxu0 0
    %2378 = vmatpush1.bf16.msra.mxu0 0
    %2379 = vmatprep.subr.bf16.mxu0 0
    %2380 = vmatpush1.bf16.msra.mxu0 0
    %2381 = vmatprep.subr.bf16.mxu0 0
    %2382 = vmatpush1.bf16.msra.mxu0 0
    %2383 = vmatprep.mubr.bf16.mxu0 0
    %2384 = vmatmul.mubr.bf16.gmra.mrb[0].mxu0 %v2340
    %v2385 = vpop.f32.mrb[0].mxu0
    %v2386 = vadd.f32 0.0, %v2385
    %v2387 = vpop.f32.mrb[0].mxu0
    %v2388 = vpop.f32.mrb[0].mxu0
    %v2389 = vadd.f32 0.0, %v2388
    %v2390 = vpop.f32.mrb[0].mxu0
    %2391 = vmatprep.mubr.bf16.mxu0 0
    %2392 = vmatmul.mubr.bf16.gmra.mrb[0].mxu0 %v2343
    %v2393 = vpop.f32.mrb[0].mxu0
    %v2394 = vadd.f32 0.0, %v2393
    %v2395 = vpop.f32.mrb[0].mxu0
    %v2396 = vpop.f32.mrb[0].mxu0
    %v2397 = vadd.f32 0.0, %v2396
    %v2398 = vpop.f32.mrb[0].mxu0
    %2399 = vmatprep.mubr.bf16.mxu0 0
    %2400 = vmatmul.mubr.bf16.gmra.mrb[0].mxu0 %v2346
    %v2401 = vpop.f32.mrb[0].mxu0
    %v2402 = vadd.f32 0.0, %v2401
    %v2403 = vpop.f32.mrb[0].mxu0
    %v2404 = vpop.f32.mrb[0].mxu0
    %v2405 = vadd.f32 0.0, %v2404
    %v2406 = vpop.f32.mrb[0].mxu0
    %2407 = vmatprep.mubr.bf16.mxu0 0
    %2408 = vmatmul.mubr.bf16.gmra.mrb[0].mxu0 %v2349
    %v2409 = vpop.f32.mrb[0].mxu0
    %v2410 = vadd.f32 0.0, %v2409
    %v2411 = vpop.f32.mrb[0].mxu0
    %v2412 = vpop.f32.mrb[0].mxu0
    %v2413 = vadd.f32 0.0, %v2412
    %v2414 = vpop.f32.mrb[0].mxu0
    %2415 = vdwg.mxu0
    %v2416 = vpack.c.bf16 %v2389, %v2386
    %v2417 = vpack.c.bf16 %v2397, %v2394
    %v2418 = vpack.c.bf16 %v2405, %v2402
    %v2419 = vpack.c.bf16 %v2413, %v2410
    %2424 = vrot.lane.b32.xlu0 %v651, 120
    %v2425 = vpop.permute.xlu0 %2424
    %2426 = vrot.lane.b32.xlu0 %v652, 120
    %v2427 = vpop.permute.xlu0 %2426
    %2428 = vrot.lane.b32.xlu0 %v653, 120
    %v2429 = vpop.permute.xlu0 %2428
    %2430 = vrot.lane.b32.xlu0 %v654, 120
    %v2431 = vpop.permute.xlu0 %2430
    %2436 = vrot.lane.b32.xlu0 %v659, 120
    %v2437 = vpop.permute.xlu0 %2436
    %2438 = vrot.lane.b32.xlu0 %v660, 120
    %v2439 = vpop.permute.xlu0 %2438
    %2440 = vrot.lane.b32.xlu0 %v661, 120
    %v2441 = vpop.permute.xlu0 %2440
    %2442 = vrot.lane.b32.xlu0 %v662, 120
    %v2443 = vpop.permute.xlu0 %2442
    %v2445 = vsel %vm675, %v2425, 0
    %v2448 = vsel %vm675, %v2427, 0
    %v2451 = vsel %vm675, %v2429, 0
    %v2454 = vsel %vm675, %v2431, 0
    %v2457 = vsel %vm675, %v2437, 0
    %v2460 = vsel %vm675, %v2439, 0
    %v2463 = vsel %vm675, %v2441, 0
    %v2466 = vsel %vm675, %v2443, 0
    %2468 = vmatprep.subr.bf16.mxu0 0
    %2469 = vmatpush1.bf16.xpose.msra.mxu0 %v2457
    %2470 = vmatprep.subr.bf16.mxu0 0
    %2471 = vmatpush1.bf16.xpose.msra.mxu0 %v2460
    %2472 = vmatprep.subr.bf16.mxu0 0
    %2473 = vmatpush1.bf16.xpose.msra.mxu0 %v2463
    %2474 = vmatprep.subr.bf16.mxu0 0
    %2475 = vmatpush1.bf16.xpose.msra.mxu0 %v2466
    %2476 = vmatprep.subr.bf16.mxu0 0
    %2477 = vmatpush1.bf16.xpose.msra.mxu0 0
    %2478 = vmatprep.subr.bf16.mxu0 0
    %2479 = vmatpush1.bf16.xpose.msra.mxu0 0
    %2480 = vmatprep.subr.bf16.mxu0 0
    %2481 = vmatpush1.bf16.xpose.msra.mxu0 0
    %2482 = vmatprep.subr.bf16.mxu0 0
    %2483 = vmatpush1.bf16.xpose.msra.mxu0 0
    %2484 = vmatprep.subr.bf16.mxu0 0
    %2485 = vmatpush1.bf16.xpose.msra.mxu0 0
    %2486 = vmatprep.subr.bf16.mxu0 0
    %2487 = vmatpush1.bf16.xpose.msra.mxu0 0
    %2488 = vmatprep.subr.bf16.mxu0 0
    %2489 = vmatpush1.bf16.xpose.msra.mxu0 0
    %2490 = vmatprep.subr.bf16.mxu0 0
    %2491 = vmatpush1.bf16.xpose.msra.mxu0 0
    %2492 = vmatprep.subr.bf16.mxu0 0
    %2493 = vmatpush1.bf16.xpose.msra.mxu0 0
    %2494 = vmatprep.subr.bf16.mxu0 0
    %2495 = vmatpush1.bf16.xpose.msra.mxu0 0
    %2496 = vmatprep.subr.bf16.mxu0 0
    %2497 = vmatpush1.bf16.xpose.msra.mxu0 0
    %2498 = vmatprep.subr.bf16.mxu0 0
    %2499 = vmatpush1.bf16.xpose.msra.mxu0 0
    %2500 = vmatprep.mubr.bf16.mxu0 0
    %2501 = vmatmul.mubr.bf16.gmra.mrb[0].mxu0 %v2445
    %v2502 = vpop.f32.mrb[0].mxu0
    %v2503 = vadd.f32 0.0, %v2502
    %v2504 = vpop.f32.mrb[0].mxu0
    %v2505 = vpop.f32.mrb[0].mxu0
    %v2506 = vadd.f32 0.0, %v2505
    %v2507 = vpop.f32.mrb[0].mxu0
    %2508 = vmatprep.mubr.bf16.mxu0 0
    %2509 = vmatmul.mubr.bf16.gmra.mrb[0].mxu0 %v2448
    %v2510 = vpop.f32.mrb[0].mxu0
    %v2511 = vadd.f32 0.0, %v2510
    %v2512 = vpop.f32.mrb[0].mxu0
    %v2513 = vpop.f32.mrb[0].mxu0
    %v2514 = vadd.f32 0.0, %v2513
    %v2515 = vpop.f32.mrb[0].mxu0
    %2516 = vmatprep.mubr.bf16.mxu0 0
    %2517 = vmatmul.mubr.bf16.gmra.mrb[0].mxu0 %v2451
    %v2518 = vpop.f32.mrb[0].mxu0
    %v2519 = vadd.f32 0.0, %v2518
    %v2520 = vpop.f32.mrb[0].mxu0
    %v2521 = vpop.f32.mrb[0].mxu0
    %v2522 = vadd.f32 0.0, %v2521
    %v2523 = vpop.f32.mrb[0].mxu0
    %2524 = vmatprep.mubr.bf16.mxu0 0
    %2525 = vmatmul.mubr.bf16.gmra.mrb[0].mxu0 %v2454
    %v2526 = vpop.f32.mrb[0].mxu0
    %v2527 = vadd.f32 0.0, %v2526
    %v2528 = vpop.f32.mrb[0].mxu0
    %v2529 = vpop.f32.mrb[0].mxu0
    %v2530 = vadd.f32 0.0, %v2529
    %v2531 = vpop.f32.mrb[0].mxu0
    %2532 = vdwg.mxu0
    %v2533 = vsel %vm765, %v2503, -inf
    %2534 = vmax.xlane.f32.xlu0 %v2533
    %v2535 = vpop.xlane.xlu0 %2534
    %v2536 = vsel %vm765, %v2506, -inf
    %2537 = vmax.xlane.f32.xlu0 %v2536
    %v2538 = vpop.xlane.xlu0 %2537
    %v2539 = vsel %vm765, %v2511, -inf
    %2540 = vmax.xlane.f32.xlu0 %v2539
    %v2541 = vpop.xlane.xlu0 %2540
    %v2542 = vsel %vm765, %v2514, -inf
    %2543 = vmax.xlane.f32.xlu0 %v2542
    %v2544 = vpop.xlane.xlu0 %2543
    %v2545 = vsel %vm765, %v2519, -inf
    %2546 = vmax.xlane.f32.xlu0 %v2545
    %v2547 = vpop.xlane.xlu0 %2546
    %v2548 = vsel %vm765, %v2522, -inf
    %2549 = vmax.xlane.f32.xlu0 %v2548
    %v2550 = vpop.xlane.xlu0 %2549
    %v2551 = vsel %vm765, %v2527, -inf
    %2552 = vmax.xlane.f32.xlu0 %v2551
    %v2553 = vpop.xlane.xlu0 %2552
    %v2554 = vsel %vm765, %v2530, -inf
    %2555 = vmax.xlane.f32.xlu0 %v2554
    %v2556 = vpop.xlane.xlu0 %2555
    %v2557 = vsub.f32 %v2503, %v2535
    %v2558 = vsub.f32 %v2506, %v2538
    %v2559 = vsub.f32 %v2511, %v2541
    %v2560 = vsub.f32 %v2514, %v2544
    %v2561 = vsub.f32 %v2519, %v2547
    %v2562 = vsub.f32 %v2522, %v2550
    %v2563 = vsub.f32 %v2527, %v2553
    %v2564 = vsub.f32 %v2530, %v2556
    %v2565 = vmul.f32 %v2557, 1.442695
    %v2566 = vpow.pop %v2565
    %v2567 = vmul.f32 %v2558, 1.442695
    %v2568 = vpow.pop %v2567
    %v2569 = vmul.f32 %v2559, 1.442695
    %v2570 = vpow.pop %v2569
    %v2571 = vmul.f32 %v2560, 1.442695
    %v2572 = vpow.pop %v2571
    %v2573 = vmul.f32 %v2561, 1.442695
    %v2574 = vpow.pop %v2573
    %v2575 = vmul.f32 %v2562, 1.442695
    %v2576 = vpow.pop %v2575
    %v2577 = vmul.f32 %v2563, 1.442695
    %v2578 = vpow.pop %v2577
    %v2579 = vmul.f32 %v2564, 1.442695
    %v2580 = vpow.pop %v2579
    %v2581 = vsel %vm765, %v2566, 0.0
    %2582 = vadd.xlane.f32.xlu0 %v2581
    %v2583 = vpop.xlane.xlu0 %2582
    %v2584 = vsel %vm765, %v2568, 0.0
    %2585 = vadd.xlane.f32.xlu0 %v2584
    %v2586 = vpop.xlane.xlu0 %2585
    %v2587 = vsel %vm765, %v2570, 0.0
    %2588 = vadd.xlane.f32.xlu0 %v2587
    %v2589 = vpop.xlane.xlu0 %2588
    %v2590 = vsel %vm765, %v2572, 0.0
    %2591 = vadd.xlane.f32.xlu0 %v2590
    %v2592 = vpop.xlane.xlu0 %2591
    %v2593 = vsel %vm765, %v2574, 0.0
    %2594 = vadd.xlane.f32.xlu0 %v2593
    %v2595 = vpop.xlane.xlu0 %2594
    %v2596 = vsel %vm765, %v2576, 0.0
    %2597 = vadd.xlane.f32.xlu0 %v2596
    %v2598 = vpop.xlane.xlu0 %2597
    %v2599 = vsel %vm765, %v2578, 0.0
    %2600 = vadd.xlane.f32.xlu0 %v2599
    %v2601 = vpop.xlane.xlu0 %2600
    %v2602 = vsel %vm765, %v2580, 0.0
    %2603 = vadd.xlane.f32.xlu0 %v2602
    %v2604 = vpop.xlane.xlu0 %2603
    %v2605 = vrcp.pop %v2583
    %v2606 = vrcp.pop %v2586
    %v2607 = vrcp.pop %v2589
    %v2608 = vrcp.pop %v2592
    %v2609 = vrcp.pop %v2595
    %v2610 = vrcp.pop %v2598
    %v2611 = vrcp.pop %v2601
    %v2612 = vrcp.pop %v2604
    %v2613 = vmul.f32 %v2566, %v2605
    %v2614 = vmul.f32 %v2568, %v2606
    %v2615 = vmul.f32 %v2570, %v2607
    %v2616 = vmul.f32 %v2572, %v2608
    %v2617 = vmul.f32 %v2574, %v2609
    %v2618 = vmul.f32 %v2576, %v2610
    %v2619 = vmul.f32 %v2578, %v2611
    %v2620 = vmul.f32 %v2580, %v2612
    %v2621 = vpack.c.bf16 %v2614, %v2613
    %v2622 = vpack.c.bf16 %v2616, %v2615
    %v2623 = vpack.c.bf16 %v2618, %v2617
    %v2624 = vpack.c.bf16 %v2620, %v2619
    %2629 = vrot.lane.b32.xlu0 %v667, 120
    %v2630 = vpop.permute.xlu0 %2629
    %2631 = vrot.lane.b32.xlu0 %v668, 120
    %v2632 = vpop.permute.xlu0 %2631
    %2633 = vrot.lane.b32.xlu0 %v669, 120
    %v2634 = vpop.permute.xlu0 %2633
    %2635 = vrot.lane.b32.xlu0 %v670, 120
    %v2636 = vpop.permute.xlu0 %2635
    %v2642 = vsel %vm765, %v2621, 0
    %v2645 = vsel %vm765, %v2622, 0
    %v2648 = vsel %vm765, %v2623, 0
    %v2651 = vsel %vm765, %v2624, 0
    %2653 = vmatprep.subr.bf16.mxu0 0
    %2654 = vmatpush1.bf16.msra.mxu0 %v2630
    %2655 = vmatprep.subr.bf16.mxu0 0
    %2656 = vmatpush1.bf16.msra.mxu0 %v2632
    %2657 = vmatprep.subr.bf16.mxu0 0
    %2658 = vmatpush1.bf16.msra.mxu0 %v2634
    %2659 = vmatprep.subr.bf16.mxu0 0
    %2660 = vmatpush1.bf16.msra.mxu0 %v2636
    %2661 = vmatprep.subr.bf16.mxu0 0
    %2662 = vmatpush1.bf16.msra.mxu0 0
    %2663 = vmatprep.subr.bf16.mxu0 0
    %2664 = vmatpush1.bf16.msra.mxu0 0
    %2665 = vmatprep.subr.bf16.mxu0 0
    %2666 = vmatpush1.bf16.msra.mxu0 0
    %2667 = vmatprep.subr.bf16.mxu0 0
    %2668 = vmatpush1.bf16.msra.mxu0 0
    %2669 = vmatprep.subr.bf16.mxu0 0
    %2670 = vmatpush1.bf16.msra.mxu0 0
    %2671 = vmatprep.subr.bf16.mxu0 0
    %2672 = vmatpush1.bf16.msra.mxu0 0
    %2673 = vmatprep.subr.bf16.mxu0 0
    %2674 = vmatpush1.bf16.msra.mxu0 0
    %2675 = vmatprep.subr.bf16.mxu0 0
    %2676 = vmatpush1.bf16.msra.mxu0 0
    %2677 = vmatprep.subr.bf16.mxu0 0
    %2678 = vmatpush1.bf16.msra.mxu0 0
    %2679 = vmatprep.subr.bf16.mxu0 0
    %2680 = vmatpush1.bf16.msra.mxu0 0
    %2681 = vmatprep.subr.bf16.mxu0 0
    %2682 = vmatpush1.bf16.msra.mxu0 0
    %2683 = vmatprep.subr.bf16.mxu0 0
    %2684 = vmatpush1.bf16.msra.mxu0 0
    %2685 = vmatprep.mubr.bf16.mxu0 0
    %2686 = vmatmul.mubr.bf16.gmra.mrb[0].mxu0 %v2642
    %v2687 = vpop.f32.mrb[0].mxu0
    %v2688 = vadd.f32 0.0, %v2687
    %v2689 = vpop.f32.mrb[0].mxu0
    %v2690 = vpop.f32.mrb[0].mxu0
    %v2691 = vadd.f32 0.0, %v2690
    %v2692 = vpop.f32.mrb[0].mxu0
    %2693 = vmatprep.mubr.bf16.mxu0 0
    %2694 = vmatmul.mubr.bf16.gmra.mrb[0].mxu0 %v2645
    %v2695 = vpop.f32.mrb[0].mxu0
    %v2696 = vadd.f32 0.0, %v2695
    %v2697 = vpop.f32.mrb[0].mxu0
    %v2698 = vpop.f32.mrb[0].mxu0
    %v2699 = vadd.f32 0.0, %v2698
    %v2700 = vpop.f32.mrb[0].mxu0
    %2701 = vmatprep.mubr.bf16.mxu0 0
    %2702 = vmatmul.mubr.bf16.gmra.mrb[0].mxu0 %v2648
    %v2703 = vpop.f32.mrb[0].mxu0
    %v2704 = vadd.f32 0.0, %v2703
    %v2705 = vpop.f32.mrb[0].mxu0
    %v2706 = vpop.f32.mrb[0].mxu0
    %v2707 = vadd.f32 0.0, %v2706
    %v2708 = vpop.f32.mrb[0].mxu0
    %2709 = vmatprep.mubr.bf16.mxu0 0
    %2710 = vmatmul.mubr.bf16.gmra.mrb[0].mxu0 %v2651
    %v2711 = vpop.f32.mrb[0].mxu0
    %v2712 = vadd.f32 0.0, %v2711
    %v2713 = vpop.f32.mrb[0].mxu0
    %v2714 = vpop.f32.mrb[0].mxu0
    %v2715 = vadd.f32 0.0, %v2714
    %v2716 = vpop.f32.mrb[0].mxu0
    %2717 = vdwg.mxu0
    %v2718 = vpack.c.bf16 %v2691, %v2688
    %v2719 = vpack.c.bf16 %v2699, %v2696
    %v2720 = vpack.c.bf16 %v2707, %v2704
    %v2721 = vpack.c.bf16 %v2715, %v2712
    %v2723 = vsel %vm675, %v2718, 0
    %v2726 = vsel %vm675, %v2719, 0
    %v2729 = vsel %vm675, %v2720, 0
    %v2732 = vsel %vm675, %v2721, 0
    %2734 = vmatprep.subr.bf16.mxu0 0
    %2735 = vmatpush1.bf16.msra.mxu0 %v1255
    %2736 = vmatprep.subr.bf16.mxu0 0
    %2737 = vmatpush1.bf16.msra.mxu0 0
    %2738 = vmatprep.subr.bf16.mxu0 0
    %2739 = vmatpush1.bf16.msra.mxu0 0
    %2740 = vmatprep.subr.bf16.mxu0 0
    %2741 = vmatpush1.bf16.msra.mxu0 0
    %2742 = vmatprep.subr.bf16.mxu0 0
    %2743 = vmatpush1.bf16.msra.mxu0 0
    %2744 = vmatprep.subr.bf16.mxu0 0
    %2745 = vmatpush1.bf16.msra.mxu0 0
    %2746 = vmatprep.subr.bf16.mxu0 0
    %2747 = vmatpush1.bf16.msra.mxu0 0
    %2748 = vmatprep.subr.bf16.mxu0 0
    %2749 = vmatpush1.bf16.msra.mxu0 0
    %2750 = vmatprep.subr.bf16.mxu0 0
    %2751 = vmatpush1.bf16.msra.mxu0 0
    %2752 = vmatprep.subr.bf16.mxu0 0
    %2753 = vmatpush1.bf16.msra.mxu0 0
    %2754 = vmatprep.subr.bf16.mxu0 0
    %2755 = vmatpush1.bf16.msra.mxu0 0
    %2756 = vmatprep.subr.bf16.mxu0 0
    %2757 = vmatpush1.bf16.msra.mxu0 0
    %2758 = vmatprep.subr.bf16.mxu0 0
    %2759 = vmatpush1.bf16.msra.mxu0 0
    %2760 = vmatprep.subr.bf16.mxu0 0
    %2761 = vmatpush1.bf16.msra.mxu0 0
    %2762 = vmatprep.subr.bf16.mxu0 0
    %2763 = vmatpush1.bf16.msra.mxu0 0
    %2764 = vmatprep.subr.bf16.mxu0 0
    %2765 = vmatpush1.bf16.msra.mxu0 0
    %2766 = vmatprep.mubr.bf16.mxu0 0
    %2767 = vmatmul.mubr.bf16.gmra.mrb[0].mxu0 %v2723
    %v2768 = vpop.f32.mrb[0].mxu0
    %v2769 = vadd.f32 0.0, %v2768
    %v2770 = vpop.f32.mrb[0].mxu0
    %v2771 = vpop.f32.mrb[0].mxu0
    %v2772 = vadd.f32 0.0, %v2771
    %v2773 = vpop.f32.mrb[0].mxu0
    %2774 = vmatprep.mubr.bf16.mxu0 0
    %2775 = vmatmul.mubr.bf16.gmra.mrb[0].mxu0 %v2726
    %v2776 = vpop.f32.mrb[0].mxu0
    %v2777 = vadd.f32 0.0, %v2776
    %v2778 = vpop.f32.mrb[0].mxu0
    %v2779 = vpop.f32.mrb[0].mxu0
    %v2780 = vadd.f32 0.0, %v2779
    %v2781 = vpop.f32.mrb[0].mxu0
    %2782 = vmatprep.mubr.bf16.mxu0 0
    %2783 = vmatmul.mubr.bf16.gmra.mrb[0].mxu0 %v2729
    %v2784 = vpop.f32.mrb[0].mxu0
    %v2785 = vadd.f32 0.0, %v2784
    %v2786 = vpop.f32.mrb[0].mxu0
    %v2787 = vpop.f32.mrb[0].mxu0
    %v2788 = vadd.f32 0.0, %v2787
    %v2789 = vpop.f32.mrb[0].mxu0
    %2790 = vmatprep.mubr.bf16.mxu0 0
    %2791 = vmatmul.mubr.bf16.gmra.mrb[0].mxu0 %v2732
    %v2792 = vpop.f32.mrb[0].mxu0
    %v2793 = vadd.f32 0.0, %v2792
    %v2794 = vpop.f32.mrb[0].mxu0
    %v2795 = vpop.f32.mrb[0].mxu0
    %v2796 = vadd.f32 0.0, %v2795
    %v2797 = vpop.f32.mrb[0].mxu0
    %2798 = vdwg.mxu0
    %v2800 = vsel %vm675, %v2416, 0
    %v2803 = vsel %vm675, %v2417, 0
    %v2806 = vsel %vm675, %v2418, 0
    %v2809 = vsel %vm675, %v2419, 0
    %2811 = vmatprep.subr.bf16.mxu0 0
    %2812 = vmatpush1.bf16.msra.mxu0 %v1335
    %2813 = vmatprep.subr.bf16.mxu0 0
    %2814 = vmatpush1.bf16.msra.mxu0 0
    %2815 = vmatprep.subr.bf16.mxu0 0
    %2816 = vmatpush1.bf16.msra.mxu0 0
    %2817 = vmatprep.subr.bf16.mxu0 0
    %2818 = vmatpush1.bf16.msra.mxu0 0
    %2819 = vmatprep.subr.bf16.mxu0 0
    %2820 = vmatpush1.bf16.msra.mxu0 0
    %2821 = vmatprep.subr.bf16.mxu0 0
    %2822 = vmatpush1.bf16.msra.mxu0 0
    %2823 = vmatprep.subr.bf16.mxu0 0
    %2824 = vmatpush1.bf16.msra.mxu0 0
    %2825 = vmatprep.subr.bf16.mxu0 0
    %2826 = vmatpush1.bf16.msra.mxu0 0
    %2827 = vmatprep.subr.bf16.mxu0 0
    %2828 = vmatpush1.bf16.msra.mxu0 0
    %2829 = vmatprep.subr.bf16.mxu0 0
    %2830 = vmatpush1.bf16.msra.mxu0 0
    %2831 = vmatprep.subr.bf16.mxu0 0
    %2832 = vmatpush1.bf16.msra.mxu0 0
    %2833 = vmatprep.subr.bf16.mxu0 0
    %2834 = vmatpush1.bf16.msra.mxu0 0
    %2835 = vmatprep.subr.bf16.mxu0 0
    %2836 = vmatpush1.bf16.msra.mxu0 0
    %2837 = vmatprep.subr.bf16.mxu0 0
    %2838 = vmatpush1.bf16.msra.mxu0 0
    %2839 = vmatprep.subr.bf16.mxu0 0
    %2840 = vmatpush1.bf16.msra.mxu0 0
    %2841 = vmatprep.subr.bf16.mxu0 0
    %2842 = vmatpush1.bf16.msra.mxu0 0
    %2843 = vmatprep.mubr.bf16.mxu0 0
    %2844 = vmatmul.mubr.bf16.gmra.mrb[0].mxu0 %v2800
    %v2845 = vpop.f32.mrb[0].mxu0
    %v2846 = vadd.f32 %v2769, %v2845
    %v2847 = vpop.f32.mrb[0].mxu0
    %v2848 = vpop.f32.mrb[0].mxu0
    %v2849 = vadd.f32 %v2772, %v2848
    %v2850 = vpop.f32.mrb[0].mxu0
    %2851 = vmatprep.mubr.bf16.mxu0 0
    %2852 = vmatmul.mubr.bf16.gmra.mrb[0].mxu0 %v2803
    %v2853 = vpop.f32.mrb[0].mxu0
    %v2854 = vadd.f32 %v2777, %v2853
    %v2855 = vpop.f32.mrb[0].mxu0
    %v2856 = vpop.f32.mrb[0].mxu0
    %v2857 = vadd.f32 %v2780, %v2856
    %v2858 = vpop.f32.mrb[0].mxu0
    %2859 = vmatprep.mubr.bf16.mxu0 0
    %2860 = vmatmul.mubr.bf16.gmra.mrb[0].mxu0 %v2806
    %v2861 = vpop.f32.mrb[0].mxu0
    %v2862 = vadd.f32 %v2785, %v2861
    %v2863 = vpop.f32.mrb[0].mxu0
    %v2864 = vpop.f32.mrb[0].mxu0
    %v2865 = vadd.f32 %v2788, %v2864
    %v2866 = vpop.f32.mrb[0].mxu0
    %2867 = vmatprep.mubr.bf16.mxu0 0
    %2868 = vmatmul.mubr.bf16.gmra.mrb[0].mxu0 %v2809
    %v2869 = vpop.f32.mrb[0].mxu0
    %v2870 = vadd.f32 %v2793, %v2869
    %v2871 = vpop.f32.mrb[0].mxu0
    %v2872 = vpop.f32.mrb[0].mxu0
    %v2873 = vadd.f32 %v2796, %v2872
    %v2874 = vpop.f32.mrb[0].mxu0
    %2875 = vdwg.mxu0
    %2876 = vrot.lane.b32.xlu0 %v651, 112
    %v2877 = vpop.permute.xlu0 %2876
    %2878 = vrot.lane.b32.xlu0 %v652, 112
    %v2879 = vpop.permute.xlu0 %2878
    %2880 = vrot.lane.b32.xlu0 %v653, 112
    %v2881 = vpop.permute.xlu0 %2880
    %2882 = vrot.lane.b32.xlu0 %v654, 112
    %v2883 = vpop.permute.xlu0 %2882
    %2884 = vrot.lane.b32.xlu0 %v659, 112
    %v2885 = vpop.permute.xlu0 %2884
    %2886 = vrot.lane.b32.xlu0 %v660, 112
    %v2887 = vpop.permute.xlu0 %2886
    %2888 = vrot.lane.b32.xlu0 %v661, 112
    %v2889 = vpop.permute.xlu0 %2888
    %2890 = vrot.lane.b32.xlu0 %v662, 112
    %v2891 = vpop.permute.xlu0 %2890
    %v2893 = vsel %vm675, %v2877, 0
    %v2896 = vsel %vm675, %v2879, 0
    %v2899 = vsel %vm675, %v2881, 0
    %v2902 = vsel %vm675, %v2883, 0
    %v2905 = vsel %vm675, %v2885, 0
    %v2908 = vsel %vm675, %v2887, 0
    %v2911 = vsel %vm675, %v2889, 0
    %v2914 = vsel %vm675, %v2891, 0
    %2916 = vmatprep.subr.bf16.mxu0 0
    %2917 = vmatpush1.bf16.xpose.msra.mxu0 %v2905
    %2918 = vmatprep.subr.bf16.mxu0 0
    %2919 = vmatpush1.bf16.xpose.msra.mxu0 %v2908
    %2920 = vmatprep.subr.bf16.mxu0 0
    %2921 = vmatpush1.bf16.xpose.msra.mxu0 %v2911
    %2922 = vmatprep.subr.bf16.mxu0 0
    %2923 = vmatpush1.bf16.xpose.msra.mxu0 %v2914
    %2924 = vmatprep.subr.bf16.mxu0 0
    %2925 = vmatpush1.bf16.xpose.msra.mxu0 0
    %2926 = vmatprep.subr.bf16.mxu0 0
    %2927 = vmatpush1.bf16.xpose.msra.mxu0 0
    %2928 = vmatprep.subr.bf16.mxu0 0
    %2929 = vmatpush1.bf16.xpose.msra.mxu0 0
    %2930 = vmatprep.subr.bf16.mxu0 0
    %2931 = vmatpush1.bf16.xpose.msra.mxu0 0
    %2932 = vmatprep.subr.bf16.mxu0 0
    %2933 = vmatpush1.bf16.xpose.msra.mxu0 0
    %2934 = vmatprep.subr.bf16.mxu0 0
    %2935 = vmatpush1.bf16.xpose.msra.mxu0 0
    %2936 = vmatprep.subr.bf16.mxu0 0
    %2937 = vmatpush1.bf16.xpose.msra.mxu0 0
    %2938 = vmatprep.subr.bf16.mxu0 0
    %2939 = vmatpush1.bf16.xpose.msra.mxu0 0
    %2940 = vmatprep.subr.bf16.mxu0 0
    %2941 = vmatpush1.bf16.xpose.msra.mxu0 0
    %2942 = vmatprep.subr.bf16.mxu0 0
    %2943 = vmatpush1.bf16.xpose.msra.mxu0 0
    %2944 = vmatprep.subr.bf16.mxu0 0
    %2945 = vmatpush1.bf16.xpose.msra.mxu0 0
    %2946 = vmatprep.subr.bf16.mxu0 0
    %2947 = vmatpush1.bf16.xpose.msra.mxu0 0
    %2948 = vmatprep.mubr.bf16.mxu0 0
    %2949 = vmatmul.mubr.bf16.gmra.mrb[0].mxu0 %v2893
    %v2950 = vpop.f32.mrb[0].mxu0
    %v2951 = vadd.f32 0.0, %v2950
    %v2952 = vpop.f32.mrb[0].mxu0
    %v2953 = vpop.f32.mrb[0].mxu0
    %v2954 = vadd.f32 0.0, %v2953
    %v2955 = vpop.f32.mrb[0].mxu0
    %2956 = vmatprep.mubr.bf16.mxu0 0
    %2957 = vmatmul.mubr.bf16.gmra.mrb[0].mxu0 %v2896
    %v2958 = vpop.f32.mrb[0].mxu0
    %v2959 = vadd.f32 0.0, %v2958
    %v2960 = vpop.f32.mrb[0].mxu0
    %v2961 = vpop.f32.mrb[0].mxu0
    %v2962 = vadd.f32 0.0, %v2961
    %v2963 = vpop.f32.mrb[0].mxu0
    %2964 = vmatprep.mubr.bf16.mxu0 0
    %2965 = vmatmul.mubr.bf16.gmra.mrb[0].mxu0 %v2899
    %v2966 = vpop.f32.mrb[0].mxu0
    %v2967 = vadd.f32 0.0, %v2966
    %v2968 = vpop.f32.mrb[0].mxu0
    %v2969 = vpop.f32.mrb[0].mxu0
    %v2970 = vadd.f32 0.0, %v2969
    %v2971 = vpop.f32.mrb[0].mxu0
    %2972 = vmatprep.mubr.bf16.mxu0 0
    %2973 = vmatmul.mubr.bf16.gmra.mrb[0].mxu0 %v2902
    %v2974 = vpop.f32.mrb[0].mxu0
    %v2975 = vadd.f32 0.0, %v2974
    %v2976 = vpop.f32.mrb[0].mxu0
    %v2977 = vpop.f32.mrb[0].mxu0
    %v2978 = vadd.f32 0.0, %v2977
    %v2979 = vpop.f32.mrb[0].mxu0
    %2980 = vdwg.mxu0
    %v2981 = vsel %vm765, %v2951, -inf
    %2982 = vmax.xlane.f32.xlu0 %v2981
    %v2983 = vpop.xlane.xlu0 %2982
    %v2984 = vsel %vm765, %v2954, -inf
    %2985 = vmax.xlane.f32.xlu0 %v2984
    %v2986 = vpop.xlane.xlu0 %2985
    %v2987 = vsel %vm765, %v2959, -inf
    %2988 = vmax.xlane.f32.xlu0 %v2987
    %v2989 = vpop.xlane.xlu0 %2988
    %v2990 = vsel %vm765, %v2962, -inf
    %2991 = vmax.xlane.f32.xlu0 %v2990
    %v2992 = vpop.xlane.xlu0 %2991
    %v2993 = vsel %vm765, %v2967, -inf
    %2994 = vmax.xlane.f32.xlu0 %v2993
    %v2995 = vpop.xlane.xlu0 %2994
    %v2996 = vsel %vm765, %v2970, -inf
    %2997 = vmax.xlane.f32.xlu0 %v2996
    %v2998 = vpop.xlane.xlu0 %2997
    %v2999 = vsel %vm765, %v2975, -inf
    %3000 = vmax.xlane.f32.xlu0 %v2999
    %v3001 = vpop.xlane.xlu0 %3000
    %v3002 = vsel %vm765, %v2978, -inf
    %3003 = vmax.xlane.f32.xlu0 %v3002
    %v3004 = vpop.xlane.xlu0 %3003
    %v3005 = vsub.f32 %v2951, %v2983
    %v3006 = vsub.f32 %v2954, %v2986
    %v3007 = vsub.f32 %v2959, %v2989
    %v3008 = vsub.f32 %v2962, %v2992
    %v3009 = vsub.f32 %v2967, %v2995
    %v3010 = vsub.f32 %v2970, %v2998
    %v3011 = vsub.f32 %v2975, %v3001
    %v3012 = vsub.f32 %v2978, %v3004
    %v3013 = vmul.f32 %v3005, 1.442695
    %v3014 = vpow.pop %v3013
    %v3015 = vmul.f32 %v3006, 1.442695
    %v3016 = vpow.pop %v3015
    %v3017 = vmul.f32 %v3007, 1.442695
    %v3018 = vpow.pop %v3017
    %v3019 = vmul.f32 %v3008, 1.442695
    %v3020 = vpow.pop %v3019
    %v3021 = vmul.f32 %v3009, 1.442695
    %v3022 = vpow.pop %v3021
    %v3023 = vmul.f32 %v3010, 1.442695
    %v3024 = vpow.pop %v3023
    %v3025 = vmul.f32 %v3011, 1.442695
    %v3026 = vpow.pop %v3025
    %v3027 = vmul.f32 %v3012, 1.442695
    %v3028 = vpow.pop %v3027
    %v3029 = vsel %vm765, %v3014, 0.0
    %3030 = vadd.xlane.f32.xlu0 %v3029
    %v3031 = vpop.xlane.xlu0 %3030
    %v3032 = vsel %vm765, %v3016, 0.0
    %3033 = vadd.xlane.f32.xlu0 %v3032
    %v3034 = vpop.xlane.xlu0 %3033
    %v3035 = vsel %vm765, %v3018, 0.0
    %3036 = vadd.xlane.f32.xlu0 %v3035
    %v3037 = vpop.xlane.xlu0 %3036
    %v3038 = vsel %vm765, %v3020, 0.0
    %3039 = vadd.xlane.f32.xlu0 %v3038
    %v3040 = vpop.xlane.xlu0 %3039
    %v3041 = vsel %vm765, %v3022, 0.0
    %3042 = vadd.xlane.f32.xlu0 %v3041
    %v3043 = vpop.xlane.xlu0 %3042
    %v3044 = vsel %vm765, %v3024, 0.0
    %3045 = vadd.xlane.f32.xlu0 %v3044
    %v3046 = vpop.xlane.xlu0 %3045
    %v3047 = vsel %vm765, %v3026, 0.0
    %3048 = vadd.xlane.f32.xlu0 %v3047
    %v3049 = vpop.xlane.xlu0 %3048
    %v3050 = vsel %vm765, %v3028, 0.0
    %3051 = vadd.xlane.f32.xlu0 %v3050
    %v3052 = vpop.xlane.xlu0 %3051
    %v3053 = vrcp.pop %v3031
    %v3054 = vrcp.pop %v3034
    %v3055 = vrcp.pop %v3037
    %v3056 = vrcp.pop %v3040
    %v3057 = vrcp.pop %v3043
    %v3058 = vrcp.pop %v3046
    %v3059 = vrcp.pop %v3049
    %v3060 = vrcp.pop %v3052
    %v3061 = vmul.f32 %v3014, %v3053
    %v3062 = vmul.f32 %v3016, %v3054
    %v3063 = vmul.f32 %v3018, %v3055
    %v3064 = vmul.f32 %v3020, %v3056
    %v3065 = vmul.f32 %v3022, %v3057
    %v3066 = vmul.f32 %v3024, %v3058
    %v3067 = vmul.f32 %v3026, %v3059
    %v3068 = vmul.f32 %v3028, %v3060
    %v3069 = vpack.c.bf16 %v3062, %v3061
    %v3070 = vpack.c.bf16 %v3064, %v3063
    %v3071 = vpack.c.bf16 %v3066, %v3065
    %v3072 = vpack.c.bf16 %v3068, %v3067
    %3073 = vrot.lane.b32.xlu0 %v667, 112
    %v3074 = vpop.permute.xlu0 %3073
    %3075 = vrot.lane.b32.xlu0 %v668, 112
    %v3076 = vpop.permute.xlu0 %3075
    %3077 = vrot.lane.b32.xlu0 %v669, 112
    %v3078 = vpop.permute.xlu0 %3077
    %3079 = vrot.lane.b32.xlu0 %v670, 112
    %v3080 = vpop.permute.xlu0 %3079
    %v3086 = vsel %vm765, %v3069, 0
    %v3089 = vsel %vm765, %v3070, 0
    %v3092 = vsel %vm765, %v3071, 0
    %v3095 = vsel %vm765, %v3072, 0
    %3097 = vmatprep.subr.bf16.mxu0 0
    %3098 = vmatpush1.bf16.msra.mxu0 %v3074
    %3099 = vmatprep.subr.bf16.mxu0 0
    %3100 = vmatpush1.bf16.msra.mxu0 %v3076
    %3101 = vmatprep.subr.bf16.mxu0 0
    %3102 = vmatpush1.bf16.msra.mxu0 %v3078
    %3103 = vmatprep.subr.bf16.mxu0 0
    %3104 = vmatpush1.bf16.msra.mxu0 %v3080
    %3105 = vmatprep.subr.bf16.mxu0 0
    %3106 = vmatpush1.bf16.msra.mxu0 0
    %3107 = vmatprep.subr.bf16.mxu0 0
    %3108 = vmatpush1.bf16.msra.mxu0 0
    %3109 = vmatprep.subr.bf16.mxu0 0
    %3110 = vmatpush1.bf16.msra.mxu0 0
    %3111 = vmatprep.subr.bf16.mxu0 0
    %3112 = vmatpush1.bf16.msra.mxu0 0
    %3113 = vmatprep.subr.bf16.mxu0 0
    %3114 = vmatpush1.bf16.msra.mxu0 0
    %3115 = vmatprep.subr.bf16.mxu0 0
    %3116 = vmatpush1.bf16.msra.mxu0 0
    %3117 = vmatprep.subr.bf16.mxu0 0
    %3118 = vmatpush1.bf16.msra.mxu0 0
    %3119 = vmatprep.subr.bf16.mxu0 0
    %3120 = vmatpush1.bf16.msra.mxu0 0
    %3121 = vmatprep.subr.bf16.mxu0 0
    %3122 = vmatpush1.bf16.msra.mxu0 0
    %3123 = vmatprep.subr.bf16.mxu0 0
    %3124 = vmatpush1.bf16.msra.mxu0 0
    %3125 = vmatprep.subr.bf16.mxu0 0
    %3126 = vmatpush1.bf16.msra.mxu0 0
    %3127 = vmatprep.subr.bf16.mxu0 0
    %3128 = vmatpush1.bf16.msra.mxu0 0
    %3129 = vmatprep.mubr.bf16.mxu0 0
    %3130 = vmatmul.mubr.bf16.gmra.mrb[0].mxu0 %v3086
    %v3131 = vpop.f32.mrb[0].mxu0
    %v3132 = vadd.f32 0.0, %v3131
    %v3133 = vpop.f32.mrb[0].mxu0
    %v3134 = vpop.f32.mrb[0].mxu0
    %v3135 = vadd.f32 0.0, %v3134
    %v3136 = vpop.f32.mrb[0].mxu0
    %3137 = vmatprep.mubr.bf16.mxu0 0
    %3138 = vmatmul.mubr.bf16.gmra.mrb[0].mxu0 %v3089
    %v3139 = vpop.f32.mrb[0].mxu0
    %v3140 = vadd.f32 0.0, %v3139
    %v3141 = vpop.f32.mrb[0].mxu0
    %v3142 = vpop.f32.mrb[0].mxu0
    %v3143 = vadd.f32 0.0, %v3142
    %v3144 = vpop.f32.mrb[0].mxu0
    %3145 = vmatprep.mubr.bf16.mxu0 0
    %3146 = vmatmul.mubr.bf16.gmra.mrb[0].mxu0 %v3092
    %v3147 = vpop.f32.mrb[0].mxu0
    %v3148 = vadd.f32 0.0, %v3147
    %v3149 = vpop.f32.mrb[0].mxu0
    %v3150 = vpop.f32.mrb[0].mxu0
    %v3151 = vadd.f32 0.0, %v3150
    %v3152 = vpop.f32.mrb[0].mxu0
    %3153 = vmatprep.mubr.bf16.mxu0 0
    %3154 = vmatmul.mubr.bf16.gmra.mrb[0].mxu0 %v3095
    %v3155 = vpop.f32.mrb[0].mxu0
    %v3156 = vadd.f32 0.0, %v3155
    %v3157 = vpop.f32.mrb[0].mxu0
    %v3158 = vpop.f32.mrb[0].mxu0
    %v3159 = vadd.f32 0.0, %v3158
    %v3160 = vpop.f32.mrb[0].mxu0
    %3161 = vdwg.mxu0
    %v3162 = vpack.c.bf16 %v3135, %v3132
    %v3163 = vpack.c.bf16 %v3143, %v3140
    %v3164 = vpack.c.bf16 %v3151, %v3148
    %v3165 = vpack.c.bf16 %v3159, %v3156
    %v3167 = vsel %vm675, %v3162, 0
    %v3170 = vsel %vm675, %v3163, 0
    %v3173 = vsel %vm675, %v3164, 0
    %v3176 = vsel %vm675, %v3165, 0
    %3178 = vmatprep.subr.bf16.mxu0 0
    %3179 = vmatpush1.bf16.msra.mxu0 %v1705
    %3180 = vmatprep.subr.bf16.mxu0 0
    %3181 = vmatpush1.bf16.msra.mxu0 0
    %3182 = vmatprep.subr.bf16.mxu0 0
    %3183 = vmatpush1.bf16.msra.mxu0 0
    %3184 = vmatprep.subr.bf16.mxu0 0
    %3185 = vmatpush1.bf16.msra.mxu0 0
    %3186 = vmatprep.subr.bf16.mxu0 0
    %3187 = vmatpush1.bf16.msra.mxu0 0
    %3188 = vmatprep.subr.bf16.mxu0 0
    %3189 = vmatpush1.bf16.msra.mxu0 0
    %3190 = vmatprep.subr.bf16.mxu0 0
    %3191 = vmatpush1.bf16.msra.mxu0 0
    %3192 = vmatprep.subr.bf16.mxu0 0
    %3193 = vmatpush1.bf16.msra.mxu0 0
    %3194 = vmatprep.subr.bf16.mxu0 0
    %3195 = vmatpush1.bf16.msra.mxu0 0
    %3196 = vmatprep.subr.bf16.mxu0 0
    %3197 = vmatpush1.bf16.msra.mxu0 0
    %3198 = vmatprep.subr.bf16.mxu0 0
    %3199 = vmatpush1.bf16.msra.mxu0 0
    %3200 = vmatprep.subr.bf16.mxu0 0
    %3201 = vmatpush1.bf16.msra.mxu0 0
    %3202 = vmatprep.subr.bf16.mxu0 0
    %3203 = vmatpush1.bf16.msra.mxu0 0
    %3204 = vmatprep.subr.bf16.mxu0 0
    %3205 = vmatpush1.bf16.msra.mxu0 0
    %3206 = vmatprep.subr.bf16.mxu0 0
    %3207 = vmatpush1.bf16.msra.mxu0 0
    %3208 = vmatprep.subr.bf16.mxu0 0
    %3209 = vmatpush1.bf16.msra.mxu0 0
    %3210 = vmatprep.mubr.bf16.mxu0 0
    %3211 = vmatmul.mubr.bf16.gmra.mrb[0].mxu0 %v3167
    %v3212 = vpop.f32.mrb[0].mxu0
    %v3213 = vadd.f32 0.0, %v3212
    %v3214 = vpop.f32.mrb[0].mxu0
    %v3215 = vpop.f32.mrb[0].mxu0
    %v3216 = vadd.f32 0.0, %v3215
    %v3217 = vpop.f32.mrb[0].mxu0
    %3218 = vmatprep.mubr.bf16.mxu0 0
    %3219 = vmatmul.mubr.bf16.gmra.mrb[0].mxu0 %v3170
    %v3220 = vpop.f32.mrb[0].mxu0
    %v3221 = vadd.f32 0.0, %v3220
    %v3222 = vpop.f32.mrb[0].mxu0
    %v3223 = vpop.f32.mrb[0].mxu0
    %v3224 = vadd.f32 0.0, %v3223
    %v3225 = vpop.f32.mrb[0].mxu0
    %3226 = vmatprep.mubr.bf16.mxu0 0
    %3227 = vmatmul.mubr.bf16.gmra.mrb[0].mxu0 %v3173
    %v3228 = vpop.f32.mrb[0].mxu0
    %v3229 = vadd.f32 0.0, %v3228
    %v3230 = vpop.f32.mrb[0].mxu0
    %v3231 = vpop.f32.mrb[0].mxu0
    %v3232 = vadd.f32 0.0, %v3231
    %v3233 = vpop.f32.mrb[0].mxu0
    %3234 = vmatprep.mubr.bf16.mxu0 0
    %3235 = vmatmul.mubr.bf16.gmra.mrb[0].mxu0 %v3176
    %v3236 = vpop.f32.mrb[0].mxu0
    %v3237 = vadd.f32 0.0, %v3236
    %v3238 = vpop.f32.mrb[0].mxu0
    %v3239 = vpop.f32.mrb[0].mxu0
    %v3240 = vadd.f32 0.0, %v3239
    %v3241 = vpop.f32.mrb[0].mxu0
    %3242 = vdwg.mxu0
    %v3243 = vadd.f32 %v2846, %v3213
    %v3244 = vadd.f32 %v2849, %v3216
    %v3245 = vadd.f32 %v2854, %v3221
    %v3246 = vadd.f32 %v2857, %v3224
    %v3247 = vadd.f32 %v2862, %v3229
    %v3248 = vadd.f32 %v2865, %v3232
    %v3249 = vadd.f32 %v2870, %v3237
    %v3250 = vadd.f32 %v2873, %v3240
    %3251 = vrot.lane.b32.xlu0 %v651, 104
    %v3252 = vpop.permute.xlu0 %3251
    %3253 = vrot.lane.b32.xlu0 %v652, 104
    %v3254 = vpop.permute.xlu0 %3253
    %3255 = vrot.lane.b32.xlu0 %v653, 104
    %v3256 = vpop.permute.xlu0 %3255
    %3257 = vrot.lane.b32.xlu0 %v654, 104
    %v3258 = vpop.permute.xlu0 %3257
    %3259 = vrot.lane.b32.xlu0 %v659, 104
    %v3260 = vpop.permute.xlu0 %3259
    %3261 = vrot.lane.b32.xlu0 %v660, 104
    %v3262 = vpop.permute.xlu0 %3261
    %3263 = vrot.lane.b32.xlu0 %v661, 104
    %v3264 = vpop.permute.xlu0 %3263
    %3265 = vrot.lane.b32.xlu0 %v662, 104
    %v3266 = vpop.permute.xlu0 %3265
    %v3268 = vsel %vm675, %v3252, 0
    %v3271 = vsel %vm675, %v3254, 0
    %v3274 = vsel %vm675, %v3256, 0
    %v3277 = vsel %vm675, %v3258, 0
    %v3280 = vsel %vm675, %v3260, 0
    %v3283 = vsel %vm675, %v3262, 0
    %v3286 = vsel %vm675, %v3264, 0
    %v3289 = vsel %vm675, %v3266, 0
    %3291 = vmatprep.subr.bf16.mxu0 0
    %3292 = vmatpush1.bf16.xpose.msra.mxu0 %v3280
    %3293 = vmatprep.subr.bf16.mxu0 0
    %3294 = vmatpush1.bf16.xpose.msra.mxu0 %v3283
    %3295 = vmatprep.subr.bf16.mxu0 0
    %3296 = vmatpush1.bf16.xpose.msra.mxu0 %v3286
    %3297 = vmatprep.subr.bf16.mxu0 0
    %3298 = vmatpush1.bf16.xpose.msra.mxu0 %v3289
    %3299 = vmatprep.subr.bf16.mxu0 0
    %3300 = vmatpush1.bf16.xpose.msra.mxu0 0
    %3301 = vmatprep.subr.bf16.mxu0 0
    %3302 = vmatpush1.bf16.xpose.msra.mxu0 0
    %3303 = vmatprep.subr.bf16.mxu0 0
    %3304 = vmatpush1.bf16.xpose.msra.mxu0 0
    %3305 = vmatprep.subr.bf16.mxu0 0
    %3306 = vmatpush1.bf16.xpose.msra.mxu0 0
    %3307 = vmatprep.subr.bf16.mxu0 0
    %3308 = vmatpush1.bf16.xpose.msra.mxu0 0
    %3309 = vmatprep.subr.bf16.mxu0 0
    %3310 = vmatpush1.bf16.xpose.msra.mxu0 0
    %3311 = vmatprep.subr.bf16.mxu0 0
    %3312 = vmatpush1.bf16.xpose.msra.mxu0 0
    %3313 = vmatprep.subr.bf16.mxu0 0
    %3314 = vmatpush1.bf16.xpose.msra.mxu0 0
    %3315 = vmatprep.subr.bf16.mxu0 0
    %3316 = vmatpush1.bf16.xpose.msra.mxu0 0
    %3317 = vmatprep.subr.bf16.mxu0 0
    %3318 = vmatpush1.bf16.xpose.msra.mxu0 0
    %3319 = vmatprep.subr.bf16.mxu0 0
    %3320 = vmatpush1.bf16.xpose.msra.mxu0 0
    %3321 = vmatprep.subr.bf16.mxu0 0
    %3322 = vmatpush1.bf16.xpose.msra.mxu0 0
    %3323 = vmatprep.mubr.bf16.mxu0 0
    %3324 = vmatmul.mubr.bf16.gmra.mrb[0].mxu0 %v3268
    %v3325 = vpop.f32.mrb[0].mxu0
    %v3326 = vadd.f32 0.0, %v3325
    %v3327 = vpop.f32.mrb[0].mxu0
    %v3328 = vpop.f32.mrb[0].mxu0
    %v3329 = vadd.f32 0.0, %v3328
    %v3330 = vpop.f32.mrb[0].mxu0
    %3331 = vmatprep.mubr.bf16.mxu0 0
    %3332 = vmatmul.mubr.bf16.gmra.mrb[0].mxu0 %v3271
    %v3333 = vpop.f32.mrb[0].mxu0
    %v3334 = vadd.f32 0.0, %v3333
    %v3335 = vpop.f32.mrb[0].mxu0
    %v3336 = vpop.f32.mrb[0].mxu0
    %v3337 = vadd.f32 0.0, %v3336
    %v3338 = vpop.f32.mrb[0].mxu0
    %3339 = vmatprep.mubr.bf16.mxu0 0
    %3340 = vmatmul.mubr.bf16.gmra.mrb[0].mxu0 %v3274
    %v3341 = vpop.f32.mrb[0].mxu0
    %v3342 = vadd.f32 0.0, %v3341
    %v3343 = vpop.f32.mrb[0].mxu0
    %v3344 = vpop.f32.mrb[0].mxu0
    %v3345 = vadd.f32 0.0, %v3344
    %v3346 = vpop.f32.mrb[0].mxu0
    %3347 = vmatprep.mubr.bf16.mxu0 0
    %3348 = vmatmul.mubr.bf16.gmra.mrb[0].mxu0 %v3277
    %v3349 = vpop.f32.mrb[0].mxu0
    %v3350 = vadd.f32 0.0, %v3349
    %v3351 = vpop.f32.mrb[0].mxu0
    %v3352 = vpop.f32.mrb[0].mxu0
    %v3353 = vadd.f32 0.0, %v3352
    %v3354 = vpop.f32.mrb[0].mxu0
    %3355 = vdwg.mxu0
    %v3356 = vsel %vm765, %v3326, -inf
    %3357 = vmax.xlane.f32.xlu0 %v3356
    %v3358 = vpop.xlane.xlu0 %3357
    %v3359 = vsel %vm765, %v3329, -inf
    %3360 = vmax.xlane.f32.xlu0 %v3359
    %v3361 = vpop.xlane.xlu0 %3360
    %v3362 = vsel %vm765, %v3334, -inf
    %3363 = vmax.xlane.f32.xlu0 %v3362
    %v3364 = vpop.xlane.xlu0 %3363
    %v3365 = vsel %vm765, %v3337, -inf
    %3366 = vmax.xlane.f32.xlu0 %v3365
    %v3367 = vpop.xlane.xlu0 %3366
    %v3368 = vsel %vm765, %v3342, -inf
    %3369 = vmax.xlane.f32.xlu0 %v3368
    %v3370 = vpop.xlane.xlu0 %3369
    %v3371 = vsel %vm765, %v3345, -inf
    %3372 = vmax.xlane.f32.xlu0 %v3371
    %v3373 = vpop.xlane.xlu0 %3372
    %v3374 = vsel %vm765, %v3350, -inf
    %3375 = vmax.xlane.f32.xlu0 %v3374
    %v3376 = vpop.xlane.xlu0 %3375
    %v3377 = vsel %vm765, %v3353, -inf
    %3378 = vmax.xlane.f32.xlu0 %v3377
    %v3379 = vpop.xlane.xlu0 %3378
    %v3380 = vsub.f32 %v3326, %v3358
    %v3381 = vsub.f32 %v3329, %v3361
    %v3382 = vsub.f32 %v3334, %v3364
    %v3383 = vsub.f32 %v3337, %v3367
    %v3384 = vsub.f32 %v3342, %v3370
    %v3385 = vsub.f32 %v3345, %v3373
    %v3386 = vsub.f32 %v3350, %v3376
    %v3387 = vsub.f32 %v3353, %v3379
    %v3388 = vmul.f32 %v3380, 1.442695
    %v3389 = vpow.pop %v3388
    %v3390 = vmul.f32 %v3381, 1.442695
    %v3391 = vpow.pop %v3390
    %v3392 = vmul.f32 %v3382, 1.442695
    %v3393 = vpow.pop %v3392
    %v3394 = vmul.f32 %v3383, 1.442695
    %v3395 = vpow.pop %v3394
    %v3396 = vmul.f32 %v3384, 1.442695
    %v3397 = vpow.pop %v3396
    %v3398 = vmul.f32 %v3385, 1.442695
    %v3399 = vpow.pop %v3398
    %v3400 = vmul.f32 %v3386, 1.442695
    %v3401 = vpow.pop %v3400
    %v3402 = vmul.f32 %v3387, 1.442695
    %v3403 = vpow.pop %v3402
    %v3404 = vsel %vm765, %v3389, 0.0
    %3405 = vadd.xlane.f32.xlu0 %v3404
    %v3406 = vpop.xlane.xlu0 %3405
    %v3407 = vsel %vm765, %v3391, 0.0
    %3408 = vadd.xlane.f32.xlu0 %v3407
    %v3409 = vpop.xlane.xlu0 %3408
    %v3410 = vsel %vm765, %v3393, 0.0
    %3411 = vadd.xlane.f32.xlu0 %v3410
    %v3412 = vpop.xlane.xlu0 %3411
    %v3413 = vsel %vm765, %v3395, 0.0
    %3414 = vadd.xlane.f32.xlu0 %v3413
    %v3415 = vpop.xlane.xlu0 %3414
    %v3416 = vsel %vm765, %v3397, 0.0
    %3417 = vadd.xlane.f32.xlu0 %v3416
    %v3418 = vpop.xlane.xlu0 %3417
    %v3419 = vsel %vm765, %v3399, 0.0
    %3420 = vadd.xlane.f32.xlu0 %v3419
    %v3421 = vpop.xlane.xlu0 %3420
    %v3422 = vsel %vm765, %v3401, 0.0
    %3423 = vadd.xlane.f32.xlu0 %v3422
    %v3424 = vpop.xlane.xlu0 %3423
    %v3425 = vsel %vm765, %v3403, 0.0
    %3426 = vadd.xlane.f32.xlu0 %v3425
    %v3427 = vpop.xlane.xlu0 %3426
    %v3428 = vrcp.pop %v3406
    %v3429 = vrcp.pop %v3409
    %v3430 = vrcp.pop %v3412
    %v3431 = vrcp.pop %v3415
    %v3432 = vrcp.pop %v3418
    %v3433 = vrcp.pop %v3421
    %v3434 = vrcp.pop %v3424
    %v3435 = vrcp.pop %v3427
    %v3436 = vmul.f32 %v3389, %v3428
    %v3437 = vmul.f32 %v3391, %v3429
    %v3438 = vmul.f32 %v3393, %v3430
    %v3439 = vmul.f32 %v3395, %v3431
    %v3440 = vmul.f32 %v3397, %v3432
    %v3441 = vmul.f32 %v3399, %v3433
    %v3442 = vmul.f32 %v3401, %v3434
    %v3443 = vmul.f32 %v3403, %v3435
    %v3444 = vpack.c.bf16 %v3437, %v3436
    %v3445 = vpack.c.bf16 %v3439, %v3438
    %v3446 = vpack.c.bf16 %v3441, %v3440
    %v3447 = vpack.c.bf16 %v3443, %v3442
    %3448 = vrot.lane.b32.xlu0 %v667, 104
    %v3449 = vpop.permute.xlu0 %3448
    %3450 = vrot.lane.b32.xlu0 %v668, 104
    %v3451 = vpop.permute.xlu0 %3450
    %3452 = vrot.lane.b32.xlu0 %v669, 104
    %v3453 = vpop.permute.xlu0 %3452
    %3454 = vrot.lane.b32.xlu0 %v670, 104
    %v3455 = vpop.permute.xlu0 %3454
    %v3461 = vsel %vm765, %v3444, 0
    %v3464 = vsel %vm765, %v3445, 0
    %v3467 = vsel %vm765, %v3446, 0
    %v3470 = vsel %vm765, %v3447, 0
    %3472 = vmatprep.subr.bf16.mxu0 0
    %3473 = vmatpush1.bf16.msra.mxu0 %v3449
    %3474 = vmatprep.subr.bf16.mxu0 0
    %3475 = vmatpush1.bf16.msra.mxu0 %v3451
    %3476 = vmatprep.subr.bf16.mxu0 0
    %3477 = vmatpush1.bf16.msra.mxu0 %v3453
    %3478 = vmatprep.subr.bf16.mxu0 0
    %3479 = vmatpush1.bf16.msra.mxu0 %v3455
    %3480 = vmatprep.subr.bf16.mxu0 0
    %3481 = vmatpush1.bf16.msra.mxu0 0
    %3482 = vmatprep.subr.bf16.mxu0 0
    %3483 = vmatpush1.bf16.msra.mxu0 0
    %3484 = vmatprep.subr.bf16.mxu0 0
    %3485 = vmatpush1.bf16.msra.mxu0 0
    %3486 = vmatprep.subr.bf16.mxu0 0
    %3487 = vmatpush1.bf16.msra.mxu0 0
    %3488 = vmatprep.subr.bf16.mxu0 0
    %3489 = vmatpush1.bf16.msra.mxu0 0
    %3490 = vmatprep.subr.bf16.mxu0 0
    %3491 = vmatpush1.bf16.msra.mxu0 0
    %3492 = vmatprep.subr.bf16.mxu0 0
    %3493 = vmatpush1.bf16.msra.mxu0 0
    %3494 = vmatprep.subr.bf16.mxu0 0
    %3495 = vmatpush1.bf16.msra.mxu0 0
    %3496 = vmatprep.subr.bf16.mxu0 0
    %3497 = vmatpush1.bf16.msra.mxu0 0
    %3498 = vmatprep.subr.bf16.mxu0 0
    %3499 = vmatpush1.bf16.msra.mxu0 0
    %3500 = vmatprep.subr.bf16.mxu0 0
    %3501 = vmatpush1.bf16.msra.mxu0 0
    %3502 = vmatprep.subr.bf16.mxu0 0
    %3503 = vmatpush1.bf16.msra.mxu0 0
    %3504 = vmatprep.mubr.bf16.mxu0 0
    %3505 = vmatmul.mubr.bf16.gmra.mrb[0].mxu0 %v3461
    %v3506 = vpop.f32.mrb[0].mxu0
    %v3507 = vadd.f32 0.0, %v3506
    %v3508 = vpop.f32.mrb[0].mxu0
    %v3509 = vpop.f32.mrb[0].mxu0
    %v3510 = vadd.f32 0.0, %v3509
    %v3511 = vpop.f32.mrb[0].mxu0
    %3512 = vmatprep.mubr.bf16.mxu0 0
    %3513 = vmatmul.mubr.bf16.gmra.mrb[0].mxu0 %v3464
    %v3514 = vpop.f32.mrb[0].mxu0
    %v3515 = vadd.f32 0.0, %v3514
    %v3516 = vpop.f32.mrb[0].mxu0
    %v3517 = vpop.f32.mrb[0].mxu0
    %v3518 = vadd.f32 0.0, %v3517
    %v3519 = vpop.f32.mrb[0].mxu0
    %3520 = vmatprep.mubr.bf16.mxu0 0
    %3521 = vmatmul.mubr.bf16.gmra.mrb[0].mxu0 %v3467
    %v3522 = vpop.f32.mrb[0].mxu0
    %v3523 = vadd.f32 0.0, %v3522
    %v3524 = vpop.f32.mrb[0].mxu0
    %v3525 = vpop.f32.mrb[0].mxu0
    %v3526 = vadd.f32 0.0, %v3525
    %v3527 = vpop.f32.mrb[0].mxu0
    %3528 = vmatprep.mubr.bf16.mxu0 0
    %3529 = vmatmul.mubr.bf16.gmra.mrb[0].mxu0 %v3470
    %v3530 = vpop.f32.mrb[0].mxu0
    %v3531 = vadd.f32 0.0, %v3530
    %v3532 = vpop.f32.mrb[0].mxu0
    %v3533 = vpop.f32.mrb[0].mxu0
    %v3534 = vadd.f32 0.0, %v3533
    %v3535 = vpop.f32.mrb[0].mxu0
    %3536 = vdwg.mxu0
    %v3537 = vpack.c.bf16 %v3510, %v3507
    %v3538 = vpack.c.bf16 %v3518, %v3515
    %v3539 = vpack.c.bf16 %v3526, %v3523
    %v3540 = vpack.c.bf16 %v3534, %v3531
    %v3542 = vsel %vm675, %v3537, 0
    %v3545 = vsel %vm675, %v3538, 0
    %v3548 = vsel %vm675, %v3539, 0
    %v3551 = vsel %vm675, %v3540, 0
    %3553 = vmatprep.subr.bf16.mxu0 0
    %3554 = vmatpush1.bf16.msra.mxu0 %v2083
    %3555 = vmatprep.subr.bf16.mxu0 0
    %3556 = vmatpush1.bf16.msra.mxu0 0
    %3557 = vmatprep.subr.bf16.mxu0 0
    %3558 = vmatpush1.bf16.msra.mxu0 0
    %3559 = vmatprep.subr.bf16.mxu0 0
    %3560 = vmatpush1.bf16.msra.mxu0 0
    %3561 = vmatprep.subr.bf16.mxu0 0
    %3562 = vmatpush1.bf16.msra.mxu0 0
    %3563 = vmatprep.subr.bf16.mxu0 0
    %3564 = vmatpush1.bf16.msra.mxu0 0
    %3565 = vmatprep.subr.bf16.mxu0 0
    %3566 = vmatpush1.bf16.msra.mxu0 0
    %3567 = vmatprep.subr.bf16.mxu0 0
    %3568 = vmatpush1.bf16.msra.mxu0 0
    %3569 = vmatprep.subr.bf16.mxu0 0
    %3570 = vmatpush1.bf16.msra.mxu0 0
    %3571 = vmatprep.subr.bf16.mxu0 0
    %3572 = vmatpush1.bf16.msra.mxu0 0
    %3573 = vmatprep.subr.bf16.mxu0 0
    %3574 = vmatpush1.bf16.msra.mxu0 0
    %3575 = vmatprep.subr.bf16.mxu0 0
    %3576 = vmatpush1.bf16.msra.mxu0 0
    %3577 = vmatprep.subr.bf16.mxu0 0
    %3578 = vmatpush1.bf16.msra.mxu0 0
    %3579 = vmatprep.subr.bf16.mxu0 0
    %3580 = vmatpush1.bf16.msra.mxu0 0
    %3581 = vmatprep.subr.bf16.mxu0 0
    %3582 = vmatpush1.bf16.msra.mxu0 0
    %3583 = vmatprep.subr.bf16.mxu0 0
    %3584 = vmatpush1.bf16.msra.mxu0 0
    %3585 = vmatprep.mubr.bf16.mxu0 0
    %3586 = vmatmul.mubr.bf16.gmra.mrb[0].mxu0 %v3542
    %v3587 = vpop.f32.mrb[0].mxu0
    %v3588 = vadd.f32 0.0, %v3587
    %v3589 = vpop.f32.mrb[0].mxu0
    %v3590 = vpop.f32.mrb[0].mxu0
    %v3591 = vadd.f32 0.0, %v3590
    %v3592 = vpop.f32.mrb[0].mxu0
    %3593 = vmatprep.mubr.bf16.mxu0 0
    %3594 = vmatmul.mubr.bf16.gmra.mrb[0].mxu0 %v3545
    %v3595 = vpop.f32.mrb[0].mxu0
    %v3596 = vadd.f32 0.0, %v3595
    %v3597 = vpop.f32.mrb[0].mxu0
    %v3598 = vpop.f32.mrb[0].mxu0
    %v3599 = vadd.f32 0.0, %v3598
    %v3600 = vpop.f32.mrb[0].mxu0
    %3601 = vmatprep.mubr.bf16.mxu0 0
    %3602 = vmatmul.mubr.bf16.gmra.mrb[0].mxu0 %v3548
    %v3603 = vpop.f32.mrb[0].mxu0
    %v3604 = vadd.f32 0.0, %v3603
    %v3605 = vpop.f32.mrb[0].mxu0
    %v3606 = vpop.f32.mrb[0].mxu0
    %v3607 = vadd.f32 0.0, %v3606
    %v3608 = vpop.f32.mrb[0].mxu0
    %3609 = vmatprep.mubr.bf16.mxu0 0
    %3610 = vmatmul.mubr.bf16.gmra.mrb[0].mxu0 %v3551
    %v3611 = vpop.f32.mrb[0].mxu0
    %v3612 = vadd.f32 0.0, %v3611
    %v3613 = vpop.f32.mrb[0].mxu0
    %v3614 = vpop.f32.mrb[0].mxu0
    %v3615 = vadd.f32 0.0, %v3614
    %v3616 = vpop.f32.mrb[0].mxu0
    %3617 = vdwg.mxu0
    %v3618 = vadd.f32 %v3243, %v3588
    %v3619 = vadd.f32 %v3244, %v3591
    %v3620 = vadd.f32 %v3245, %v3596
    %v3621 = vadd.f32 %v3246, %v3599
    %v3622 = vadd.f32 %v3247, %v3604
    %v3623 = vadd.f32 %v3248, %v3607
    %v3624 = vadd.f32 %v3249, %v3612
    %v3625 = vadd.f32 %v3250, %v3615
    %v3626 = vld [vmem:[%s9] sm:$0x1]
    %v3628 = vlaneseq
    %v3629 = vshrl.u32 %v3628, 7
    %v3630 = vsub.s32 0, %v3629
    %v3631 = vrot.slane %v3626, %v3630
    %v3633 = vadd.f32 %v2150, %v3631
    %v3634 = vadd.f32 %v2151, %v3631
    %v3635 = vadd.f32 %v2152, %v3631
    %v3636 = vadd.f32 %v2153, %v3631
    %v3637 = vadd.f32 %v2154, %v3631
    %v3638 = vadd.f32 %v2155, %v3631
    %v3639 = vadd.f32 %v2156, %v3631
    %v3640 = vadd.f32 %v2157, %v3631
    %v3641 = vadd.f32 %v3618, %v3631
    %v3642 = vadd.f32 %v3619, %v3631
    %v3643 = vadd.f32 %v3620, %v3631
    %v3644 = vadd.f32 %v3621, %v3631
    %v3645 = vadd.f32 %v3622, %v3631
    %v3646 = vadd.f32 %v3623, %v3631
    %v3647 = vadd.f32 %v3624, %v3631
    %v3648 = vadd.f32 %v3625, %v3631
    %v3649 = vadd.f32 %v111, %v3633
    %v3650 = vadd.f32 %v112, %v3634
    %v3651 = vadd.f32 %v113, %v3635
    %v3652 = vadd.f32 %v114, %v3636
    %v3653 = vadd.f32 %v115, %v3637
    %v3654 = vadd.f32 %v116, %v3638
    %v3655 = vadd.f32 %v117, %v3639
    %v3656 = vadd.f32 %v118, %v3640
    %v3657 = vadd.f32 %v148, %v3641
    %v3658 = vadd.f32 %v149, %v3642
    %v3659 = vadd.f32 %v150, %v3643
    %v3660 = vadd.f32 %v151, %v3644
    %v3661 = vadd.f32 %v152, %v3645
    %v3662 = vadd.f32 %v153, %v3646
    %v3663 = vadd.f32 %v154, %v3647
    %v3664 = vadd.f32 %v155, %v3648
    %v3665 = vsel %vm269, %v3649, 0.0
    %3666 = vadd.xlane.f32.xlu0 %v3665
    %v3667 = vpop.xlane.xlu0 %3666
    %v3668 = vsel %vm269, %v3650, 0.0
    %3669 = vadd.xlane.f32.xlu0 %v3668
    %v3670 = vpop.xlane.xlu0 %3669
    %v3671 = vsel %vm269, %v3651, 0.0
    %3672 = vadd.xlane.f32.xlu0 %v3671
    %v3673 = vpop.xlane.xlu0 %3672
    %v3674 = vsel %vm269, %v3652, 0.0
    %3675 = vadd.xlane.f32.xlu0 %v3674
    %v3676 = vpop.xlane.xlu0 %3675
    %v3677 = vsel %vm269, %v3653, 0.0
    %3678 = vadd.xlane.f32.xlu0 %v3677
    %v3679 = vpop.xlane.xlu0 %3678
    %v3680 = vsel %vm269, %v3654, 0.0
    %3681 = vadd.xlane.f32.xlu0 %v3680
    %v3682 = vpop.xlane.xlu0 %3681
    %v3683 = vsel %vm269, %v3655, 0.0
    %3684 = vadd.xlane.f32.xlu0 %v3683
    %v3685 = vpop.xlane.xlu0 %3684
    %v3686 = vsel %vm269, %v3656, 0.0
    %3687 = vadd.xlane.f32.xlu0 %v3686
    %v3688 = vpop.xlane.xlu0 %3687
    %v3689 = vsel %vm269, %v3657, 0.0
    %3690 = vadd.xlane.f32.xlu0 %v3689
    %v3691 = vpop.xlane.xlu0 %3690
    %v3692 = vsel %vm269, %v3658, 0.0
    %3693 = vadd.xlane.f32.xlu0 %v3692
    %v3694 = vpop.xlane.xlu0 %3693
    %v3695 = vsel %vm269, %v3659, 0.0
    %3696 = vadd.xlane.f32.xlu0 %v3695
    %v3697 = vpop.xlane.xlu0 %3696
    %v3698 = vsel %vm269, %v3660, 0.0
    %3699 = vadd.xlane.f32.xlu0 %v3698
    %v3700 = vpop.xlane.xlu0 %3699
    %v3701 = vsel %vm269, %v3661, 0.0
    %3702 = vadd.xlane.f32.xlu0 %v3701
    %v3703 = vpop.xlane.xlu0 %3702
    %v3704 = vsel %vm269, %v3662, 0.0
    %3705 = vadd.xlane.f32.xlu0 %v3704
    %v3706 = vpop.xlane.xlu0 %3705
    %v3707 = vsel %vm269, %v3663, 0.0
    %3708 = vadd.xlane.f32.xlu0 %v3707
    %v3709 = vpop.xlane.xlu0 %3708
    %v3710 = vsel %vm269, %v3664, 0.0
    %3711 = vadd.xlane.f32.xlu0 %v3710
    %v3712 = vpop.xlane.xlu0 %3711
    %v3713 = vrcp.pop 32.0
    %v3714 = vmul.f32 %v3667, %v3713
    %v3715 = vmul.f32 %v3670, %v3713
    %v3716 = vmul.f32 %v3673, %v3713
    %v3717 = vmul.f32 %v3676, %v3713
    %v3718 = vmul.f32 %v3679, %v3713
    %v3719 = vmul.f32 %v3682, %v3713
    %v3720 = vmul.f32 %v3685, %v3713
    %v3721 = vmul.f32 %v3688, %v3713
    %v3722 = vmul.f32 %v3691, %v3713
    %v3723 = vmul.f32 %v3694, %v3713
    %v3724 = vmul.f32 %v3697, %v3713
    %v3725 = vmul.f32 %v3700, %v3713
    %v3726 = vmul.f32 %v3703, %v3713
    %v3727 = vmul.f32 %v3706, %v3713
    %v3728 = vmul.f32 %v3709, %v3713
    %v3729 = vmul.f32 %v3712, %v3713
    %v3730 = vsub.f32 %v3649, %v3714
    %v3731 = vsub.f32 %v3650, %v3715
    %v3732 = vsub.f32 %v3651, %v3716
    %v3733 = vsub.f32 %v3652, %v3717
    %v3734 = vsub.f32 %v3653, %v3718
    %v3735 = vsub.f32 %v3654, %v3719
    %v3736 = vsub.f32 %v3655, %v3720
    %v3737 = vsub.f32 %v3656, %v3721
    %v3738 = vsub.f32 %v3657, %v3722
    %v3739 = vsub.f32 %v3658, %v3723
    %v3740 = vsub.f32 %v3659, %v3724
    %v3741 = vsub.f32 %v3660, %v3725
    %v3742 = vsub.f32 %v3661, %v3726
    %v3743 = vsub.f32 %v3662, %v3727
    %v3744 = vsub.f32 %v3663, %v3728
    %v3745 = vsub.f32 %v3664, %v3729
    %v3746 = vmul.f32 %v3730, %v3730
    %v3747 = vmul.f32 %v3731, %v3731
    %v3748 = vmul.f32 %v3732, %v3732
    %v3749 = vmul.f32 %v3733, %v3733
    %v3750 = vmul.f32 %v3734, %v3734
    %v3751 = vmul.f32 %v3735, %v3735
    %v3752 = vmul.f32 %v3736, %v3736
    %v3753 = vmul.f32 %v3737, %v3737
    %v3754 = vmul.f32 %v3738, %v3738
    %v3755 = vmul.f32 %v3739, %v3739
    %v3756 = vmul.f32 %v3740, %v3740
    %v3757 = vmul.f32 %v3741, %v3741
    %v3758 = vmul.f32 %v3742, %v3742
    %v3759 = vmul.f32 %v3743, %v3743
    %v3760 = vmul.f32 %v3744, %v3744
    %v3761 = vmul.f32 %v3745, %v3745
    %v3762 = vsel %vm269, %v3746, 0.0
    %3763 = vadd.xlane.f32.xlu0 %v3762
    %v3764 = vpop.xlane.xlu0 %3763
    %v3765 = vsel %vm269, %v3747, 0.0
    %3766 = vadd.xlane.f32.xlu0 %v3765
    %v3767 = vpop.xlane.xlu0 %3766
    %v3768 = vsel %vm269, %v3748, 0.0
    %3769 = vadd.xlane.f32.xlu0 %v3768
    %v3770 = vpop.xlane.xlu0 %3769
    %v3771 = vsel %vm269, %v3749, 0.0
    %3772 = vadd.xlane.f32.xlu0 %v3771
    %v3773 = vpop.xlane.xlu0 %3772
    %v3774 = vsel %vm269, %v3750, 0.0
    %3775 = vadd.xlane.f32.xlu0 %v3774
    %v3776 = vpop.xlane.xlu0 %3775
    %v3777 = vsel %vm269, %v3751, 0.0
    %3778 = vadd.xlane.f32.xlu0 %v3777
    %v3779 = vpop.xlane.xlu0 %3778
    %v3780 = vsel %vm269, %v3752, 0.0
    %3781 = vadd.xlane.f32.xlu0 %v3780
    %v3782 = vpop.xlane.xlu0 %3781
    %v3783 = vsel %vm269, %v3753, 0.0
    %3784 = vadd.xlane.f32.xlu0 %v3783
    %v3785 = vpop.xlane.xlu0 %3784
    %v3786 = vsel %vm269, %v3754, 0.0
    %3787 = vadd.xlane.f32.xlu0 %v3786
    %v3788 = vpop.xlane.xlu0 %3787
    %v3789 = vsel %vm269, %v3755, 0.0
    %3790 = vadd.xlane.f32.xlu0 %v3789
    %v3791 = vpop.xlane.xlu0 %3790
    %v3792 = vsel %vm269, %v3756, 0.0
    %3793 = vadd.xlane.f32.xlu0 %v3792
    %v3794 = vpop.xlane.xlu0 %3793
    %v3795 = vsel %vm269, %v3757, 0.0
    %3796 = vadd.xlane.f32.xlu0 %v3795
    %v3797 = vpop.xlane.xlu0 %3796
    %v3798 = vsel %vm269, %v3758, 0.0
    %3799 = vadd.xlane.f32.xlu0 %v3798
    %v3800 = vpop.xlane.xlu0 %3799
    %v3801 = vsel %vm269, %v3759, 0.0
    %3802 = vadd.xlane.f32.xlu0 %v3801
    %v3803 = vpop.xlane.xlu0 %3802
    %v3804 = vsel %vm269, %v3760, 0.0
    %3805 = vadd.xlane.f32.xlu0 %v3804
    %v3806 = vpop.xlane.xlu0 %3805
    %v3807 = vsel %vm269, %v3761, 0.0
    %3808 = vadd.xlane.f32.xlu0 %v3807
    %v3809 = vpop.xlane.xlu0 %3808
    %v3810 = vmul.f32 %v3764, %v3713
    %v3811 = vmul.f32 %v3767, %v3713
    %v3812 = vmul.f32 %v3770, %v3713
    %v3813 = vmul.f32 %v3773, %v3713
    %v3814 = vmul.f32 %v3776, %v3713
    %v3815 = vmul.f32 %v3779, %v3713
    %v3816 = vmul.f32 %v3782, %v3713
    %v3817 = vmul.f32 %v3785, %v3713
    %v3818 = vmul.f32 %v3788, %v3713
    %v3819 = vmul.f32 %v3791, %v3713
    %v3820 = vmul.f32 %v3794, %v3713
    %v3821 = vmul.f32 %v3797, %v3713
    %v3822 = vmul.f32 %v3800, %v3713
    %v3823 = vmul.f32 %v3803, %v3713
    %v3824 = vmul.f32 %v3806, %v3713
    %v3825 = vmul.f32 %v3809, %v3713
    %v3826 = vadd.f32 %v3810, 1e-05
    %v3827 = vadd.f32 %v3811, 1e-05
    %v3828 = vadd.f32 %v3812, 1e-05
    %v3829 = vadd.f32 %v3813, 1e-05
    %v3830 = vadd.f32 %v3814, 1e-05
    %v3831 = vadd.f32 %v3815, 1e-05
    %v3832 = vadd.f32 %v3816, 1e-05
    %v3833 = vadd.f32 %v3817, 1e-05
    %v3834 = vadd.f32 %v3818, 1e-05
    %v3835 = vadd.f32 %v3819, 1e-05
    %v3836 = vadd.f32 %v3820, 1e-05
    %v3837 = vadd.f32 %v3821, 1e-05
    %v3838 = vadd.f32 %v3822, 1e-05
    %v3839 = vadd.f32 %v3823, 1e-05
    %v3840 = vadd.f32 %v3824, 1e-05
    %v3841 = vadd.f32 %v3825, 1e-05
    %v3842 = vrsqrt.pop %v3826
    %v3843 = vrsqrt.pop %v3827
    %v3844 = vrsqrt.pop %v3828
    %v3845 = vrsqrt.pop %v3829
    %v3846 = vrsqrt.pop %v3830
    %v3847 = vrsqrt.pop %v3831
    %v3848 = vrsqrt.pop %v3832
    %v3849 = vrsqrt.pop %v3833
    %v3850 = vrsqrt.pop %v3834
    %v3851 = vrsqrt.pop %v3835
    %v3852 = vrsqrt.pop %v3836
    %v3853 = vrsqrt.pop %v3837
    %v3854 = vrsqrt.pop %v3838
    %v3855 = vrsqrt.pop %v3839
    %v3856 = vrsqrt.pop %v3840
    %v3857 = vrsqrt.pop %v3841
    %v3858 = vmul.f32 %v3730, %v3842
    %v3859 = vmul.f32 %v3731, %v3843
    %v3860 = vmul.f32 %v3732, %v3844
    %v3861 = vmul.f32 %v3733, %v3845
    %v3862 = vmul.f32 %v3734, %v3846
    %v3863 = vmul.f32 %v3735, %v3847
    %v3864 = vmul.f32 %v3736, %v3848
    %v3865 = vmul.f32 %v3737, %v3849
    %v3866 = vmul.f32 %v3738, %v3850
    %v3867 = vmul.f32 %v3739, %v3851
    %v3868 = vmul.f32 %v3740, %v3852
    %v3869 = vmul.f32 %v3741, %v3853
    %v3870 = vmul.f32 %v3742, %v3854
    %v3871 = vmul.f32 %v3743, %v3855
    %v3872 = vmul.f32 %v3744, %v3856
    %v3873 = vmul.f32 %v3745, %v3857
    %v3874 = vld [vmem:[%s18] sm:$0x1]
    %v3876 = vlaneseq
    %v3877 = vshrl.u32 %v3876, 7
    %v3878 = vsub.s32 0, %v3877
    %v3879 = vrot.slane %v3874, %v3878
    %v3881 = vmul.f32 %v3858, %v3879
    %v3882 = vmul.f32 %v3859, %v3879
    %v3883 = vmul.f32 %v3860, %v3879
    %v3884 = vmul.f32 %v3861, %v3879
    %v3885 = vmul.f32 %v3862, %v3879
    %v3886 = vmul.f32 %v3863, %v3879
    %v3887 = vmul.f32 %v3864, %v3879
    %v3888 = vmul.f32 %v3865, %v3879
    %v3889 = vmul.f32 %v3866, %v3879
    %v3890 = vmul.f32 %v3867, %v3879
    %v3891 = vmul.f32 %v3868, %v3879
    %v3892 = vmul.f32 %v3869, %v3879
    %v3893 = vmul.f32 %v3870, %v3879
    %v3894 = vmul.f32 %v3871, %v3879
    %v3895 = vmul.f32 %v3872, %v3879
    %v3896 = vmul.f32 %v3873, %v3879
    %v3897 = vld [vmem:[%s19] sm:$0x1]
    %v3899 = vlaneseq
    %v3900 = vshrl.u32 %v3899, 7
    %v3901 = vsub.s32 0, %v3900
    %v3902 = vrot.slane %v3897, %v3901
    %v3904 = vadd.f32 %v3881, %v3902
    %v3905 = vadd.f32 %v3882, %v3902
    %v3906 = vadd.f32 %v3883, %v3902
    %v3907 = vadd.f32 %v3884, %v3902
    %v3908 = vadd.f32 %v3885, %v3902
    %v3909 = vadd.f32 %v3886, %v3902
    %v3910 = vadd.f32 %v3887, %v3902
    %v3911 = vadd.f32 %v3888, %v3902
    %v3912 = vadd.f32 %v3889, %v3902
    %v3913 = vadd.f32 %v3890, %v3902
    %v3914 = vadd.f32 %v3891, %v3902
    %v3915 = vadd.f32 %v3892, %v3902
    %v3916 = vadd.f32 %v3893, %v3902
    %v3917 = vadd.f32 %v3894, %v3902
    %v3918 = vadd.f32 %v3895, %v3902
    %v3919 = vadd.f32 %v3896, %v3902
    %v3920 = vpack.c.bf16 %v3905, %v3904
    %v3921 = vpack.c.bf16 %v3907, %v3906
    %v3922 = vpack.c.bf16 %v3909, %v3908
    %v3923 = vpack.c.bf16 %v3911, %v3910
    %v3924 = vpack.c.bf16 %v3913, %v3912
    %v3925 = vpack.c.bf16 %v3915, %v3914
    %v3926 = vpack.c.bf16 %v3917, %v3916
    %v3927 = vpack.c.bf16 %v3919, %v3918
    %v3928 = vld [vmem:[%s10] sm:$0xf]
    %v3929 = vld [vmem:[%s10 + $0x4] sm:$0xf]
    %v3930 = vld [vmem:[%s10 + $0x8] sm:$0xf]
    %v3931 = vld [vmem:[%s10 + $0xc] sm:$0xf]
    %v3932 = vld [vmem:[%s13] sm:$0x1]
    %v3934 = vlaneseq
    %v3935 = vshrl.u32 %v3934, 7
    %v3936 = vsub.s32 0, %v3935
    %v3937 = vrot.slane %v3932, %v3936
    %v3943 = vunpack.c.l.b16 %v3928
    %v3944 = vunpack.c.l.b16 %v3929
    %v3945 = vunpack.c.l.b16 %v3930
    %v3946 = vunpack.c.l.b16 %v3931
    %v3947 = vpack.c.b16 %v3944, %v3943
    %v3948 = vpack.c.b16 %v3946, %v3945
    %v3952 = vsel %vm269, %v3920, 0
    %v3955 = vsel %vm269, %v3921, 0
    %v3958 = vsel %vm269, %v3922, 0
    %v3961 = vsel %vm269, %v3923, 0
    %v3964 = vsel %vm269, %v3924, 0
    %v3967 = vsel %vm269, %v3925, 0
    %v3970 = vsel %vm269, %v3926, 0
    %v3973 = vsel %vm269, %v3927, 0
    %3975 = vmatprep.subr.bf16.mxu0 0
    %3976 = vmatpush1.bf16.msra.mxu0 %v3947
    %3977 = vmatprep.subr.bf16.mxu0 0
    %3978 = vmatpush1.bf16.msra.mxu0 %v3948
    %3979 = vmatprep.subr.bf16.mxu0 0
    %3980 = vmatpush1.bf16.msra.mxu0 0
    %3981 = vmatprep.subr.bf16.mxu0 0
    %3982 = vmatpush1.bf16.msra.mxu0 0
    %3983 = vmatprep.subr.bf16.mxu0 0
    %3984 = vmatpush1.bf16.msra.mxu0 0
    %3985 = vmatprep.subr.bf16.mxu0 0
    %3986 = vmatpush1.bf16.msra.mxu0 0
    %3987 = vmatprep.subr.bf16.mxu0 0
    %3988 = vmatpush1.bf16.msra.mxu0 0
    %3989 = vmatprep.subr.bf16.mxu0 0
    %3990 = vmatpush1.bf16.msra.mxu0 0
    %3991 = vmatprep.subr.bf16.mxu0 0
    %3992 = vmatpush1.bf16.msra.mxu0 0
    %3993 = vmatprep.subr.bf16.mxu0 0
    %3994 = vmatpush1.bf16.msra.mxu0 0
    %3995 = vmatprep.subr.bf16.mxu0 0
    %3996 = vmatpush1.bf16.msra.mxu0 0
    %3997 = vmatprep.subr.bf16.mxu0 0
    %3998 = vmatpush1.bf16.msra.mxu0 0
    %3999 = vmatprep.subr.bf16.mxu0 0
    %4000 = vmatpush1.bf16.msra.mxu0 0
    %4001 = vmatprep.subr.bf16.mxu0 0
    %4002 = vmatpush1.bf16.msra.mxu0 0
    %4003 = vmatprep.subr.bf16.mxu0 0
    %4004 = vmatpush1.bf16.msra.mxu0 0
    %4005 = vmatprep.subr.bf16.mxu0 0
    %4006 = vmatpush1.bf16.msra.mxu0 0
    %4007 = vmatprep.mubr.bf16.mxu0 0
    %4008 = vmatmul.mubr.bf16.gmra.mrb[0].mxu0 %v3952
    %v4009 = vpop.f32.mrb[0].mxu0
    %v4010 = vadd.f32 %v3937, %v4009
    %v4011 = vpop.f32.mrb[0].mxu0
    %v4012 = vpop.f32.mrb[0].mxu0
    %v4013 = vadd.f32 %v3937, %v4012
    %v4014 = vpop.f32.mrb[0].mxu0
    %4015 = vmatprep.mubr.bf16.mxu0 0
    %4016 = vmatmul.mubr.bf16.gmra.mrb[0].mxu0 %v3955
    %v4017 = vpop.f32.mrb[0].mxu0
    %v4018 = vadd.f32 %v3937, %v4017
    %v4019 = vpop.f32.mrb[0].mxu0
    %v4020 = vpop.f32.mrb[0].mxu0
    %v4021 = vadd.f32 %v3937, %v4020
    %v4022 = vpop.f32.mrb[0].mxu0
    %4023 = vmatprep.mubr.bf16.mxu0 0
    %4024 = vmatmul.mubr.bf16.gmra.mrb[0].mxu0 %v3958
    %v4025 = vpop.f32.mrb[0].mxu0
    %v4026 = vadd.f32 %v3937, %v4025
    %v4027 = vpop.f32.mrb[0].mxu0
    %v4028 = vpop.f32.mrb[0].mxu0
    %v4029 = vadd.f32 %v3937, %v4028
    %v4030 = vpop.f32.mrb[0].mxu0
    %4031 = vmatprep.mubr.bf16.mxu0 0
    %4032 = vmatmul.mubr.bf16.gmra.mrb[0].mxu0 %v3961
    %v4033 = vpop.f32.mrb[0].mxu0
    %v4034 = vadd.f32 %v3937, %v4033
    %v4035 = vpop.f32.mrb[0].mxu0
    %v4036 = vpop.f32.mrb[0].mxu0
    %v4037 = vadd.f32 %v3937, %v4036
    %v4038 = vpop.f32.mrb[0].mxu0
    %4039 = vmatprep.mubr.bf16.mxu0 0
    %4040 = vmatmul.mubr.bf16.gmra.mrb[0].mxu0 %v3964
    %v4041 = vpop.f32.mrb[0].mxu0
    %v4042 = vadd.f32 %v3937, %v4041
    %v4043 = vpop.f32.mrb[0].mxu0
    %v4044 = vpop.f32.mrb[0].mxu0
    %v4045 = vadd.f32 %v3937, %v4044
    %v4046 = vpop.f32.mrb[0].mxu0
    %4047 = vmatprep.mubr.bf16.mxu0 0
    %4048 = vmatmul.mubr.bf16.gmra.mrb[0].mxu0 %v3967
    %v4049 = vpop.f32.mrb[0].mxu0
    %v4050 = vadd.f32 %v3937, %v4049
    %v4051 = vpop.f32.mrb[0].mxu0
    %v4052 = vpop.f32.mrb[0].mxu0
    %v4053 = vadd.f32 %v3937, %v4052
    %v4054 = vpop.f32.mrb[0].mxu0
    %4055 = vmatprep.mubr.bf16.mxu0 0
    %4056 = vmatmul.mubr.bf16.gmra.mrb[0].mxu0 %v3970
    %v4057 = vpop.f32.mrb[0].mxu0
    %v4058 = vadd.f32 %v3937, %v4057
    %v4059 = vpop.f32.mrb[0].mxu0
    %v4060 = vpop.f32.mrb[0].mxu0
    %v4061 = vadd.f32 %v3937, %v4060
    %v4062 = vpop.f32.mrb[0].mxu0
    %4063 = vmatprep.mubr.bf16.mxu0 0
    %4064 = vmatmul.mubr.bf16.gmra.mrb[0].mxu0 %v3973
    %v4065 = vpop.f32.mrb[0].mxu0
    %v4066 = vadd.f32 %v3937, %v4065
    %v4067 = vpop.f32.mrb[0].mxu0
    %v4068 = vpop.f32.mrb[0].mxu0
    %v4069 = vadd.f32 %v3937, %v4068
    %v4070 = vpop.f32.mrb[0].mxu0
    %4071 = vdwg.mxu0
    %v4072 = vld [vmem:[%s11] sm:$0xf]
    %v4073 = vld [vmem:[%s11 + $0x4] sm:$0xf]
    %v4074 = vld [vmem:[%s11 + $0x8] sm:$0xf]
    %v4075 = vld [vmem:[%s11 + $0xc] sm:$0xf]
    %v4076 = vld [vmem:[%s14] sm:$0x1]
    %v4078 = vlaneseq
    %v4079 = vshrl.u32 %v4078, 7
    %v4080 = vsub.s32 0, %v4079
    %v4081 = vrot.slane %v4076, %v4080
    %v4087 = vunpack.c.l.b16 %v4072
    %v4088 = vunpack.c.l.b16 %v4073
    %v4089 = vunpack.c.l.b16 %v4074
    %v4090 = vunpack.c.l.b16 %v4075
    %v4091 = vpack.c.b16 %v4088, %v4087
    %v4092 = vpack.c.b16 %v4090, %v4089
    %v4096 = vsel %vm269, %v237, 0
    %4098 = vmatprep.subr.bf16.mxu0 0
    %4099 = vmatpush1.bf16.msra.mxu0 %v4091
    %4100 = vmatprep.subr.bf16.mxu0 0
    %4101 = vmatpush1.bf16.msra.mxu0 %v4092
    %4102 = vmatprep.subr.bf16.mxu0 0
    %4103 = vmatpush1.bf16.msra.mxu0 0
    %4104 = vmatprep.subr.bf16.mxu0 0
    %4105 = vmatpush1.bf16.msra.mxu0 0
    %4106 = vmatprep.subr.bf16.mxu0 0
    %4107 = vmatpush1.bf16.msra.mxu0 0
    %4108 = vmatprep.subr.bf16.mxu0 0
    %4109 = vmatpush1.bf16.msra.mxu0 0
    %4110 = vmatprep.subr.bf16.mxu0 0
    %4111 = vmatpush1.bf16.msra.mxu0 0
    %4112 = vmatprep.subr.bf16.mxu0 0
    %4113 = vmatpush1.bf16.msra.mxu0 0
    %4114 = vmatprep.subr.bf16.mxu0 0
    %4115 = vmatpush1.bf16.msra.mxu0 0
    %4116 = vmatprep.subr.bf16.mxu0 0
    %4117 = vmatpush1.bf16.msra.mxu0 0
    %4118 = vmatprep.subr.bf16.mxu0 0
    %4119 = vmatpush1.bf16.msra.mxu0 0
    %4120 = vmatprep.subr.bf16.mxu0 0
    %4121 = vmatpush1.bf16.msra.mxu0 0
    %4122 = vmatprep.subr.bf16.mxu0 0
    %4123 = vmatpush1.bf16.msra.mxu0 0
    %4124 = vmatprep.subr.bf16.mxu0 0
    %4125 = vmatpush1.bf16.msra.mxu0 0
    %4126 = vmatprep.subr.bf16.mxu0 0
    %4127 = vmatpush1.bf16.msra.mxu0 0
    %4128 = vmatprep.subr.bf16.mxu0 0
    %4129 = vmatpush1.bf16.msra.mxu0 0
    %4130 = vmatprep.mubr.bf16.mxu0 0
    %4131 = vmatmul.mubr.bf16.gmra.mrb[0].mxu0 %v4096
    %v4132 = vpop.f32.mrb[0].mxu0
    %v4133 = vadd.f32 %v4081, %v4132
    %v4134 = vpop.f32.mrb[0].mxu0
    %v4135 = vpop.f32.mrb[0].mxu0
    %v4136 = vadd.f32 %v4081, %v4135
    %v4137 = vpop.f32.mrb[0].mxu0
    %4138 = vdwg.mxu0
    %v4139 = vld [vmem:[%s12] sm:$0xf]
    %v4140 = vld [vmem:[%s12 + $0x4] sm:$0xf]
    %v4141 = vld [vmem:[%s12 + $0x8] sm:$0xf]
    %v4142 = vld [vmem:[%s12 + $0xc] sm:$0xf]
    %v4143 = vld [vmem:[%s15] sm:$0x1]
    %v4145 = vlaneseq
    %v4146 = vshrl.u32 %v4145, 7
    %v4147 = vsub.s32 0, %v4146
    %v4148 = vrot.slane %v4143, %v4147
    %v4154 = vunpack.c.l.b16 %v4139
    %v4155 = vunpack.c.l.b16 %v4140
    %v4156 = vunpack.c.l.b16 %v4141
    %v4157 = vunpack.c.l.b16 %v4142
    %v4158 = vpack.c.b16 %v4155, %v4154
    %v4159 = vpack.c.b16 %v4157, %v4156
    %4162 = vmatprep.subr.bf16.mxu0 0
    %4163 = vmatpush1.bf16.msra.mxu0 %v4158
    %4164 = vmatprep.subr.bf16.mxu0 0
    %4165 = vmatpush1.bf16.msra.mxu0 %v4159
    %4166 = vmatprep.subr.bf16.mxu0 0
    %4167 = vmatpush1.bf16.msra.mxu0 0
    %4168 = vmatprep.subr.bf16.mxu0 0
    %4169 = vmatpush1.bf16.msra.mxu0 0
    %4170 = vmatprep.subr.bf16.mxu0 0
    %4171 = vmatpush1.bf16.msra.mxu0 0
    %4172 = vmatprep.subr.bf16.mxu0 0
    %4173 = vmatpush1.bf16.msra.mxu0 0
    %4174 = vmatprep.subr.bf16.mxu0 0
    %4175 = vmatpush1.bf16.msra.mxu0 0
    %4176 = vmatprep.subr.bf16.mxu0 0
    %4177 = vmatpush1.bf16.msra.mxu0 0
    %4178 = vmatprep.subr.bf16.mxu0 0
    %4179 = vmatpush1.bf16.msra.mxu0 0
    %4180 = vmatprep.subr.bf16.mxu0 0
    %4181 = vmatpush1.bf16.msra.mxu0 0
    %4182 = vmatprep.subr.bf16.mxu0 0
    %4183 = vmatpush1.bf16.msra.mxu0 0
    %4184 = vmatprep.subr.bf16.mxu0 0
    %4185 = vmatpush1.bf16.msra.mxu0 0
    %4186 = vmatprep.subr.bf16.mxu0 0
    %4187 = vmatpush1.bf16.msra.mxu0 0
    %4188 = vmatprep.subr.bf16.mxu0 0
    %4189 = vmatpush1.bf16.msra.mxu0 0
    %4190 = vmatprep.subr.bf16.mxu0 0
    %4191 = vmatpush1.bf16.msra.mxu0 0
    %4192 = vmatprep.subr.bf16.mxu0 0
    %4193 = vmatpush1.bf16.msra.mxu0 0
    %4194 = vmatprep.mubr.bf16.mxu0 0
    %4195 = vmatmul.mubr.bf16.gmra.mrb[0].mxu0 %v4096
    %v4196 = vpop.f32.mrb[0].mxu0
    %v4197 = vadd.f32 %v4148, %v4196
    %v4198 = vpop.f32.mrb[0].mxu0
    %v4199 = vpop.f32.mrb[0].mxu0
    %v4200 = vadd.f32 %v4148, %v4199
    %v4201 = vpop.f32.mrb[0].mxu0
    %4202 = vdwg.mxu0
    %v4203 = vmul.f32 %v4010, 0.35355338
    %v4204 = vmul.f32 %v4013, 0.35355338
    %v4205 = vmul.f32 %v4018, 0.35355338
    %v4206 = vmul.f32 %v4021, 0.35355338
    %v4207 = vmul.f32 %v4026, 0.35355338
    %v4208 = vmul.f32 %v4029, 0.35355338
    %v4209 = vmul.f32 %v4034, 0.35355338
    %v4210 = vmul.f32 %v4037, 0.35355338
    %v4211 = vmul.f32 %v4042, 0.35355338
    %v4212 = vmul.f32 %v4045, 0.35355338
    %v4213 = vmul.f32 %v4050, 0.35355338
    %v4214 = vmul.f32 %v4053, 0.35355338
    %v4215 = vmul.f32 %v4058, 0.35355338
    %v4216 = vmul.f32 %v4061, 0.35355338
    %v4217 = vmul.f32 %v4066, 0.35355338
    %v4218 = vmul.f32 %v4069, 0.35355338
    %v4219 = vpack.c.bf16 %v4204, %v4203
    %v4220 = vpack.c.bf16 %v4206, %v4205
    %v4221 = vpack.c.bf16 %v4208, %v4207
    %v4222 = vpack.c.bf16 %v4210, %v4209
    %v4223 = vpack.c.bf16 %v4212, %v4211
    %v4224 = vpack.c.bf16 %v4214, %v4213
    %v4225 = vpack.c.bf16 %v4216, %v4215
    %v4226 = vpack.c.bf16 %v4218, %v4217
    %v4227 = vpack.c.bf16 %v4136, %v4133
    %v4228 = vpack.c.bf16 %v4200, %v4197
    %v4229 = vld [vmem:[%s16] sm:$0xf]
    %v4230 = vld [vmem:[%s16 + $0x4] sm:$0xf]
    %v4231 = vld [vmem:[%s16 + $0x8] sm:$0xf]
    %v4232 = vld [vmem:[%s16 + $0xc] sm:$0xf]
    %v4234 = vsel %vm675, %v4219, 0
    %v4237 = vsel %vm675, %v4220, 0
    %v4240 = vsel %vm675, %v4221, 0
    %v4243 = vsel %vm675, %v4222, 0
    %v4246 = vsel %vm675, %v4227, 0
    %4248 = vmatprep.subr.bf16.mxu0 0
    %4249 = vmatpush1.bf16.xpose.msra.mxu0 %v4246
    %4250 = vmatprep.subr.bf16.mxu0 0
    %4251 = vmatpush1.bf16.xpose.msra.mxu0 0
    %4252 = vmatprep.subr.bf16.mxu0 0
    %4253 = vmatpush1.bf16.xpose.msra.mxu0 0
    %4254 = vmatprep.subr.bf16.mxu0 0
    %4255 = vmatpush1.bf16.xpose.msra.mxu0 0
    %4256 = vmatprep.subr.bf16.mxu0 0
    %4257 = vmatpush1.bf16.xpose.msra.mxu0 0
    %4258 = vmatprep.subr.bf16.mxu0 0
    %4259 = vmatpush1.bf16.xpose.msra.mxu0 0
    %4260 = vmatprep.subr.bf16.mxu0 0
    %4261 = vmatpush1.bf16.xpose.msra.mxu0 0
    %4262 = vmatprep.subr.bf16.mxu0 0
    %4263 = vmatpush1.bf16.xpose.msra.mxu0 0
    %4264 = vmatprep.subr.bf16.mxu0 0
    %4265 = vmatpush1.bf16.xpose.msra.mxu0 0
    %4266 = vmatprep.subr.bf16.mxu0 0
    %4267 = vmatpush1.bf16.xpose.msra.mxu0 0
    %4268 = vmatprep.subr.bf16.mxu0 0
    %4269 = vmatpush1.bf16.xpose.msra.mxu0 0
    %4270 = vmatprep.subr.bf16.mxu0 0
    %4271 = vmatpush1.bf16.xpose.msra.mxu0 0
    %4272 = vmatprep.subr.bf16.mxu0 0
    %4273 = vmatpush1.bf16.xpose.msra.mxu0 0
    %4274 = vmatprep.subr.bf16.mxu0 0
    %4275 = vmatpush1.bf16.xpose.msra.mxu0 0
    %4276 = vmatprep.subr.bf16.mxu0 0
    %4277 = vmatpush1.bf16.xpose.msra.mxu0 0
    %4278 = vmatprep.subr.bf16.mxu0 0
    %4279 = vmatpush1.bf16.xpose.msra.mxu0 0
    %4280 = vmatprep.mubr.bf16.mxu0 0
    %4281 = vmatmul.mubr.bf16.gmra.mrb[0].mxu0 %v4234
    %v4282 = vpop.f32.mrb[0].mxu0
    %v4283 = vadd.f32 0.0, %v4282
    %v4284 = vpop.f32.mrb[0].mxu0
    %v4285 = vpop.f32.mrb[0].mxu0
    %v4286 = vadd.f32 0.0, %v4285
    %v4287 = vpop.f32.mrb[0].mxu0
    %4288 = vmatprep.mubr.bf16.mxu0 0
    %4289 = vmatmul.mubr.bf16.gmra.mrb[0].mxu0 %v4237
    %v4290 = vpop.f32.mrb[0].mxu0
    %v4291 = vadd.f32 0.0, %v4290
    %v4292 = vpop.f32.mrb[0].mxu0
    %v4293 = vpop.f32.mrb[0].mxu0
    %v4294 = vadd.f32 0.0, %v4293
    %v4295 = vpop.f32.mrb[0].mxu0
    %4296 = vmatprep.mubr.bf16.mxu0 0
    %4297 = vmatmul.mubr.bf16.gmra.mrb[0].mxu0 %v4240
    %v4298 = vpop.f32.mrb[0].mxu0
    %v4299 = vadd.f32 0.0, %v4298
    %v4300 = vpop.f32.mrb[0].mxu0
    %v4301 = vpop.f32.mrb[0].mxu0
    %v4302 = vadd.f32 0.0, %v4301
    %v4303 = vpop.f32.mrb[0].mxu0
    %4304 = vmatprep.mubr.bf16.mxu0 0
    %4305 = vmatmul.mubr.bf16.gmra.mrb[0].mxu0 %v4243
    %v4306 = vpop.f32.mrb[0].mxu0
    %v4307 = vadd.f32 0.0, %v4306
    %v4308 = vpop.f32.mrb[0].mxu0
    %v4309 = vpop.f32.mrb[0].mxu0
    %v4310 = vadd.f32 0.0, %v4309
    %v4311 = vpop.f32.mrb[0].mxu0
    %4312 = vdwg.mxu0
    %v4313 = vsel %vm675, %v4283, -inf
    %4314 = vmax.xlane.f32.xlu0 %v4313
    %v4315 = vpop.xlane.xlu0 %4314
    %v4316 = vsel %vm675, %v4286, -inf
    %4317 = vmax.xlane.f32.xlu0 %v4316
    %v4318 = vpop.xlane.xlu0 %4317
    %v4319 = vsel %vm675, %v4291, -inf
    %4320 = vmax.xlane.f32.xlu0 %v4319
    %v4321 = vpop.xlane.xlu0 %4320
    %v4322 = vsel %vm675, %v4294, -inf
    %4323 = vmax.xlane.f32.xlu0 %v4322
    %v4324 = vpop.xlane.xlu0 %4323
    %v4325 = vsel %vm675, %v4299, -inf
    %4326 = vmax.xlane.f32.xlu0 %v4325
    %v4327 = vpop.xlane.xlu0 %4326
    %v4328 = vsel %vm675, %v4302, -inf
    %4329 = vmax.xlane.f32.xlu0 %v4328
    %v4330 = vpop.xlane.xlu0 %4329
    %v4331 = vsel %vm675, %v4307, -inf
    %4332 = vmax.xlane.f32.xlu0 %v4331
    %v4333 = vpop.xlane.xlu0 %4332
    %v4334 = vsel %vm675, %v4310, -inf
    %4335 = vmax.xlane.f32.xlu0 %v4334
    %v4336 = vpop.xlane.xlu0 %4335
    %v4337 = vsub.f32 %v4283, %v4315
    %v4338 = vsub.f32 %v4286, %v4318
    %v4339 = vsub.f32 %v4291, %v4321
    %v4340 = vsub.f32 %v4294, %v4324
    %v4341 = vsub.f32 %v4299, %v4327
    %v4342 = vsub.f32 %v4302, %v4330
    %v4343 = vsub.f32 %v4307, %v4333
    %v4344 = vsub.f32 %v4310, %v4336
    %v4345 = vmul.f32 %v4337, 1.442695
    %v4346 = vpow.pop %v4345
    %v4347 = vmul.f32 %v4338, 1.442695
    %v4348 = vpow.pop %v4347
    %v4349 = vmul.f32 %v4339, 1.442695
    %v4350 = vpow.pop %v4349
    %v4351 = vmul.f32 %v4340, 1.442695
    %v4352 = vpow.pop %v4351
    %v4353 = vmul.f32 %v4341, 1.442695
    %v4354 = vpow.pop %v4353
    %v4355 = vmul.f32 %v4342, 1.442695
    %v4356 = vpow.pop %v4355
    %v4357 = vmul.f32 %v4343, 1.442695
    %v4358 = vpow.pop %v4357
    %v4359 = vmul.f32 %v4344, 1.442695
    %v4360 = vpow.pop %v4359
    %v4361 = vsel %vm675, %v4346, 0.0
    %4362 = vadd.xlane.f32.xlu0 %v4361
    %v4363 = vpop.xlane.xlu0 %4362
    %v4364 = vsel %vm675, %v4348, 0.0
    %4365 = vadd.xlane.f32.xlu0 %v4364
    %v4366 = vpop.xlane.xlu0 %4365
    %v4367 = vsel %vm675, %v4350, 0.0
    %4368 = vadd.xlane.f32.xlu0 %v4367
    %v4369 = vpop.xlane.xlu0 %4368
    %v4370 = vsel %vm675, %v4352, 0.0
    %4371 = vadd.xlane.f32.xlu0 %v4370
    %v4372 = vpop.xlane.xlu0 %4371
    %v4373 = vsel %vm675, %v4354, 0.0
    %4374 = vadd.xlane.f32.xlu0 %v4373
    %v4375 = vpop.xlane.xlu0 %4374
    %v4376 = vsel %vm675, %v4356, 0.0
    %4377 = vadd.xlane.f32.xlu0 %v4376
    %v4378 = vpop.xlane.xlu0 %4377
    %v4379 = vsel %vm675, %v4358, 0.0
    %4380 = vadd.xlane.f32.xlu0 %v4379
    %v4381 = vpop.xlane.xlu0 %4380
    %v4382 = vsel %vm675, %v4360, 0.0
    %4383 = vadd.xlane.f32.xlu0 %v4382
    %v4384 = vpop.xlane.xlu0 %4383
    %v4385 = vrcp.pop %v4363
    %v4386 = vrcp.pop %v4366
    %v4387 = vrcp.pop %v4369
    %v4388 = vrcp.pop %v4372
    %v4389 = vrcp.pop %v4375
    %v4390 = vrcp.pop %v4378
    %v4391 = vrcp.pop %v4381
    %v4392 = vrcp.pop %v4384
    %v4393 = vmul.f32 %v4346, %v4385
    %v4394 = vmul.f32 %v4348, %v4386
    %v4395 = vmul.f32 %v4350, %v4387
    %v4396 = vmul.f32 %v4352, %v4388
    %v4397 = vmul.f32 %v4354, %v4389
    %v4398 = vmul.f32 %v4356, %v4390
    %v4399 = vmul.f32 %v4358, %v4391
    %v4400 = vmul.f32 %v4360, %v4392
    %v4401 = vpack.c.bf16 %v4394, %v4393
    %v4402 = vpack.c.bf16 %v4396, %v4395
    %v4403 = vpack.c.bf16 %v4398, %v4397
    %v4404 = vpack.c.bf16 %v4400, %v4399
    %v4406 = vsel %vm675, %v4401, 0
    %v4409 = vsel %vm675, %v4402, 0
    %v4412 = vsel %vm675, %v4403, 0
    %v4415 = vsel %vm675, %v4404, 0
    %v4418 = vsel %vm1253, %v4228, 0
    %4420 = vmatprep.subr.bf16.mxu0 0
    %4421 = vmatpush1.bf16.msra.mxu0 %v4418
    %4422 = vmatprep.subr.bf16.mxu0 0
    %4423 = vmatpush1.bf16.msra.mxu0 0
    %4424 = vmatprep.subr.bf16.mxu0 0
    %4425 = vmatpush1.bf16.msra.mxu0 0
    %4426 = vmatprep.subr.bf16.mxu0 0
    %4427 = vmatpush1.bf16.msra.mxu0 0
    %4428 = vmatprep.subr.bf16.mxu0 0
    %4429 = vmatpush1.bf16.msra.mxu0 0
    %4430 = vmatprep.subr.bf16.mxu0 0
    %4431 = vmatpush1.bf16.msra.mxu0 0
    %4432 = vmatprep.subr.bf16.mxu0 0
    %4433 = vmatpush1.bf16.msra.mxu0 0
    %4434 = vmatprep.subr.bf16.mxu0 0
    %4435 = vmatpush1.bf16.msra.mxu0 0
    %4436 = vmatprep.subr.bf16.mxu0 0
    %4437 = vmatpush1.bf16.msra.mxu0 0
    %4438 = vmatprep.subr.bf16.mxu0 0
    %4439 = vmatpush1.bf16.msra.mxu0 0
    %4440 = vmatprep.subr.bf16.mxu0 0
    %4441 = vmatpush1.bf16.msra.mxu0 0
    %4442 = vmatprep.subr.bf16.mxu0 0
    %4443 = vmatpush1.bf16.msra.mxu0 0
    %4444 = vmatprep.subr.bf16.mxu0 0
    %4445 = vmatpush1.bf16.msra.mxu0 0
    %4446 = vmatprep.subr.bf16.mxu0 0
    %4447 = vmatpush1.bf16.msra.mxu0 0
    %4448 = vmatprep.subr.bf16.mxu0 0
    %4449 = vmatpush1.bf16.msra.mxu0 0
    %4450 = vmatprep.subr.bf16.mxu0 0
    %4451 = vmatpush1.bf16.msra.mxu0 0
    %4452 = vmatprep.mubr.bf16.mxu0 0
    %4453 = vmatmul.mubr.bf16.gmra.mrb[0].mxu0 %v4406
    %v4454 = vpop.f32.mrb[0].mxu0
    %v4455 = vadd.f32 0.0, %v4454
    %v4456 = vpop.f32.mrb[0].mxu0
    %v4457 = vpop.f32.mrb[0].mxu0
    %v4458 = vadd.f32 0.0, %v4457
    %v4459 = vpop.f32.mrb[0].mxu0
    %4460 = vmatprep.mubr.bf16.mxu0 0
    %4461 = vmatmul.mubr.bf16.gmra.mrb[0].mxu0 %v4409
    %v4462 = vpop.f32.mrb[0].mxu0
    %v4463 = vadd.f32 0.0, %v4462
    %v4464 = vpop.f32.mrb[0].mxu0
    %v4465 = vpop.f32.mrb[0].mxu0
    %v4466 = vadd.f32 0.0, %v4465
    %v4467 = vpop.f32.mrb[0].mxu0
    %4468 = vmatprep.mubr.bf16.mxu0 0
    %4469 = vmatmul.mubr.bf16.gmra.mrb[0].mxu0 %v4412
    %v4470 = vpop.f32.mrb[0].mxu0
    %v4471 = vadd.f32 0.0, %v4470
    %v4472 = vpop.f32.mrb[0].mxu0
    %v4473 = vpop.f32.mrb[0].mxu0
    %v4474 = vadd.f32 0.0, %v4473
    %v4475 = vpop.f32.mrb[0].mxu0
    %4476 = vmatprep.mubr.bf16.mxu0 0
    %4477 = vmatmul.mubr.bf16.gmra.mrb[0].mxu0 %v4415
    %v4478 = vpop.f32.mrb[0].mxu0
    %v4479 = vadd.f32 0.0, %v4478
    %v4480 = vpop.f32.mrb[0].mxu0
    %v4481 = vpop.f32.mrb[0].mxu0
    %v4482 = vadd.f32 0.0, %v4481
    %v4483 = vpop.f32.mrb[0].mxu0
    %4484 = vdwg.mxu0
    %v4485 = vpack.c.bf16 %v4458, %v4455
    %v4486 = vpack.c.bf16 %v4466, %v4463
    %v4487 = vpack.c.bf16 %v4474, %v4471
    %v4488 = vpack.c.bf16 %v4482, %v4479
    %4493 = vrot.lane.b32.xlu0 %v4219, 120
    %v4494 = vpop.permute.xlu0 %4493
    %4495 = vrot.lane.b32.xlu0 %v4220, 120
    %v4496 = vpop.permute.xlu0 %4495
    %4497 = vrot.lane.b32.xlu0 %v4221, 120
    %v4498 = vpop.permute.xlu0 %4497
    %4499 = vrot.lane.b32.xlu0 %v4222, 120
    %v4500 = vpop.permute.xlu0 %4499
    %4502 = vrot.lane.b32.xlu0 %v4227, 120
    %v4503 = vpop.permute.xlu0 %4502
    %v4505 = vsel %vm675, %v4494, 0
    %v4508 = vsel %vm675, %v4496, 0
    %v4511 = vsel %vm675, %v4498, 0
    %v4514 = vsel %vm675, %v4500, 0
    %v4517 = vsel %vm675, %v4503, 0
    %4519 = vmatprep.subr.bf16.mxu0 0
    %4520 = vmatpush1.bf16.xpose.msra.mxu0 %v4517
    %4521 = vmatprep.subr.bf16.mxu0 0
    %4522 = vmatpush1.bf16.xpose.msra.mxu0 0
    %4523 = vmatprep.subr.bf16.mxu0 0
    %4524 = vmatpush1.bf16.xpose.msra.mxu0 0
    %4525 = vmatprep.subr.bf16.mxu0 0
    %4526 = vmatpush1.bf16.xpose.msra.mxu0 0
    %4527 = vmatprep.subr.bf16.mxu0 0
    %4528 = vmatpush1.bf16.xpose.msra.mxu0 0
    %4529 = vmatprep.subr.bf16.mxu0 0
    %4530 = vmatpush1.bf16.xpose.msra.mxu0 0
    %4531 = vmatprep.subr.bf16.mxu0 0
    %4532 = vmatpush1.bf16.xpose.msra.mxu0 0
    %4533 = vmatprep.subr.bf16.mxu0 0
    %4534 = vmatpush1.bf16.xpose.msra.mxu0 0
    %4535 = vmatprep.subr.bf16.mxu0 0
    %4536 = vmatpush1.bf16.xpose.msra.mxu0 0
    %4537 = vmatprep.subr.bf16.mxu0 0
    %4538 = vmatpush1.bf16.xpose.msra.mxu0 0
    %4539 = vmatprep.subr.bf16.mxu0 0
    %4540 = vmatpush1.bf16.xpose.msra.mxu0 0
    %4541 = vmatprep.subr.bf16.mxu0 0
    %4542 = vmatpush1.bf16.xpose.msra.mxu0 0
    %4543 = vmatprep.subr.bf16.mxu0 0
    %4544 = vmatpush1.bf16.xpose.msra.mxu0 0
    %4545 = vmatprep.subr.bf16.mxu0 0
    %4546 = vmatpush1.bf16.xpose.msra.mxu0 0
    %4547 = vmatprep.subr.bf16.mxu0 0
    %4548 = vmatpush1.bf16.xpose.msra.mxu0 0
    %4549 = vmatprep.subr.bf16.mxu0 0
    %4550 = vmatpush1.bf16.xpose.msra.mxu0 0
    %4551 = vmatprep.mubr.bf16.mxu0 0
    %4552 = vmatmul.mubr.bf16.gmra.mrb[0].mxu0 %v4505
    %v4553 = vpop.f32.mrb[0].mxu0
    %v4554 = vadd.f32 0.0, %v4553
    %v4555 = vpop.f32.mrb[0].mxu0
    %v4556 = vpop.f32.mrb[0].mxu0
    %v4557 = vadd.f32 0.0, %v4556
    %v4558 = vpop.f32.mrb[0].mxu0
    %4559 = vmatprep.mubr.bf16.mxu0 0
    %4560 = vmatmul.mubr.bf16.gmra.mrb[0].mxu0 %v4508
    %v4561 = vpop.f32.mrb[0].mxu0
    %v4562 = vadd.f32 0.0, %v4561
    %v4563 = vpop.f32.mrb[0].mxu0
    %v4564 = vpop.f32.mrb[0].mxu0
    %v4565 = vadd.f32 0.0, %v4564
    %v4566 = vpop.f32.mrb[0].mxu0
    %4567 = vmatprep.mubr.bf16.mxu0 0
    %4568 = vmatmul.mubr.bf16.gmra.mrb[0].mxu0 %v4511
    %v4569 = vpop.f32.mrb[0].mxu0
    %v4570 = vadd.f32 0.0, %v4569
    %v4571 = vpop.f32.mrb[0].mxu0
    %v4572 = vpop.f32.mrb[0].mxu0
    %v4573 = vadd.f32 0.0, %v4572
    %v4574 = vpop.f32.mrb[0].mxu0
    %4575 = vmatprep.mubr.bf16.mxu0 0
    %4576 = vmatmul.mubr.bf16.gmra.mrb[0].mxu0 %v4514
    %v4577 = vpop.f32.mrb[0].mxu0
    %v4578 = vadd.f32 0.0, %v4577
    %v4579 = vpop.f32.mrb[0].mxu0
    %v4580 = vpop.f32.mrb[0].mxu0
    %v4581 = vadd.f32 0.0, %v4580
    %v4582 = vpop.f32.mrb[0].mxu0
    %4583 = vdwg.mxu0
    %v4584 = vsel %vm675, %v4554, -inf
    %4585 = vmax.xlane.f32.xlu0 %v4584
    %v4586 = vpop.xlane.xlu0 %4585
    %v4587 = vsel %vm675, %v4557, -inf
    %4588 = vmax.xlane.f32.xlu0 %v4587
    %v4589 = vpop.xlane.xlu0 %4588
    %v4590 = vsel %vm675, %v4562, -inf
    %4591 = vmax.xlane.f32.xlu0 %v4590
    %v4592 = vpop.xlane.xlu0 %4591
    %v4593 = vsel %vm675, %v4565, -inf
    %4594 = vmax.xlane.f32.xlu0 %v4593
    %v4595 = vpop.xlane.xlu0 %4594
    %v4596 = vsel %vm675, %v4570, -inf
    %4597 = vmax.xlane.f32.xlu0 %v4596
    %v4598 = vpop.xlane.xlu0 %4597
    %v4599 = vsel %vm675, %v4573, -inf
    %4600 = vmax.xlane.f32.xlu0 %v4599
    %v4601 = vpop.xlane.xlu0 %4600
    %v4602 = vsel %vm675, %v4578, -inf
    %4603 = vmax.xlane.f32.xlu0 %v4602
    %v4604 = vpop.xlane.xlu0 %4603
    %v4605 = vsel %vm675, %v4581, -inf
    %4606 = vmax.xlane.f32.xlu0 %v4605
    %v4607 = vpop.xlane.xlu0 %4606
    %v4608 = vsub.f32 %v4554, %v4586
    %v4609 = vsub.f32 %v4557, %v4589
    %v4610 = vsub.f32 %v4562, %v4592
    %v4611 = vsub.f32 %v4565, %v4595
    %v4612 = vsub.f32 %v4570, %v4598
    %v4613 = vsub.f32 %v4573, %v4601
    %v4614 = vsub.f32 %v4578, %v4604
    %v4615 = vsub.f32 %v4581, %v4607
    %v4616 = vmul.f32 %v4608, 1.442695
    %v4617 = vpow.pop %v4616
    %v4618 = vmul.f32 %v4609, 1.442695
    %v4619 = vpow.pop %v4618
    %v4620 = vmul.f32 %v4610, 1.442695
    %v4621 = vpow.pop %v4620
    %v4622 = vmul.f32 %v4611, 1.442695
    %v4623 = vpow.pop %v4622
    %v4624 = vmul.f32 %v4612, 1.442695
    %v4625 = vpow.pop %v4624
    %v4626 = vmul.f32 %v4613, 1.442695
    %v4627 = vpow.pop %v4626
    %v4628 = vmul.f32 %v4614, 1.442695
    %v4629 = vpow.pop %v4628
    %v4630 = vmul.f32 %v4615, 1.442695
    %v4631 = vpow.pop %v4630
    %v4632 = vsel %vm675, %v4617, 0.0
    %4633 = vadd.xlane.f32.xlu0 %v4632
    %v4634 = vpop.xlane.xlu0 %4633
    %v4635 = vsel %vm675, %v4619, 0.0
    %4636 = vadd.xlane.f32.xlu0 %v4635
    %v4637 = vpop.xlane.xlu0 %4636
    %v4638 = vsel %vm675, %v4621, 0.0
    %4639 = vadd.xlane.f32.xlu0 %v4638
    %v4640 = vpop.xlane.xlu0 %4639
    %v4641 = vsel %vm675, %v4623, 0.0
    %4642 = vadd.xlane.f32.xlu0 %v4641
    %v4643 = vpop.xlane.xlu0 %4642
    %v4644 = vsel %vm675, %v4625, 0.0
    %4645 = vadd.xlane.f32.xlu0 %v4644
    %v4646 = vpop.xlane.xlu0 %4645
    %v4647 = vsel %vm675, %v4627, 0.0
    %4648 = vadd.xlane.f32.xlu0 %v4647
    %v4649 = vpop.xlane.xlu0 %4648
    %v4650 = vsel %vm675, %v4629, 0.0
    %4651 = vadd.xlane.f32.xlu0 %v4650
    %v4652 = vpop.xlane.xlu0 %4651
    %v4653 = vsel %vm675, %v4631, 0.0
    %4654 = vadd.xlane.f32.xlu0 %v4653
    %v4655 = vpop.xlane.xlu0 %4654
    %v4656 = vrcp.pop %v4634
    %v4657 = vrcp.pop %v4637
    %v4658 = vrcp.pop %v4640
    %v4659 = vrcp.pop %v4643
    %v4660 = vrcp.pop %v4646
    %v4661 = vrcp.pop %v4649
    %v4662 = vrcp.pop %v4652
    %v4663 = vrcp.pop %v4655
    %v4664 = vmul.f32 %v4617, %v4656
    %v4665 = vmul.f32 %v4619, %v4657
    %v4666 = vmul.f32 %v4621, %v4658
    %v4667 = vmul.f32 %v4623, %v4659
    %v4668 = vmul.f32 %v4625, %v4660
    %v4669 = vmul.f32 %v4627, %v4661
    %v4670 = vmul.f32 %v4629, %v4662
    %v4671 = vmul.f32 %v4631, %v4663
    %v4672 = vpack.c.bf16 %v4665, %v4664
    %v4673 = vpack.c.bf16 %v4667, %v4666
    %v4674 = vpack.c.bf16 %v4669, %v4668
    %v4675 = vpack.c.bf16 %v4671, %v4670
    %4677 = vrot.lane.b32.xlu0 %v4228, 120
    %v4678 = vpop.permute.xlu0 %4677
    %v4680 = vsel %vm675, %v4672, 0
    %v4683 = vsel %vm675, %v4673, 0
    %v4686 = vsel %vm675, %v4674, 0
    %v4689 = vsel %vm675, %v4675, 0
    %v4692 = vsel %vm1253, %v4678, 0
    %4694 = vmatprep.subr.bf16.mxu0 0
    %4695 = vmatpush1.bf16.msra.mxu0 %v4692
    %4696 = vmatprep.subr.bf16.mxu0 0
    %4697 = vmatpush1.bf16.msra.mxu0 0
    %4698 = vmatprep.subr.bf16.mxu0 0
    %4699 = vmatpush1.bf16.msra.mxu0 0
    %4700 = vmatprep.subr.bf16.mxu0 0
    %4701 = vmatpush1.bf16.msra.mxu0 0
    %4702 = vmatprep.subr.bf16.mxu0 0
    %4703 = vmatpush1.bf16.msra.mxu0 0
    %4704 = vmatprep.subr.bf16.mxu0 0
    %4705 = vmatpush1.bf16.msra.mxu0 0
    %4706 = vmatprep.subr.bf16.mxu0 0
    %4707 = vmatpush1.bf16.msra.mxu0 0
    %4708 = vmatprep.subr.bf16.mxu0 0
    %4709 = vmatpush1.bf16.msra.mxu0 0
    %4710 = vmatprep.subr.bf16.mxu0 0
    %4711 = vmatpush1.bf16.msra.mxu0 0
    %4712 = vmatprep.subr.bf16.mxu0 0
    %4713 = vmatpush1.bf16.msra.mxu0 0
    %4714 = vmatprep.subr.bf16.mxu0 0
    %4715 = vmatpush1.bf16.msra.mxu0 0
    %4716 = vmatprep.subr.bf16.mxu0 0
    %4717 = vmatpush1.bf16.msra.mxu0 0
    %4718 = vmatprep.subr.bf16.mxu0 0
    %4719 = vmatpush1.bf16.msra.mxu0 0
    %4720 = vmatprep.subr.bf16.mxu0 0
    %4721 = vmatpush1.bf16.msra.mxu0 0
    %4722 = vmatprep.subr.bf16.mxu0 0
    %4723 = vmatpush1.bf16.msra.mxu0 0
    %4724 = vmatprep.subr.bf16.mxu0 0
    %4725 = vmatpush1.bf16.msra.mxu0 0
    %4726 = vmatprep.mubr.bf16.mxu0 0
    %4727 = vmatmul.mubr.bf16.gmra.mrb[0].mxu0 %v4680
    %v4728 = vpop.f32.mrb[0].mxu0
    %v4729 = vadd.f32 0.0, %v4728
    %v4730 = vpop.f32.mrb[0].mxu0
    %v4731 = vpop.f32.mrb[0].mxu0
    %v4732 = vadd.f32 0.0, %v4731
    %v4733 = vpop.f32.mrb[0].mxu0
    %4734 = vmatprep.mubr.bf16.mxu0 0
    %4735 = vmatmul.mubr.bf16.gmra.mrb[0].mxu0 %v4683
    %v4736 = vpop.f32.mrb[0].mxu0
    %v4737 = vadd.f32 0.0, %v4736
    %v4738 = vpop.f32.mrb[0].mxu0
    %v4739 = vpop.f32.mrb[0].mxu0
    %v4740 = vadd.f32 0.0, %v4739
    %v4741 = vpop.f32.mrb[0].mxu0
    %4742 = vmatprep.mubr.bf16.mxu0 0
    %4743 = vmatmul.mubr.bf16.gmra.mrb[0].mxu0 %v4686
    %v4744 = vpop.f32.mrb[0].mxu0
    %v4745 = vadd.f32 0.0, %v4744
    %v4746 = vpop.f32.mrb[0].mxu0
    %v4747 = vpop.f32.mrb[0].mxu0
    %v4748 = vadd.f32 0.0, %v4747
    %v4749 = vpop.f32.mrb[0].mxu0
    %4750 = vmatprep.mubr.bf16.mxu0 0
    %4751 = vmatmul.mubr.bf16.gmra.mrb[0].mxu0 %v4689
    %v4752 = vpop.f32.mrb[0].mxu0
    %v4753 = vadd.f32 0.0, %v4752
    %v4754 = vpop.f32.mrb[0].mxu0
    %v4755 = vpop.f32.mrb[0].mxu0
    %v4756 = vadd.f32 0.0, %v4755
    %v4757 = vpop.f32.mrb[0].mxu0
    %4758 = vdwg.mxu0
    %v4759 = vpack.c.bf16 %v4732, %v4729
    %v4760 = vpack.c.bf16 %v4740, %v4737
    %v4761 = vpack.c.bf16 %v4748, %v4745
    %v4762 = vpack.c.bf16 %v4756, %v4753
    %v4764 = vsel %vm675, %v4759, 0
    %v4767 = vsel %vm675, %v4760, 0
    %v4770 = vsel %vm675, %v4761, 0
    %v4773 = vsel %vm675, %v4762, 0
    %v4776 = vsel %vm1253, %v4230, 0
    %4778 = vmatprep.subr.bf16.mxu0 0
    %4779 = vmatpush1.bf16.msra.mxu0 %v4776
    %4780 = vmatprep.subr.bf16.mxu0 0
    %4781 = vmatpush1.bf16.msra.mxu0 0
    %4782 = vmatprep.subr.bf16.mxu0 0
    %4783 = vmatpush1.bf16.msra.mxu0 0
    %4784 = vmatprep.subr.bf16.mxu0 0
    %4785 = vmatpush1.bf16.msra.mxu0 0
    %4786 = vmatprep.subr.bf16.mxu0 0
    %4787 = vmatpush1.bf16.msra.mxu0 0
    %4788 = vmatprep.subr.bf16.mxu0 0
    %4789 = vmatpush1.bf16.msra.mxu0 0
    %4790 = vmatprep.subr.bf16.mxu0 0
    %4791 = vmatpush1.bf16.msra.mxu0 0
    %4792 = vmatprep.subr.bf16.mxu0 0
    %4793 = vmatpush1.bf16.msra.mxu0 0
    %4794 = vmatprep.subr.bf16.mxu0 0
    %4795 = vmatpush1.bf16.msra.mxu0 0
    %4796 = vmatprep.subr.bf16.mxu0 0
    %4797 = vmatpush1.bf16.msra.mxu0 0
    %4798 = vmatprep.subr.bf16.mxu0 0
    %4799 = vmatpush1.bf16.msra.mxu0 0
    %4800 = vmatprep.subr.bf16.mxu0 0
    %4801 = vmatpush1.bf16.msra.mxu0 0
    %4802 = vmatprep.subr.bf16.mxu0 0
    %4803 = vmatpush1.bf16.msra.mxu0 0
    %4804 = vmatprep.subr.bf16.mxu0 0
    %4805 = vmatpush1.bf16.msra.mxu0 0
    %4806 = vmatprep.subr.bf16.mxu0 0
    %4807 = vmatpush1.bf16.msra.mxu0 0
    %4808 = vmatprep.subr.bf16.mxu0 0
    %4809 = vmatpush1.bf16.msra.mxu0 0
    %4810 = vmatprep.mubr.bf16.mxu0 0
    %4811 = vmatmul.mubr.bf16.gmra.mrb[0].mxu0 %v4764
    %v4812 = vpop.f32.mrb[0].mxu0
    %v4813 = vadd.f32 0.0, %v4812
    %v4814 = vpop.f32.mrb[0].mxu0
    %v4815 = vpop.f32.mrb[0].mxu0
    %v4816 = vadd.f32 0.0, %v4815
    %v4817 = vpop.f32.mrb[0].mxu0
    %4818 = vmatprep.mubr.bf16.mxu0 0
    %4819 = vmatmul.mubr.bf16.gmra.mrb[0].mxu0 %v4767
    %v4820 = vpop.f32.mrb[0].mxu0
    %v4821 = vadd.f32 0.0, %v4820
    %v4822 = vpop.f32.mrb[0].mxu0
    %v4823 = vpop.f32.mrb[0].mxu0
    %v4824 = vadd.f32 0.0, %v4823
    %v4825 = vpop.f32.mrb[0].mxu0
    %4826 = vmatprep.mubr.bf16.mxu0 0
    %4827 = vmatmul.mubr.bf16.gmra.mrb[0].mxu0 %v4770
    %v4828 = vpop.f32.mrb[0].mxu0
    %v4829 = vadd.f32 0.0, %v4828
    %v4830 = vpop.f32.mrb[0].mxu0
    %v4831 = vpop.f32.mrb[0].mxu0
    %v4832 = vadd.f32 0.0, %v4831
    %v4833 = vpop.f32.mrb[0].mxu0
    %4834 = vmatprep.mubr.bf16.mxu0 0
    %4835 = vmatmul.mubr.bf16.gmra.mrb[0].mxu0 %v4773
    %v4836 = vpop.f32.mrb[0].mxu0
    %v4837 = vadd.f32 0.0, %v4836
    %v4838 = vpop.f32.mrb[0].mxu0
    %v4839 = vpop.f32.mrb[0].mxu0
    %v4840 = vadd.f32 0.0, %v4839
    %v4841 = vpop.f32.mrb[0].mxu0
    %4842 = vdwg.mxu0
    %v4844 = vsel %vm675, %v4485, 0
    %v4847 = vsel %vm675, %v4486, 0
    %v4850 = vsel %vm675, %v4487, 0
    %v4853 = vsel %vm675, %v4488, 0
    %v4856 = vsel %vm1253, %v4229, 0
    %4858 = vmatprep.subr.bf16.mxu0 0
    %4859 = vmatpush1.bf16.msra.mxu0 %v4856
    %4860 = vmatprep.subr.bf16.mxu0 0
    %4861 = vmatpush1.bf16.msra.mxu0 0
    %4862 = vmatprep.subr.bf16.mxu0 0
    %4863 = vmatpush1.bf16.msra.mxu0 0
    %4864 = vmatprep.subr.bf16.mxu0 0
    %4865 = vmatpush1.bf16.msra.mxu0 0
    %4866 = vmatprep.subr.bf16.mxu0 0
    %4867 = vmatpush1.bf16.msra.mxu0 0
    %4868 = vmatprep.subr.bf16.mxu0 0
    %4869 = vmatpush1.bf16.msra.mxu0 0
    %4870 = vmatprep.subr.bf16.mxu0 0
    %4871 = vmatpush1.bf16.msra.mxu0 0
    %4872 = vmatprep.subr.bf16.mxu0 0
    %4873 = vmatpush1.bf16.msra.mxu0 0
    %4874 = vmatprep.subr.bf16.mxu0 0
    %4875 = vmatpush1.bf16.msra.mxu0 0
    %4876 = vmatprep.subr.bf16.mxu0 0
    %4877 = vmatpush1.bf16.msra.mxu0 0
    %4878 = vmatprep.subr.bf16.mxu0 0
    %4879 = vmatpush1.bf16.msra.mxu0 0
    %4880 = vmatprep.subr.bf16.mxu0 0
    %4881 = vmatpush1.bf16.msra.mxu0 0
    %4882 = vmatprep.subr.bf16.mxu0 0
    %4883 = vmatpush1.bf16.msra.mxu0 0
    %4884 = vmatprep.subr.bf16.mxu0 0
    %4885 = vmatpush1.bf16.msra.mxu0 0
    %4886 = vmatprep.subr.bf16.mxu0 0
    %4887 = vmatpush1.bf16.msra.mxu0 0
    %4888 = vmatprep.subr.bf16.mxu0 0
    %4889 = vmatpush1.bf16.msra.mxu0 0
    %4890 = vmatprep.mubr.bf16.mxu0 0
    %4891 = vmatmul.mubr.bf16.gmra.mrb[0].mxu0 %v4844
    %v4892 = vpop.f32.mrb[0].mxu0
    %v4893 = vadd.f32 %v4813, %v4892
    %v4894 = vpop.f32.mrb[0].mxu0
    %v4895 = vpop.f32.mrb[0].mxu0
    %v4896 = vadd.f32 %v4816, %v4895
    %v4897 = vpop.f32.mrb[0].mxu0
    %4898 = vmatprep.mubr.bf16.mxu0 0
    %4899 = vmatmul.mubr.bf16.gmra.mrb[0].mxu0 %v4847
    %v4900 = vpop.f32.mrb[0].mxu0
    %v4901 = vadd.f32 %v4821, %v4900
    %v4902 = vpop.f32.mrb[0].mxu0
    %v4903 = vpop.f32.mrb[0].mxu0
    %v4904 = vadd.f32 %v4824, %v4903
    %v4905 = vpop.f32.mrb[0].mxu0
    %4906 = vmatprep.mubr.bf16.mxu0 0
    %4907 = vmatmul.mubr.bf16.gmra.mrb[0].mxu0 %v4850
    %v4908 = vpop.f32.mrb[0].mxu0
    %v4909 = vadd.f32 %v4829, %v4908
    %v4910 = vpop.f32.mrb[0].mxu0
    %v4911 = vpop.f32.mrb[0].mxu0
    %v4912 = vadd.f32 %v4832, %v4911
    %v4913 = vpop.f32.mrb[0].mxu0
    %4914 = vmatprep.mubr.bf16.mxu0 0
    %4915 = vmatmul.mubr.bf16.gmra.mrb[0].mxu0 %v4853
    %v4916 = vpop.f32.mrb[0].mxu0
    %v4917 = vadd.f32 %v4837, %v4916
    %v4918 = vpop.f32.mrb[0].mxu0
    %v4919 = vpop.f32.mrb[0].mxu0
    %v4920 = vadd.f32 %v4840, %v4919
    %v4921 = vpop.f32.mrb[0].mxu0
    %4922 = vdwg.mxu0
    %4923 = vrot.lane.b32.xlu0 %v4219, 112
    %v4924 = vpop.permute.xlu0 %4923
    %4925 = vrot.lane.b32.xlu0 %v4220, 112
    %v4926 = vpop.permute.xlu0 %4925
    %4927 = vrot.lane.b32.xlu0 %v4221, 112
    %v4928 = vpop.permute.xlu0 %4927
    %4929 = vrot.lane.b32.xlu0 %v4222, 112
    %v4930 = vpop.permute.xlu0 %4929
    %4931 = vrot.lane.b32.xlu0 %v4227, 112
    %v4932 = vpop.permute.xlu0 %4931
    %v4934 = vsel %vm675, %v4924, 0
    %v4937 = vsel %vm675, %v4926, 0
    %v4940 = vsel %vm675, %v4928, 0
    %v4943 = vsel %vm675, %v4930, 0
    %v4946 = vsel %vm675, %v4932, 0
    %4948 = vmatprep.subr.bf16.mxu0 0
    %4949 = vmatpush1.bf16.xpose.msra.mxu0 %v4946
    %4950 = vmatprep.subr.bf16.mxu0 0
    %4951 = vmatpush1.bf16.xpose.msra.mxu0 0
    %4952 = vmatprep.subr.bf16.mxu0 0
    %4953 = vmatpush1.bf16.xpose.msra.mxu0 0
    %4954 = vmatprep.subr.bf16.mxu0 0
    %4955 = vmatpush1.bf16.xpose.msra.mxu0 0
    %4956 = vmatprep.subr.bf16.mxu0 0
    %4957 = vmatpush1.bf16.xpose.msra.mxu0 0
    %4958 = vmatprep.subr.bf16.mxu0 0
    %4959 = vmatpush1.bf16.xpose.msra.mxu0 0
    %4960 = vmatprep.subr.bf16.mxu0 0
    %4961 = vmatpush1.bf16.xpose.msra.mxu0 0
    %4962 = vmatprep.subr.bf16.mxu0 0
    %4963 = vmatpush1.bf16.xpose.msra.mxu0 0
    %4964 = vmatprep.subr.bf16.mxu0 0
    %4965 = vmatpush1.bf16.xpose.msra.mxu0 0
    %4966 = vmatprep.subr.bf16.mxu0 0
    %4967 = vmatpush1.bf16.xpose.msra.mxu0 0
    %4968 = vmatprep.subr.bf16.mxu0 0
    %4969 = vmatpush1.bf16.xpose.msra.mxu0 0
    %4970 = vmatprep.subr.bf16.mxu0 0
    %4971 = vmatpush1.bf16.xpose.msra.mxu0 0
    %4972 = vmatprep.subr.bf16.mxu0 0
    %4973 = vmatpush1.bf16.xpose.msra.mxu0 0
    %4974 = vmatprep.subr.bf16.mxu0 0
    %4975 = vmatpush1.bf16.xpose.msra.mxu0 0
    %4976 = vmatprep.subr.bf16.mxu0 0
    %4977 = vmatpush1.bf16.xpose.msra.mxu0 0
    %4978 = vmatprep.subr.bf16.mxu0 0
    %4979 = vmatpush1.bf16.xpose.msra.mxu0 0
    %4980 = vmatprep.mubr.bf16.mxu0 0
    %4981 = vmatmul.mubr.bf16.gmra.mrb[0].mxu0 %v4934
    %v4982 = vpop.f32.mrb[0].mxu0
    %v4983 = vadd.f32 0.0, %v4982
    %v4984 = vpop.f32.mrb[0].mxu0
    %v4985 = vpop.f32.mrb[0].mxu0
    %v4986 = vadd.f32 0.0, %v4985
    %v4987 = vpop.f32.mrb[0].mxu0
    %4988 = vmatprep.mubr.bf16.mxu0 0
    %4989 = vmatmul.mubr.bf16.gmra.mrb[0].mxu0 %v4937
    %v4990 = vpop.f32.mrb[0].mxu0
    %v4991 = vadd.f32 0.0, %v4990
    %v4992 = vpop.f32.mrb[0].mxu0
    %v4993 = vpop.f32.mrb[0].mxu0
    %v4994 = vadd.f32 0.0, %v4993
    %v4995 = vpop.f32.mrb[0].mxu0
    %4996 = vmatprep.mubr.bf16.mxu0 0
    %4997 = vmatmul.mubr.bf16.gmra.mrb[0].mxu0 %v4940
    %v4998 = vpop.f32.mrb[0].mxu0
    %v4999 = vadd.f32 0.0, %v4998
    %v5000 = vpop.f32.mrb[0].mxu0
    %v5001 = vpop.f32.mrb[0].mxu0
    %v5002 = vadd.f32 0.0, %v5001
    %v5003 = vpop.f32.mrb[0].mxu0
    %5004 = vmatprep.mubr.bf16.mxu0 0
    %5005 = vmatmul.mubr.bf16.gmra.mrb[0].mxu0 %v4943
    %v5006 = vpop.f32.mrb[0].mxu0
    %v5007 = vadd.f32 0.0, %v5006
    %v5008 = vpop.f32.mrb[0].mxu0
    %v5009 = vpop.f32.mrb[0].mxu0
    %v5010 = vadd.f32 0.0, %v5009
    %v5011 = vpop.f32.mrb[0].mxu0
    %5012 = vdwg.mxu0
    %v5013 = vsel %vm675, %v4983, -inf
    %5014 = vmax.xlane.f32.xlu0 %v5013
    %v5015 = vpop.xlane.xlu0 %5014
    %v5016 = vsel %vm675, %v4986, -inf
    %5017 = vmax.xlane.f32.xlu0 %v5016
    %v5018 = vpop.xlane.xlu0 %5017
    %v5019 = vsel %vm675, %v4991, -inf
    %5020 = vmax.xlane.f32.xlu0 %v5019
    %v5021 = vpop.xlane.xlu0 %5020
    %v5022 = vsel %vm675, %v4994, -inf
    %5023 = vmax.xlane.f32.xlu0 %v5022
    %v5024 = vpop.xlane.xlu0 %5023
    %v5025 = vsel %vm675, %v4999, -inf
    %5026 = vmax.xlane.f32.xlu0 %v5025
    %v5027 = vpop.xlane.xlu0 %5026
    %v5028 = vsel %vm675, %v5002, -inf
    %5029 = vmax.xlane.f32.xlu0 %v5028
    %v5030 = vpop.xlane.xlu0 %5029
    %v5031 = vsel %vm675, %v5007, -inf
    %5032 = vmax.xlane.f32.xlu0 %v5031
    %v5033 = vpop.xlane.xlu0 %5032
    %v5034 = vsel %vm675, %v5010, -inf
    %5035 = vmax.xlane.f32.xlu0 %v5034
    %v5036 = vpop.xlane.xlu0 %5035
    %v5037 = vsub.f32 %v4983, %v5015
    %v5038 = vsub.f32 %v4986, %v5018
    %v5039 = vsub.f32 %v4991, %v5021
    %v5040 = vsub.f32 %v4994, %v5024
    %v5041 = vsub.f32 %v4999, %v5027
    %v5042 = vsub.f32 %v5002, %v5030
    %v5043 = vsub.f32 %v5007, %v5033
    %v5044 = vsub.f32 %v5010, %v5036
    %v5045 = vmul.f32 %v5037, 1.442695
    %v5046 = vpow.pop %v5045
    %v5047 = vmul.f32 %v5038, 1.442695
    %v5048 = vpow.pop %v5047
    %v5049 = vmul.f32 %v5039, 1.442695
    %v5050 = vpow.pop %v5049
    %v5051 = vmul.f32 %v5040, 1.442695
    %v5052 = vpow.pop %v5051
    %v5053 = vmul.f32 %v5041, 1.442695
    %v5054 = vpow.pop %v5053
    %v5055 = vmul.f32 %v5042, 1.442695
    %v5056 = vpow.pop %v5055
    %v5057 = vmul.f32 %v5043, 1.442695
    %v5058 = vpow.pop %v5057
    %v5059 = vmul.f32 %v5044, 1.442695
    %v5060 = vpow.pop %v5059
    %v5061 = vsel %vm675, %v5046, 0.0
    %5062 = vadd.xlane.f32.xlu0 %v5061
    %v5063 = vpop.xlane.xlu0 %5062
    %v5064 = vsel %vm675, %v5048, 0.0
    %5065 = vadd.xlane.f32.xlu0 %v5064
    %v5066 = vpop.xlane.xlu0 %5065
    %v5067 = vsel %vm675, %v5050, 0.0
    %5068 = vadd.xlane.f32.xlu0 %v5067
    %v5069 = vpop.xlane.xlu0 %5068
    %v5070 = vsel %vm675, %v5052, 0.0
    %5071 = vadd.xlane.f32.xlu0 %v5070
    %v5072 = vpop.xlane.xlu0 %5071
    %v5073 = vsel %vm675, %v5054, 0.0
    %5074 = vadd.xlane.f32.xlu0 %v5073
    %v5075 = vpop.xlane.xlu0 %5074
    %v5076 = vsel %vm675, %v5056, 0.0
    %5077 = vadd.xlane.f32.xlu0 %v5076
    %v5078 = vpop.xlane.xlu0 %5077
    %v5079 = vsel %vm675, %v5058, 0.0
    %5080 = vadd.xlane.f32.xlu0 %v5079
    %v5081 = vpop.xlane.xlu0 %5080
    %v5082 = vsel %vm675, %v5060, 0.0
    %5083 = vadd.xlane.f32.xlu0 %v5082
    %v5084 = vpop.xlane.xlu0 %5083
    %v5085 = vrcp.pop %v5063
    %v5086 = vrcp.pop %v5066
    %v5087 = vrcp.pop %v5069
    %v5088 = vrcp.pop %v5072
    %v5089 = vrcp.pop %v5075
    %v5090 = vrcp.pop %v5078
    %v5091 = vrcp.pop %v5081
    %v5092 = vrcp.pop %v5084
    %v5093 = vmul.f32 %v5046, %v5085
    %v5094 = vmul.f32 %v5048, %v5086
    %v5095 = vmul.f32 %v5050, %v5087
    %v5096 = vmul.f32 %v5052, %v5088
    %v5097 = vmul.f32 %v5054, %v5089
    %v5098 = vmul.f32 %v5056, %v5090
    %v5099 = vmul.f32 %v5058, %v5091
    %v5100 = vmul.f32 %v5060, %v5092
    %v5101 = vpack.c.bf16 %v5094, %v5093
    %v5102 = vpack.c.bf16 %v5096, %v5095
    %v5103 = vpack.c.bf16 %v5098, %v5097
    %v5104 = vpack.c.bf16 %v5100, %v5099
    %5105 = vrot.lane.b32.xlu0 %v4228, 112
    %v5106 = vpop.permute.xlu0 %5105
    %v5108 = vsel %vm675, %v5101, 0
    %v5111 = vsel %vm675, %v5102, 0
    %v5114 = vsel %vm675, %v5103, 0
    %v5117 = vsel %vm675, %v5104, 0
    %v5120 = vsel %vm1253, %v5106, 0
    %5122 = vmatprep.subr.bf16.mxu0 0
    %5123 = vmatpush1.bf16.msra.mxu0 %v5120
    %5124 = vmatprep.subr.bf16.mxu0 0
    %5125 = vmatpush1.bf16.msra.mxu0 0
    %5126 = vmatprep.subr.bf16.mxu0 0
    %5127 = vmatpush1.bf16.msra.mxu0 0
    %5128 = vmatprep.subr.bf16.mxu0 0
    %5129 = vmatpush1.bf16.msra.mxu0 0
    %5130 = vmatprep.subr.bf16.mxu0 0
    %5131 = vmatpush1.bf16.msra.mxu0 0
    %5132 = vmatprep.subr.bf16.mxu0 0
    %5133 = vmatpush1.bf16.msra.mxu0 0
    %5134 = vmatprep.subr.bf16.mxu0 0
    %5135 = vmatpush1.bf16.msra.mxu0 0
    %5136 = vmatprep.subr.bf16.mxu0 0
    %5137 = vmatpush1.bf16.msra.mxu0 0
    %5138 = vmatprep.subr.bf16.mxu0 0
    %5139 = vmatpush1.bf16.msra.mxu0 0
    %5140 = vmatprep.subr.bf16.mxu0 0
    %5141 = vmatpush1.bf16.msra.mxu0 0
    %5142 = vmatprep.subr.bf16.mxu0 0
    %5143 = vmatpush1.bf16.msra.mxu0 0
    %5144 = vmatprep.subr.bf16.mxu0 0
    %5145 = vmatpush1.bf16.msra.mxu0 0
    %5146 = vmatprep.subr.bf16.mxu0 0
    %5147 = vmatpush1.bf16.msra.mxu0 0
    %5148 = vmatprep.subr.bf16.mxu0 0
    %5149 = vmatpush1.bf16.msra.mxu0 0
    %5150 = vmatprep.subr.bf16.mxu0 0
    %5151 = vmatpush1.bf16.msra.mxu0 0
    %5152 = vmatprep.subr.bf16.mxu0 0
    %5153 = vmatpush1.bf16.msra.mxu0 0
    %5154 = vmatprep.mubr.bf16.mxu0 0
    %5155 = vmatmul.mubr.bf16.gmra.mrb[0].mxu0 %v5108
    %v5156 = vpop.f32.mrb[0].mxu0
    %v5157 = vadd.f32 0.0, %v5156
    %v5158 = vpop.f32.mrb[0].mxu0
    %v5159 = vpop.f32.mrb[0].mxu0
    %v5160 = vadd.f32 0.0, %v5159
    %v5161 = vpop.f32.mrb[0].mxu0
    %5162 = vmatprep.mubr.bf16.mxu0 0
    %5163 = vmatmul.mubr.bf16.gmra.mrb[0].mxu0 %v5111
    %v5164 = vpop.f32.mrb[0].mxu0
    %v5165 = vadd.f32 0.0, %v5164
    %v5166 = vpop.f32.mrb[0].mxu0
    %v5167 = vpop.f32.mrb[0].mxu0
    %v5168 = vadd.f32 0.0, %v5167
    %v5169 = vpop.f32.mrb[0].mxu0
    %5170 = vmatprep.mubr.bf16.mxu0 0
    %5171 = vmatmul.mubr.bf16.gmra.mrb[0].mxu0 %v5114
    %v5172 = vpop.f32.mrb[0].mxu0
    %v5173 = vadd.f32 0.0, %v5172
    %v5174 = vpop.f32.mrb[0].mxu0
    %v5175 = vpop.f32.mrb[0].mxu0
    %v5176 = vadd.f32 0.0, %v5175
    %v5177 = vpop.f32.mrb[0].mxu0
    %5178 = vmatprep.mubr.bf16.mxu0 0
    %5179 = vmatmul.mubr.bf16.gmra.mrb[0].mxu0 %v5117
    %v5180 = vpop.f32.mrb[0].mxu0
    %v5181 = vadd.f32 0.0, %v5180
    %v5182 = vpop.f32.mrb[0].mxu0
    %v5183 = vpop.f32.mrb[0].mxu0
    %v5184 = vadd.f32 0.0, %v5183
    %v5185 = vpop.f32.mrb[0].mxu0
    %5186 = vdwg.mxu0
    %v5187 = vpack.c.bf16 %v5160, %v5157
    %v5188 = vpack.c.bf16 %v5168, %v5165
    %v5189 = vpack.c.bf16 %v5176, %v5173
    %v5190 = vpack.c.bf16 %v5184, %v5181
    %v5192 = vsel %vm675, %v5187, 0
    %v5195 = vsel %vm675, %v5188, 0
    %v5198 = vsel %vm675, %v5189, 0
    %v5201 = vsel %vm675, %v5190, 0
    %v5204 = vsel %vm1253, %v4231, 0
    %5206 = vmatprep.subr.bf16.mxu0 0
    %5207 = vmatpush1.bf16.msra.mxu0 %v5204
    %5208 = vmatprep.subr.bf16.mxu0 0
    %5209 = vmatpush1.bf16.msra.mxu0 0
    %5210 = vmatprep.subr.bf16.mxu0 0
    %5211 = vmatpush1.bf16.msra.mxu0 0
    %5212 = vmatprep.subr.bf16.mxu0 0
    %5213 = vmatpush1.bf16.msra.mxu0 0
    %5214 = vmatprep.subr.bf16.mxu0 0
    %5215 = vmatpush1.bf16.msra.mxu0 0
    %5216 = vmatprep.subr.bf16.mxu0 0
    %5217 = vmatpush1.bf16.msra.mxu0 0
    %5218 = vmatprep.subr.bf16.mxu0 0
    %5219 = vmatpush1.bf16.msra.mxu0 0
    %5220 = vmatprep.subr.bf16.mxu0 0
    %5221 = vmatpush1.bf16.msra.mxu0 0
    %5222 = vmatprep.subr.bf16.mxu0 0
    %5223 = vmatpush1.bf16.msra.mxu0 0
    %5224 = vmatprep.subr.bf16.mxu0 0
    %5225 = vmatpush1.bf16.msra.mxu0 0
    %5226 = vmatprep.subr.bf16.mxu0 0
    %5227 = vmatpush1.bf16.msra.mxu0 0
    %5228 = vmatprep.subr.bf16.mxu0 0
    %5229 = vmatpush1.bf16.msra.mxu0 0
    %5230 = vmatprep.subr.bf16.mxu0 0
    %5231 = vmatpush1.bf16.msra.mxu0 0
    %5232 = vmatprep.subr.bf16.mxu0 0
    %5233 = vmatpush1.bf16.msra.mxu0 0
    %5234 = vmatprep.subr.bf16.mxu0 0
    %5235 = vmatpush1.bf16.msra.mxu0 0
    %5236 = vmatprep.subr.bf16.mxu0 0
    %5237 = vmatpush1.bf16.msra.mxu0 0
    %5238 = vmatprep.mubr.bf16.mxu0 0
    %5239 = vmatmul.mubr.bf16.gmra.mrb[0].mxu0 %v5192
    %v5240 = vpop.f32.mrb[0].mxu0
    %v5241 = vadd.f32 0.0, %v5240
    %v5242 = vpop.f32.mrb[0].mxu0
    %v5243 = vpop.f32.mrb[0].mxu0
    %v5244 = vadd.f32 0.0, %v5243
    %v5245 = vpop.f32.mrb[0].mxu0
    %5246 = vmatprep.mubr.bf16.mxu0 0
    %5247 = vmatmul.mubr.bf16.gmra.mrb[0].mxu0 %v5195
    %v5248 = vpop.f32.mrb[0].mxu0
    %v5249 = vadd.f32 0.0, %v5248
    %v5250 = vpop.f32.mrb[0].mxu0
    %v5251 = vpop.f32.mrb[0].mxu0
    %v5252 = vadd.f32 0.0, %v5251
    %v5253 = vpop.f32.mrb[0].mxu0
    %5254 = vmatprep.mubr.bf16.mxu0 0
    %5255 = vmatmul.mubr.bf16.gmra.mrb[0].mxu0 %v5198
    %v5256 = vpop.f32.mrb[0].mxu0
    %v5257 = vadd.f32 0.0, %v5256
    %v5258 = vpop.f32.mrb[0].mxu0
    %v5259 = vpop.f32.mrb[0].mxu0
    %v5260 = vadd.f32 0.0, %v5259
    %v5261 = vpop.f32.mrb[0].mxu0
    %5262 = vmatprep.mubr.bf16.mxu0 0
    %5263 = vmatmul.mubr.bf16.gmra.mrb[0].mxu0 %v5201
    %v5264 = vpop.f32.mrb[0].mxu0
    %v5265 = vadd.f32 0.0, %v5264
    %v5266 = vpop.f32.mrb[0].mxu0
    %v5267 = vpop.f32.mrb[0].mxu0
    %v5268 = vadd.f32 0.0, %v5267
    %v5269 = vpop.f32.mrb[0].mxu0
    %5270 = vdwg.mxu0
    %v5271 = vadd.f32 %v4893, %v5241
    %v5272 = vadd.f32 %v4896, %v5244
    %v5273 = vadd.f32 %v4901, %v5249
    %v5274 = vadd.f32 %v4904, %v5252
    %v5275 = vadd.f32 %v4909, %v5257
    %v5276 = vadd.f32 %v4912, %v5260
    %v5277 = vadd.f32 %v4917, %v5265
    %v5278 = vadd.f32 %v4920, %v5268
    %5279 = vrot.lane.b32.xlu0 %v4219, 104
    %v5280 = vpop.permute.xlu0 %5279
    %5281 = vrot.lane.b32.xlu0 %v4220, 104
    %v5282 = vpop.permute.xlu0 %5281
    %5283 = vrot.lane.b32.xlu0 %v4221, 104
    %v5284 = vpop.permute.xlu0 %5283
    %5285 = vrot.lane.b32.xlu0 %v4222, 104
    %v5286 = vpop.permute.xlu0 %5285
    %5287 = vrot.lane.b32.xlu0 %v4227, 104
    %v5288 = vpop.permute.xlu0 %5287
    %v5290 = vsel %vm675, %v5280, 0
    %v5293 = vsel %vm675, %v5282, 0
    %v5296 = vsel %vm675, %v5284, 0
    %v5299 = vsel %vm675, %v5286, 0
    %v5302 = vsel %vm675, %v5288, 0
    %5304 = vmatprep.subr.bf16.mxu0 0
    %5305 = vmatpush1.bf16.xpose.msra.mxu0 %v5302
    %5306 = vmatprep.subr.bf16.mxu0 0
    %5307 = vmatpush1.bf16.xpose.msra.mxu0 0
    %5308 = vmatprep.subr.bf16.mxu0 0
    %5309 = vmatpush1.bf16.xpose.msra.mxu0 0
    %5310 = vmatprep.subr.bf16.mxu0 0
    %5311 = vmatpush1.bf16.xpose.msra.mxu0 0
    %5312 = vmatprep.subr.bf16.mxu0 0
    %5313 = vmatpush1.bf16.xpose.msra.mxu0 0
    %5314 = vmatprep.subr.bf16.mxu0 0
    %5315 = vmatpush1.bf16.xpose.msra.mxu0 0
    %5316 = vmatprep.subr.bf16.mxu0 0
    %5317 = vmatpush1.bf16.xpose.msra.mxu0 0
    %5318 = vmatprep.subr.bf16.mxu0 0
    %5319 = vmatpush1.bf16.xpose.msra.mxu0 0
    %5320 = vmatprep.subr.bf16.mxu0 0
    %5321 = vmatpush1.bf16.xpose.msra.mxu0 0
    %5322 = vmatprep.subr.bf16.mxu0 0
    %5323 = vmatpush1.bf16.xpose.msra.mxu0 0
    %5324 = vmatprep.subr.bf16.mxu0 0
    %5325 = vmatpush1.bf16.xpose.msra.mxu0 0
    %5326 = vmatprep.subr.bf16.mxu0 0
    %5327 = vmatpush1.bf16.xpose.msra.mxu0 0
    %5328 = vmatprep.subr.bf16.mxu0 0
    %5329 = vmatpush1.bf16.xpose.msra.mxu0 0
    %5330 = vmatprep.subr.bf16.mxu0 0
    %5331 = vmatpush1.bf16.xpose.msra.mxu0 0
    %5332 = vmatprep.subr.bf16.mxu0 0
    %5333 = vmatpush1.bf16.xpose.msra.mxu0 0
    %5334 = vmatprep.subr.bf16.mxu0 0
    %5335 = vmatpush1.bf16.xpose.msra.mxu0 0
    %5336 = vmatprep.mubr.bf16.mxu0 0
    %5337 = vmatmul.mubr.bf16.gmra.mrb[0].mxu0 %v5290
    %v5338 = vpop.f32.mrb[0].mxu0
    %v5339 = vadd.f32 0.0, %v5338
    %v5340 = vpop.f32.mrb[0].mxu0
    %v5341 = vpop.f32.mrb[0].mxu0
    %v5342 = vadd.f32 0.0, %v5341
    %v5343 = vpop.f32.mrb[0].mxu0
    %5344 = vmatprep.mubr.bf16.mxu0 0
    %5345 = vmatmul.mubr.bf16.gmra.mrb[0].mxu0 %v5293
    %v5346 = vpop.f32.mrb[0].mxu0
    %v5347 = vadd.f32 0.0, %v5346
    %v5348 = vpop.f32.mrb[0].mxu0
    %v5349 = vpop.f32.mrb[0].mxu0
    %v5350 = vadd.f32 0.0, %v5349
    %v5351 = vpop.f32.mrb[0].mxu0
    %5352 = vmatprep.mubr.bf16.mxu0 0
    %5353 = vmatmul.mubr.bf16.gmra.mrb[0].mxu0 %v5296
    %v5354 = vpop.f32.mrb[0].mxu0
    %v5355 = vadd.f32 0.0, %v5354
    %v5356 = vpop.f32.mrb[0].mxu0
    %v5357 = vpop.f32.mrb[0].mxu0
    %v5358 = vadd.f32 0.0, %v5357
    %v5359 = vpop.f32.mrb[0].mxu0
    %5360 = vmatprep.mubr.bf16.mxu0 0
    %5361 = vmatmul.mubr.bf16.gmra.mrb[0].mxu0 %v5299
    %v5362 = vpop.f32.mrb[0].mxu0
    %v5363 = vadd.f32 0.0, %v5362
    %v5364 = vpop.f32.mrb[0].mxu0
    %v5365 = vpop.f32.mrb[0].mxu0
    %v5366 = vadd.f32 0.0, %v5365
    %v5367 = vpop.f32.mrb[0].mxu0
    %5368 = vdwg.mxu0
    %v5369 = vsel %vm675, %v5339, -inf
    %5370 = vmax.xlane.f32.xlu0 %v5369
    %v5371 = vpop.xlane.xlu0 %5370
    %v5372 = vsel %vm675, %v5342, -inf
    %5373 = vmax.xlane.f32.xlu0 %v5372
    %v5374 = vpop.xlane.xlu0 %5373
    %v5375 = vsel %vm675, %v5347, -inf
    %5376 = vmax.xlane.f32.xlu0 %v5375
    %v5377 = vpop.xlane.xlu0 %5376
    %v5378 = vsel %vm675, %v5350, -inf
    %5379 = vmax.xlane.f32.xlu0 %v5378
    %v5380 = vpop.xlane.xlu0 %5379
    %v5381 = vsel %vm675, %v5355, -inf
    %5382 = vmax.xlane.f32.xlu0 %v5381
    %v5383 = vpop.xlane.xlu0 %5382
    %v5384 = vsel %vm675, %v5358, -inf
    %5385 = vmax.xlane.f32.xlu0 %v5384
    %v5386 = vpop.xlane.xlu0 %5385
    %v5387 = vsel %vm675, %v5363, -inf
    %5388 = vmax.xlane.f32.xlu0 %v5387
    %v5389 = vpop.xlane.xlu0 %5388
    %v5390 = vsel %vm675, %v5366, -inf
    %5391 = vmax.xlane.f32.xlu0 %v5390
    %v5392 = vpop.xlane.xlu0 %5391
    %v5393 = vsub.f32 %v5339, %v5371
    %v5394 = vsub.f32 %v5342, %v5374
    %v5395 = vsub.f32 %v5347, %v5377
    %v5396 = vsub.f32 %v5350, %v5380
    %v5397 = vsub.f32 %v5355, %v5383
    %v5398 = vsub.f32 %v5358, %v5386
    %v5399 = vsub.f32 %v5363, %v5389
    %v5400 = vsub.f32 %v5366, %v5392
    %v5401 = vmul.f32 %v5393, 1.442695
    %v5402 = vpow.pop %v5401
    %v5403 = vmul.f32 %v5394, 1.442695
    %v5404 = vpow.pop %v5403
    %v5405 = vmul.f32 %v5395, 1.442695
    %v5406 = vpow.pop %v5405
    %v5407 = vmul.f32 %v5396, 1.442695
    %v5408 = vpow.pop %v5407
    %v5409 = vmul.f32 %v5397, 1.442695
    %v5410 = vpow.pop %v5409
    %v5411 = vmul.f32 %v5398, 1.442695
    %v5412 = vpow.pop %v5411
    %v5413 = vmul.f32 %v5399, 1.442695
    %v5414 = vpow.pop %v5413
    %v5415 = vmul.f32 %v5400, 1.442695
    %v5416 = vpow.pop %v5415
    %v5417 = vsel %vm675, %v5402, 0.0
    %5418 = vadd.xlane.f32.xlu0 %v5417
    %v5419 = vpop.xlane.xlu0 %5418
    %v5420 = vsel %vm675, %v5404, 0.0
    %5421 = vadd.xlane.f32.xlu0 %v5420
    %v5422 = vpop.xlane.xlu0 %5421
    %v5423 = vsel %vm675, %v5406, 0.0
    %5424 = vadd.xlane.f32.xlu0 %v5423
    %v5425 = vpop.xlane.xlu0 %5424
    %v5426 = vsel %vm675, %v5408, 0.0
    %5427 = vadd.xlane.f32.xlu0 %v5426
    %v5428 = vpop.xlane.xlu0 %5427
    %v5429 = vsel %vm675, %v5410, 0.0
    %5430 = vadd.xlane.f32.xlu0 %v5429
    %v5431 = vpop.xlane.xlu0 %5430
    %v5432 = vsel %vm675, %v5412, 0.0
    %5433 = vadd.xlane.f32.xlu0 %v5432
    %v5434 = vpop.xlane.xlu0 %5433
    %v5435 = vsel %vm675, %v5414, 0.0
    %5436 = vadd.xlane.f32.xlu0 %v5435
    %v5437 = vpop.xlane.xlu0 %5436
    %v5438 = vsel %vm675, %v5416, 0.0
    %5439 = vadd.xlane.f32.xlu0 %v5438
    %v5440 = vpop.xlane.xlu0 %5439
    %v5441 = vrcp.pop %v5419
    %v5442 = vrcp.pop %v5422
    %v5443 = vrcp.pop %v5425
    %v5444 = vrcp.pop %v5428
    %v5445 = vrcp.pop %v5431
    %v5446 = vrcp.pop %v5434
    %v5447 = vrcp.pop %v5437
    %v5448 = vrcp.pop %v5440
    %v5449 = vmul.f32 %v5402, %v5441
    %v5450 = vmul.f32 %v5404, %v5442
    %v5451 = vmul.f32 %v5406, %v5443
    %v5452 = vmul.f32 %v5408, %v5444
    %v5453 = vmul.f32 %v5410, %v5445
    %v5454 = vmul.f32 %v5412, %v5446
    %v5455 = vmul.f32 %v5414, %v5447
    %v5456 = vmul.f32 %v5416, %v5448
    %v5457 = vpack.c.bf16 %v5450, %v5449
    %v5458 = vpack.c.bf16 %v5452, %v5451
    %v5459 = vpack.c.bf16 %v5454, %v5453
    %v5460 = vpack.c.bf16 %v5456, %v5455
    %5461 = vrot.lane.b32.xlu0 %v4228, 104
    %v5462 = vpop.permute.xlu0 %5461
    %v5464 = vsel %vm675, %v5457, 0
    %v5467 = vsel %vm675, %v5458, 0
    %v5470 = vsel %vm675, %v5459, 0
    %v5473 = vsel %vm675, %v5460, 0
    %v5476 = vsel %vm1253, %v5462, 0
    %5478 = vmatprep.subr.bf16.mxu0 0
    %5479 = vmatpush1.bf16.msra.mxu0 %v5476
    %5480 = vmatprep.subr.bf16.mxu0 0
    %5481 = vmatpush1.bf16.msra.mxu0 0
    %5482 = vmatprep.subr.bf16.mxu0 0
    %5483 = vmatpush1.bf16.msra.mxu0 0
    %5484 = vmatprep.subr.bf16.mxu0 0
    %5485 = vmatpush1.bf16.msra.mxu0 0
    %5486 = vmatprep.subr.bf16.mxu0 0
    %5487 = vmatpush1.bf16.msra.mxu0 0
    %5488 = vmatprep.subr.bf16.mxu0 0
    %5489 = vmatpush1.bf16.msra.mxu0 0
    %5490 = vmatprep.subr.bf16.mxu0 0
    %5491 = vmatpush1.bf16.msra.mxu0 0
    %5492 = vmatprep.subr.bf16.mxu0 0
    %5493 = vmatpush1.bf16.msra.mxu0 0
    %5494 = vmatprep.subr.bf16.mxu0 0
    %5495 = vmatpush1.bf16.msra.mxu0 0
    %5496 = vmatprep.subr.bf16.mxu0 0
    %5497 = vmatpush1.bf16.msra.mxu0 0
    %5498 = vmatprep.subr.bf16.mxu0 0
    %5499 = vmatpush1.bf16.msra.mxu0 0
    %5500 = vmatprep.subr.bf16.mxu0 0
    %5501 = vmatpush1.bf16.msra.mxu0 0
    %5502 = vmatprep.subr.bf16.mxu0 0
    %5503 = vmatpush1.bf16.msra.mxu0 0
    %5504 = vmatprep.subr.bf16.mxu0 0
    %5505 = vmatpush1.bf16.msra.mxu0 0
    %5506 = vmatprep.subr.bf16.mxu0 0
    %5507 = vmatpush1.bf16.msra.mxu0 0
    %5508 = vmatprep.subr.bf16.mxu0 0
    %5509 = vmatpush1.bf16.msra.mxu0 0
    %5510 = vmatprep.mubr.bf16.mxu0 0
    %5511 = vmatmul.mubr.bf16.gmra.mrb[0].mxu0 %v5464
    %v5512 = vpop.f32.mrb[0].mxu0
    %v5513 = vadd.f32 0.0, %v5512
    %v5514 = vpop.f32.mrb[0].mxu0
    %v5515 = vpop.f32.mrb[0].mxu0
    %v5516 = vadd.f32 0.0, %v5515
    %v5517 = vpop.f32.mrb[0].mxu0
    %5518 = vmatprep.mubr.bf16.mxu0 0
    %5519 = vmatmul.mubr.bf16.gmra.mrb[0].mxu0 %v5467
    %v5520 = vpop.f32.mrb[0].mxu0
    %v5521 = vadd.f32 0.0, %v5520
    %v5522 = vpop.f32.mrb[0].mxu0
    %v5523 = vpop.f32.mrb[0].mxu0
    %v5524 = vadd.f32 0.0, %v5523
    %v5525 = vpop.f32.mrb[0].mxu0
    %5526 = vmatprep.mubr.bf16.mxu0 0
    %5527 = vmatmul.mubr.bf16.gmra.mrb[0].mxu0 %v5470
    %v5528 = vpop.f32.mrb[0].mxu0
    %v5529 = vadd.f32 0.0, %v5528
    %v5530 = vpop.f32.mrb[0].mxu0
    %v5531 = vpop.f32.mrb[0].mxu0
    %v5532 = vadd.f32 0.0, %v5531
    %v5533 = vpop.f32.mrb[0].mxu0
    %5534 = vmatprep.mubr.bf16.mxu0 0
    %5535 = vmatmul.mubr.bf16.gmra.mrb[0].mxu0 %v5473
    %v5536 = vpop.f32.mrb[0].mxu0
    %v5537 = vadd.f32 0.0, %v5536
    %v5538 = vpop.f32.mrb[0].mxu0
    %v5539 = vpop.f32.mrb[0].mxu0
    %v5540 = vadd.f32 0.0, %v5539
    %v5541 = vpop.f32.mrb[0].mxu0
    %5542 = vdwg.mxu0
    %v5543 = vpack.c.bf16 %v5516, %v5513
    %v5544 = vpack.c.bf16 %v5524, %v5521
    %v5545 = vpack.c.bf16 %v5532, %v5529
    %v5546 = vpack.c.bf16 %v5540, %v5537
    %v5548 = vsel %vm675, %v5543, 0
    %v5551 = vsel %vm675, %v5544, 0
    %v5554 = vsel %vm675, %v5545, 0
    %v5557 = vsel %vm675, %v5546, 0
    %v5560 = vsel %vm1253, %v4232, 0
    %5562 = vmatprep.subr.bf16.mxu0 0
    %5563 = vmatpush1.bf16.msra.mxu0 %v5560
    %5564 = vmatprep.subr.bf16.mxu0 0
    %5565 = vmatpush1.bf16.msra.mxu0 0
    %5566 = vmatprep.subr.bf16.mxu0 0
    %5567 = vmatpush1.bf16.msra.mxu0 0
    %5568 = vmatprep.subr.bf16.mxu0 0
    %5569 = vmatpush1.bf16.msra.mxu0 0
    %5570 = vmatprep.subr.bf16.mxu0 0
    %5571 = vmatpush1.bf16.msra.mxu0 0
    %5572 = vmatprep.subr.bf16.mxu0 0
    %5573 = vmatpush1.bf16.msra.mxu0 0
    %5574 = vmatprep.subr.bf16.mxu0 0
    %5575 = vmatpush1.bf16.msra.mxu0 0
    %5576 = vmatprep.subr.bf16.mxu0 0
    %5577 = vmatpush1.bf16.msra.mxu0 0
    %5578 = vmatprep.subr.bf16.mxu0 0
    %5579 = vmatpush1.bf16.msra.mxu0 0
    %5580 = vmatprep.subr.bf16.mxu0 0
    %5581 = vmatpush1.bf16.msra.mxu0 0
    %5582 = vmatprep.subr.bf16.mxu0 0
    %5583 = vmatpush1.bf16.msra.mxu0 0
    %5584 = vmatprep.subr.bf16.mxu0 0
    %5585 = vmatpush1.bf16.msra.mxu0 0
    %5586 = vmatprep.subr.bf16.mxu0 0
    %5587 = vmatpush1.bf16.msra.mxu0 0
    %5588 = vmatprep.subr.bf16.mxu0 0
    %5589 = vmatpush1.bf16.msra.mxu0 0
    %5590 = vmatprep.subr.bf16.mxu0 0
    %5591 = vmatpush1.bf16.msra.mxu0 0
    %5592 = vmatprep.subr.bf16.mxu0 0
    %5593 = vmatpush1.bf16.msra.mxu0 0
    %5594 = vmatprep.mubr.bf16.mxu0 0
    %5595 = vmatmul.mubr.bf16.gmra.mrb[0].mxu0 %v5548
    %v5596 = vpop.f32.mrb[0].mxu0
    %v5597 = vadd.f32 0.0, %v5596
    %v5598 = vpop.f32.mrb[0].mxu0
    %v5599 = vpop.f32.mrb[0].mxu0
    %v5600 = vadd.f32 0.0, %v5599
    %v5601 = vpop.f32.mrb[0].mxu0
    %5602 = vmatprep.mubr.bf16.mxu0 0
    %5603 = vmatmul.mubr.bf16.gmra.mrb[0].mxu0 %v5551
    %v5604 = vpop.f32.mrb[0].mxu0
    %v5605 = vadd.f32 0.0, %v5604
    %v5606 = vpop.f32.mrb[0].mxu0
    %v5607 = vpop.f32.mrb[0].mxu0
    %v5608 = vadd.f32 0.0, %v5607
    %v5609 = vpop.f32.mrb[0].mxu0
    %5610 = vmatprep.mubr.bf16.mxu0 0
    %5611 = vmatmul.mubr.bf16.gmra.mrb[0].mxu0 %v5554
    %v5612 = vpop.f32.mrb[0].mxu0
    %v5613 = vadd.f32 0.0, %v5612
    %v5614 = vpop.f32.mrb[0].mxu0
    %v5615 = vpop.f32.mrb[0].mxu0
    %v5616 = vadd.f32 0.0, %v5615
    %v5617 = vpop.f32.mrb[0].mxu0
    %5618 = vmatprep.mubr.bf16.mxu0 0
    %5619 = vmatmul.mubr.bf16.gmra.mrb[0].mxu0 %v5557
    %v5620 = vpop.f32.mrb[0].mxu0
    %v5621 = vadd.f32 0.0, %v5620
    %v5622 = vpop.f32.mrb[0].mxu0
    %v5623 = vpop.f32.mrb[0].mxu0
    %v5624 = vadd.f32 0.0, %v5623
    %v5625 = vpop.f32.mrb[0].mxu0
    %5626 = vdwg.mxu0
    %v5627 = vadd.f32 %v5271, %v5597
    %v5628 = vadd.f32 %v5272, %v5600
    %v5629 = vadd.f32 %v5273, %v5605
    %v5630 = vadd.f32 %v5274, %v5608
    %v5631 = vadd.f32 %v5275, %v5613
    %v5632 = vadd.f32 %v5276, %v5616
    %v5633 = vadd.f32 %v5277, %v5621
    %v5634 = vadd.f32 %v5278, %v5624
    %v5635 = vrot.slane %v4227, 4
    %v5637 = vsel %vm675, %v4223, 0
    %v5640 = vsel %vm675, %v4224, 0
    %v5643 = vsel %vm675, %v4225, 0
    %v5646 = vsel %vm675, %v4226, 0
    %v5649 = vsel %vm675, %v5635, 0
    %5651 = vmatprep.subr.bf16.mxu0 0
    %5652 = vmatpush1.bf16.xpose.msra.mxu0 %v5649
    %5653 = vmatprep.subr.bf16.mxu0 0
    %5654 = vmatpush1.bf16.xpose.msra.mxu0 0
    %5655 = vmatprep.subr.bf16.mxu0 0
    %5656 = vmatpush1.bf16.xpose.msra.mxu0 0
    %5657 = vmatprep.subr.bf16.mxu0 0
    %5658 = vmatpush1.bf16.xpose.msra.mxu0 0
    %5659 = vmatprep.subr.bf16.mxu0 0
    %5660 = vmatpush1.bf16.xpose.msra.mxu0 0
    %5661 = vmatprep.subr.bf16.mxu0 0
    %5662 = vmatpush1.bf16.xpose.msra.mxu0 0
    %5663 = vmatprep.subr.bf16.mxu0 0
    %5664 = vmatpush1.bf16.xpose.msra.mxu0 0
    %5665 = vmatprep.subr.bf16.mxu0 0
    %5666 = vmatpush1.bf16.xpose.msra.mxu0 0
    %5667 = vmatprep.subr.bf16.mxu0 0
    %5668 = vmatpush1.bf16.xpose.msra.mxu0 0
    %5669 = vmatprep.subr.bf16.mxu0 0
    %5670 = vmatpush1.bf16.xpose.msra.mxu0 0
    %5671 = vmatprep.subr.bf16.mxu0 0
    %5672 = vmatpush1.bf16.xpose.msra.mxu0 0
    %5673 = vmatprep.subr.bf16.mxu0 0
    %5674 = vmatpush1.bf16.xpose.msra.mxu0 0
    %5675 = vmatprep.subr.bf16.mxu0 0
    %5676 = vmatpush1.bf16.xpose.msra.mxu0 0
    %5677 = vmatprep.subr.bf16.mxu0 0
    %5678 = vmatpush1.bf16.xpose.msra.mxu0 0
    %5679 = vmatprep.subr.bf16.mxu0 0
    %5680 = vmatpush1.bf16.xpose.msra.mxu0 0
    %5681 = vmatprep.subr.bf16.mxu0 0
    %5682 = vmatpush1.bf16.xpose.msra.mxu0 0
    %5683 = vmatprep.mubr.bf16.mxu0 0
    %5684 = vmatmul.mubr.bf16.gmra.mrb[0].mxu0 %v5637
    %v5685 = vpop.f32.mrb[0].mxu0
    %v5686 = vadd.f32 0.0, %v5685
    %v5687 = vpop.f32.mrb[0].mxu0
    %v5688 = vpop.f32.mrb[0].mxu0
    %v5689 = vadd.f32 0.0, %v5688
    %v5690 = vpop.f32.mrb[0].mxu0
    %5691 = vmatprep.mubr.bf16.mxu0 0
    %5692 = vmatmul.mubr.bf16.gmra.mrb[0].mxu0 %v5640
    %v5693 = vpop.f32.mrb[0].mxu0
    %v5694 = vadd.f32 0.0, %v5693
    %v5695 = vpop.f32.mrb[0].mxu0
    %v5696 = vpop.f32.mrb[0].mxu0
    %v5697 = vadd.f32 0.0, %v5696
    %v5698 = vpop.f32.mrb[0].mxu0
    %5699 = vmatprep.mubr.bf16.mxu0 0
    %5700 = vmatmul.mubr.bf16.gmra.mrb[0].mxu0 %v5643
    %v5701 = vpop.f32.mrb[0].mxu0
    %v5702 = vadd.f32 0.0, %v5701
    %v5703 = vpop.f32.mrb[0].mxu0
    %v5704 = vpop.f32.mrb[0].mxu0
    %v5705 = vadd.f32 0.0, %v5704
    %v5706 = vpop.f32.mrb[0].mxu0
    %5707 = vmatprep.mubr.bf16.mxu0 0
    %5708 = vmatmul.mubr.bf16.gmra.mrb[0].mxu0 %v5646
    %v5709 = vpop.f32.mrb[0].mxu0
    %v5710 = vadd.f32 0.0, %v5709
    %v5711 = vpop.f32.mrb[0].mxu0
    %v5712 = vpop.f32.mrb[0].mxu0
    %v5713 = vadd.f32 0.0, %v5712
    %v5714 = vpop.f32.mrb[0].mxu0
    %5715 = vdwg.mxu0
    %v5716 = vsel %vm675, %v5686, -inf
    %5717 = vmax.xlane.f32.xlu0 %v5716
    %v5718 = vpop.xlane.xlu0 %5717
    %v5719 = vsel %vm675, %v5689, -inf
    %5720 = vmax.xlane.f32.xlu0 %v5719
    %v5721 = vpop.xlane.xlu0 %5720
    %v5722 = vsel %vm675, %v5694, -inf
    %5723 = vmax.xlane.f32.xlu0 %v5722
    %v5724 = vpop.xlane.xlu0 %5723
    %v5725 = vsel %vm675, %v5697, -inf
    %5726 = vmax.xlane.f32.xlu0 %v5725
    %v5727 = vpop.xlane.xlu0 %5726
    %v5728 = vsel %vm675, %v5702, -inf
    %5729 = vmax.xlane.f32.xlu0 %v5728
    %v5730 = vpop.xlane.xlu0 %5729
    %v5731 = vsel %vm675, %v5705, -inf
    %5732 = vmax.xlane.f32.xlu0 %v5731
    %v5733 = vpop.xlane.xlu0 %5732
    %v5734 = vsel %vm675, %v5710, -inf
    %5735 = vmax.xlane.f32.xlu0 %v5734
    %v5736 = vpop.xlane.xlu0 %5735
    %v5737 = vsel %vm675, %v5713, -inf
    %5738 = vmax.xlane.f32.xlu0 %v5737
    %v5739 = vpop.xlane.xlu0 %5738
    %v5740 = vsub.f32 %v5686, %v5718
    %v5741 = vsub.f32 %v5689, %v5721
    %v5742 = vsub.f32 %v5694, %v5724
    %v5743 = vsub.f32 %v5697, %v5727
    %v5744 = vsub.f32 %v5702, %v5730
    %v5745 = vsub.f32 %v5705, %v5733
    %v5746 = vsub.f32 %v5710, %v5736
    %v5747 = vsub.f32 %v5713, %v5739
    %v5748 = vmul.f32 %v5740, 1.442695
    %v5749 = vpow.pop %v5748
    %v5750 = vmul.f32 %v5741, 1.442695
    %v5751 = vpow.pop %v5750
    %v5752 = vmul.f32 %v5742, 1.442695
    %v5753 = vpow.pop %v5752
    %v5754 = vmul.f32 %v5743, 1.442695
    %v5755 = vpow.pop %v5754
    %v5756 = vmul.f32 %v5744, 1.442695
    %v5757 = vpow.pop %v5756
    %v5758 = vmul.f32 %v5745, 1.442695
    %v5759 = vpow.pop %v5758
    %v5760 = vmul.f32 %v5746, 1.442695
    %v5761 = vpow.pop %v5760
    %v5762 = vmul.f32 %v5747, 1.442695
    %v5763 = vpow.pop %v5762
    %v5764 = vsel %vm675, %v5749, 0.0
    %5765 = vadd.xlane.f32.xlu0 %v5764
    %v5766 = vpop.xlane.xlu0 %5765
    %v5767 = vsel %vm675, %v5751, 0.0
    %5768 = vadd.xlane.f32.xlu0 %v5767
    %v5769 = vpop.xlane.xlu0 %5768
    %v5770 = vsel %vm675, %v5753, 0.0
    %5771 = vadd.xlane.f32.xlu0 %v5770
    %v5772 = vpop.xlane.xlu0 %5771
    %v5773 = vsel %vm675, %v5755, 0.0
    %5774 = vadd.xlane.f32.xlu0 %v5773
    %v5775 = vpop.xlane.xlu0 %5774
    %v5776 = vsel %vm675, %v5757, 0.0
    %5777 = vadd.xlane.f32.xlu0 %v5776
    %v5778 = vpop.xlane.xlu0 %5777
    %v5779 = vsel %vm675, %v5759, 0.0
    %5780 = vadd.xlane.f32.xlu0 %v5779
    %v5781 = vpop.xlane.xlu0 %5780
    %v5782 = vsel %vm675, %v5761, 0.0
    %5783 = vadd.xlane.f32.xlu0 %v5782
    %v5784 = vpop.xlane.xlu0 %5783
    %v5785 = vsel %vm675, %v5763, 0.0
    %5786 = vadd.xlane.f32.xlu0 %v5785
    %v5787 = vpop.xlane.xlu0 %5786
    %v5788 = vrcp.pop %v5766
    %v5789 = vrcp.pop %v5769
    %v5790 = vrcp.pop %v5772
    %v5791 = vrcp.pop %v5775
    %v5792 = vrcp.pop %v5778
    %v5793 = vrcp.pop %v5781
    %v5794 = vrcp.pop %v5784
    %v5795 = vrcp.pop %v5787
    %v5796 = vmul.f32 %v5749, %v5788
    %v5797 = vmul.f32 %v5751, %v5789
    %v5798 = vmul.f32 %v5753, %v5790
    %v5799 = vmul.f32 %v5755, %v5791
    %v5800 = vmul.f32 %v5757, %v5792
    %v5801 = vmul.f32 %v5759, %v5793
    %v5802 = vmul.f32 %v5761, %v5794
    %v5803 = vmul.f32 %v5763, %v5795
    %v5804 = vpack.c.bf16 %v5797, %v5796
    %v5805 = vpack.c.bf16 %v5799, %v5798
    %v5806 = vpack.c.bf16 %v5801, %v5800
    %v5807 = vpack.c.bf16 %v5803, %v5802
    %v5808 = vrot.slane %v4228, 4
    %v5810 = vsel %vm675, %v5804, 0
    %v5813 = vsel %vm675, %v5805, 0
    %v5816 = vsel %vm675, %v5806, 0
    %v5819 = vsel %vm675, %v5807, 0
    %v5822 = vsel %vm1253, %v5808, 0
    %5824 = vmatprep.subr.bf16.mxu0 0
    %5825 = vmatpush1.bf16.msra.mxu0 %v5822
    %5826 = vmatprep.subr.bf16.mxu0 0
    %5827 = vmatpush1.bf16.msra.mxu0 0
    %5828 = vmatprep.subr.bf16.mxu0 0
    %5829 = vmatpush1.bf16.msra.mxu0 0
    %5830 = vmatprep.subr.bf16.mxu0 0
    %5831 = vmatpush1.bf16.msra.mxu0 0
    %5832 = vmatprep.subr.bf16.mxu0 0
    %5833 = vmatpush1.bf16.msra.mxu0 0
    %5834 = vmatprep.subr.bf16.mxu0 0
    %5835 = vmatpush1.bf16.msra.mxu0 0
    %5836 = vmatprep.subr.bf16.mxu0 0
    %5837 = vmatpush1.bf16.msra.mxu0 0
    %5838 = vmatprep.subr.bf16.mxu0 0
    %5839 = vmatpush1.bf16.msra.mxu0 0
    %5840 = vmatprep.subr.bf16.mxu0 0
    %5841 = vmatpush1.bf16.msra.mxu0 0
    %5842 = vmatprep.subr.bf16.mxu0 0
    %5843 = vmatpush1.bf16.msra.mxu0 0
    %5844 = vmatprep.subr.bf16.mxu0 0
    %5845 = vmatpush1.bf16.msra.mxu0 0
    %5846 = vmatprep.subr.bf16.mxu0 0
    %5847 = vmatpush1.bf16.msra.mxu0 0
    %5848 = vmatprep.subr.bf16.mxu0 0
    %5849 = vmatpush1.bf16.msra.mxu0 0
    %5850 = vmatprep.subr.bf16.mxu0 0
    %5851 = vmatpush1.bf16.msra.mxu0 0
    %5852 = vmatprep.subr.bf16.mxu0 0
    %5853 = vmatpush1.bf16.msra.mxu0 0
    %5854 = vmatprep.subr.bf16.mxu0 0
    %5855 = vmatpush1.bf16.msra.mxu0 0
    %5856 = vmatprep.mubr.bf16.mxu0 0
    %5857 = vmatmul.mubr.bf16.gmra.mrb[0].mxu0 %v5810
    %v5858 = vpop.f32.mrb[0].mxu0
    %v5859 = vadd.f32 0.0, %v5858
    %v5860 = vpop.f32.mrb[0].mxu0
    %v5861 = vpop.f32.mrb[0].mxu0
    %v5862 = vadd.f32 0.0, %v5861
    %v5863 = vpop.f32.mrb[0].mxu0
    %5864 = vmatprep.mubr.bf16.mxu0 0
    %5865 = vmatmul.mubr.bf16.gmra.mrb[0].mxu0 %v5813
    %v5866 = vpop.f32.mrb[0].mxu0
    %v5867 = vadd.f32 0.0, %v5866
    %v5868 = vpop.f32.mrb[0].mxu0
    %v5869 = vpop.f32.mrb[0].mxu0
    %v5870 = vadd.f32 0.0, %v5869
    %v5871 = vpop.f32.mrb[0].mxu0
    %5872 = vmatprep.mubr.bf16.mxu0 0
    %5873 = vmatmul.mubr.bf16.gmra.mrb[0].mxu0 %v5816
    %v5874 = vpop.f32.mrb[0].mxu0
    %v5875 = vadd.f32 0.0, %v5874
    %v5876 = vpop.f32.mrb[0].mxu0
    %v5877 = vpop.f32.mrb[0].mxu0
    %v5878 = vadd.f32 0.0, %v5877
    %v5879 = vpop.f32.mrb[0].mxu0
    %5880 = vmatprep.mubr.bf16.mxu0 0
    %5881 = vmatmul.mubr.bf16.gmra.mrb[0].mxu0 %v5819
    %v5882 = vpop.f32.mrb[0].mxu0
    %v5883 = vadd.f32 0.0, %v5882
    %v5884 = vpop.f32.mrb[0].mxu0
    %v5885 = vpop.f32.mrb[0].mxu0
    %v5886 = vadd.f32 0.0, %v5885
    %v5887 = vpop.f32.mrb[0].mxu0
    %5888 = vdwg.mxu0
    %v5889 = vpack.c.bf16 %v5862, %v5859
    %v5890 = vpack.c.bf16 %v5870, %v5867
    %v5891 = vpack.c.bf16 %v5878, %v5875
    %v5892 = vpack.c.bf16 %v5886, %v5883
    %5897 = vrot.lane.b32.xlu0 %v4223, 120
    %v5898 = vpop.permute.xlu0 %5897
    %5899 = vrot.lane.b32.xlu0 %v4224, 120
    %v5900 = vpop.permute.xlu0 %5899
    %5901 = vrot.lane.b32.xlu0 %v4225, 120
    %v5902 = vpop.permute.xlu0 %5901
    %5903 = vrot.lane.b32.xlu0 %v4226, 120
    %v5904 = vpop.permute.xlu0 %5903
    %5905 = vrot.lane.b32.xlu0 %v5635, 120
    %v5906 = vpop.permute.xlu0 %5905
    %v5908 = vsel %vm675, %v5898, 0
    %v5911 = vsel %vm675, %v5900, 0
    %v5914 = vsel %vm675, %v5902, 0
    %v5917 = vsel %vm675, %v5904, 0
    %v5920 = vsel %vm675, %v5906, 0
    %5922 = vmatprep.subr.bf16.mxu0 0
    %5923 = vmatpush1.bf16.xpose.msra.mxu0 %v5920
    %5924 = vmatprep.subr.bf16.mxu0 0
    %5925 = vmatpush1.bf16.xpose.msra.mxu0 0
    %5926 = vmatprep.subr.bf16.mxu0 0
    %5927 = vmatpush1.bf16.xpose.msra.mxu0 0
    %5928 = vmatprep.subr.bf16.mxu0 0
    %5929 = vmatpush1.bf16.xpose.msra.mxu0 0
    %5930 = vmatprep.subr.bf16.mxu0 0
    %5931 = vmatpush1.bf16.xpose.msra.mxu0 0
    %5932 = vmatprep.subr.bf16.mxu0 0
    %5933 = vmatpush1.bf16.xpose.msra.mxu0 0
    %5934 = vmatprep.subr.bf16.mxu0 0
    %5935 = vmatpush1.bf16.xpose.msra.mxu0 0
    %5936 = vmatprep.subr.bf16.mxu0 0
    %5937 = vmatpush1.bf16.xpose.msra.mxu0 0
    %5938 = vmatprep.subr.bf16.mxu0 0
    %5939 = vmatpush1.bf16.xpose.msra.mxu0 0
    %5940 = vmatprep.subr.bf16.mxu0 0
    %5941 = vmatpush1.bf16.xpose.msra.mxu0 0
    %5942 = vmatprep.subr.bf16.mxu0 0
    %5943 = vmatpush1.bf16.xpose.msra.mxu0 0
    %5944 = vmatprep.subr.bf16.mxu0 0
    %5945 = vmatpush1.bf16.xpose.msra.mxu0 0
    %5946 = vmatprep.subr.bf16.mxu0 0
    %5947 = vmatpush1.bf16.xpose.msra.mxu0 0
    %5948 = vmatprep.subr.bf16.mxu0 0
    %5949 = vmatpush1.bf16.xpose.msra.mxu0 0
    %5950 = vmatprep.subr.bf16.mxu0 0
    %5951 = vmatpush1.bf16.xpose.msra.mxu0 0
    %5952 = vmatprep.subr.bf16.mxu0 0
    %5953 = vmatpush1.bf16.xpose.msra.mxu0 0
    %5954 = vmatprep.mubr.bf16.mxu0 0
    %5955 = vmatmul.mubr.bf16.gmra.mrb[0].mxu0 %v5908
    %v5956 = vpop.f32.mrb[0].mxu0
    %v5957 = vadd.f32 0.0, %v5956
    %v5958 = vpop.f32.mrb[0].mxu0
    %v5959 = vpop.f32.mrb[0].mxu0
    %v5960 = vadd.f32 0.0, %v5959
    %v5961 = vpop.f32.mrb[0].mxu0
    %5962 = vmatprep.mubr.bf16.mxu0 0
    %5963 = vmatmul.mubr.bf16.gmra.mrb[0].mxu0 %v5911
    %v5964 = vpop.f32.mrb[0].mxu0
    %v5965 = vadd.f32 0.0, %v5964
    %v5966 = vpop.f32.mrb[0].mxu0
    %v5967 = vpop.f32.mrb[0].mxu0
    %v5968 = vadd.f32 0.0, %v5967
    %v5969 = vpop.f32.mrb[0].mxu0
    %5970 = vmatprep.mubr.bf16.mxu0 0
    %5971 = vmatmul.mubr.bf16.gmra.mrb[0].mxu0 %v5914
    %v5972 = vpop.f32.mrb[0].mxu0
    %v5973 = vadd.f32 0.0, %v5972
    %v5974 = vpop.f32.mrb[0].mxu0
    %v5975 = vpop.f32.mrb[0].mxu0
    %v5976 = vadd.f32 0.0, %v5975
    %v5977 = vpop.f32.mrb[0].mxu0
    %5978 = vmatprep.mubr.bf16.mxu0 0
    %5979 = vmatmul.mubr.bf16.gmra.mrb[0].mxu0 %v5917
    %v5980 = vpop.f32.mrb[0].mxu0
    %v5981 = vadd.f32 0.0, %v5980
    %v5982 = vpop.f32.mrb[0].mxu0
    %v5983 = vpop.f32.mrb[0].mxu0
    %v5984 = vadd.f32 0.0, %v5983
    %v5985 = vpop.f32.mrb[0].mxu0
    %5986 = vdwg.mxu0
    %v5987 = vsel %vm675, %v5957, -inf
    %5988 = vmax.xlane.f32.xlu0 %v5987
    %v5989 = vpop.xlane.xlu0 %5988
    %v5990 = vsel %vm675, %v5960, -inf
    %5991 = vmax.xlane.f32.xlu0 %v5990
    %v5992 = vpop.xlane.xlu0 %5991
    %v5993 = vsel %vm675, %v5965, -inf
    %5994 = vmax.xlane.f32.xlu0 %v5993
    %v5995 = vpop.xlane.xlu0 %5994
    %v5996 = vsel %vm675, %v5968, -inf
    %5997 = vmax.xlane.f32.xlu0 %v5996
    %v5998 = vpop.xlane.xlu0 %5997
    %v5999 = vsel %vm675, %v5973, -inf
    %6000 = vmax.xlane.f32.xlu0 %v5999
    %v6001 = vpop.xlane.xlu0 %6000
    %v6002 = vsel %vm675, %v5976, -inf
    %6003 = vmax.xlane.f32.xlu0 %v6002
    %v6004 = vpop.xlane.xlu0 %6003
    %v6005 = vsel %vm675, %v5981, -inf
    %6006 = vmax.xlane.f32.xlu0 %v6005
    %v6007 = vpop.xlane.xlu0 %6006
    %v6008 = vsel %vm675, %v5984, -inf
    %6009 = vmax.xlane.f32.xlu0 %v6008
    %v6010 = vpop.xlane.xlu0 %6009
    %v6011 = vsub.f32 %v5957, %v5989
    %v6012 = vsub.f32 %v5960, %v5992
    %v6013 = vsub.f32 %v5965, %v5995
    %v6014 = vsub.f32 %v5968, %v5998
    %v6015 = vsub.f32 %v5973, %v6001
    %v6016 = vsub.f32 %v5976, %v6004
    %v6017 = vsub.f32 %v5981, %v6007
    %v6018 = vsub.f32 %v5984, %v6010
    %v6019 = vmul.f32 %v6011, 1.442695
    %v6020 = vpow.pop %v6019
    %v6021 = vmul.f32 %v6012, 1.442695
    %v6022 = vpow.pop %v6021
    %v6023 = vmul.f32 %v6013, 1.442695
    %v6024 = vpow.pop %v6023
    %v6025 = vmul.f32 %v6014, 1.442695
    %v6026 = vpow.pop %v6025
    %v6027 = vmul.f32 %v6015, 1.442695
    %v6028 = vpow.pop %v6027
    %v6029 = vmul.f32 %v6016, 1.442695
    %v6030 = vpow.pop %v6029
    %v6031 = vmul.f32 %v6017, 1.442695
    %v6032 = vpow.pop %v6031
    %v6033 = vmul.f32 %v6018, 1.442695
    %v6034 = vpow.pop %v6033
    %v6035 = vsel %vm675, %v6020, 0.0
    %6036 = vadd.xlane.f32.xlu0 %v6035
    %v6037 = vpop.xlane.xlu0 %6036
    %v6038 = vsel %vm675, %v6022, 0.0
    %6039 = vadd.xlane.f32.xlu0 %v6038
    %v6040 = vpop.xlane.xlu0 %6039
    %v6041 = vsel %vm675, %v6024, 0.0
    %6042 = vadd.xlane.f32.xlu0 %v6041
    %v6043 = vpop.xlane.xlu0 %6042
    %v6044 = vsel %vm675, %v6026, 0.0
    %6045 = vadd.xlane.f32.xlu0 %v6044
    %v6046 = vpop.xlane.xlu0 %6045
    %v6047 = vsel %vm675, %v6028, 0.0
    %6048 = vadd.xlane.f32.xlu0 %v6047
    %v6049 = vpop.xlane.xlu0 %6048
    %v6050 = vsel %vm675, %v6030, 0.0
    %6051 = vadd.xlane.f32.xlu0 %v6050
    %v6052 = vpop.xlane.xlu0 %6051
    %v6053 = vsel %vm675, %v6032, 0.0
    %6054 = vadd.xlane.f32.xlu0 %v6053
    %v6055 = vpop.xlane.xlu0 %6054
    %v6056 = vsel %vm675, %v6034, 0.0
    %6057 = vadd.xlane.f32.xlu0 %v6056
    %v6058 = vpop.xlane.xlu0 %6057
    %v6059 = vrcp.pop %v6037
    %v6060 = vrcp.pop %v6040
    %v6061 = vrcp.pop %v6043
    %v6062 = vrcp.pop %v6046
    %v6063 = vrcp.pop %v6049
    %v6064 = vrcp.pop %v6052
    %v6065 = vrcp.pop %v6055
    %v6066 = vrcp.pop %v6058
    %v6067 = vmul.f32 %v6020, %v6059
    %v6068 = vmul.f32 %v6022, %v6060
    %v6069 = vmul.f32 %v6024, %v6061
    %v6070 = vmul.f32 %v6026, %v6062
    %v6071 = vmul.f32 %v6028, %v6063
    %v6072 = vmul.f32 %v6030, %v6064
    %v6073 = vmul.f32 %v6032, %v6065
    %v6074 = vmul.f32 %v6034, %v6066
    %v6075 = vpack.c.bf16 %v6068, %v6067
    %v6076 = vpack.c.bf16 %v6070, %v6069
    %v6077 = vpack.c.bf16 %v6072, %v6071
    %v6078 = vpack.c.bf16 %v6074, %v6073
    %6079 = vrot.lane.b32.xlu0 %v5808, 120
    %v6080 = vpop.permute.xlu0 %6079
    %v6082 = vsel %vm675, %v6075, 0
    %v6085 = vsel %vm675, %v6076, 0
    %v6088 = vsel %vm675, %v6077, 0
    %v6091 = vsel %vm675, %v6078, 0
    %v6094 = vsel %vm1253, %v6080, 0
    %6096 = vmatprep.subr.bf16.mxu0 0
    %6097 = vmatpush1.bf16.msra.mxu0 %v6094
    %6098 = vmatprep.subr.bf16.mxu0 0
    %6099 = vmatpush1.bf16.msra.mxu0 0
    %6100 = vmatprep.subr.bf16.mxu0 0
    %6101 = vmatpush1.bf16.msra.mxu0 0
    %6102 = vmatprep.subr.bf16.mxu0 0
    %6103 = vmatpush1.bf16.msra.mxu0 0
    %6104 = vmatprep.subr.bf16.mxu0 0
    %6105 = vmatpush1.bf16.msra.mxu0 0
    %6106 = vmatprep.subr.bf16.mxu0 0
    %6107 = vmatpush1.bf16.msra.mxu0 0
    %6108 = vmatprep.subr.bf16.mxu0 0
    %6109 = vmatpush1.bf16.msra.mxu0 0
    %6110 = vmatprep.subr.bf16.mxu0 0
    %6111 = vmatpush1.bf16.msra.mxu0 0
    %6112 = vmatprep.subr.bf16.mxu0 0
    %6113 = vmatpush1.bf16.msra.mxu0 0
    %6114 = vmatprep.subr.bf16.mxu0 0
    %6115 = vmatpush1.bf16.msra.mxu0 0
    %6116 = vmatprep.subr.bf16.mxu0 0
    %6117 = vmatpush1.bf16.msra.mxu0 0
    %6118 = vmatprep.subr.bf16.mxu0 0
    %6119 = vmatpush1.bf16.msra.mxu0 0
    %6120 = vmatprep.subr.bf16.mxu0 0
    %6121 = vmatpush1.bf16.msra.mxu0 0
    %6122 = vmatprep.subr.bf16.mxu0 0
    %6123 = vmatpush1.bf16.msra.mxu0 0
    %6124 = vmatprep.subr.bf16.mxu0 0
    %6125 = vmatpush1.bf16.msra.mxu0 0
    %6126 = vmatprep.subr.bf16.mxu0 0
    %6127 = vmatpush1.bf16.msra.mxu0 0
    %6128 = vmatprep.mubr.bf16.mxu0 0
    %6129 = vmatmul.mubr.bf16.gmra.mrb[0].mxu0 %v6082
    %v6130 = vpop.f32.mrb[0].mxu0
    %v6131 = vadd.f32 0.0, %v6130
    %v6132 = vpop.f32.mrb[0].mxu0
    %v6133 = vpop.f32.mrb[0].mxu0
    %v6134 = vadd.f32 0.0, %v6133
    %v6135 = vpop.f32.mrb[0].mxu0
    %6136 = vmatprep.mubr.bf16.mxu0 0
    %6137 = vmatmul.mubr.bf16.gmra.mrb[0].mxu0 %v6085
    %v6138 = vpop.f32.mrb[0].mxu0
    %v6139 = vadd.f32 0.0, %v6138
    %v6140 = vpop.f32.mrb[0].mxu0
    %v6141 = vpop.f32.mrb[0].mxu0
    %v6142 = vadd.f32 0.0, %v6141
    %v6143 = vpop.f32.mrb[0].mxu0
    %6144 = vmatprep.mubr.bf16.mxu0 0
    %6145 = vmatmul.mubr.bf16.gmra.mrb[0].mxu0 %v6088
    %v6146 = vpop.f32.mrb[0].mxu0
    %v6147 = vadd.f32 0.0, %v6146
    %v6148 = vpop.f32.mrb[0].mxu0
    %v6149 = vpop.f32.mrb[0].mxu0
    %v6150 = vadd.f32 0.0, %v6149
    %v6151 = vpop.f32.mrb[0].mxu0
    %6152 = vmatprep.mubr.bf16.mxu0 0
    %6153 = vmatmul.mubr.bf16.gmra.mrb[0].mxu0 %v6091
    %v6154 = vpop.f32.mrb[0].mxu0
    %v6155 = vadd.f32 0.0, %v6154
    %v6156 = vpop.f32.mrb[0].mxu0
    %v6157 = vpop.f32.mrb[0].mxu0
    %v6158 = vadd.f32 0.0, %v6157
    %v6159 = vpop.f32.mrb[0].mxu0
    %6160 = vdwg.mxu0
    %v6161 = vpack.c.bf16 %v6134, %v6131
    %v6162 = vpack.c.bf16 %v6142, %v6139
    %v6163 = vpack.c.bf16 %v6150, %v6147
    %v6164 = vpack.c.bf16 %v6158, %v6155
    %v6166 = vsel %vm675, %v6161, 0
    %v6169 = vsel %vm675, %v6162, 0
    %v6172 = vsel %vm675, %v6163, 0
    %v6175 = vsel %vm675, %v6164, 0
    %6177 = vmatprep.subr.bf16.mxu0 0
    %6178 = vmatpush1.bf16.msra.mxu0 %v4776
    %6179 = vmatprep.subr.bf16.mxu0 0
    %6180 = vmatpush1.bf16.msra.mxu0 0
    %6181 = vmatprep.subr.bf16.mxu0 0
    %6182 = vmatpush1.bf16.msra.mxu0 0
    %6183 = vmatprep.subr.bf16.mxu0 0
    %6184 = vmatpush1.bf16.msra.mxu0 0
    %6185 = vmatprep.subr.bf16.mxu0 0
    %6186 = vmatpush1.bf16.msra.mxu0 0
    %6187 = vmatprep.subr.bf16.mxu0 0
    %6188 = vmatpush1.bf16.msra.mxu0 0
    %6189 = vmatprep.subr.bf16.mxu0 0
    %6190 = vmatpush1.bf16.msra.mxu0 0
    %6191 = vmatprep.subr.bf16.mxu0 0
    %6192 = vmatpush1.bf16.msra.mxu0 0
    %6193 = vmatprep.subr.bf16.mxu0 0
    %6194 = vmatpush1.bf16.msra.mxu0 0
    %6195 = vmatprep.subr.bf16.mxu0 0
    %6196 = vmatpush1.bf16.msra.mxu0 0
    %6197 = vmatprep.subr.bf16.mxu0 0
    %6198 = vmatpush1.bf16.msra.mxu0 0
    %6199 = vmatprep.subr.bf16.mxu0 0
    %6200 = vmatpush1.bf16.msra.mxu0 0
    %6201 = vmatprep.subr.bf16.mxu0 0
    %6202 = vmatpush1.bf16.msra.mxu0 0
    %6203 = vmatprep.subr.bf16.mxu0 0
    %6204 = vmatpush1.bf16.msra.mxu0 0
    %6205 = vmatprep.subr.bf16.mxu0 0
    %6206 = vmatpush1.bf16.msra.mxu0 0
    %6207 = vmatprep.subr.bf16.mxu0 0
    %6208 = vmatpush1.bf16.msra.mxu0 0
    %6209 = vmatprep.mubr.bf16.mxu0 0
    %6210 = vmatmul.mubr.bf16.gmra.mrb[0].mxu0 %v6166
    %v6211 = vpop.f32.mrb[0].mxu0
    %v6212 = vadd.f32 0.0, %v6211
    %v6213 = vpop.f32.mrb[0].mxu0
    %v6214 = vpop.f32.mrb[0].mxu0
    %v6215 = vadd.f32 0.0, %v6214
    %v6216 = vpop.f32.mrb[0].mxu0
    %6217 = vmatprep.mubr.bf16.mxu0 0
    %6218 = vmatmul.mubr.bf16.gmra.mrb[0].mxu0 %v6169
    %v6219 = vpop.f32.mrb[0].mxu0
    %v6220 = vadd.f32 0.0, %v6219
    %v6221 = vpop.f32.mrb[0].mxu0
    %v6222 = vpop.f32.mrb[0].mxu0
    %v6223 = vadd.f32 0.0, %v6222
    %v6224 = vpop.f32.mrb[0].mxu0
    %6225 = vmatprep.mubr.bf16.mxu0 0
    %6226 = vmatmul.mubr.bf16.gmra.mrb[0].mxu0 %v6172
    %v6227 = vpop.f32.mrb[0].mxu0
    %v6228 = vadd.f32 0.0, %v6227
    %v6229 = vpop.f32.mrb[0].mxu0
    %v6230 = vpop.f32.mrb[0].mxu0
    %v6231 = vadd.f32 0.0, %v6230
    %v6232 = vpop.f32.mrb[0].mxu0
    %6233 = vmatprep.mubr.bf16.mxu0 0
    %6234 = vmatmul.mubr.bf16.gmra.mrb[0].mxu0 %v6175
    %v6235 = vpop.f32.mrb[0].mxu0
    %v6236 = vadd.f32 0.0, %v6235
    %v6237 = vpop.f32.mrb[0].mxu0
    %v6238 = vpop.f32.mrb[0].mxu0
    %v6239 = vadd.f32 0.0, %v6238
    %v6240 = vpop.f32.mrb[0].mxu0
    %6241 = vdwg.mxu0
    %v6243 = vsel %vm675, %v5889, 0
    %v6246 = vsel %vm675, %v5890, 0
    %v6249 = vsel %vm675, %v5891, 0
    %v6252 = vsel %vm675, %v5892, 0
    %6254 = vmatprep.subr.bf16.mxu0 0
    %6255 = vmatpush1.bf16.msra.mxu0 %v4856
    %6256 = vmatprep.subr.bf16.mxu0 0
    %6257 = vmatpush1.bf16.msra.mxu0 0
    %6258 = vmatprep.subr.bf16.mxu0 0
    %6259 = vmatpush1.bf16.msra.mxu0 0
    %6260 = vmatprep.subr.bf16.mxu0 0
    %6261 = vmatpush1.bf16.msra.mxu0 0
    %6262 = vmatprep.subr.bf16.mxu0 0
    %6263 = vmatpush1.bf16.msra.mxu0 0
    %6264 = vmatprep.subr.bf16.mxu0 0
    %6265 = vmatpush1.bf16.msra.mxu0 0
    %6266 = vmatprep.subr.bf16.mxu0 0
    %6267 = vmatpush1.bf16.msra.mxu0 0
    %6268 = vmatprep.subr.bf16.mxu0 0
    %6269 = vmatpush1.bf16.msra.mxu0 0
    %6270 = vmatprep.subr.bf16.mxu0 0
    %6271 = vmatpush1.bf16.msra.mxu0 0
    %6272 = vmatprep.subr.bf16.mxu0 0
    %6273 = vmatpush1.bf16.msra.mxu0 0
    %6274 = vmatprep.subr.bf16.mxu0 0
    %6275 = vmatpush1.bf16.msra.mxu0 0
    %6276 = vmatprep.subr.bf16.mxu0 0
    %6277 = vmatpush1.bf16.msra.mxu0 0
    %6278 = vmatprep.subr.bf16.mxu0 0
    %6279 = vmatpush1.bf16.msra.mxu0 0
    %6280 = vmatprep.subr.bf16.mxu0 0
    %6281 = vmatpush1.bf16.msra.mxu0 0
    %6282 = vmatprep.subr.bf16.mxu0 0
    %6283 = vmatpush1.bf16.msra.mxu0 0
    %6284 = vmatprep.subr.bf16.mxu0 0
    %6285 = vmatpush1.bf16.msra.mxu0 0
    %6286 = vmatprep.mubr.bf16.mxu0 0
    %6287 = vmatmul.mubr.bf16.gmra.mrb[0].mxu0 %v6243
    %v6288 = vpop.f32.mrb[0].mxu0
    %v6289 = vadd.f32 %v6212, %v6288
    %v6290 = vpop.f32.mrb[0].mxu0
    %v6291 = vpop.f32.mrb[0].mxu0
    %v6292 = vadd.f32 %v6215, %v6291
    %v6293 = vpop.f32.mrb[0].mxu0
    %6294 = vmatprep.mubr.bf16.mxu0 0
    %6295 = vmatmul.mubr.bf16.gmra.mrb[0].mxu0 %v6246
    %v6296 = vpop.f32.mrb[0].mxu0
    %v6297 = vadd.f32 %v6220, %v6296
    %v6298 = vpop.f32.mrb[0].mxu0
    %v6299 = vpop.f32.mrb[0].mxu0
    %v6300 = vadd.f32 %v6223, %v6299
    %v6301 = vpop.f32.mrb[0].mxu0
    %6302 = vmatprep.mubr.bf16.mxu0 0
    %6303 = vmatmul.mubr.bf16.gmra.mrb[0].mxu0 %v6249
    %v6304 = vpop.f32.mrb[0].mxu0
    %v6305 = vadd.f32 %v6228, %v6304
    %v6306 = vpop.f32.mrb[0].mxu0
    %v6307 = vpop.f32.mrb[0].mxu0
    %v6308 = vadd.f32 %v6231, %v6307
    %v6309 = vpop.f32.mrb[0].mxu0
    %6310 = vmatprep.mubr.bf16.mxu0 0
    %6311 = vmatmul.mubr.bf16.gmra.mrb[0].mxu0 %v6252
    %v6312 = vpop.f32.mrb[0].mxu0
    %v6313 = vadd.f32 %v6236, %v6312
    %v6314 = vpop.f32.mrb[0].mxu0
    %v6315 = vpop.f32.mrb[0].mxu0
    %v6316 = vadd.f32 %v6239, %v6315
    %v6317 = vpop.f32.mrb[0].mxu0
    %6318 = vdwg.mxu0
    %6319 = vrot.lane.b32.xlu0 %v4223, 112
    %v6320 = vpop.permute.xlu0 %6319
    %6321 = vrot.lane.b32.xlu0 %v4224, 112
    %v6322 = vpop.permute.xlu0 %6321
    %6323 = vrot.lane.b32.xlu0 %v4225, 112
    %v6324 = vpop.permute.xlu0 %6323
    %6325 = vrot.lane.b32.xlu0 %v4226, 112
    %v6326 = vpop.permute.xlu0 %6325
    %6327 = vrot.lane.b32.xlu0 %v5635, 112
    %v6328 = vpop.permute.xlu0 %6327
    %v6330 = vsel %vm675, %v6320, 0
    %v6333 = vsel %vm675, %v6322, 0
    %v6336 = vsel %vm675, %v6324, 0
    %v6339 = vsel %vm675, %v6326, 0
    %v6342 = vsel %vm675, %v6328, 0
    %6344 = vmatprep.subr.bf16.mxu0 0
    %6345 = vmatpush1.bf16.xpose.msra.mxu0 %v6342
    %6346 = vmatprep.subr.bf16.mxu0 0
    %6347 = vmatpush1.bf16.xpose.msra.mxu0 0
    %6348 = vmatprep.subr.bf16.mxu0 0
    %6349 = vmatpush1.bf16.xpose.msra.mxu0 0
    %6350 = vmatprep.subr.bf16.mxu0 0
    %6351 = vmatpush1.bf16.xpose.msra.mxu0 0
    %6352 = vmatprep.subr.bf16.mxu0 0
    %6353 = vmatpush1.bf16.xpose.msra.mxu0 0
    %6354 = vmatprep.subr.bf16.mxu0 0
    %6355 = vmatpush1.bf16.xpose.msra.mxu0 0
    %6356 = vmatprep.subr.bf16.mxu0 0
    %6357 = vmatpush1.bf16.xpose.msra.mxu0 0
    %6358 = vmatprep.subr.bf16.mxu0 0
    %6359 = vmatpush1.bf16.xpose.msra.mxu0 0
    %6360 = vmatprep.subr.bf16.mxu0 0
    %6361 = vmatpush1.bf16.xpose.msra.mxu0 0
    %6362 = vmatprep.subr.bf16.mxu0 0
    %6363 = vmatpush1.bf16.xpose.msra.mxu0 0
    %6364 = vmatprep.subr.bf16.mxu0 0
    %6365 = vmatpush1.bf16.xpose.msra.mxu0 0
    %6366 = vmatprep.subr.bf16.mxu0 0
    %6367 = vmatpush1.bf16.xpose.msra.mxu0 0
    %6368 = vmatprep.subr.bf16.mxu0 0
    %6369 = vmatpush1.bf16.xpose.msra.mxu0 0
    %6370 = vmatprep.subr.bf16.mxu0 0
    %6371 = vmatpush1.bf16.xpose.msra.mxu0 0
    %6372 = vmatprep.subr.bf16.mxu0 0
    %6373 = vmatpush1.bf16.xpose.msra.mxu0 0
    %6374 = vmatprep.subr.bf16.mxu0 0
    %6375 = vmatpush1.bf16.xpose.msra.mxu0 0
    %6376 = vmatprep.mubr.bf16.mxu0 0
    %6377 = vmatmul.mubr.bf16.gmra.mrb[0].mxu0 %v6330
    %v6378 = vpop.f32.mrb[0].mxu0
    %v6379 = vadd.f32 0.0, %v6378
    %v6380 = vpop.f32.mrb[0].mxu0
    %v6381 = vpop.f32.mrb[0].mxu0
    %v6382 = vadd.f32 0.0, %v6381
    %v6383 = vpop.f32.mrb[0].mxu0
    %6384 = vmatprep.mubr.bf16.mxu0 0
    %6385 = vmatmul.mubr.bf16.gmra.mrb[0].mxu0 %v6333
    %v6386 = vpop.f32.mrb[0].mxu0
    %v6387 = vadd.f32 0.0, %v6386
    %v6388 = vpop.f32.mrb[0].mxu0
    %v6389 = vpop.f32.mrb[0].mxu0
    %v6390 = vadd.f32 0.0, %v6389
    %v6391 = vpop.f32.mrb[0].mxu0
    %6392 = vmatprep.mubr.bf16.mxu0 0
    %6393 = vmatmul.mubr.bf16.gmra.mrb[0].mxu0 %v6336
    %v6394 = vpop.f32.mrb[0].mxu0
    %v6395 = vadd.f32 0.0, %v6394
    %v6396 = vpop.f32.mrb[0].mxu0
    %v6397 = vpop.f32.mrb[0].mxu0
    %v6398 = vadd.f32 0.0, %v6397
    %v6399 = vpop.f32.mrb[0].mxu0
    %6400 = vmatprep.mubr.bf16.mxu0 0
    %6401 = vmatmul.mubr.bf16.gmra.mrb[0].mxu0 %v6339
    %v6402 = vpop.f32.mrb[0].mxu0
    %v6403 = vadd.f32 0.0, %v6402
    %v6404 = vpop.f32.mrb[0].mxu0
    %v6405 = vpop.f32.mrb[0].mxu0
    %v6406 = vadd.f32 0.0, %v6405
    %v6407 = vpop.f32.mrb[0].mxu0
    %6408 = vdwg.mxu0
    %v6409 = vsel %vm675, %v6379, -inf
    %6410 = vmax.xlane.f32.xlu0 %v6409
    %v6411 = vpop.xlane.xlu0 %6410
    %v6412 = vsel %vm675, %v6382, -inf
    %6413 = vmax.xlane.f32.xlu0 %v6412
    %v6414 = vpop.xlane.xlu0 %6413
    %v6415 = vsel %vm675, %v6387, -inf
    %6416 = vmax.xlane.f32.xlu0 %v6415
    %v6417 = vpop.xlane.xlu0 %6416
    %v6418 = vsel %vm675, %v6390, -inf
    %6419 = vmax.xlane.f32.xlu0 %v6418
    %v6420 = vpop.xlane.xlu0 %6419
    %v6421 = vsel %vm675, %v6395, -inf
    %6422 = vmax.xlane.f32.xlu0 %v6421
    %v6423 = vpop.xlane.xlu0 %6422
    %v6424 = vsel %vm675, %v6398, -inf
    %6425 = vmax.xlane.f32.xlu0 %v6424
    %v6426 = vpop.xlane.xlu0 %6425
    %v6427 = vsel %vm675, %v6403, -inf
    %6428 = vmax.xlane.f32.xlu0 %v6427
    %v6429 = vpop.xlane.xlu0 %6428
    %v6430 = vsel %vm675, %v6406, -inf
    %6431 = vmax.xlane.f32.xlu0 %v6430
    %v6432 = vpop.xlane.xlu0 %6431
    %v6433 = vsub.f32 %v6379, %v6411
    %v6434 = vsub.f32 %v6382, %v6414
    %v6435 = vsub.f32 %v6387, %v6417
    %v6436 = vsub.f32 %v6390, %v6420
    %v6437 = vsub.f32 %v6395, %v6423
    %v6438 = vsub.f32 %v6398, %v6426
    %v6439 = vsub.f32 %v6403, %v6429
    %v6440 = vsub.f32 %v6406, %v6432
    %v6441 = vmul.f32 %v6433, 1.442695
    %v6442 = vpow.pop %v6441
    %v6443 = vmul.f32 %v6434, 1.442695
    %v6444 = vpow.pop %v6443
    %v6445 = vmul.f32 %v6435, 1.442695
    %v6446 = vpow.pop %v6445
    %v6447 = vmul.f32 %v6436, 1.442695
    %v6448 = vpow.pop %v6447
    %v6449 = vmul.f32 %v6437, 1.442695
    %v6450 = vpow.pop %v6449
    %v6451 = vmul.f32 %v6438, 1.442695
    %v6452 = vpow.pop %v6451
    %v6453 = vmul.f32 %v6439, 1.442695
    %v6454 = vpow.pop %v6453
    %v6455 = vmul.f32 %v6440, 1.442695
    %v6456 = vpow.pop %v6455
    %v6457 = vsel %vm675, %v6442, 0.0
    %6458 = vadd.xlane.f32.xlu0 %v6457
    %v6459 = vpop.xlane.xlu0 %6458
    %v6460 = vsel %vm675, %v6444, 0.0
    %6461 = vadd.xlane.f32.xlu0 %v6460
    %v6462 = vpop.xlane.xlu0 %6461
    %v6463 = vsel %vm675, %v6446, 0.0
    %6464 = vadd.xlane.f32.xlu0 %v6463
    %v6465 = vpop.xlane.xlu0 %6464
    %v6466 = vsel %vm675, %v6448, 0.0
    %6467 = vadd.xlane.f32.xlu0 %v6466
    %v6468 = vpop.xlane.xlu0 %6467
    %v6469 = vsel %vm675, %v6450, 0.0
    %6470 = vadd.xlane.f32.xlu0 %v6469
    %v6471 = vpop.xlane.xlu0 %6470
    %v6472 = vsel %vm675, %v6452, 0.0
    %6473 = vadd.xlane.f32.xlu0 %v6472
    %v6474 = vpop.xlane.xlu0 %6473
    %v6475 = vsel %vm675, %v6454, 0.0
    %6476 = vadd.xlane.f32.xlu0 %v6475
    %v6477 = vpop.xlane.xlu0 %6476
    %v6478 = vsel %vm675, %v6456, 0.0
    %6479 = vadd.xlane.f32.xlu0 %v6478
    %v6480 = vpop.xlane.xlu0 %6479
    %v6481 = vrcp.pop %v6459
    %v6482 = vrcp.pop %v6462
    %v6483 = vrcp.pop %v6465
    %v6484 = vrcp.pop %v6468
    %v6485 = vrcp.pop %v6471
    %v6486 = vrcp.pop %v6474
    %v6487 = vrcp.pop %v6477
    %v6488 = vrcp.pop %v6480
    %v6489 = vmul.f32 %v6442, %v6481
    %v6490 = vmul.f32 %v6444, %v6482
    %v6491 = vmul.f32 %v6446, %v6483
    %v6492 = vmul.f32 %v6448, %v6484
    %v6493 = vmul.f32 %v6450, %v6485
    %v6494 = vmul.f32 %v6452, %v6486
    %v6495 = vmul.f32 %v6454, %v6487
    %v6496 = vmul.f32 %v6456, %v6488
    %v6497 = vpack.c.bf16 %v6490, %v6489
    %v6498 = vpack.c.bf16 %v6492, %v6491
    %v6499 = vpack.c.bf16 %v6494, %v6493
    %v6500 = vpack.c.bf16 %v6496, %v6495
    %6501 = vrot.lane.b32.xlu0 %v5808, 112
    %v6502 = vpop.permute.xlu0 %6501
    %v6504 = vsel %vm675, %v6497, 0
    %v6507 = vsel %vm675, %v6498, 0
    %v6510 = vsel %vm675, %v6499, 0
    %v6513 = vsel %vm675, %v6500, 0
    %v6516 = vsel %vm1253, %v6502, 0
    %6518 = vmatprep.subr.bf16.mxu0 0
    %6519 = vmatpush1.bf16.msra.mxu0 %v6516
    %6520 = vmatprep.subr.bf16.mxu0 0
    %6521 = vmatpush1.bf16.msra.mxu0 0
    %6522 = vmatprep.subr.bf16.mxu0 0
    %6523 = vmatpush1.bf16.msra.mxu0 0
    %6524 = vmatprep.subr.bf16.mxu0 0
    %6525 = vmatpush1.bf16.msra.mxu0 0
    %6526 = vmatprep.subr.bf16.mxu0 0
    %6527 = vmatpush1.bf16.msra.mxu0 0
    %6528 = vmatprep.subr.bf16.mxu0 0
    %6529 = vmatpush1.bf16.msra.mxu0 0
    %6530 = vmatprep.subr.bf16.mxu0 0
    %6531 = vmatpush1.bf16.msra.mxu0 0
    %6532 = vmatprep.subr.bf16.mxu0 0
    %6533 = vmatpush1.bf16.msra.mxu0 0
    %6534 = vmatprep.subr.bf16.mxu0 0
    %6535 = vmatpush1.bf16.msra.mxu0 0
    %6536 = vmatprep.subr.bf16.mxu0 0
    %6537 = vmatpush1.bf16.msra.mxu0 0
    %6538 = vmatprep.subr.bf16.mxu0 0
    %6539 = vmatpush1.bf16.msra.mxu0 0
    %6540 = vmatprep.subr.bf16.mxu0 0
    %6541 = vmatpush1.bf16.msra.mxu0 0
    %6542 = vmatprep.subr.bf16.mxu0 0
    %6543 = vmatpush1.bf16.msra.mxu0 0
    %6544 = vmatprep.subr.bf16.mxu0 0
    %6545 = vmatpush1.bf16.msra.mxu0 0
    %6546 = vmatprep.subr.bf16.mxu0 0
    %6547 = vmatpush1.bf16.msra.mxu0 0
    %6548 = vmatprep.subr.bf16.mxu0 0
    %6549 = vmatpush1.bf16.msra.mxu0 0
    %6550 = vmatprep.mubr.bf16.mxu0 0
    %6551 = vmatmul.mubr.bf16.gmra.mrb[0].mxu0 %v6504
    %v6552 = vpop.f32.mrb[0].mxu0
    %v6553 = vadd.f32 0.0, %v6552
    %v6554 = vpop.f32.mrb[0].mxu0
    %v6555 = vpop.f32.mrb[0].mxu0
    %v6556 = vadd.f32 0.0, %v6555
    %v6557 = vpop.f32.mrb[0].mxu0
    %6558 = vmatprep.mubr.bf16.mxu0 0
    %6559 = vmatmul.mubr.bf16.gmra.mrb[0].mxu0 %v6507
    %v6560 = vpop.f32.mrb[0].mxu0
    %v6561 = vadd.f32 0.0, %v6560
    %v6562 = vpop.f32.mrb[0].mxu0
    %v6563 = vpop.f32.mrb[0].mxu0
    %v6564 = vadd.f32 0.0, %v6563
    %v6565 = vpop.f32.mrb[0].mxu0
    %6566 = vmatprep.mubr.bf16.mxu0 0
    %6567 = vmatmul.mubr.bf16.gmra.mrb[0].mxu0 %v6510
    %v6568 = vpop.f32.mrb[0].mxu0
    %v6569 = vadd.f32 0.0, %v6568
    %v6570 = vpop.f32.mrb[0].mxu0
    %v6571 = vpop.f32.mrb[0].mxu0
    %v6572 = vadd.f32 0.0, %v6571
    %v6573 = vpop.f32.mrb[0].mxu0
    %6574 = vmatprep.mubr.bf16.mxu0 0
    %6575 = vmatmul.mubr.bf16.gmra.mrb[0].mxu0 %v6513
    %v6576 = vpop.f32.mrb[0].mxu0
    %v6577 = vadd.f32 0.0, %v6576
    %v6578 = vpop.f32.mrb[0].mxu0
    %v6579 = vpop.f32.mrb[0].mxu0
    %v6580 = vadd.f32 0.0, %v6579
    %v6581 = vpop.f32.mrb[0].mxu0
    %6582 = vdwg.mxu0
    %v6583 = vpack.c.bf16 %v6556, %v6553
    %v6584 = vpack.c.bf16 %v6564, %v6561
    %v6585 = vpack.c.bf16 %v6572, %v6569
    %v6586 = vpack.c.bf16 %v6580, %v6577
    %v6588 = vsel %vm675, %v6583, 0
    %v6591 = vsel %vm675, %v6584, 0
    %v6594 = vsel %vm675, %v6585, 0
    %v6597 = vsel %vm675, %v6586, 0
    %6599 = vmatprep.subr.bf16.mxu0 0
    %6600 = vmatpush1.bf16.msra.mxu0 %v5204
    %6601 = vmatprep.subr.bf16.mxu0 0
    %6602 = vmatpush1.bf16.msra.mxu0 0
    %6603 = vmatprep.subr.bf16.mxu0 0
    %6604 = vmatpush1.bf16.msra.mxu0 0
    %6605 = vmatprep.subr.bf16.mxu0 0
    %6606 = vmatpush1.bf16.msra.mxu0 0
    %6607 = vmatprep.subr.bf16.mxu0 0
    %6608 = vmatpush1.bf16.msra.mxu0 0
    %6609 = vmatprep.subr.bf16.mxu0 0
    %6610 = vmatpush1.bf16.msra.mxu0 0
    %6611 = vmatprep.subr.bf16.mxu0 0
    %6612 = vmatpush1.bf16.msra.mxu0 0
    %6613 = vmatprep.subr.bf16.mxu0 0
    %6614 = vmatpush1.bf16.msra.mxu0 0
    %6615 = vmatprep.subr.bf16.mxu0 0
    %6616 = vmatpush1.bf16.msra.mxu0 0
    %6617 = vmatprep.subr.bf16.mxu0 0
    %6618 = vmatpush1.bf16.msra.mxu0 0
    %6619 = vmatprep.subr.bf16.mxu0 0
    %6620 = vmatpush1.bf16.msra.mxu0 0
    %6621 = vmatprep.subr.bf16.mxu0 0
    %6622 = vmatpush1.bf16.msra.mxu0 0
    %6623 = vmatprep.subr.bf16.mxu0 0
    %6624 = vmatpush1.bf16.msra.mxu0 0
    %6625 = vmatprep.subr.bf16.mxu0 0
    %6626 = vmatpush1.bf16.msra.mxu0 0
    %6627 = vmatprep.subr.bf16.mxu0 0
    %6628 = vmatpush1.bf16.msra.mxu0 0
    %6629 = vmatprep.subr.bf16.mxu0 0
    %6630 = vmatpush1.bf16.msra.mxu0 0
    %6631 = vmatprep.mubr.bf16.mxu0 0
    %6632 = vmatmul.mubr.bf16.gmra.mrb[0].mxu0 %v6588
    %v6633 = vpop.f32.mrb[0].mxu0
    %v6634 = vadd.f32 0.0, %v6633
    %v6635 = vpop.f32.mrb[0].mxu0
    %v6636 = vpop.f32.mrb[0].mxu0
    %v6637 = vadd.f32 0.0, %v6636
    %v6638 = vpop.f32.mrb[0].mxu0
    %6639 = vmatprep.mubr.bf16.mxu0 0
    %6640 = vmatmul.mubr.bf16.gmra.mrb[0].mxu0 %v6591
    %v6641 = vpop.f32.mrb[0].mxu0
    %v6642 = vadd.f32 0.0, %v6641
    %v6643 = vpop.f32.mrb[0].mxu0
    %v6644 = vpop.f32.mrb[0].mxu0
    %v6645 = vadd.f32 0.0, %v6644
    %v6646 = vpop.f32.mrb[0].mxu0
    %6647 = vmatprep.mubr.bf16.mxu0 0
    %6648 = vmatmul.mubr.bf16.gmra.mrb[0].mxu0 %v6594
    %v6649 = vpop.f32.mrb[0].mxu0
    %v6650 = vadd.f32 0.0, %v6649
    %v6651 = vpop.f32.mrb[0].mxu0
    %v6652 = vpop.f32.mrb[0].mxu0
    %v6653 = vadd.f32 0.0, %v6652
    %v6654 = vpop.f32.mrb[0].mxu0
    %6655 = vmatprep.mubr.bf16.mxu0 0
    %6656 = vmatmul.mubr.bf16.gmra.mrb[0].mxu0 %v6597
    %v6657 = vpop.f32.mrb[0].mxu0
    %v6658 = vadd.f32 0.0, %v6657
    %v6659 = vpop.f32.mrb[0].mxu0
    %v6660 = vpop.f32.mrb[0].mxu0
    %v6661 = vadd.f32 0.0, %v6660
    %v6662 = vpop.f32.mrb[0].mxu0
    %6663 = vdwg.mxu0
    %v6664 = vadd.f32 %v6289, %v6634
    %v6665 = vadd.f32 %v6292, %v6637
    %v6666 = vadd.f32 %v6297, %v6642
    %v6667 = vadd.f32 %v6300, %v6645
    %v6668 = vadd.f32 %v6305, %v6650
    %v6669 = vadd.f32 %v6308, %v6653
    %v6670 = vadd.f32 %v6313, %v6658
    %v6671 = vadd.f32 %v6316, %v6661
    %6672 = vrot.lane.b32.xlu0 %v4223, 104
    %v6673 = vpop.permute.xlu0 %6672
    %6674 = vrot.lane.b32.xlu0 %v4224, 104
    %v6675 = vpop.permute.xlu0 %6674
    %6676 = vrot.lane.b32.xlu0 %v4225, 104
    %v6677 = vpop.permute.xlu0 %6676
    %6678 = vrot.lane.b32.xlu0 %v4226, 104
    %v6679 = vpop.permute.xlu0 %6678
    %6680 = vrot.lane.b32.xlu0 %v5635, 104
    %v6681 = vpop.permute.xlu0 %6680
    %v6683 = vsel %vm675, %v6673, 0
    %v6686 = vsel %vm675, %v6675, 0
    %v6689 = vsel %vm675, %v6677, 0
    %v6692 = vsel %vm675, %v6679, 0
    %v6695 = vsel %vm675, %v6681, 0
    %6697 = vmatprep.subr.bf16.mxu0 0
    %6698 = vmatpush1.bf16.xpose.msra.mxu0 %v6695
    %6699 = vmatprep.subr.bf16.mxu0 0
    %6700 = vmatpush1.bf16.xpose.msra.mxu0 0
    %6701 = vmatprep.subr.bf16.mxu0 0
    %6702 = vmatpush1.bf16.xpose.msra.mxu0 0
    %6703 = vmatprep.subr.bf16.mxu0 0
    %6704 = vmatpush1.bf16.xpose.msra.mxu0 0
    %6705 = vmatprep.subr.bf16.mxu0 0
    %6706 = vmatpush1.bf16.xpose.msra.mxu0 0
    %6707 = vmatprep.subr.bf16.mxu0 0
    %6708 = vmatpush1.bf16.xpose.msra.mxu0 0
    %6709 = vmatprep.subr.bf16.mxu0 0
    %6710 = vmatpush1.bf16.xpose.msra.mxu0 0
    %6711 = vmatprep.subr.bf16.mxu0 0
    %6712 = vmatpush1.bf16.xpose.msra.mxu0 0
    %6713 = vmatprep.subr.bf16.mxu0 0
    %6714 = vmatpush1.bf16.xpose.msra.mxu0 0
    %6715 = vmatprep.subr.bf16.mxu0 0
    %6716 = vmatpush1.bf16.xpose.msra.mxu0 0
    %6717 = vmatprep.subr.bf16.mxu0 0
    %6718 = vmatpush1.bf16.xpose.msra.mxu0 0
    %6719 = vmatprep.subr.bf16.mxu0 0
    %6720 = vmatpush1.bf16.xpose.msra.mxu0 0
    %6721 = vmatprep.subr.bf16.mxu0 0
    %6722 = vmatpush1.bf16.xpose.msra.mxu0 0
    %6723 = vmatprep.subr.bf16.mxu0 0
    %6724 = vmatpush1.bf16.xpose.msra.mxu0 0
    %6725 = vmatprep.subr.bf16.mxu0 0
    %6726 = vmatpush1.bf16.xpose.msra.mxu0 0
    %6727 = vmatprep.subr.bf16.mxu0 0
    %6728 = vmatpush1.bf16.xpose.msra.mxu0 0
    %6729 = vmatprep.mubr.bf16.mxu0 0
    %6730 = vmatmul.mubr.bf16.gmra.mrb[0].mxu0 %v6683
    %v6731 = vpop.f32.mrb[0].mxu0
    %v6732 = vadd.f32 0.0, %v6731
    %v6733 = vpop.f32.mrb[0].mxu0
    %v6734 = vpop.f32.mrb[0].mxu0
    %v6735 = vadd.f32 0.0, %v6734
    %v6736 = vpop.f32.mrb[0].mxu0
    %6737 = vmatprep.mubr.bf16.mxu0 0
    %6738 = vmatmul.mubr.bf16.gmra.mrb[0].mxu0 %v6686
    %v6739 = vpop.f32.mrb[0].mxu0
    %v6740 = vadd.f32 0.0, %v6739
    %v6741 = vpop.f32.mrb[0].mxu0
    %v6742 = vpop.f32.mrb[0].mxu0
    %v6743 = vadd.f32 0.0, %v6742
    %v6744 = vpop.f32.mrb[0].mxu0
    %6745 = vmatprep.mubr.bf16.mxu0 0
    %6746 = vmatmul.mubr.bf16.gmra.mrb[0].mxu0 %v6689
    %v6747 = vpop.f32.mrb[0].mxu0
    %v6748 = vadd.f32 0.0, %v6747
    %v6749 = vpop.f32.mrb[0].mxu0
    %v6750 = vpop.f32.mrb[0].mxu0
    %v6751 = vadd.f32 0.0, %v6750
    %v6752 = vpop.f32.mrb[0].mxu0
    %6753 = vmatprep.mubr.bf16.mxu0 0
    %6754 = vmatmul.mubr.bf16.gmra.mrb[0].mxu0 %v6692
    %v6755 = vpop.f32.mrb[0].mxu0
    %v6756 = vadd.f32 0.0, %v6755
    %v6757 = vpop.f32.mrb[0].mxu0
    %v6758 = vpop.f32.mrb[0].mxu0
    %v6759 = vadd.f32 0.0, %v6758
    %v6760 = vpop.f32.mrb[0].mxu0
    %6761 = vdwg.mxu0
    %v6762 = vsel %vm675, %v6732, -inf
    %6763 = vmax.xlane.f32.xlu0 %v6762
    %v6764 = vpop.xlane.xlu0 %6763
    %v6765 = vsel %vm675, %v6735, -inf
    %6766 = vmax.xlane.f32.xlu0 %v6765
    %v6767 = vpop.xlane.xlu0 %6766
    %v6768 = vsel %vm675, %v6740, -inf
    %6769 = vmax.xlane.f32.xlu0 %v6768
    %v6770 = vpop.xlane.xlu0 %6769
    %v6771 = vsel %vm675, %v6743, -inf
    %6772 = vmax.xlane.f32.xlu0 %v6771
    %v6773 = vpop.xlane.xlu0 %6772
    %v6774 = vsel %vm675, %v6748, -inf
    %6775 = vmax.xlane.f32.xlu0 %v6774
    %v6776 = vpop.xlane.xlu0 %6775
    %v6777 = vsel %vm675, %v6751, -inf
    %6778 = vmax.xlane.f32.xlu0 %v6777
    %v6779 = vpop.xlane.xlu0 %6778
    %v6780 = vsel %vm675, %v6756, -inf
    %6781 = vmax.xlane.f32.xlu0 %v6780
    %v6782 = vpop.xlane.xlu0 %6781
    %v6783 = vsel %vm675, %v6759, -inf
    %6784 = vmax.xlane.f32.xlu0 %v6783
    %v6785 = vpop.xlane.xlu0 %6784
    %v6786 = vsub.f32 %v6732, %v6764
    %v6787 = vsub.f32 %v6735, %v6767
    %v6788 = vsub.f32 %v6740, %v6770
    %v6789 = vsub.f32 %v6743, %v6773
    %v6790 = vsub.f32 %v6748, %v6776
    %v6791 = vsub.f32 %v6751, %v6779
    %v6792 = vsub.f32 %v6756, %v6782
    %v6793 = vsub.f32 %v6759, %v6785
    %v6794 = vmul.f32 %v6786, 1.442695
    %v6795 = vpow.pop %v6794
    %v6796 = vmul.f32 %v6787, 1.442695
    %v6797 = vpow.pop %v6796
    %v6798 = vmul.f32 %v6788, 1.442695
    %v6799 = vpow.pop %v6798
    %v6800 = vmul.f32 %v6789, 1.442695
    %v6801 = vpow.pop %v6800
    %v6802 = vmul.f32 %v6790, 1.442695
    %v6803 = vpow.pop %v6802
    %v6804 = vmul.f32 %v6791, 1.442695
    %v6805 = vpow.pop %v6804
    %v6806 = vmul.f32 %v6792, 1.442695
    %v6807 = vpow.pop %v6806
    %v6808 = vmul.f32 %v6793, 1.442695
    %v6809 = vpow.pop %v6808
    %v6810 = vsel %vm675, %v6795, 0.0
    %6811 = vadd.xlane.f32.xlu0 %v6810
    %v6812 = vpop.xlane.xlu0 %6811
    %v6813 = vsel %vm675, %v6797, 0.0
    %6814 = vadd.xlane.f32.xlu0 %v6813
    %v6815 = vpop.xlane.xlu0 %6814
    %v6816 = vsel %vm675, %v6799, 0.0
    %6817 = vadd.xlane.f32.xlu0 %v6816
    %v6818 = vpop.xlane.xlu0 %6817
    %v6819 = vsel %vm675, %v6801, 0.0
    %6820 = vadd.xlane.f32.xlu0 %v6819
    %v6821 = vpop.xlane.xlu0 %6820
    %v6822 = vsel %vm675, %v6803, 0.0
    %6823 = vadd.xlane.f32.xlu0 %v6822
    %v6824 = vpop.xlane.xlu0 %6823
    %v6825 = vsel %vm675, %v6805, 0.0
    %6826 = vadd.xlane.f32.xlu0 %v6825
    %v6827 = vpop.xlane.xlu0 %6826
    %v6828 = vsel %vm675, %v6807, 0.0
    %6829 = vadd.xlane.f32.xlu0 %v6828
    %v6830 = vpop.xlane.xlu0 %6829
    %v6831 = vsel %vm675, %v6809, 0.0
    %6832 = vadd.xlane.f32.xlu0 %v6831
    %v6833 = vpop.xlane.xlu0 %6832
    %v6834 = vrcp.pop %v6812
    %v6835 = vrcp.pop %v6815
    %v6836 = vrcp.pop %v6818
    %v6837 = vrcp.pop %v6821
    %v6838 = vrcp.pop %v6824
    %v6839 = vrcp.pop %v6827
    %v6840 = vrcp.pop %v6830
    %v6841 = vrcp.pop %v6833
    %v6842 = vmul.f32 %v6795, %v6834
    %v6843 = vmul.f32 %v6797, %v6835
    %v6844 = vmul.f32 %v6799, %v6836
    %v6845 = vmul.f32 %v6801, %v6837
    %v6846 = vmul.f32 %v6803, %v6838
    %v6847 = vmul.f32 %v6805, %v6839
    %v6848 = vmul.f32 %v6807, %v6840
    %v6849 = vmul.f32 %v6809, %v6841
    %v6850 = vpack.c.bf16 %v6843, %v6842
    %v6851 = vpack.c.bf16 %v6845, %v6844
    %v6852 = vpack.c.bf16 %v6847, %v6846
    %v6853 = vpack.c.bf16 %v6849, %v6848
    %6854 = vrot.lane.b32.xlu0 %v5808, 104
    %v6855 = vpop.permute.xlu0 %6854
    %v6857 = vsel %vm675, %v6850, 0
    %v6860 = vsel %vm675, %v6851, 0
    %v6863 = vsel %vm675, %v6852, 0
    %v6866 = vsel %vm675, %v6853, 0
    %v6869 = vsel %vm1253, %v6855, 0
    %6871 = vmatprep.subr.bf16.mxu0 0
    %6872 = vmatpush1.bf16.msra.mxu0 %v6869
    %6873 = vmatprep.subr.bf16.mxu0 0
    %6874 = vmatpush1.bf16.msra.mxu0 0
    %6875 = vmatprep.subr.bf16.mxu0 0
    %6876 = vmatpush1.bf16.msra.mxu0 0
    %6877 = vmatprep.subr.bf16.mxu0 0
    %6878 = vmatpush1.bf16.msra.mxu0 0
    %6879 = vmatprep.subr.bf16.mxu0 0
    %6880 = vmatpush1.bf16.msra.mxu0 0
    %6881 = vmatprep.subr.bf16.mxu0 0
    %6882 = vmatpush1.bf16.msra.mxu0 0
    %6883 = vmatprep.subr.bf16.mxu0 0
    %6884 = vmatpush1.bf16.msra.mxu0 0
    %6885 = vmatprep.subr.bf16.mxu0 0
    %6886 = vmatpush1.bf16.msra.mxu0 0
    %6887 = vmatprep.subr.bf16.mxu0 0
    %6888 = vmatpush1.bf16.msra.mxu0 0
    %6889 = vmatprep.subr.bf16.mxu0 0
    %6890 = vmatpush1.bf16.msra.mxu0 0
    %6891 = vmatprep.subr.bf16.mxu0 0
    %6892 = vmatpush1.bf16.msra.mxu0 0
    %6893 = vmatprep.subr.bf16.mxu0 0
    %6894 = vmatpush1.bf16.msra.mxu0 0
    %6895 = vmatprep.subr.bf16.mxu0 0
    %6896 = vmatpush1.bf16.msra.mxu0 0
    %6897 = vmatprep.subr.bf16.mxu0 0
    %6898 = vmatpush1.bf16.msra.mxu0 0
    %6899 = vmatprep.subr.bf16.mxu0 0
    %6900 = vmatpush1.bf16.msra.mxu0 0
    %6901 = vmatprep.subr.bf16.mxu0 0
    %6902 = vmatpush1.bf16.msra.mxu0 0
    %6903 = vmatprep.mubr.bf16.mxu0 0
    %6904 = vmatmul.mubr.bf16.gmra.mrb[0].mxu0 %v6857
    %v6905 = vpop.f32.mrb[0].mxu0
    %v6906 = vadd.f32 0.0, %v6905
    %v6907 = vpop.f32.mrb[0].mxu0
    %v6908 = vpop.f32.mrb[0].mxu0
    %v6909 = vadd.f32 0.0, %v6908
    %v6910 = vpop.f32.mrb[0].mxu0
    %6911 = vmatprep.mubr.bf16.mxu0 0
    %6912 = vmatmul.mubr.bf16.gmra.mrb[0].mxu0 %v6860
    %v6913 = vpop.f32.mrb[0].mxu0
    %v6914 = vadd.f32 0.0, %v6913
    %v6915 = vpop.f32.mrb[0].mxu0
    %v6916 = vpop.f32.mrb[0].mxu0
    %v6917 = vadd.f32 0.0, %v6916
    %v6918 = vpop.f32.mrb[0].mxu0
    %6919 = vmatprep.mubr.bf16.mxu0 0
    %6920 = vmatmul.mubr.bf16.gmra.mrb[0].mxu0 %v6863
    %v6921 = vpop.f32.mrb[0].mxu0
    %v6922 = vadd.f32 0.0, %v6921
    %v6923 = vpop.f32.mrb[0].mxu0
    %v6924 = vpop.f32.mrb[0].mxu0
    %v6925 = vadd.f32 0.0, %v6924
    %v6926 = vpop.f32.mrb[0].mxu0
    %6927 = vmatprep.mubr.bf16.mxu0 0
    %6928 = vmatmul.mubr.bf16.gmra.mrb[0].mxu0 %v6866
    %v6929 = vpop.f32.mrb[0].mxu0
    %v6930 = vadd.f32 0.0, %v6929
    %v6931 = vpop.f32.mrb[0].mxu0
    %v6932 = vpop.f32.mrb[0].mxu0
    %v6933 = vadd.f32 0.0, %v6932
    %v6934 = vpop.f32.mrb[0].mxu0
    %6935 = vdwg.mxu0
    %v6936 = vpack.c.bf16 %v6909, %v6906
    %v6937 = vpack.c.bf16 %v6917, %v6914
    %v6938 = vpack.c.bf16 %v6925, %v6922
    %v6939 = vpack.c.bf16 %v6933, %v6930
    %v6941 = vsel %vm675, %v6936, 0
    %v6944 = vsel %vm675, %v6937, 0
    %v6947 = vsel %vm675, %v6938, 0
    %v6950 = vsel %vm675, %v6939, 0
    %6952 = vmatprep.subr.bf16.mxu0 0
    %6953 = vmatpush1.bf16.msra.mxu0 %v5560
    %6954 = vmatprep.subr.bf16.mxu0 0
    %6955 = vmatpush1.bf16.msra.mxu0 0
    %6956 = vmatprep.subr.bf16.mxu0 0
    %6957 = vmatpush1.bf16.msra.mxu0 0
    %6958 = vmatprep.subr.bf16.mxu0 0
    %6959 = vmatpush1.bf16.msra.mxu0 0
    %6960 = vmatprep.subr.bf16.mxu0 0
    %6961 = vmatpush1.bf16.msra.mxu0 0
    %6962 = vmatprep.subr.bf16.mxu0 0
    %6963 = vmatpush1.bf16.msra.mxu0 0
    %6964 = vmatprep.subr.bf16.mxu0 0
    %6965 = vmatpush1.bf16.msra.mxu0 0
    %6966 = vmatprep.subr.bf16.mxu0 0
    %6967 = vmatpush1.bf16.msra.mxu0 0
    %6968 = vmatprep.subr.bf16.mxu0 0
    %6969 = vmatpush1.bf16.msra.mxu0 0
    %6970 = vmatprep.subr.bf16.mxu0 0
    %6971 = vmatpush1.bf16.msra.mxu0 0
    %6972 = vmatprep.subr.bf16.mxu0 0
    %6973 = vmatpush1.bf16.msra.mxu0 0
    %6974 = vmatprep.subr.bf16.mxu0 0
    %6975 = vmatpush1.bf16.msra.mxu0 0
    %6976 = vmatprep.subr.bf16.mxu0 0
    %6977 = vmatpush1.bf16.msra.mxu0 0
    %6978 = vmatprep.subr.bf16.mxu0 0
    %6979 = vmatpush1.bf16.msra.mxu0 0
    %6980 = vmatprep.subr.bf16.mxu0 0
    %6981 = vmatpush1.bf16.msra.mxu0 0
    %6982 = vmatprep.subr.bf16.mxu0 0
    %6983 = vmatpush1.bf16.msra.mxu0 0
    %6984 = vmatprep.mubr.bf16.mxu0 0
    %6985 = vmatmul.mubr.bf16.gmra.mrb[0].mxu0 %v6941
    %v6986 = vpop.f32.mrb[0].mxu0
    %v6987 = vadd.f32 0.0, %v6986
    %v6988 = vpop.f32.mrb[0].mxu0
    %v6989 = vpop.f32.mrb[0].mxu0
    %v6990 = vadd.f32 0.0, %v6989
    %v6991 = vpop.f32.mrb[0].mxu0
    %6992 = vmatprep.mubr.bf16.mxu0 0
    %6993 = vmatmul.mubr.bf16.gmra.mrb[0].mxu0 %v6944
    %v6994 = vpop.f32.mrb[0].mxu0
    %v6995 = vadd.f32 0.0, %v6994
    %v6996 = vpop.f32.mrb[0].mxu0
    %v6997 = vpop.f32.mrb[0].mxu0
    %v6998 = vadd.f32 0.0, %v6997
    %v6999 = vpop.f32.mrb[0].mxu0
    %7000 = vmatprep.mubr.bf16.mxu0 0
    %7001 = vmatmul.mubr.bf16.gmra.mrb[0].mxu0 %v6947
    %v7002 = vpop.f32.mrb[0].mxu0
    %v7003 = vadd.f32 0.0, %v7002
    %v7004 = vpop.f32.mrb[0].mxu0
    %v7005 = vpop.f32.mrb[0].mxu0
    %v7006 = vadd.f32 0.0, %v7005
    %v7007 = vpop.f32.mrb[0].mxu0
    %7008 = vmatprep.mubr.bf16.mxu0 0
    %7009 = vmatmul.mubr.bf16.gmra.mrb[0].mxu0 %v6950
    %v7010 = vpop.f32.mrb[0].mxu0
    %v7011 = vadd.f32 0.0, %v7010
    %v7012 = vpop.f32.mrb[0].mxu0
    %v7013 = vpop.f32.mrb[0].mxu0
    %v7014 = vadd.f32 0.0, %v7013
    %v7015 = vpop.f32.mrb[0].mxu0
    %7016 = vdwg.mxu0
    %v7017 = vadd.f32 %v6664, %v6987
    %v7018 = vadd.f32 %v6665, %v6990
    %v7019 = vadd.f32 %v6666, %v6995
    %v7020 = vadd.f32 %v6667, %v6998
    %v7021 = vadd.f32 %v6668, %v7003
    %v7022 = vadd.f32 %v6669, %v7006
    %v7023 = vadd.f32 %v6670, %v7011
    %v7024 = vadd.f32 %v6671, %v7014
    %v7025 = vld [vmem:[%s17] sm:$0x1]
    %v7027 = vlaneseq
    %v7028 = vshrl.u32 %v7027, 7
    %v7029 = vsub.s32 0, %v7028
    %v7030 = vrot.slane %v7025, %v7029
    %v7032 = vadd.f32 %v5627, %v7030
    %v7033 = vadd.f32 %v5628, %v7030
    %v7034 = vadd.f32 %v5629, %v7030
    %v7035 = vadd.f32 %v5630, %v7030
    %v7036 = vadd.f32 %v5631, %v7030
    %v7037 = vadd.f32 %v5632, %v7030
    %v7038 = vadd.f32 %v5633, %v7030
    %v7039 = vadd.f32 %v5634, %v7030
    %v7040 = vadd.f32 %v7017, %v7030
    %v7041 = vadd.f32 %v7018, %v7030
    %v7042 = vadd.f32 %v7019, %v7030
    %v7043 = vadd.f32 %v7020, %v7030
    %v7044 = vadd.f32 %v7021, %v7030
    %v7045 = vadd.f32 %v7022, %v7030
    %v7046 = vadd.f32 %v7023, %v7030
    %v7047 = vadd.f32 %v7024, %v7030
    %v7048 = vadd.f32 %v3904, %v7032
    %v7049 = vadd.f32 %v3905, %v7033
    %v7050 = vadd.f32 %v3906, %v7034
    %v7051 = vadd.f32 %v3907, %v7035
    %v7052 = vadd.f32 %v3908, %v7036
    %v7053 = vadd.f32 %v3909, %v7037
    %v7054 = vadd.f32 %v3910, %v7038
    %v7055 = vadd.f32 %v3911, %v7039
    %v7056 = vadd.f32 %v3912, %v7040
    %v7057 = vadd.f32 %v3913, %v7041
    %v7058 = vadd.f32 %v3914, %v7042
    %v7059 = vadd.f32 %v3915, %v7043
    %v7060 = vadd.f32 %v3916, %v7044
    %v7061 = vadd.f32 %v3917, %v7045
    %v7062 = vadd.f32 %v3918, %v7046
    %v7063 = vadd.f32 %v3919, %v7047
    %v7064 = vsel %vm269, %v7048, 0.0
    %7065 = vadd.xlane.f32.xlu0 %v7064
    %v7066 = vpop.xlane.xlu0 %7065
    %v7067 = vsel %vm269, %v7049, 0.0
    %7068 = vadd.xlane.f32.xlu0 %v7067
    %v7069 = vpop.xlane.xlu0 %7068
    %v7070 = vsel %vm269, %v7050, 0.0
    %7071 = vadd.xlane.f32.xlu0 %v7070
    %v7072 = vpop.xlane.xlu0 %7071
    %v7073 = vsel %vm269, %v7051, 0.0
    %7074 = vadd.xlane.f32.xlu0 %v7073
    %v7075 = vpop.xlane.xlu0 %7074
    %v7076 = vsel %vm269, %v7052, 0.0
    %7077 = vadd.xlane.f32.xlu0 %v7076
    %v7078 = vpop.xlane.xlu0 %7077
    %v7079 = vsel %vm269, %v7053, 0.0
    %7080 = vadd.xlane.f32.xlu0 %v7079
    %v7081 = vpop.xlane.xlu0 %7080
    %v7082 = vsel %vm269, %v7054, 0.0
    %7083 = vadd.xlane.f32.xlu0 %v7082
    %v7084 = vpop.xlane.xlu0 %7083
    %v7085 = vsel %vm269, %v7055, 0.0
    %7086 = vadd.xlane.f32.xlu0 %v7085
    %v7087 = vpop.xlane.xlu0 %7086
    %v7088 = vsel %vm269, %v7056, 0.0
    %7089 = vadd.xlane.f32.xlu0 %v7088
    %v7090 = vpop.xlane.xlu0 %7089
    %v7091 = vsel %vm269, %v7057, 0.0
    %7092 = vadd.xlane.f32.xlu0 %v7091
    %v7093 = vpop.xlane.xlu0 %7092
    %v7094 = vsel %vm269, %v7058, 0.0
    %7095 = vadd.xlane.f32.xlu0 %v7094
    %v7096 = vpop.xlane.xlu0 %7095
    %v7097 = vsel %vm269, %v7059, 0.0
    %7098 = vadd.xlane.f32.xlu0 %v7097
    %v7099 = vpop.xlane.xlu0 %7098
    %v7100 = vsel %vm269, %v7060, 0.0
    %7101 = vadd.xlane.f32.xlu0 %v7100
    %v7102 = vpop.xlane.xlu0 %7101
    %v7103 = vsel %vm269, %v7061, 0.0
    %7104 = vadd.xlane.f32.xlu0 %v7103
    %v7105 = vpop.xlane.xlu0 %7104
    %v7106 = vsel %vm269, %v7062, 0.0
    %7107 = vadd.xlane.f32.xlu0 %v7106
    %v7108 = vpop.xlane.xlu0 %7107
    %v7109 = vsel %vm269, %v7063, 0.0
    %7110 = vadd.xlane.f32.xlu0 %v7109
    %v7111 = vpop.xlane.xlu0 %7110
    %v7112 = vmul.f32 %v7066, %v3713
    %v7113 = vmul.f32 %v7069, %v3713
    %v7114 = vmul.f32 %v7072, %v3713
    %v7115 = vmul.f32 %v7075, %v3713
    %v7116 = vmul.f32 %v7078, %v3713
    %v7117 = vmul.f32 %v7081, %v3713
    %v7118 = vmul.f32 %v7084, %v3713
    %v7119 = vmul.f32 %v7087, %v3713
    %v7120 = vmul.f32 %v7090, %v3713
    %v7121 = vmul.f32 %v7093, %v3713
    %v7122 = vmul.f32 %v7096, %v3713
    %v7123 = vmul.f32 %v7099, %v3713
    %v7124 = vmul.f32 %v7102, %v3713
    %v7125 = vmul.f32 %v7105, %v3713
    %v7126 = vmul.f32 %v7108, %v3713
    %v7127 = vmul.f32 %v7111, %v3713
    %v7128 = vsub.f32 %v7048, %v7112
    %v7129 = vsub.f32 %v7049, %v7113
    %v7130 = vsub.f32 %v7050, %v7114
    %v7131 = vsub.f32 %v7051, %v7115
    %v7132 = vsub.f32 %v7052, %v7116
    %v7133 = vsub.f32 %v7053, %v7117
    %v7134 = vsub.f32 %v7054, %v7118
    %v7135 = vsub.f32 %v7055, %v7119
    %v7136 = vsub.f32 %v7056, %v7120
    %v7137 = vsub.f32 %v7057, %v7121
    %v7138 = vsub.f32 %v7058, %v7122
    %v7139 = vsub.f32 %v7059, %v7123
    %v7140 = vsub.f32 %v7060, %v7124
    %v7141 = vsub.f32 %v7061, %v7125
    %v7142 = vsub.f32 %v7062, %v7126
    %v7143 = vsub.f32 %v7063, %v7127
    %v7144 = vmul.f32 %v7128, %v7128
    %v7145 = vmul.f32 %v7129, %v7129
    %v7146 = vmul.f32 %v7130, %v7130
    %v7147 = vmul.f32 %v7131, %v7131
    %v7148 = vmul.f32 %v7132, %v7132
    %v7149 = vmul.f32 %v7133, %v7133
    %v7150 = vmul.f32 %v7134, %v7134
    %v7151 = vmul.f32 %v7135, %v7135
    %v7152 = vmul.f32 %v7136, %v7136
    %v7153 = vmul.f32 %v7137, %v7137
    %v7154 = vmul.f32 %v7138, %v7138
    %v7155 = vmul.f32 %v7139, %v7139
    %v7156 = vmul.f32 %v7140, %v7140
    %v7157 = vmul.f32 %v7141, %v7141
    %v7158 = vmul.f32 %v7142, %v7142
    %v7159 = vmul.f32 %v7143, %v7143
    %v7160 = vsel %vm269, %v7144, 0.0
    %7161 = vadd.xlane.f32.xlu0 %v7160
    %v7162 = vpop.xlane.xlu0 %7161
    %v7163 = vsel %vm269, %v7145, 0.0
    %7164 = vadd.xlane.f32.xlu0 %v7163
    %v7165 = vpop.xlane.xlu0 %7164
    %v7166 = vsel %vm269, %v7146, 0.0
    %7167 = vadd.xlane.f32.xlu0 %v7166
    %v7168 = vpop.xlane.xlu0 %7167
    %v7169 = vsel %vm269, %v7147, 0.0
    %7170 = vadd.xlane.f32.xlu0 %v7169
    %v7171 = vpop.xlane.xlu0 %7170
    %v7172 = vsel %vm269, %v7148, 0.0
    %7173 = vadd.xlane.f32.xlu0 %v7172
    %v7174 = vpop.xlane.xlu0 %7173
    %v7175 = vsel %vm269, %v7149, 0.0
    %7176 = vadd.xlane.f32.xlu0 %v7175
    %v7177 = vpop.xlane.xlu0 %7176
    %v7178 = vsel %vm269, %v7150, 0.0
    %7179 = vadd.xlane.f32.xlu0 %v7178
    %v7180 = vpop.xlane.xlu0 %7179
    %v7181 = vsel %vm269, %v7151, 0.0
    %7182 = vadd.xlane.f32.xlu0 %v7181
    %v7183 = vpop.xlane.xlu0 %7182
    %v7184 = vsel %vm269, %v7152, 0.0
    %7185 = vadd.xlane.f32.xlu0 %v7184
    %v7186 = vpop.xlane.xlu0 %7185
    %v7187 = vsel %vm269, %v7153, 0.0
    %7188 = vadd.xlane.f32.xlu0 %v7187
    %v7189 = vpop.xlane.xlu0 %7188
    %v7190 = vsel %vm269, %v7154, 0.0
    %7191 = vadd.xlane.f32.xlu0 %v7190
    %v7192 = vpop.xlane.xlu0 %7191
    %v7193 = vsel %vm269, %v7155, 0.0
    %7194 = vadd.xlane.f32.xlu0 %v7193
    %v7195 = vpop.xlane.xlu0 %7194
    %v7196 = vsel %vm269, %v7156, 0.0
    %7197 = vadd.xlane.f32.xlu0 %v7196
    %v7198 = vpop.xlane.xlu0 %7197
    %v7199 = vsel %vm269, %v7157, 0.0
    %7200 = vadd.xlane.f32.xlu0 %v7199
    %v7201 = vpop.xlane.xlu0 %7200
    %v7202 = vsel %vm269, %v7158, 0.0
    %7203 = vadd.xlane.f32.xlu0 %v7202
    %v7204 = vpop.xlane.xlu0 %7203
    %v7205 = vsel %vm269, %v7159, 0.0
    %7206 = vadd.xlane.f32.xlu0 %v7205
    %v7207 = vpop.xlane.xlu0 %7206
    %v7208 = vmul.f32 %v7162, %v3713
    %v7209 = vmul.f32 %v7165, %v3713
    %v7210 = vmul.f32 %v7168, %v3713
    %v7211 = vmul.f32 %v7171, %v3713
    %v7212 = vmul.f32 %v7174, %v3713
    %v7213 = vmul.f32 %v7177, %v3713
    %v7214 = vmul.f32 %v7180, %v3713
    %v7215 = vmul.f32 %v7183, %v3713
    %v7216 = vmul.f32 %v7186, %v3713
    %v7217 = vmul.f32 %v7189, %v3713
    %v7218 = vmul.f32 %v7192, %v3713
    %v7219 = vmul.f32 %v7195, %v3713
    %v7220 = vmul.f32 %v7198, %v3713
    %v7221 = vmul.f32 %v7201, %v3713
    %v7222 = vmul.f32 %v7204, %v3713
    %v7223 = vmul.f32 %v7207, %v3713
    %v7224 = vadd.f32 %v7208, 1e-05
    %v7225 = vadd.f32 %v7209, 1e-05
    %v7226 = vadd.f32 %v7210, 1e-05
    %v7227 = vadd.f32 %v7211, 1e-05
    %v7228 = vadd.f32 %v7212, 1e-05
    %v7229 = vadd.f32 %v7213, 1e-05
    %v7230 = vadd.f32 %v7214, 1e-05
    %v7231 = vadd.f32 %v7215, 1e-05
    %v7232 = vadd.f32 %v7216, 1e-05
    %v7233 = vadd.f32 %v7217, 1e-05
    %v7234 = vadd.f32 %v7218, 1e-05
    %v7235 = vadd.f32 %v7219, 1e-05
    %v7236 = vadd.f32 %v7220, 1e-05
    %v7237 = vadd.f32 %v7221, 1e-05
    %v7238 = vadd.f32 %v7222, 1e-05
    %v7239 = vadd.f32 %v7223, 1e-05
    %v7240 = vrsqrt.pop %v7224
    %v7241 = vrsqrt.pop %v7225
    %v7242 = vrsqrt.pop %v7226
    %v7243 = vrsqrt.pop %v7227
    %v7244 = vrsqrt.pop %v7228
    %v7245 = vrsqrt.pop %v7229
    %v7246 = vrsqrt.pop %v7230
    %v7247 = vrsqrt.pop %v7231
    %v7248 = vrsqrt.pop %v7232
    %v7249 = vrsqrt.pop %v7233
    %v7250 = vrsqrt.pop %v7234
    %v7251 = vrsqrt.pop %v7235
    %v7252 = vrsqrt.pop %v7236
    %v7253 = vrsqrt.pop %v7237
    %v7254 = vrsqrt.pop %v7238
    %v7255 = vrsqrt.pop %v7239
    %v7256 = vmul.f32 %v7128, %v7240
    %v7257 = vmul.f32 %v7129, %v7241
    %v7258 = vmul.f32 %v7130, %v7242
    %v7259 = vmul.f32 %v7131, %v7243
    %v7260 = vmul.f32 %v7132, %v7244
    %v7261 = vmul.f32 %v7133, %v7245
    %v7262 = vmul.f32 %v7134, %v7246
    %v7263 = vmul.f32 %v7135, %v7247
    %v7264 = vmul.f32 %v7136, %v7248
    %v7265 = vmul.f32 %v7137, %v7249
    %v7266 = vmul.f32 %v7138, %v7250
    %v7267 = vmul.f32 %v7139, %v7251
    %v7268 = vmul.f32 %v7140, %v7252
    %v7269 = vmul.f32 %v7141, %v7253
    %v7270 = vmul.f32 %v7142, %v7254
    %v7271 = vmul.f32 %v7143, %v7255
    %v7272 = vld [vmem:[%s20] sm:$0x1]
    %v7274 = vlaneseq
    %v7275 = vshrl.u32 %v7274, 7
    %v7276 = vsub.s32 0, %v7275
    %v7277 = vrot.slane %v7272, %v7276
    %v7279 = vmul.f32 %v7256, %v7277
    %v7280 = vmul.f32 %v7257, %v7277
    %v7281 = vmul.f32 %v7258, %v7277
    %v7282 = vmul.f32 %v7259, %v7277
    %v7283 = vmul.f32 %v7260, %v7277
    %v7284 = vmul.f32 %v7261, %v7277
    %v7285 = vmul.f32 %v7262, %v7277
    %v7286 = vmul.f32 %v7263, %v7277
    %v7287 = vmul.f32 %v7264, %v7277
    %v7288 = vmul.f32 %v7265, %v7277
    %v7289 = vmul.f32 %v7266, %v7277
    %v7290 = vmul.f32 %v7267, %v7277
    %v7291 = vmul.f32 %v7268, %v7277
    %v7292 = vmul.f32 %v7269, %v7277
    %v7293 = vmul.f32 %v7270, %v7277
    %v7294 = vmul.f32 %v7271, %v7277
    %v7295 = vld [vmem:[%s21] sm:$0x1]
    %v7297 = vlaneseq
    %v7298 = vshrl.u32 %v7297, 7
    %v7299 = vsub.s32 0, %v7298
    %v7300 = vrot.slane %v7295, %v7299
    %v7302 = vadd.f32 %v7279, %v7300
    %v7303 = vadd.f32 %v7280, %v7300
    %v7304 = vadd.f32 %v7281, %v7300
    %v7305 = vadd.f32 %v7282, %v7300
    %v7306 = vadd.f32 %v7283, %v7300
    %v7307 = vadd.f32 %v7284, %v7300
    %v7308 = vadd.f32 %v7285, %v7300
    %v7309 = vadd.f32 %v7286, %v7300
    %v7310 = vadd.f32 %v7287, %v7300
    %v7311 = vadd.f32 %v7288, %v7300
    %v7312 = vadd.f32 %v7289, %v7300
    %v7313 = vadd.f32 %v7290, %v7300
    %v7314 = vadd.f32 %v7291, %v7300
    %v7315 = vadd.f32 %v7292, %v7300
    %v7316 = vadd.f32 %v7293, %v7300
    %v7317 = vadd.f32 %v7294, %v7300
    %v7318 = vpack.c.bf16 %v7303, %v7302
    %v7319 = vpack.c.bf16 %v7305, %v7304
    %v7320 = vpack.c.bf16 %v7307, %v7306
    %v7321 = vpack.c.bf16 %v7309, %v7308
    %v7322 = vpack.c.bf16 %v7311, %v7310
    %v7323 = vpack.c.bf16 %v7313, %v7312
    %v7324 = vpack.c.bf16 %v7315, %v7314
    %v7325 = vpack.c.bf16 %v7317, %v7316
    %v7326 = vld [vmem:[%s24] sm:$0xff]
    %v7327 = vld [vmem:[%s24 + $0x8] sm:$0xff]
    %v7328 = vld [vmem:[%s24 + $0x10] sm:$0xff]
    %v7329 = vld [vmem:[%s24 + $0x18] sm:$0xff]
    %v7330 = vld [vmem:[%s24 + $0x20] sm:$0xff]
    %v7331 = vld [vmem:[%s24 + $0x28] sm:$0xff]
    %v7332 = vld [vmem:[%s24 + $0x30] sm:$0xff]
    %v7333 = vld [vmem:[%s24 + $0x38] sm:$0xff]
    %v7334 = vld [vmem:[%s24 + $0x40] sm:$0xff]
    %v7335 = vld [vmem:[%s24 + $0x48] sm:$0xff]
    %v7336 = vld [vmem:[%s24 + $0x50] sm:$0xff]
    %v7337 = vld [vmem:[%s24 + $0x58] sm:$0xff]
    %v7338 = vld [vmem:[%s24 + $0x60] sm:$0xff]
    %v7339 = vld [vmem:[%s24 + $0x68] sm:$0xff]
    %v7340 = vld [vmem:[%s24 + $0x70] sm:$0xff]
    %v7341 = vld [vmem:[%s24 + $0x78] sm:$0xff]
    %v7342 = vld [vmem:[%s24 + $0x80] sm:$0xff]
    %v7343 = vld [vmem:[%s24 + $0x88] sm:$0xff]
    %v7344 = vld [vmem:[%s24 + $0x90] sm:$0xff]
    %v7345 = vld [vmem:[%s24 + $0x98] sm:$0xff]
    %v7346 = vld [vmem:[%s24 + $0xa0] sm:$0xff]
    %v7347 = vld [vmem:[%s24 + $0xa8] sm:$0xff]
    %v7348 = vld [vmem:[%s24 + $0xb0] sm:$0xff]
    %v7349 = vld [vmem:[%s24 + $0xb8] sm:$0xff]
    %v7350 = vld [vmem:[%s24 + $0xc0] sm:$0xff]
    %v7351 = vld [vmem:[%s24 + $0xc8] sm:$0xff]
    %v7352 = vld [vmem:[%s24 + $0xd0] sm:$0xff]
    %v7353 = vld [vmem:[%s24 + $0xd8] sm:$0xff]
    %v7354 = vld [vmem:[%s24 + $0xe0] sm:$0xff]
    %v7355 = vld [vmem:[%s24 + $0xe8] sm:$0xff]
    %v7356 = vld [vmem:[%s24 + $0xf0] sm:$0xff]
    %v7357 = vld [vmem:[%s24 + $0xf8] sm:$0xff]
    %v7358 = vld [vmem:[%s25] sm:$0xff]
    %v7359 = vld [vmem:[%s25 + $0x8] sm:$0xff]
    %v7362 = vlaneseq
    %v7363 = vshrl.u32 %v7362, 7
    %v7364 = vsub.s32 0, %v7363
    %v7365 = vrot.slane %v7358, %v7364
    %v7366 = vlaneseq
    %v7367 = vshrl.u32 %v7366, 7
    %v7368 = vsub.s32 1, %v7367
    %v7369 = vrot.slane %v7358, %v7368
    %v7370 = vlaneseq
    %v7371 = vshrl.u32 %v7370, 7
    %v7372 = vsub.s32 2, %v7371
    %v7373 = vrot.slane %v7358, %v7372
    %v7374 = vlaneseq
    %v7375 = vshrl.u32 %v7374, 7
    %v7376 = vsub.s32 3, %v7375
    %v7377 = vrot.slane %v7358, %v7376
    %v7378 = vlaneseq
    %v7379 = vshrl.u32 %v7378, 7
    %v7380 = vsub.s32 4, %v7379
    %v7381 = vrot.slane %v7358, %v7380
    %v7382 = vlaneseq
    %v7383 = vshrl.u32 %v7382, 7
    %v7384 = vsub.s32 5, %v7383
    %v7385 = vrot.slane %v7358, %v7384
    %v7386 = vlaneseq
    %v7387 = vshrl.u32 %v7386, 7
    %v7388 = vsub.s32 6, %v7387
    %v7389 = vrot.slane %v7358, %v7388
    %v7390 = vlaneseq
    %v7391 = vshrl.u32 %v7390, 7
    %v7392 = vsub.s32 7, %v7391
    %v7393 = vrot.slane %v7358, %v7392
    %v7394 = vlaneseq
    %v7395 = vshrl.u32 %v7394, 7
    %v7396 = vsub.s32 0, %v7395
    %v7397 = vrot.slane %v7359, %v7396
    %v7398 = vlaneseq
    %v7399 = vshrl.u32 %v7398, 7
    %v7400 = vsub.s32 1, %v7399
    %v7401 = vrot.slane %v7359, %v7400
    %v7402 = vlaneseq
    %v7403 = vshrl.u32 %v7402, 7
    %v7404 = vsub.s32 2, %v7403
    %v7405 = vrot.slane %v7359, %v7404
    %v7406 = vlaneseq
    %v7407 = vshrl.u32 %v7406, 7
    %v7408 = vsub.s32 3, %v7407
    %v7409 = vrot.slane %v7359, %v7408
    %v7410 = vlaneseq
    %v7411 = vshrl.u32 %v7410, 7
    %v7412 = vsub.s32 4, %v7411
    %v7413 = vrot.slane %v7359, %v7412
    %v7414 = vlaneseq
    %v7415 = vshrl.u32 %v7414, 7
    %v7416 = vsub.s32 5, %v7415
    %v7417 = vrot.slane %v7359, %v7416
    %v7418 = vlaneseq
    %v7419 = vshrl.u32 %v7418, 7
    %v7420 = vsub.s32 6, %v7419
    %v7421 = vrot.slane %v7359, %v7420
    %v7422 = vlaneseq
    %v7423 = vshrl.u32 %v7422, 7
    %v7424 = vsub.s32 7, %v7423
    %v7425 = vrot.slane %v7359, %v7424
    %v7474 = vunpack.c.l.b16 %v7326
    %v7475 = vunpack.c.h.b16 %v7326
    %v7476 = vunpack.c.l.b16 %v7327
    %v7477 = vunpack.c.h.b16 %v7327
    %v7478 = vunpack.c.l.b16 %v7328
    %v7479 = vunpack.c.h.b16 %v7328
    %v7480 = vunpack.c.l.b16 %v7329
    %v7481 = vunpack.c.h.b16 %v7329
    %v7482 = vunpack.c.l.b16 %v7330
    %v7483 = vunpack.c.h.b16 %v7330
    %v7484 = vunpack.c.l.b16 %v7331
    %v7485 = vunpack.c.h.b16 %v7331
    %v7486 = vunpack.c.l.b16 %v7332
    %v7487 = vunpack.c.h.b16 %v7332
    %v7488 = vunpack.c.l.b16 %v7333
    %v7489 = vunpack.c.h.b16 %v7333
    %v7490 = vunpack.c.l.b16 %v7334
    %v7491 = vunpack.c.h.b16 %v7334
    %v7492 = vunpack.c.l.b16 %v7335
    %v7493 = vunpack.c.h.b16 %v7335
    %v7494 = vunpack.c.l.b16 %v7336
    %v7495 = vunpack.c.h.b16 %v7336
    %v7496 = vunpack.c.l.b16 %v7337
    %v7497 = vunpack.c.h.b16 %v7337
    %v7498 = vunpack.c.l.b16 %v7338
    %v7499 = vunpack.c.h.b16 %v7338
    %v7500 = vunpack.c.l.b16 %v7339
    %v7501 = vunpack.c.h.b16 %v7339
    %v7502 = vunpack.c.l.b16 %v7340
    %v7503 = vunpack.c.h.b16 %v7340
    %v7504 = vunpack.c.l.b16 %v7341
    %v7505 = vunpack.c.h.b16 %v7341
    %v7506 = vunpack.c.l.b16 %v7342
    %v7507 = vunpack.c.h.b16 %v7342
    %v7508 = vunpack.c.l.b16 %v7343
    %v7509 = vunpack.c.h.b16 %v7343
    %v7510 = vunpack.c.l.b16 %v7344
    %v7511 = vunpack.c.h.b16 %v7344
    %v7512 = vunpack.c.l.b16 %v7345
    %v7513 = vunpack.c.h.b16 %v7345
    %v7514 = vunpack.c.l.b16 %v7346
    %v7515 = vunpack.c.h.b16 %v7346
    %v7516 = vunpack.c.l.b16 %v7347
    %v7517 = vunpack.c.h.b16 %v7347
    %v7518 = vunpack.c.l.b16 %v7348
    %v7519 = vunpack.c.h.b16 %v7348
    %v7520 = vunpack.c.l.b16 %v7349
    %v7521 = vunpack.c.h.b16 %v7349
    %v7522 = vunpack.c.l.b16 %v7350
    %v7523 = vunpack.c.h.b16 %v7350
    %v7524 = vunpack.c.l.b16 %v7351
    %v7525 = vunpack.c.h.b16 %v7351
    %v7526 = vunpack.c.l.b16 %v7352
    %v7527 = vunpack.c.h.b16 %v7352
    %v7528 = vunpack.c.l.b16 %v7353
    %v7529 = vunpack.c.h.b16 %v7353
    %v7530 = vunpack.c.l.b16 %v7354
    %v7531 = vunpack.c.h.b16 %v7354
    %v7532 = vunpack.c.l.b16 %v7355
    %v7533 = vunpack.c.h.b16 %v7355
    %v7534 = vunpack.c.l.b16 %v7356
    %v7535 = vunpack.c.h.b16 %v7356
    %v7536 = vunpack.c.l.b16 %v7357
    %v7537 = vunpack.c.h.b16 %v7357
    %v7538 = vpack.c.b16 %v7490, %v7474
    %v7539 = vpack.c.b16 %v7491, %v7475
    %v7540 = vpack.c.b16 %v7492, %v7476
    %v7541 = vpack.c.b16 %v7493, %v7477
    %v7542 = vpack.c.b16 %v7494, %v7478
    %v7543 = vpack.c.b16 %v7495, %v7479
    %v7544 = vpack.c.b16 %v7496, %v7480
    %v7545 = vpack.c.b16 %v7497, %v7481
    %v7546 = vpack.c.b16 %v7498, %v7482
    %v7547 = vpack.c.b16 %v7499, %v7483
    %v7548 = vpack.c.b16 %v7500, %v7484
    %v7549 = vpack.c.b16 %v7501, %v7485
    %v7550 = vpack.c.b16 %v7502, %v7486
    %v7551 = vpack.c.b16 %v7503, %v7487
    %v7552 = vpack.c.b16 %v7504, %v7488
    %v7553 = vpack.c.b16 %v7505, %v7489
    %v7554 = vpack.c.b16 %v7522, %v7506
    %v7555 = vpack.c.b16 %v7523, %v7507
    %v7556 = vpack.c.b16 %v7524, %v7508
    %v7557 = vpack.c.b16 %v7525, %v7509
    %v7558 = vpack.c.b16 %v7526, %v7510
    %v7559 = vpack.c.b16 %v7527, %v7511
    %v7560 = vpack.c.b16 %v7528, %v7512
    %v7561 = vpack.c.b16 %v7529, %v7513
    %v7562 = vpack.c.b16 %v7530, %v7514
    %v7563 = vpack.c.b16 %v7531, %v7515
    %v7564 = vpack.c.b16 %v7532, %v7516
    %v7565 = vpack.c.b16 %v7533, %v7517
    %v7566 = vpack.c.b16 %v7534, %v7518
    %v7567 = vpack.c.b16 %v7535, %v7519
    %v7568 = vpack.c.b16 %v7536, %v7520
    %v7569 = vpack.c.b16 %v7537, %v7521
    %v7603 = vsel %vm269, %v7318, 0
    %v7606 = vsel %vm269, %v7319, 0
    %v7609 = vsel %vm269, %v7320, 0
    %v7612 = vsel %vm269, %v7321, 0
    %v7615 = vsel %vm269, %v7322, 0
    %v7618 = vsel %vm269, %v7323, 0
    %v7621 = vsel %vm269, %v7324, 0
    %v7624 = vsel %vm269, %v7325, 0
    %7626 = vmatprep.subr.bf16.mxu0 %v7539
    %7627 = vmatpush1.bf16.msra.mxu0 %v7538
    %7628 = vmatprep.subr.bf16.mxu0 %v7555
    %7629 = vmatpush1.bf16.msra.mxu0 %v7554
    %7630 = vmatprep.subr.bf16.mxu0 0
    %7631 = vmatpush1.bf16.msra.mxu0 0
    %7632 = vmatprep.subr.bf16.mxu0 0
    %7633 = vmatpush1.bf16.msra.mxu0 0
    %7634 = vmatprep.subr.bf16.mxu0 0
    %7635 = vmatpush1.bf16.msra.mxu0 0
    %7636 = vmatprep.subr.bf16.mxu0 0
    %7637 = vmatpush1.bf16.msra.mxu0 0
    %7638 = vmatprep.subr.bf16.mxu0 0
    %7639 = vmatpush1.bf16.msra.mxu0 0
    %7640 = vmatprep.subr.bf16.mxu0 0
    %7641 = vmatpush1.bf16.msra.mxu0 0
    %7642 = vmatprep.subr.bf16.mxu0 0
    %7643 = vmatpush1.bf16.msra.mxu0 0
    %7644 = vmatprep.subr.bf16.mxu0 0
    %7645 = vmatpush1.bf16.msra.mxu0 0
    %7646 = vmatprep.subr.bf16.mxu0 0
    %7647 = vmatpush1.bf16.msra.mxu0 0
    %7648 = vmatprep.subr.bf16.mxu0 0
    %7649 = vmatpush1.bf16.msra.mxu0 0
    %7650 = vmatprep.subr.bf16.mxu0 0
    %7651 = vmatpush1.bf16.msra.mxu0 0
    %7652 = vmatprep.subr.bf16.mxu0 0
    %7653 = vmatpush1.bf16.msra.mxu0 0
    %7654 = vmatprep.subr.bf16.mxu0 0
    %7655 = vmatpush1.bf16.msra.mxu0 0
    %7656 = vmatprep.subr.bf16.mxu0 0
    %7657 = vmatpush1.bf16.msra.mxu0 0
    %7658 = vmatprep.mubr.bf16.mxu0 0
    %7659 = vmatmul.mubr.bf16.gmra.mrb[0].mxu0 %v7603
    %v7660 = vpop.f32.mrb[0].mxu0
    %v7661 = vadd.f32 %v7365, %v7660
    %v7662 = vpop.f32.mrb[0].mxu0
    %v7663 = vadd.f32 %v7369, %v7662
    %v7664 = vpop.f32.mrb[0].mxu0
    %v7665 = vadd.f32 %v7365, %v7664
    %v7666 = vpop.f32.mrb[0].mxu0
    %v7667 = vadd.f32 %v7369, %v7666
    %7668 = vmatprep.mubr.bf16.mxu0 0
    %7669 = vmatmul.mubr.bf16.gmra.mrb[0].mxu0 %v7606
    %v7670 = vpop.f32.mrb[0].mxu0
    %v7671 = vadd.f32 %v7365, %v7670
    %v7672 = vpop.f32.mrb[0].mxu0
    %v7673 = vadd.f32 %v7369, %v7672
    %v7674 = vpop.f32.mrb[0].mxu0
    %v7675 = vadd.f32 %v7365, %v7674
    %v7676 = vpop.f32.mrb[0].mxu0
    %v7677 = vadd.f32 %v7369, %v7676
    %7678 = vmatprep.mubr.bf16.mxu0 0
    %7679 = vmatmul.mubr.bf16.gmra.mrb[0].mxu0 %v7609
    %v7680 = vpop.f32.mrb[0].mxu0
    %v7681 = vadd.f32 %v7365, %v7680
    %v7682 = vpop.f32.mrb[0].mxu0
    %v7683 = vadd.f32 %v7369, %v7682
    %v7684 = vpop.f32.mrb[0].mxu0
    %v7685 = vadd.f32 %v7365, %v7684
    %v7686 = vpop.f32.mrb[0].mxu0
    %v7687 = vadd.f32 %v7369, %v7686
    %7688 = vmatprep.mubr.bf16.mxu0 0
    %7689 = vmatmul.mubr.bf16.gmra.mrb[0].mxu0 %v7612
    %v7690 = vpop.f32.mrb[0].mxu0
    %v7691 = vadd.f32 %v7365, %v7690
    %v7692 = vpop.f32.mrb[0].mxu0
    %v7693 = vadd.f32 %v7369, %v7692
    %v7694 = vpop.f32.mrb[0].mxu0
    %v7695 = vadd.f32 %v7365, %v7694
    %v7696 = vpop.f32.mrb[0].mxu0
    %v7697 = vadd.f32 %v7369, %v7696
    %7698 = vmatprep.mubr.bf16.mxu0 0
    %7699 = vmatmul.mubr.bf16.gmra.mrb[0].mxu0 %v7615
    %v7700 = vpop.f32.mrb[0].mxu0
    %v7701 = vadd.f32 %v7365, %v7700
    %v7702 = vpop.f32.mrb[0].mxu0
    %v7703 = vadd.f32 %v7369, %v7702
    %v7704 = vpop.f32.mrb[0].mxu0
    %v7705 = vadd.f32 %v7365, %v7704
    %v7706 = vpop.f32.mrb[0].mxu0
    %v7707 = vadd.f32 %v7369, %v7706
    %7708 = vmatprep.mubr.bf16.mxu0 0
    %7709 = vmatmul.mubr.bf16.gmra.mrb[0].mxu0 %v7618
    %v7710 = vpop.f32.mrb[0].mxu0
    %v7711 = vadd.f32 %v7365, %v7710
    %v7712 = vpop.f32.mrb[0].mxu0
    %v7713 = vadd.f32 %v7369, %v7712
    %v7714 = vpop.f32.mrb[0].mxu0
    %v7715 = vadd.f32 %v7365, %v7714
    %v7716 = vpop.f32.mrb[0].mxu0
    %v7717 = vadd.f32 %v7369, %v7716
    %7718 = vmatprep.mubr.bf16.mxu0 0
    %7719 = vmatmul.mubr.bf16.gmra.mrb[0].mxu0 %v7621
    %v7720 = vpop.f32.mrb[0].mxu0
    %v7721 = vadd.f32 %v7365, %v7720
    %v7722 = vpop.f32.mrb[0].mxu0
    %v7723 = vadd.f32 %v7369, %v7722
    %v7724 = vpop.f32.mrb[0].mxu0
    %v7725 = vadd.f32 %v7365, %v7724
    %v7726 = vpop.f32.mrb[0].mxu0
    %v7727 = vadd.f32 %v7369, %v7726
    %7728 = vmatprep.mubr.bf16.mxu0 0
    %7729 = vmatmul.mubr.bf16.gmra.mrb[0].mxu0 %v7624
    %v7730 = vpop.f32.mrb[0].mxu0
    %v7731 = vadd.f32 %v7365, %v7730
    %v7732 = vpop.f32.mrb[0].mxu0
    %v7733 = vadd.f32 %v7369, %v7732
    %v7734 = vpop.f32.mrb[0].mxu0
    %v7735 = vadd.f32 %v7365, %v7734
    %v7736 = vpop.f32.mrb[0].mxu0
    %v7737 = vadd.f32 %v7369, %v7736
    %7738 = vdwg.mxu0
    %7739 = vmatprep.subr.bf16.mxu0 %v7541
    %7740 = vmatpush1.bf16.msra.mxu0 %v7540
    %7741 = vmatprep.subr.bf16.mxu0 %v7557
    %7742 = vmatpush1.bf16.msra.mxu0 %v7556
    %7743 = vmatprep.subr.bf16.mxu0 0
    %7744 = vmatpush1.bf16.msra.mxu0 0
    %7745 = vmatprep.subr.bf16.mxu0 0
    %7746 = vmatpush1.bf16.msra.mxu0 0
    %7747 = vmatprep.subr.bf16.mxu0 0
    %7748 = vmatpush1.bf16.msra.mxu0 0
    %7749 = vmatprep.subr.bf16.mxu0 0
    %7750 = vmatpush1.bf16.msra.mxu0 0
    %7751 = vmatprep.subr.bf16.mxu0 0
    %7752 = vmatpush1.bf16.msra.mxu0 0
    %7753 = vmatprep.subr.bf16.mxu0 0
    %7754 = vmatpush1.bf16.msra.mxu0 0
    %7755 = vmatprep.subr.bf16.mxu0 0
    %7756 = vmatpush1.bf16.msra.mxu0 0
    %7757 = vmatprep.subr.bf16.mxu0 0
    %7758 = vmatpush1.bf16.msra.mxu0 0
    %7759 = vmatprep.subr.bf16.mxu0 0
    %7760 = vmatpush1.bf16.msra.mxu0 0
    %7761 = vmatprep.subr.bf16.mxu0 0
    %7762 = vmatpush1.bf16.msra.mxu0 0
    %7763 = vmatprep.subr.bf16.mxu0 0
    %7764 = vmatpush1.bf16.msra.mxu0 0
    %7765 = vmatprep.subr.bf16.mxu0 0
    %7766 = vmatpush1.bf16.msra.mxu0 0
    %7767 = vmatprep.subr.bf16.mxu0 0
    %7768 = vmatpush1.bf16.msra.mxu0 0
    %7769 = vmatprep.subr.bf16.mxu0 0
    %7770 = vmatpush1.bf16.msra.mxu0 0
    %7771 = vmatprep.mubr.bf16.mxu0 0
    %7772 = vmatmul.mubr.bf16.gmra.mrb[0].mxu0 %v7603
    %v7773 = vpop.f32.mrb[0].mxu0
    %v7774 = vadd.f32 %v7373, %v7773
    %v7775 = vpop.f32.mrb[0].mxu0
    %v7776 = vadd.f32 %v7377, %v7775
    %v7777 = vpop.f32.mrb[0].mxu0
    %v7778 = vadd.f32 %v7373, %v7777
    %v7779 = vpop.f32.mrb[0].mxu0
    %v7780 = vadd.f32 %v7377, %v7779
    %7781 = vmatprep.mubr.bf16.mxu0 0
    %7782 = vmatmul.mubr.bf16.gmra.mrb[0].mxu0 %v7606
    %v7783 = vpop.f32.mrb[0].mxu0
    %v7784 = vadd.f32 %v7373, %v7783
    %v7785 = vpop.f32.mrb[0].mxu0
    %v7786 = vadd.f32 %v7377, %v7785
    %v7787 = vpop.f32.mrb[0].mxu0
    %v7788 = vadd.f32 %v7373, %v7787
    %v7789 = vpop.f32.mrb[0].mxu0
    %v7790 = vadd.f32 %v7377, %v7789
    %7791 = vmatprep.mubr.bf16.mxu0 0
    %7792 = vmatmul.mubr.bf16.gmra.mrb[0].mxu0 %v7609
    %v7793 = vpop.f32.mrb[0].mxu0
    %v7794 = vadd.f32 %v7373, %v7793
    %v7795 = vpop.f32.mrb[0].mxu0
    %v7796 = vadd.f32 %v7377, %v7795
    %v7797 = vpop.f32.mrb[0].mxu0
    %v7798 = vadd.f32 %v7373, %v7797
    %v7799 = vpop.f32.mrb[0].mxu0
    %v7800 = vadd.f32 %v7377, %v7799
    %7801 = vmatprep.mubr.bf16.mxu0 0
    %7802 = vmatmul.mubr.bf16.gmra.mrb[0].mxu0 %v7612
    %v7803 = vpop.f32.mrb[0].mxu0
    %v7804 = vadd.f32 %v7373, %v7803
    %v7805 = vpop.f32.mrb[0].mxu0
    %v7806 = vadd.f32 %v7377, %v7805
    %v7807 = vpop.f32.mrb[0].mxu0
    %v7808 = vadd.f32 %v7373, %v7807
    %v7809 = vpop.f32.mrb[0].mxu0
    %v7810 = vadd.f32 %v7377, %v7809
    %7811 = vmatprep.mubr.bf16.mxu0 0
    %7812 = vmatmul.mubr.bf16.gmra.mrb[0].mxu0 %v7615
    %v7813 = vpop.f32.mrb[0].mxu0
    %v7814 = vadd.f32 %v7373, %v7813
    %v7815 = vpop.f32.mrb[0].mxu0
    %v7816 = vadd.f32 %v7377, %v7815
    %v7817 = vpop.f32.mrb[0].mxu0
    %v7818 = vadd.f32 %v7373, %v7817
    %v7819 = vpop.f32.mrb[0].mxu0
    %v7820 = vadd.f32 %v7377, %v7819
    %7821 = vmatprep.mubr.bf16.mxu0 0
    %7822 = vmatmul.mubr.bf16.gmra.mrb[0].mxu0 %v7618
    %v7823 = vpop.f32.mrb[0].mxu0
    %v7824 = vadd.f32 %v7373, %v7823
    %v7825 = vpop.f32.mrb[0].mxu0
    %v7826 = vadd.f32 %v7377, %v7825
    %v7827 = vpop.f32.mrb[0].mxu0
    %v7828 = vadd.f32 %v7373, %v7827
    %v7829 = vpop.f32.mrb[0].mxu0
    %v7830 = vadd.f32 %v7377, %v7829
    %7831 = vmatprep.mubr.bf16.mxu0 0
    %7832 = vmatmul.mubr.bf16.gmra.mrb[0].mxu0 %v7621
    %v7833 = vpop.f32.mrb[0].mxu0
    %v7834 = vadd.f32 %v7373, %v7833
    %v7835 = vpop.f32.mrb[0].mxu0
    %v7836 = vadd.f32 %v7377, %v7835
    %v7837 = vpop.f32.mrb[0].mxu0
    %v7838 = vadd.f32 %v7373, %v7837
    %v7839 = vpop.f32.mrb[0].mxu0
    %v7840 = vadd.f32 %v7377, %v7839
    %7841 = vmatprep.mubr.bf16.mxu0 0
    %7842 = vmatmul.mubr.bf16.gmra.mrb[0].mxu0 %v7624
    %v7843 = vpop.f32.mrb[0].mxu0
    %v7844 = vadd.f32 %v7373, %v7843
    %v7845 = vpop.f32.mrb[0].mxu0
    %v7846 = vadd.f32 %v7377, %v7845
    %v7847 = vpop.f32.mrb[0].mxu0
    %v7848 = vadd.f32 %v7373, %v7847
    %v7849 = vpop.f32.mrb[0].mxu0
    %v7850 = vadd.f32 %v7377, %v7849
    %7851 = vdwg.mxu0
    %7852 = vmatprep.subr.bf16.mxu0 %v7543
    %7853 = vmatpush1.bf16.msra.mxu0 %v7542
    %7854 = vmatprep.subr.bf16.mxu0 %v7559
    %7855 = vmatpush1.bf16.msra.mxu0 %v7558
    %7856 = vmatprep.subr.bf16.mxu0 0
    %7857 = vmatpush1.bf16.msra.mxu0 0
    %7858 = vmatprep.subr.bf16.mxu0 0
    %7859 = vmatpush1.bf16.msra.mxu0 0
    %7860 = vmatprep.subr.bf16.mxu0 0
    %7861 = vmatpush1.bf16.msra.mxu0 0
    %7862 = vmatprep.subr.bf16.mxu0 0
    %7863 = vmatpush1.bf16.msra.mxu0 0
    %7864 = vmatprep.subr.bf16.mxu0 0
    %7865 = vmatpush1.bf16.msra.mxu0 0
    %7866 = vmatprep.subr.bf16.mxu0 0
    %7867 = vmatpush1.bf16.msra.mxu0 0
    %7868 = vmatprep.subr.bf16.mxu0 0
    %7869 = vmatpush1.bf16.msra.mxu0 0
    %7870 = vmatprep.subr.bf16.mxu0 0
    %7871 = vmatpush1.bf16.msra.mxu0 0
    %7872 = vmatprep.subr.bf16.mxu0 0
    %7873 = vmatpush1.bf16.msra.mxu0 0
    %7874 = vmatprep.subr.bf16.mxu0 0
    %7875 = vmatpush1.bf16.msra.mxu0 0
    %7876 = vmatprep.subr.bf16.mxu0 0
    %7877 = vmatpush1.bf16.msra.mxu0 0
    %7878 = vmatprep.subr.bf16.mxu0 0
    %7879 = vmatpush1.bf16.msra.mxu0 0
    %7880 = vmatprep.subr.bf16.mxu0 0
    %7881 = vmatpush1.bf16.msra.mxu0 0
    %7882 = vmatprep.subr.bf16.mxu0 0
    %7883 = vmatpush1.bf16.msra.mxu0 0
    %7884 = vmatprep.mubr.bf16.mxu0 0
    %7885 = vmatmul.mubr.bf16.gmra.mrb[0].mxu0 %v7603
    %v7886 = vpop.f32.mrb[0].mxu0
    %v7887 = vadd.f32 %v7381, %v7886
    %v7888 = vpop.f32.mrb[0].mxu0
    %v7889 = vadd.f32 %v7385, %v7888
    %v7890 = vpop.f32.mrb[0].mxu0
    %v7891 = vadd.f32 %v7381, %v7890
    %v7892 = vpop.f32.mrb[0].mxu0
    %v7893 = vadd.f32 %v7385, %v7892
    %7894 = vmatprep.mubr.bf16.mxu0 0
    %7895 = vmatmul.mubr.bf16.gmra.mrb[0].mxu0 %v7606
    %v7896 = vpop.f32.mrb[0].mxu0
    %v7897 = vadd.f32 %v7381, %v7896
    %v7898 = vpop.f32.mrb[0].mxu0
    %v7899 = vadd.f32 %v7385, %v7898
    %v7900 = vpop.f32.mrb[0].mxu0
    %v7901 = vadd.f32 %v7381, %v7900
    %v7902 = vpop.f32.mrb[0].mxu0
    %v7903 = vadd.f32 %v7385, %v7902
    %7904 = vmatprep.mubr.bf16.mxu0 0
    %7905 = vmatmul.mubr.bf16.gmra.mrb[0].mxu0 %v7609
    %v7906 = vpop.f32.mrb[0].mxu0
    %v7907 = vadd.f32 %v7381, %v7906
    %v7908 = vpop.f32.mrb[0].mxu0
    %v7909 = vadd.f32 %v7385, %v7908
    %v7910 = vpop.f32.mrb[0].mxu0
    %v7911 = vadd.f32 %v7381, %v7910
    %v7912 = vpop.f32.mrb[0].mxu0
    %v7913 = vadd.f32 %v7385, %v7912
    %7914 = vmatprep.mubr.bf16.mxu0 0
    %7915 = vmatmul.mubr.bf16.gmra.mrb[0].mxu0 %v7612
    %v7916 = vpop.f32.mrb[0].mxu0
    %v7917 = vadd.f32 %v7381, %v7916
    %v7918 = vpop.f32.mrb[0].mxu0
    %v7919 = vadd.f32 %v7385, %v7918
    %v7920 = vpop.f32.mrb[0].mxu0
    %v7921 = vadd.f32 %v7381, %v7920
    %v7922 = vpop.f32.mrb[0].mxu0
    %v7923 = vadd.f32 %v7385, %v7922
    %7924 = vmatprep.mubr.bf16.mxu0 0
    %7925 = vmatmul.mubr.bf16.gmra.mrb[0].mxu0 %v7615
    %v7926 = vpop.f32.mrb[0].mxu0
    %v7927 = vadd.f32 %v7381, %v7926
    %v7928 = vpop.f32.mrb[0].mxu0
    %v7929 = vadd.f32 %v7385, %v7928
    %v7930 = vpop.f32.mrb[0].mxu0
    %v7931 = vadd.f32 %v7381, %v7930
    %v7932 = vpop.f32.mrb[0].mxu0
    %v7933 = vadd.f32 %v7385, %v7932
    %7934 = vmatprep.mubr.bf16.mxu0 0
    %7935 = vmatmul.mubr.bf16.gmra.mrb[0].mxu0 %v7618
    %v7936 = vpop.f32.mrb[0].mxu0
    %v7937 = vadd.f32 %v7381, %v7936
    %v7938 = vpop.f32.mrb[0].mxu0
    %v7939 = vadd.f32 %v7385, %v7938
    %v7940 = vpop.f32.mrb[0].mxu0
    %v7941 = vadd.f32 %v7381, %v7940
    %v7942 = vpop.f32.mrb[0].mxu0
    %v7943 = vadd.f32 %v7385, %v7942
    %7944 = vmatprep.mubr.bf16.mxu0 0
    %7945 = vmatmul.mubr.bf16.gmra.mrb[0].mxu0 %v7621
    %v7946 = vpop.f32.mrb[0].mxu0
    %v7947 = vadd.f32 %v7381, %v7946
    %v7948 = vpop.f32.mrb[0].mxu0
    %v7949 = vadd.f32 %v7385, %v7948
    %v7950 = vpop.f32.mrb[0].mxu0
    %v7951 = vadd.f32 %v7381, %v7950
    %v7952 = vpop.f32.mrb[0].mxu0
    %v7953 = vadd.f32 %v7385, %v7952
    %7954 = vmatprep.mubr.bf16.mxu0 0
    %7955 = vmatmul.mubr.bf16.gmra.mrb[0].mxu0 %v7624
    %v7956 = vpop.f32.mrb[0].mxu0
    %v7957 = vadd.f32 %v7381, %v7956
    %v7958 = vpop.f32.mrb[0].mxu0
    %v7959 = vadd.f32 %v7385, %v7958
    %v7960 = vpop.f32.mrb[0].mxu0
    %v7961 = vadd.f32 %v7381, %v7960
    %v7962 = vpop.f32.mrb[0].mxu0
    %v7963 = vadd.f32 %v7385, %v7962
    %7964 = vdwg.mxu0
    %7965 = vmatprep.subr.bf16.mxu0 %v7545
    %7966 = vmatpush1.bf16.msra.mxu0 %v7544
    %7967 = vmatprep.subr.bf16.mxu0 %v7561
    %7968 = vmatpush1.bf16.msra.mxu0 %v7560
    %7969 = vmatprep.subr.bf16.mxu0 0
    %7970 = vmatpush1.bf16.msra.mxu0 0
    %7971 = vmatprep.subr.bf16.mxu0 0
    %7972 = vmatpush1.bf16.msra.mxu0 0
    %7973 = vmatprep.subr.bf16.mxu0 0
    %7974 = vmatpush1.bf16.msra.mxu0 0
    %7975 = vmatprep.subr.bf16.mxu0 0
    %7976 = vmatpush1.bf16.msra.mxu0 0
    %7977 = vmatprep.subr.bf16.mxu0 0
    %7978 = vmatpush1.bf16.msra.mxu0 0
    %7979 = vmatprep.subr.bf16.mxu0 0
    %7980 = vmatpush1.bf16.msra.mxu0 0
    %7981 = vmatprep.subr.bf16.mxu0 0
    %7982 = vmatpush1.bf16.msra.mxu0 0
    %7983 = vmatprep.subr.bf16.mxu0 0
    %7984 = vmatpush1.bf16.msra.mxu0 0
    %7985 = vmatprep.subr.bf16.mxu0 0
    %7986 = vmatpush1.bf16.msra.mxu0 0
    %7987 = vmatprep.subr.bf16.mxu0 0
    %7988 = vmatpush1.bf16.msra.mxu0 0
    %7989 = vmatprep.subr.bf16.mxu0 0
    %7990 = vmatpush1.bf16.msra.mxu0 0
    %7991 = vmatprep.subr.bf16.mxu0 0
    %7992 = vmatpush1.bf16.msra.mxu0 0
    %7993 = vmatprep.subr.bf16.mxu0 0
    %7994 = vmatpush1.bf16.msra.mxu0 0
    %7995 = vmatprep.subr.bf16.mxu0 0
    %7996 = vmatpush1.bf16.msra.mxu0 0
    %7997 = vmatprep.mubr.bf16.mxu0 0
    %7998 = vmatmul.mubr.bf16.gmra.mrb[0].mxu0 %v7603
    %v7999 = vpop.f32.mrb[0].mxu0
    %v8000 = vadd.f32 %v7389, %v7999
    %v8001 = vpop.f32.mrb[0].mxu0
    %v8002 = vadd.f32 %v7393, %v8001
    %v8003 = vpop.f32.mrb[0].mxu0
    %v8004 = vadd.f32 %v7389, %v8003
    %v8005 = vpop.f32.mrb[0].mxu0
    %v8006 = vadd.f32 %v7393, %v8005
    %8007 = vmatprep.mubr.bf16.mxu0 0
    %8008 = vmatmul.mubr.bf16.gmra.mrb[0].mxu0 %v7606
    %v8009 = vpop.f32.mrb[0].mxu0
    %v8010 = vadd.f32 %v7389, %v8009
    %v8011 = vpop.f32.mrb[0].mxu0
    %v8012 = vadd.f32 %v7393, %v8011
    %v8013 = vpop.f32.mrb[0].mxu0
    %v8014 = vadd.f32 %v7389, %v8013
    %v8015 = vpop.f32.mrb[0].mxu0
    %v8016 = vadd.f32 %v7393, %v8015
    %8017 = vmatprep.mubr.bf16.mxu0 0
    %8018 = vmatmul.mubr.bf16.gmra.mrb[0].mxu0 %v7609
    %v8019 = vpop.f32.mrb[0].mxu0
    %v8020 = vadd.f32 %v7389, %v8019
    %v8021 = vpop.f32.mrb[0].mxu0
    %v8022 = vadd.f32 %v7393, %v8021
    %v8023 = vpop.f32.mrb[0].mxu0
    %v8024 = vadd.f32 %v7389, %v8023
    %v8025 = vpop.f32.mrb[0].mxu0
    %v8026 = vadd.f32 %v7393, %v8025
    %8027 = vmatprep.mubr.bf16.mxu0 0
    %8028 = vmatmul.mubr.bf16.gmra.mrb[0].mxu0 %v7612
    %v8029 = vpop.f32.mrb[0].mxu0
    %v8030 = vadd.f32 %v7389, %v8029
    %v8031 = vpop.f32.mrb[0].mxu0
    %v8032 = vadd.f32 %v7393, %v8031
    %v8033 = vpop.f32.mrb[0].mxu0
    %v8034 = vadd.f32 %v7389, %v8033
    %v8035 = vpop.f32.mrb[0].mxu0
    %v8036 = vadd.f32 %v7393, %v8035
    %8037 = vmatprep.mubr.bf16.mxu0 0
    %8038 = vmatmul.mubr.bf16.gmra.mrb[0].mxu0 %v7615
    %v8039 = vpop.f32.mrb[0].mxu0
    %v8040 = vadd.f32 %v7389, %v8039
    %v8041 = vpop.f32.mrb[0].mxu0
    %v8042 = vadd.f32 %v7393, %v8041
    %v8043 = vpop.f32.mrb[0].mxu0
    %v8044 = vadd.f32 %v7389, %v8043
    %v8045 = vpop.f32.mrb[0].mxu0
    %v8046 = vadd.f32 %v7393, %v8045
    %8047 = vmatprep.mubr.bf16.mxu0 0
    %8048 = vmatmul.mubr.bf16.gmra.mrb[0].mxu0 %v7618
    %v8049 = vpop.f32.mrb[0].mxu0
    %v8050 = vadd.f32 %v7389, %v8049
    %v8051 = vpop.f32.mrb[0].mxu0
    %v8052 = vadd.f32 %v7393, %v8051
    %v8053 = vpop.f32.mrb[0].mxu0
    %v8054 = vadd.f32 %v7389, %v8053
    %v8055 = vpop.f32.mrb[0].mxu0
    %v8056 = vadd.f32 %v7393, %v8055
    %8057 = vmatprep.mubr.bf16.mxu0 0
    %8058 = vmatmul.mubr.bf16.gmra.mrb[0].mxu0 %v7621
    %v8059 = vpop.f32.mrb[0].mxu0
    %v8060 = vadd.f32 %v7389, %v8059
    %v8061 = vpop.f32.mrb[0].mxu0
    %v8062 = vadd.f32 %v7393, %v8061
    %v8063 = vpop.f32.mrb[0].mxu0
    %v8064 = vadd.f32 %v7389, %v8063
    %v8065 = vpop.f32.mrb[0].mxu0
    %v8066 = vadd.f32 %v7393, %v8065
    %8067 = vmatprep.mubr.bf16.mxu0 0
    %8068 = vmatmul.mubr.bf16.gmra.mrb[0].mxu0 %v7624
    %v8069 = vpop.f32.mrb[0].mxu0
    %v8070 = vadd.f32 %v7389, %v8069
    %v8071 = vpop.f32.mrb[0].mxu0
    %v8072 = vadd.f32 %v7393, %v8071
    %v8073 = vpop.f32.mrb[0].mxu0
    %v8074 = vadd.f32 %v7389, %v8073
    %v8075 = vpop.f32.mrb[0].mxu0
    %v8076 = vadd.f32 %v7393, %v8075
    %8077 = vdwg.mxu0
    %8078 = vmatprep.subr.bf16.mxu0 %v7547
    %8079 = vmatpush1.bf16.msra.mxu0 %v7546
    %8080 = vmatprep.subr.bf16.mxu0 %v7563
    %8081 = vmatpush1.bf16.msra.mxu0 %v7562
    %8082 = vmatprep.subr.bf16.mxu0 0
    %8083 = vmatpush1.bf16.msra.mxu0 0
    %8084 = vmatprep.subr.bf16.mxu0 0
    %8085 = vmatpush1.bf16.msra.mxu0 0
    %8086 = vmatprep.subr.bf16.mxu0 0
    %8087 = vmatpush1.bf16.msra.mxu0 0
    %8088 = vmatprep.subr.bf16.mxu0 0
    %8089 = vmatpush1.bf16.msra.mxu0 0
    %8090 = vmatprep.subr.bf16.mxu0 0
    %8091 = vmatpush1.bf16.msra.mxu0 0
    %8092 = vmatprep.subr.bf16.mxu0 0
    %8093 = vmatpush1.bf16.msra.mxu0 0
    %8094 = vmatprep.subr.bf16.mxu0 0
    %8095 = vmatpush1.bf16.msra.mxu0 0
    %8096 = vmatprep.subr.bf16.mxu0 0
    %8097 = vmatpush1.bf16.msra.mxu0 0
    %8098 = vmatprep.subr.bf16.mxu0 0
    %8099 = vmatpush1.bf16.msra.mxu0 0
    %8100 = vmatprep.subr.bf16.mxu0 0
    %8101 = vmatpush1.bf16.msra.mxu0 0
    %8102 = vmatprep.subr.bf16.mxu0 0
    %8103 = vmatpush1.bf16.msra.mxu0 0
    %8104 = vmatprep.subr.bf16.mxu0 0
    %8105 = vmatpush1.bf16.msra.mxu0 0
    %8106 = vmatprep.subr.bf16.mxu0 0
    %8107 = vmatpush1.bf16.msra.mxu0 0
    %8108 = vmatprep.subr.bf16.mxu0 0
    %8109 = vmatpush1.bf16.msra.mxu0 0
    %8110 = vmatprep.mubr.bf16.mxu0 0
    %8111 = vmatmul.mubr.bf16.gmra.mrb[0].mxu0 %v7603
    %v8112 = vpop.f32.mrb[0].mxu0
    %v8113 = vadd.f32 %v7397, %v8112
    %v8114 = vpop.f32.mrb[0].mxu0
    %v8115 = vadd.f32 %v7401, %v8114
    %v8116 = vpop.f32.mrb[0].mxu0
    %v8117 = vadd.f32 %v7397, %v8116
    %v8118 = vpop.f32.mrb[0].mxu0
    %v8119 = vadd.f32 %v7401, %v8118
    %8120 = vmatprep.mubr.bf16.mxu0 0
    %8121 = vmatmul.mubr.bf16.gmra.mrb[0].mxu0 %v7606
    %v8122 = vpop.f32.mrb[0].mxu0
    %v8123 = vadd.f32 %v7397, %v8122
    %v8124 = vpop.f32.mrb[0].mxu0
    %v8125 = vadd.f32 %v7401, %v8124
    %v8126 = vpop.f32.mrb[0].mxu0
    %v8127 = vadd.f32 %v7397, %v8126
    %v8128 = vpop.f32.mrb[0].mxu0
    %v8129 = vadd.f32 %v7401, %v8128
    %8130 = vmatprep.mubr.bf16.mxu0 0
    %8131 = vmatmul.mubr.bf16.gmra.mrb[0].mxu0 %v7609
    %v8132 = vpop.f32.mrb[0].mxu0
    %v8133 = vadd.f32 %v7397, %v8132
    %v8134 = vpop.f32.mrb[0].mxu0
    %v8135 = vadd.f32 %v7401, %v8134
    %v8136 = vpop.f32.mrb[0].mxu0
    %v8137 = vadd.f32 %v7397, %v8136
    %v8138 = vpop.f32.mrb[0].mxu0
    %v8139 = vadd.f32 %v7401, %v8138
    %8140 = vmatprep.mubr.bf16.mxu0 0
    %8141 = vmatmul.mubr.bf16.gmra.mrb[0].mxu0 %v7612
    %v8142 = vpop.f32.mrb[0].mxu0
    %v8143 = vadd.f32 %v7397, %v8142
    %v8144 = vpop.f32.mrb[0].mxu0
    %v8145 = vadd.f32 %v7401, %v8144
    %v8146 = vpop.f32.mrb[0].mxu0
    %v8147 = vadd.f32 %v7397, %v8146
    %v8148 = vpop.f32.mrb[0].mxu0
    %v8149 = vadd.f32 %v7401, %v8148
    %8150 = vmatprep.mubr.bf16.mxu0 0
    %8151 = vmatmul.mubr.bf16.gmra.mrb[0].mxu0 %v7615
    %v8152 = vpop.f32.mrb[0].mxu0
    %v8153 = vadd.f32 %v7397, %v8152
    %v8154 = vpop.f32.mrb[0].mxu0
    %v8155 = vadd.f32 %v7401, %v8154
    %v8156 = vpop.f32.mrb[0].mxu0
    %v8157 = vadd.f32 %v7397, %v8156
    %v8158 = vpop.f32.mrb[0].mxu0
    %v8159 = vadd.f32 %v7401, %v8158
    %8160 = vmatprep.mubr.bf16.mxu0 0
    %8161 = vmatmul.mubr.bf16.gmra.mrb[0].mxu0 %v7618
    %v8162 = vpop.f32.mrb[0].mxu0
    %v8163 = vadd.f32 %v7397, %v8162
    %v8164 = vpop.f32.mrb[0].mxu0
    %v8165 = vadd.f32 %v7401, %v8164
    %v8166 = vpop.f32.mrb[0].mxu0
    %v8167 = vadd.f32 %v7397, %v8166
    %v8168 = vpop.f32.mrb[0].mxu0
    %v8169 = vadd.f32 %v7401, %v8168
    %8170 = vmatprep.mubr.bf16.mxu0 0
    %8171 = vmatmul.mubr.bf16.gmra.mrb[0].mxu0 %v7621
    %v8172 = vpop.f32.mrb[0].mxu0
    %v8173 = vadd.f32 %v7397, %v8172
    %v8174 = vpop.f32.mrb[0].mxu0
    %v8175 = vadd.f32 %v7401, %v8174
    %v8176 = vpop.f32.mrb[0].mxu0
    %v8177 = vadd.f32 %v7397, %v8176
    %v8178 = vpop.f32.mrb[0].mxu0
    %v8179 = vadd.f32 %v7401, %v8178
    %8180 = vmatprep.mubr.bf16.mxu0 0
    %8181 = vmatmul.mubr.bf16.gmra.mrb[0].mxu0 %v7624
    %v8182 = vpop.f32.mrb[0].mxu0
    %v8183 = vadd.f32 %v7397, %v8182
    %v8184 = vpop.f32.mrb[0].mxu0
    %v8185 = vadd.f32 %v7401, %v8184
    %v8186 = vpop.f32.mrb[0].mxu0
    %v8187 = vadd.f32 %v7397, %v8186
    %v8188 = vpop.f32.mrb[0].mxu0
    %v8189 = vadd.f32 %v7401, %v8188
    %8190 = vdwg.mxu0
    %8191 = vmatprep.subr.bf16.mxu0 %v7549
    %8192 = vmatpush1.bf16.msra.mxu0 %v7548
    %8193 = vmatprep.subr.bf16.mxu0 %v7565
    %8194 = vmatpush1.bf16.msra.mxu0 %v7564
    %8195 = vmatprep.subr.bf16.mxu0 0
    %8196 = vmatpush1.bf16.msra.mxu0 0
    %8197 = vmatprep.subr.bf16.mxu0 0
    %8198 = vmatpush1.bf16.msra.mxu0 0
    %8199 = vmatprep.subr.bf16.mxu0 0
    %8200 = vmatpush1.bf16.msra.mxu0 0
    %8201 = vmatprep.subr.bf16.mxu0 0
    %8202 = vmatpush1.bf16.msra.mxu0 0
    %8203 = vmatprep.subr.bf16.mxu0 0
    %8204 = vmatpush1.bf16.msra.mxu0 0
    %8205 = vmatprep.subr.bf16.mxu0 0
    %8206 = vmatpush1.bf16.msra.mxu0 0
    %8207 = vmatprep.subr.bf16.mxu0 0
    %8208 = vmatpush1.bf16.msra.mxu0 0
    %8209 = vmatprep.subr.bf16.mxu0 0
    %8210 = vmatpush1.bf16.msra.mxu0 0
    %8211 = vmatprep.subr.bf16.mxu0 0
    %8212 = vmatpush1.bf16.msra.mxu0 0
    %8213 = vmatprep.subr.bf16.mxu0 0
    %8214 = vmatpush1.bf16.msra.mxu0 0
    %8215 = vmatprep.subr.bf16.mxu0 0
    %8216 = vmatpush1.bf16.msra.mxu0 0
    %8217 = vmatprep.subr.bf16.mxu0 0
    %8218 = vmatpush1.bf16.msra.mxu0 0
    %8219 = vmatprep.subr.bf16.mxu0 0
    %8220 = vmatpush1.bf16.msra.mxu0 0
    %8221 = vmatprep.subr.bf16.mxu0 0
    %8222 = vmatpush1.bf16.msra.mxu0 0
    %8223 = vmatprep.mubr.bf16.mxu0 0
    %8224 = vmatmul.mubr.bf16.gmra.mrb[0].mxu0 %v7603
    %v8225 = vpop.f32.mrb[0].mxu0
    %v8226 = vadd.f32 %v7405, %v8225
    %v8227 = vpop.f32.mrb[0].mxu0
    %v8228 = vadd.f32 %v7409, %v8227
    %v8229 = vpop.f32.mrb[0].mxu0
    %v8230 = vadd.f32 %v7405, %v8229
    %v8231 = vpop.f32.mrb[0].mxu0
    %v8232 = vadd.f32 %v7409, %v8231
    %8233 = vmatprep.mubr.bf16.mxu0 0
    %8234 = vmatmul.mubr.bf16.gmra.mrb[0].mxu0 %v7606
    %v8235 = vpop.f32.mrb[0].mxu0
    %v8236 = vadd.f32 %v7405, %v8235
    %v8237 = vpop.f32.mrb[0].mxu0
    %v8238 = vadd.f32 %v7409, %v8237
    %v8239 = vpop.f32.mrb[0].mxu0
    %v8240 = vadd.f32 %v7405, %v8239
    %v8241 = vpop.f32.mrb[0].mxu0
    %v8242 = vadd.f32 %v7409, %v8241
    %8243 = vmatprep.mubr.bf16.mxu0 0
    %8244 = vmatmul.mubr.bf16.gmra.mrb[0].mxu0 %v7609
    %v8245 = vpop.f32.mrb[0].mxu0
    %v8246 = vadd.f32 %v7405, %v8245
    %v8247 = vpop.f32.mrb[0].mxu0
    %v8248 = vadd.f32 %v7409, %v8247
    %v8249 = vpop.f32.mrb[0].mxu0
    %v8250 = vadd.f32 %v7405, %v8249
    %v8251 = vpop.f32.mrb[0].mxu0
    %v8252 = vadd.f32 %v7409, %v8251
    %8253 = vmatprep.mubr.bf16.mxu0 0
    %8254 = vmatmul.mubr.bf16.gmra.mrb[0].mxu0 %v7612
    %v8255 = vpop.f32.mrb[0].mxu0
    %v8256 = vadd.f32 %v7405, %v8255
    %v8257 = vpop.f32.mrb[0].mxu0
    %v8258 = vadd.f32 %v7409, %v8257
    %v8259 = vpop.f32.mrb[0].mxu0
    %v8260 = vadd.f32 %v7405, %v8259
    %v8261 = vpop.f32.mrb[0].mxu0
    %v8262 = vadd.f32 %v7409, %v8261
    %8263 = vmatprep.mubr.bf16.mxu0 0
    %8264 = vmatmul.mubr.bf16.gmra.mrb[0].mxu0 %v7615
    %v8265 = vpop.f32.mrb[0].mxu0
    %v8266 = vadd.f32 %v7405, %v8265
    %v8267 = vpop.f32.mrb[0].mxu0
    %v8268 = vadd.f32 %v7409, %v8267
    %v8269 = vpop.f32.mrb[0].mxu0
    %v8270 = vadd.f32 %v7405, %v8269
    %v8271 = vpop.f32.mrb[0].mxu0
    %v8272 = vadd.f32 %v7409, %v8271
    %8273 = vmatprep.mubr.bf16.mxu0 0
    %8274 = vmatmul.mubr.bf16.gmra.mrb[0].mxu0 %v7618
    %v8275 = vpop.f32.mrb[0].mxu0
    %v8276 = vadd.f32 %v7405, %v8275
    %v8277 = vpop.f32.mrb[0].mxu0
    %v8278 = vadd.f32 %v7409, %v8277
    %v8279 = vpop.f32.mrb[0].mxu0
    %v8280 = vadd.f32 %v7405, %v8279
    %v8281 = vpop.f32.mrb[0].mxu0
    %v8282 = vadd.f32 %v7409, %v8281
    %8283 = vmatprep.mubr.bf16.mxu0 0
    %8284 = vmatmul.mubr.bf16.gmra.mrb[0].mxu0 %v7621
    %v8285 = vpop.f32.mrb[0].mxu0
    %v8286 = vadd.f32 %v7405, %v8285
    %v8287 = vpop.f32.mrb[0].mxu0
    %v8288 = vadd.f32 %v7409, %v8287
    %v8289 = vpop.f32.mrb[0].mxu0
    %v8290 = vadd.f32 %v7405, %v8289
    %v8291 = vpop.f32.mrb[0].mxu0
    %v8292 = vadd.f32 %v7409, %v8291
    %8293 = vmatprep.mubr.bf16.mxu0 0
    %8294 = vmatmul.mubr.bf16.gmra.mrb[0].mxu0 %v7624
    %v8295 = vpop.f32.mrb[0].mxu0
    %v8296 = vadd.f32 %v7405, %v8295
    %v8297 = vpop.f32.mrb[0].mxu0
    %v8298 = vadd.f32 %v7409, %v8297
    %v8299 = vpop.f32.mrb[0].mxu0
    %v8300 = vadd.f32 %v7405, %v8299
    %v8301 = vpop.f32.mrb[0].mxu0
    %v8302 = vadd.f32 %v7409, %v8301
    %8303 = vdwg.mxu0
    %8304 = vmatprep.subr.bf16.mxu0 %v7551
    %8305 = vmatpush1.bf16.msra.mxu0 %v7550
    %8306 = vmatprep.subr.bf16.mxu0 %v7567
    %8307 = vmatpush1.bf16.msra.mxu0 %v7566
    %8308 = vmatprep.subr.bf16.mxu0 0
    %8309 = vmatpush1.bf16.msra.mxu0 0
    %8310 = vmatprep.subr.bf16.mxu0 0
    %8311 = vmatpush1.bf16.msra.mxu0 0
    %8312 = vmatprep.subr.bf16.mxu0 0
    %8313 = vmatpush1.bf16.msra.mxu0 0
    %8314 = vmatprep.subr.bf16.mxu0 0
    %8315 = vmatpush1.bf16.msra.mxu0 0
    %8316 = vmatprep.subr.bf16.mxu0 0
    %8317 = vmatpush1.bf16.msra.mxu0 0
    %8318 = vmatprep.subr.bf16.mxu0 0
    %8319 = vmatpush1.bf16.msra.mxu0 0
    %8320 = vmatprep.subr.bf16.mxu0 0
    %8321 = vmatpush1.bf16.msra.mxu0 0
    %8322 = vmatprep.subr.bf16.mxu0 0
    %8323 = vmatpush1.bf16.msra.mxu0 0
    %8324 = vmatprep.subr.bf16.mxu0 0
    %8325 = vmatpush1.bf16.msra.mxu0 0
    %8326 = vmatprep.subr.bf16.mxu0 0
    %8327 = vmatpush1.bf16.msra.mxu0 0
    %8328 = vmatprep.subr.bf16.mxu0 0
    %8329 = vmatpush1.bf16.msra.mxu0 0
    %8330 = vmatprep.subr.bf16.mxu0 0
    %8331 = vmatpush1.bf16.msra.mxu0 0
    %8332 = vmatprep.subr.bf16.mxu0 0
    %8333 = vmatpush1.bf16.msra.mxu0 0
    %8334 = vmatprep.subr.bf16.mxu0 0
    %8335 = vmatpush1.bf16.msra.mxu0 0
    %8336 = vmatprep.mubr.bf16.mxu0 0
    %8337 = vmatmul.mubr.bf16.gmra.mrb[0].mxu0 %v7603
    %v8338 = vpop.f32.mrb[0].mxu0
    %v8339 = vadd.f32 %v7413, %v8338
    %v8340 = vpop.f32.mrb[0].mxu0
    %v8341 = vadd.f32 %v7417, %v8340
    %v8342 = vpop.f32.mrb[0].mxu0
    %v8343 = vadd.f32 %v7413, %v8342
    %v8344 = vpop.f32.mrb[0].mxu0
    %v8345 = vadd.f32 %v7417, %v8344
    %8346 = vmatprep.mubr.bf16.mxu0 0
    %8347 = vmatmul.mubr.bf16.gmra.mrb[0].mxu0 %v7606
    %v8348 = vpop.f32.mrb[0].mxu0
    %v8349 = vadd.f32 %v7413, %v8348
    %v8350 = vpop.f32.mrb[0].mxu0
    %v8351 = vadd.f32 %v7417, %v8350
    %v8352 = vpop.f32.mrb[0].mxu0
    %v8353 = vadd.f32 %v7413, %v8352
    %v8354 = vpop.f32.mrb[0].mxu0
    %v8355 = vadd.f32 %v7417, %v8354
    %8356 = vmatprep.mubr.bf16.mxu0 0
    %8357 = vmatmul.mubr.bf16.gmra.mrb[0].mxu0 %v7609
    %v8358 = vpop.f32.mrb[0].mxu0
    %v8359 = vadd.f32 %v7413, %v8358
    %v8360 = vpop.f32.mrb[0].mxu0
    %v8361 = vadd.f32 %v7417, %v8360
    %v8362 = vpop.f32.mrb[0].mxu0
    %v8363 = vadd.f32 %v7413, %v8362
    %v8364 = vpop.f32.mrb[0].mxu0
    %v8365 = vadd.f32 %v7417, %v8364
    %8366 = vmatprep.mubr.bf16.mxu0 0
    %8367 = vmatmul.mubr.bf16.gmra.mrb[0].mxu0 %v7612
    %v8368 = vpop.f32.mrb[0].mxu0
    %v8369 = vadd.f32 %v7413, %v8368
    %v8370 = vpop.f32.mrb[0].mxu0
    %v8371 = vadd.f32 %v7417, %v8370
    %v8372 = vpop.f32.mrb[0].mxu0
    %v8373 = vadd.f32 %v7413, %v8372
    %v8374 = vpop.f32.mrb[0].mxu0
    %v8375 = vadd.f32 %v7417, %v8374
    %8376 = vmatprep.mubr.bf16.mxu0 0
    %8377 = vmatmul.mubr.bf16.gmra.mrb[0].mxu0 %v7615
    %v8378 = vpop.f32.mrb[0].mxu0
    %v8379 = vadd.f32 %v7413, %v8378
    %v8380 = vpop.f32.mrb[0].mxu0
    %v8381 = vadd.f32 %v7417, %v8380
    %v8382 = vpop.f32.mrb[0].mxu0
    %v8383 = vadd.f32 %v7413, %v8382
    %v8384 = vpop.f32.mrb[0].mxu0
    %v8385 = vadd.f32 %v7417, %v8384
    %8386 = vmatprep.mubr.bf16.mxu0 0
    %8387 = vmatmul.mubr.bf16.gmra.mrb[0].mxu0 %v7618
    %v8388 = vpop.f32.mrb[0].mxu0
    %v8389 = vadd.f32 %v7413, %v8388
    %v8390 = vpop.f32.mrb[0].mxu0
    %v8391 = vadd.f32 %v7417, %v8390
    %v8392 = vpop.f32.mrb[0].mxu0
    %v8393 = vadd.f32 %v7413, %v8392
    %v8394 = vpop.f32.mrb[0].mxu0
    %v8395 = vadd.f32 %v7417, %v8394
    %8396 = vmatprep.mubr.bf16.mxu0 0
    %8397 = vmatmul.mubr.bf16.gmra.mrb[0].mxu0 %v7621
    %v8398 = vpop.f32.mrb[0].mxu0
    %v8399 = vadd.f32 %v7413, %v8398
    %v8400 = vpop.f32.mrb[0].mxu0
    %v8401 = vadd.f32 %v7417, %v8400
    %v8402 = vpop.f32.mrb[0].mxu0
    %v8403 = vadd.f32 %v7413, %v8402
    %v8404 = vpop.f32.mrb[0].mxu0
    %v8405 = vadd.f32 %v7417, %v8404
    %8406 = vmatprep.mubr.bf16.mxu0 0
    %8407 = vmatmul.mubr.bf16.gmra.mrb[0].mxu0 %v7624
    %v8408 = vpop.f32.mrb[0].mxu0
    %v8409 = vadd.f32 %v7413, %v8408
    %v8410 = vpop.f32.mrb[0].mxu0
    %v8411 = vadd.f32 %v7417, %v8410
    %v8412 = vpop.f32.mrb[0].mxu0
    %v8413 = vadd.f32 %v7413, %v8412
    %v8414 = vpop.f32.mrb[0].mxu0
    %v8415 = vadd.f32 %v7417, %v8414
    %8416 = vdwg.mxu0
    %8417 = vmatprep.subr.bf16.mxu0 %v7553
    %8418 = vmatpush1.bf16.msra.mxu0 %v7552
    %8419 = vmatprep.subr.bf16.mxu0 %v7569
    %8420 = vmatpush1.bf16.msra.mxu0 %v7568
    %8421 = vmatprep.subr.bf16.mxu0 0
    %8422 = vmatpush1.bf16.msra.mxu0 0
    %8423 = vmatprep.subr.bf16.mxu0 0
    %8424 = vmatpush1.bf16.msra.mxu0 0
    %8425 = vmatprep.subr.bf16.mxu0 0
    %8426 = vmatpush1.bf16.msra.mxu0 0
    %8427 = vmatprep.subr.bf16.mxu0 0
    %8428 = vmatpush1.bf16.msra.mxu0 0
    %8429 = vmatprep.subr.bf16.mxu0 0
    %8430 = vmatpush1.bf16.msra.mxu0 0
    %8431 = vmatprep.subr.bf16.mxu0 0
    %8432 = vmatpush1.bf16.msra.mxu0 0
    %8433 = vmatprep.subr.bf16.mxu0 0
    %8434 = vmatpush1.bf16.msra.mxu0 0
    %8435 = vmatprep.subr.bf16.mxu0 0
    %8436 = vmatpush1.bf16.msra.mxu0 0
    %8437 = vmatprep.subr.bf16.mxu0 0
    %8438 = vmatpush1.bf16.msra.mxu0 0
    %8439 = vmatprep.subr.bf16.mxu0 0
    %8440 = vmatpush1.bf16.msra.mxu0 0
    %8441 = vmatprep.subr.bf16.mxu0 0
    %8442 = vmatpush1.bf16.msra.mxu0 0
    %8443 = vmatprep.subr.bf16.mxu0 0
    %8444 = vmatpush1.bf16.msra.mxu0 0
    %8445 = vmatprep.subr.bf16.mxu0 0
    %8446 = vmatpush1.bf16.msra.mxu0 0
    %8447 = vmatprep.subr.bf16.mxu0 0
    %8448 = vmatpush1.bf16.msra.mxu0 0
    %8449 = vmatprep.mubr.bf16.mxu0 0
    %8450 = vmatmul.mubr.bf16.gmra.mrb[0].mxu0 %v7603
    %v8451 = vpop.f32.mrb[0].mxu0
    %v8452 = vadd.f32 %v7421, %v8451
    %v8453 = vpop.f32.mrb[0].mxu0
    %v8454 = vadd.f32 %v7425, %v8453
    %v8455 = vpop.f32.mrb[0].mxu0
    %v8456 = vadd.f32 %v7421, %v8455
    %v8457 = vpop.f32.mrb[0].mxu0
    %v8458 = vadd.f32 %v7425, %v8457
    %8459 = vmatprep.mubr.bf16.mxu0 0
    %8460 = vmatmul.mubr.bf16.gmra.mrb[0].mxu0 %v7606
    %v8461 = vpop.f32.mrb[0].mxu0
    %v8462 = vadd.f32 %v7421, %v8461
    %v8463 = vpop.f32.mrb[0].mxu0
    %v8464 = vadd.f32 %v7425, %v8463
    %v8465 = vpop.f32.mrb[0].mxu0
    %v8466 = vadd.f32 %v7421, %v8465
    %v8467 = vpop.f32.mrb[0].mxu0
    %v8468 = vadd.f32 %v7425, %v8467
    %8469 = vmatprep.mubr.bf16.mxu0 0
    %8470 = vmatmul.mubr.bf16.gmra.mrb[0].mxu0 %v7609
    %v8471 = vpop.f32.mrb[0].mxu0
    %v8472 = vadd.f32 %v7421, %v8471
    %v8473 = vpop.f32.mrb[0].mxu0
    %v8474 = vadd.f32 %v7425, %v8473
    %v8475 = vpop.f32.mrb[0].mxu0
    %v8476 = vadd.f32 %v7421, %v8475
    %v8477 = vpop.f32.mrb[0].mxu0
    %v8478 = vadd.f32 %v7425, %v8477
    %8479 = vmatprep.mubr.bf16.mxu0 0
    %8480 = vmatmul.mubr.bf16.gmra.mrb[0].mxu0 %v7612
    %v8481 = vpop.f32.mrb[0].mxu0
    %v8482 = vadd.f32 %v7421, %v8481
    %v8483 = vpop.f32.mrb[0].mxu0
    %v8484 = vadd.f32 %v7425, %v8483
    %v8485 = vpop.f32.mrb[0].mxu0
    %v8486 = vadd.f32 %v7421, %v8485
    %v8487 = vpop.f32.mrb[0].mxu0
    %v8488 = vadd.f32 %v7425, %v8487
    %8489 = vmatprep.mubr.bf16.mxu0 0
    %8490 = vmatmul.mubr.bf16.gmra.mrb[0].mxu0 %v7615
    %v8491 = vpop.f32.mrb[0].mxu0
    %v8492 = vadd.f32 %v7421, %v8491
    %v8493 = vpop.f32.mrb[0].mxu0
    %v8494 = vadd.f32 %v7425, %v8493
    %v8495 = vpop.f32.mrb[0].mxu0
    %v8496 = vadd.f32 %v7421, %v8495
    %v8497 = vpop.f32.mrb[0].mxu0
    %v8498 = vadd.f32 %v7425, %v8497
    %8499 = vmatprep.mubr.bf16.mxu0 0
    %8500 = vmatmul.mubr.bf16.gmra.mrb[0].mxu0 %v7618
    %v8501 = vpop.f32.mrb[0].mxu0
    %v8502 = vadd.f32 %v7421, %v8501
    %v8503 = vpop.f32.mrb[0].mxu0
    %v8504 = vadd.f32 %v7425, %v8503
    %v8505 = vpop.f32.mrb[0].mxu0
    %v8506 = vadd.f32 %v7421, %v8505
    %v8507 = vpop.f32.mrb[0].mxu0
    %v8508 = vadd.f32 %v7425, %v8507
    %8509 = vmatprep.mubr.bf16.mxu0 0
    %8510 = vmatmul.mubr.bf16.gmra.mrb[0].mxu0 %v7621
    %v8511 = vpop.f32.mrb[0].mxu0
    %v8512 = vadd.f32 %v7421, %v8511
    %v8513 = vpop.f32.mrb[0].mxu0
    %v8514 = vadd.f32 %v7425, %v8513
    %v8515 = vpop.f32.mrb[0].mxu0
    %v8516 = vadd.f32 %v7421, %v8515
    %v8517 = vpop.f32.mrb[0].mxu0
    %v8518 = vadd.f32 %v7425, %v8517
    %8519 = vmatprep.mubr.bf16.mxu0 0
    %8520 = vmatmul.mubr.bf16.gmra.mrb[0].mxu0 %v7624
    %v8521 = vpop.f32.mrb[0].mxu0
    %v8522 = vadd.f32 %v7421, %v8521
    %v8523 = vpop.f32.mrb[0].mxu0
    %v8524 = vadd.f32 %v7425, %v8523
    %v8525 = vpop.f32.mrb[0].mxu0
    %v8526 = vadd.f32 %v7421, %v8525
    %v8527 = vpop.f32.mrb[0].mxu0
    %v8528 = vadd.f32 %v7425, %v8527
    %8529 = vdwg.mxu0
    %v8530 = vmax.f32 %v7661, 0.0
    %v8531 = vmax.f32 %v7663, 0.0
    %v8532 = vmax.f32 %v7774, 0.0
    %v8533 = vmax.f32 %v7776, 0.0
    %v8534 = vmax.f32 %v7887, 0.0
    %v8535 = vmax.f32 %v7889, 0.0
    %v8536 = vmax.f32 %v8000, 0.0
    %v8537 = vmax.f32 %v8002, 0.0
    %v8538 = vmax.f32 %v8113, 0.0
    %v8539 = vmax.f32 %v8115, 0.0
    %v8540 = vmax.f32 %v8226, 0.0
    %v8541 = vmax.f32 %v8228, 0.0
    %v8542 = vmax.f32 %v8339, 0.0
    %v8543 = vmax.f32 %v8341, 0.0
    %v8544 = vmax.f32 %v8452, 0.0
    %v8545 = vmax.f32 %v8454, 0.0
    %v8546 = vmax.f32 %v7665, 0.0
    %v8547 = vmax.f32 %v7667, 0.0
    %v8548 = vmax.f32 %v7778, 0.0
    %v8549 = vmax.f32 %v7780, 0.0
    %v8550 = vmax.f32 %v7891, 0.0
    %v8551 = vmax.f32 %v7893, 0.0
    %v8552 = vmax.f32 %v8004, 0.0
    %v8553 = vmax.f32 %v8006, 0.0
    %v8554 = vmax.f32 %v8117, 0.0
    %v8555 = vmax.f32 %v8119, 0.0
    %v8556 = vmax.f32 %v8230, 0.0
    %v8557 = vmax.f32 %v8232, 0.0
    %v8558 = vmax.f32 %v8343, 0.0
    %v8559 = vmax.f32 %v8345, 0.0
    %v8560 = vmax.f32 %v8456, 0.0
    %v8561 = vmax.f32 %v8458, 0.0
    %v8562 = vmax.f32 %v7671, 0.0
    %v8563 = vmax.f32 %v7673, 0.0
    %v8564 = vmax.f32 %v7784, 0.0
    %v8565 = vmax.f32 %v7786, 0.0
    %v8566 = vmax.f32 %v7897, 0.0
    %v8567 = vmax.f32 %v7899, 0.0
    %v8568 = vmax.f32 %v8010, 0.0
    %v8569 = vmax.f32 %v8012, 0.0
    %v8570 = vmax.f32 %v8123, 0.0
    %v8571 = vmax.f32 %v8125, 0.0
    %v8572 = vmax.f32 %v8236, 0.0
    %v8573 = vmax.f32 %v8238, 0.0
    %v8574 = vmax.f32 %v8349, 0.0
    %v8575 = vmax.f32 %v8351, 0.0
    %v8576 = vmax.f32 %v8462, 0.0
    %v8577 = vmax.f32 %v8464, 0.0
    %v8578 = vmax.f32 %v7675, 0.0
    %v8579 = vmax.f32 %v7677, 0.0
    %v8580 = vmax.f32 %v7788, 0.0
    %v8581 = vmax.f32 %v7790, 0.0
    %v8582 = vmax.f32 %v7901, 0.0
    %v8583 = vmax.f32 %v7903, 0.0
    %v8584 = vmax.f32 %v8014, 0.0
    %v8585 = vmax.f32 %v8016, 0.0
    %v8586 = vmax.f32 %v8127, 0.0
    %v8587 = vmax.f32 %v8129, 0.0
    %v8588 = vmax.f32 %v8240, 0.0
    %v8589 = vmax.f32 %v8242, 0.0
    %v8590 = vmax.f32 %v8353, 0.0
    %v8591 = vmax.f32 %v8355, 0.0
    %v8592 = vmax.f32 %v8466, 0.0
    %v8593 = vmax.f32 %v8468, 0.0
    %v8594 = vmax.f32 %v7681, 0.0
    %v8595 = vmax.f32 %v7683, 0.0
    %v8596 = vmax.f32 %v7794, 0.0
    %v8597 = vmax.f32 %v7796, 0.0
    %v8598 = vmax.f32 %v7907, 0.0
    %v8599 = vmax.f32 %v7909, 0.0
    %v8600 = vmax.f32 %v8020, 0.0
    %v8601 = vmax.f32 %v8022, 0.0
    %v8602 = vmax.f32 %v8133, 0.0
    %v8603 = vmax.f32 %v8135, 0.0
    %v8604 = vmax.f32 %v8246, 0.0
    %v8605 = vmax.f32 %v8248, 0.0
    %v8606 = vmax.f32 %v8359, 0.0
    %v8607 = vmax.f32 %v8361, 0.0
    %v8608 = vmax.f32 %v8472, 0.0
    %v8609 = vmax.f32 %v8474, 0.0
    %v8610 = vmax.f32 %v7685, 0.0
    %v8611 = vmax.f32 %v7687, 0.0
    %v8612 = vmax.f32 %v7798, 0.0
    %v8613 = vmax.f32 %v7800, 0.0
    %v8614 = vmax.f32 %v7911, 0.0
    %v8615 = vmax.f32 %v7913, 0.0
    %v8616 = vmax.f32 %v8024, 0.0
    %v8617 = vmax.f32 %v8026, 0.0
    %v8618 = vmax.f32 %v8137, 0.0
    %v8619 = vmax.f32 %v8139, 0.0
    %v8620 = vmax.f32 %v8250, 0.0
    %v8621 = vmax.f32 %v8252, 0.0
    %v8622 = vmax.f32 %v8363, 0.0
    %v8623 = vmax.f32 %v8365, 0.0
    %v8624 = vmax.f32 %v8476, 0.0
    %v8625 = vmax.f32 %v8478, 0.0
    %v8626 = vmax.f32 %v7691, 0.0
    %v8627 = vmax.f32 %v7693, 0.0
    %v8628 = vmax.f32 %v7804, 0.0
    %v8629 = vmax.f32 %v7806, 0.0
    %v8630 = vmax.f32 %v7917, 0.0
    %v8631 = vmax.f32 %v7919, 0.0
    %v8632 = vmax.f32 %v8030, 0.0
    %v8633 = vmax.f32 %v8032, 0.0
    %v8634 = vmax.f32 %v8143, 0.0
    %v8635 = vmax.f32 %v8145, 0.0
    %v8636 = vmax.f32 %v8256, 0.0
    %v8637 = vmax.f32 %v8258, 0.0
    %v8638 = vmax.f32 %v8369, 0.0
    %v8639 = vmax.f32 %v8371, 0.0
    %v8640 = vmax.f32 %v8482, 0.0
    %v8641 = vmax.f32 %v8484, 0.0
    %v8642 = vmax.f32 %v7695, 0.0
    %v8643 = vmax.f32 %v7697, 0.0
    %v8644 = vmax.f32 %v7808, 0.0
    %v8645 = vmax.f32 %v7810, 0.0
    %v8646 = vmax.f32 %v7921, 0.0
    %v8647 = vmax.f32 %v7923, 0.0
    %v8648 = vmax.f32 %v8034, 0.0
    %v8649 = vmax.f32 %v8036, 0.0
    %v8650 = vmax.f32 %v8147, 0.0
    %v8651 = vmax.f32 %v8149, 0.0
    %v8652 = vmax.f32 %v8260, 0.0
    %v8653 = vmax.f32 %v8262, 0.0
    %v8654 = vmax.f32 %v8373, 0.0
    %v8655 = vmax.f32 %v8375, 0.0
    %v8656 = vmax.f32 %v8486, 0.0
    %v8657 = vmax.f32 %v8488, 0.0
    %v8658 = vmax.f32 %v7701, 0.0
    %v8659 = vmax.f32 %v7703, 0.0
    %v8660 = vmax.f32 %v7814, 0.0
    %v8661 = vmax.f32 %v7816, 0.0
    %v8662 = vmax.f32 %v7927, 0.0
    %v8663 = vmax.f32 %v7929, 0.0
    %v8664 = vmax.f32 %v8040, 0.0
    %v8665 = vmax.f32 %v8042, 0.0
    %v8666 = vmax.f32 %v8153, 0.0
    %v8667 = vmax.f32 %v8155, 0.0
    %v8668 = vmax.f32 %v8266, 0.0
    %v8669 = vmax.f32 %v8268, 0.0
    %v8670 = vmax.f32 %v8379, 0.0
    %v8671 = vmax.f32 %v8381, 0.0
    %v8672 = vmax.f32 %v8492, 0.0
    %v8673 = vmax.f32 %v8494, 0.0
    %v8674 = vmax.f32 %v7705, 0.0
    %v8675 = vmax.f32 %v7707, 0.0
    %v8676 = vmax.f32 %v7818, 0.0
    %v8677 = vmax.f32 %v7820, 0.0
    %v8678 = vmax.f32 %v7931, 0.0
    %v8679 = vmax.f32 %v7933, 0.0
    %v8680 = vmax.f32 %v8044, 0.0
    %v8681 = vmax.f32 %v8046, 0.0
    %v8682 = vmax.f32 %v8157, 0.0
    %v8683 = vmax.f32 %v8159, 0.0
    %v8684 = vmax.f32 %v8270, 0.0
    %v8685 = vmax.f32 %v8272, 0.0
    %v8686 = vmax.f32 %v8383, 0.0
    %v8687 = vmax.f32 %v8385, 0.0
    %v8688 = vmax.f32 %v8496, 0.0
    %v8689 = vmax.f32 %v8498, 0.0
    %v8690 = vmax.f32 %v7711, 0.0
    %v8691 = vmax.f32 %v7713, 0.0
    %v8692 = vmax.f32 %v7824, 0.0
    %v8693 = vmax.f32 %v7826, 0.0
    %v8694 = vmax.f32 %v7937, 0.0
    %v8695 = vmax.f32 %v7939, 0.0
    %v8696 = vmax.f32 %v8050, 0.0
    %v8697 = vmax.f32 %v8052, 0.0
    %v8698 = vmax.f32 %v8163, 0.0
    %v8699 = vmax.f32 %v8165, 0.0
    %v8700 = vmax.f32 %v8276, 0.0
    %v8701 = vmax.f32 %v8278, 0.0
    %v8702 = vmax.f32 %v8389, 0.0
    %v8703 = vmax.f32 %v8391, 0.0
    %v8704 = vmax.f32 %v8502, 0.0
    %v8705 = vmax.f32 %v8504, 0.0
    %v8706 = vmax.f32 %v7715, 0.0
    %v8707 = vmax.f32 %v7717, 0.0
    %v8708 = vmax.f32 %v7828, 0.0
    %v8709 = vmax.f32 %v7830, 0.0
    %v8710 = vmax.f32 %v7941, 0.0
    %v8711 = vmax.f32 %v7943, 0.0
    %v8712 = vmax.f32 %v8054, 0.0
    %v8713 = vmax.f32 %v8056, 0.0
    %v8714 = vmax.f32 %v8167, 0.0
    %v8715 = vmax.f32 %v8169, 0.0
    %v8716 = vmax.f32 %v8280, 0.0
    %v8717 = vmax.f32 %v8282, 0.0
    %v8718 = vmax.f32 %v8393, 0.0
    %v8719 = vmax.f32 %v8395, 0.0
    %v8720 = vmax.f32 %v8506, 0.0
    %v8721 = vmax.f32 %v8508, 0.0
    %v8722 = vmax.f32 %v7721, 0.0
    %v8723 = vmax.f32 %v7723, 0.0
    %v8724 = vmax.f32 %v7834, 0.0
    %v8725 = vmax.f32 %v7836, 0.0
    %v8726 = vmax.f32 %v7947, 0.0
    %v8727 = vmax.f32 %v7949, 0.0
    %v8728 = vmax.f32 %v8060, 0.0
    %v8729 = vmax.f32 %v8062, 0.0
    %v8730 = vmax.f32 %v8173, 0.0
    %v8731 = vmax.f32 %v8175, 0.0
    %v8732 = vmax.f32 %v8286, 0.0
    %v8733 = vmax.f32 %v8288, 0.0
    %v8734 = vmax.f32 %v8399, 0.0
    %v8735 = vmax.f32 %v8401, 0.0
    %v8736 = vmax.f32 %v8512, 0.0
    %v8737 = vmax.f32 %v8514, 0.0
    %v8738 = vmax.f32 %v7725, 0.0
    %v8739 = vmax.f32 %v7727, 0.0
    %v8740 = vmax.f32 %v7838, 0.0
    %v8741 = vmax.f32 %v7840, 0.0
    %v8742 = vmax.f32 %v7951, 0.0
    %v8743 = vmax.f32 %v7953, 0.0
    %v8744 = vmax.f32 %v8064, 0.0
    %v8745 = vmax.f32 %v8066, 0.0
    %v8746 = vmax.f32 %v8177, 0.0
    %v8747 = vmax.f32 %v8179, 0.0
    %v8748 = vmax.f32 %v8290, 0.0
    %v8749 = vmax.f32 %v8292, 0.0
    %v8750 = vmax.f32 %v8403, 0.0
    %v8751 = vmax.f32 %v8405, 0.0
    %v8752 = vmax.f32 %v8516, 0.0
    %v8753 = vmax.f32 %v8518, 0.0
    %v8754 = vmax.f32 %v7731, 0.0
    %v8755 = vmax.f32 %v7733, 0.0
    %v8756 = vmax.f32 %v7844, 0.0
    %v8757 = vmax.f32 %v7846, 0.0
    %v8758 = vmax.f32 %v7957, 0.0
    %v8759 = vmax.f32 %v7959, 0.0
    %v8760 = vmax.f32 %v8070, 0.0
    %v8761 = vmax.f32 %v8072, 0.0
    %v8762 = vmax.f32 %v8183, 0.0
    %v8763 = vmax.f32 %v8185, 0.0
    %v8764 = vmax.f32 %v8296, 0.0
    %v8765 = vmax.f32 %v8298, 0.0
    %v8766 = vmax.f32 %v8409, 0.0
    %v8767 = vmax.f32 %v8411, 0.0
    %v8768 = vmax.f32 %v8522, 0.0
    %v8769 = vmax.f32 %v8524, 0.0
    %v8770 = vmax.f32 %v7735, 0.0
    %v8771 = vmax.f32 %v7737, 0.0
    %v8772 = vmax.f32 %v7848, 0.0
    %v8773 = vmax.f32 %v7850, 0.0
    %v8774 = vmax.f32 %v7961, 0.0
    %v8775 = vmax.f32 %v7963, 0.0
    %v8776 = vmax.f32 %v8074, 0.0
    %v8777 = vmax.f32 %v8076, 0.0
    %v8778 = vmax.f32 %v8187, 0.0
    %v8779 = vmax.f32 %v8189, 0.0
    %v8780 = vmax.f32 %v8300, 0.0
    %v8781 = vmax.f32 %v8302, 0.0
    %v8782 = vmax.f32 %v8413, 0.0
    %v8783 = vmax.f32 %v8415, 0.0
    %v8784 = vmax.f32 %v8526, 0.0
    %v8785 = vmax.f32 %v8528, 0.0
    %v8786 = vpack.c.bf16 %v8546, %v8530
    %v8787 = vpack.c.bf16 %v8547, %v8531
    %v8788 = vpack.c.bf16 %v8548, %v8532
    %v8789 = vpack.c.bf16 %v8549, %v8533
    %v8790 = vpack.c.bf16 %v8550, %v8534
    %v8791 = vpack.c.bf16 %v8551, %v8535
    %v8792 = vpack.c.bf16 %v8552, %v8536
    %v8793 = vpack.c.bf16 %v8553, %v8537
    %v8794 = vpack.c.bf16 %v8554, %v8538
    %v8795 = vpack.c.bf16 %v8555, %v8539
    %v8796 = vpack.c.bf16 %v8556, %v8540
    %v8797 = vpack.c.bf16 %v8557, %v8541
    %v8798 = vpack.c.bf16 %v8558, %v8542
    %v8799 = vpack.c.bf16 %v8559, %v8543
    %v8800 = vpack.c.bf16 %v8560, %v8544
    %v8801 = vpack.c.bf16 %v8561, %v8545
    %v8802 = vpack.c.bf16 %v8578, %v8562
    %v8803 = vpack.c.bf16 %v8579, %v8563
    %v8804 = vpack.c.bf16 %v8580, %v8564
    %v8805 = vpack.c.bf16 %v8581, %v8565
    %v8806 = vpack.c.bf16 %v8582, %v8566
    %v8807 = vpack.c.bf16 %v8583, %v8567
    %v8808 = vpack.c.bf16 %v8584, %v8568
    %v8809 = vpack.c.bf16 %v8585, %v8569
    %v8810 = vpack.c.bf16 %v8586, %v8570
    %v8811 = vpack.c.bf16 %v8587, %v8571
    %v8812 = vpack.c.bf16 %v8588, %v8572
    %v8813 = vpack.c.bf16 %v8589, %v8573
    %v8814 = vpack.c.bf16 %v8590, %v8574
    %v8815 = vpack.c.bf16 %v8591, %v8575
    %v8816 = vpack.c.bf16 %v8592, %v8576
    %v8817 = vpack.c.bf16 %v8593, %v8577
    %v8818 = vpack.c.bf16 %v8610, %v8594
    %v8819 = vpack.c.bf16 %v8611, %v8595
    %v8820 = vpack.c.bf16 %v8612, %v8596
    %v8821 = vpack.c.bf16 %v8613, %v8597
    %v8822 = vpack.c.bf16 %v8614, %v8598
    %v8823 = vpack.c.bf16 %v8615, %v8599
    %v8824 = vpack.c.bf16 %v8616, %v8600
    %v8825 = vpack.c.bf16 %v8617, %v8601
    %v8826 = vpack.c.bf16 %v8618, %v8602
    %v8827 = vpack.c.bf16 %v8619, %v8603
    %v8828 = vpack.c.bf16 %v8620, %v8604
    %v8829 = vpack.c.bf16 %v8621, %v8605
    %v8830 = vpack.c.bf16 %v8622, %v8606
    %v8831 = vpack.c.bf16 %v8623, %v8607
    %v8832 = vpack.c.bf16 %v8624, %v8608
    %v8833 = vpack.c.bf16 %v8625, %v8609
    %v8834 = vpack.c.bf16 %v8642, %v8626
    %v8835 = vpack.c.bf16 %v8643, %v8627
    %v8836 = vpack.c.bf16 %v8644, %v8628
    %v8837 = vpack.c.bf16 %v8645, %v8629
    %v8838 = vpack.c.bf16 %v8646, %v8630
    %v8839 = vpack.c.bf16 %v8647, %v8631
    %v8840 = vpack.c.bf16 %v8648, %v8632
    %v8841 = vpack.c.bf16 %v8649, %v8633
    %v8842 = vpack.c.bf16 %v8650, %v8634
    %v8843 = vpack.c.bf16 %v8651, %v8635
    %v8844 = vpack.c.bf16 %v8652, %v8636
    %v8845 = vpack.c.bf16 %v8653, %v8637
    %v8846 = vpack.c.bf16 %v8654, %v8638
    %v8847 = vpack.c.bf16 %v8655, %v8639
    %v8848 = vpack.c.bf16 %v8656, %v8640
    %v8849 = vpack.c.bf16 %v8657, %v8641
    %v8850 = vpack.c.bf16 %v8674, %v8658
    %v8851 = vpack.c.bf16 %v8675, %v8659
    %v8852 = vpack.c.bf16 %v8676, %v8660
    %v8853 = vpack.c.bf16 %v8677, %v8661
    %v8854 = vpack.c.bf16 %v8678, %v8662
    %v8855 = vpack.c.bf16 %v8679, %v8663
    %v8856 = vpack.c.bf16 %v8680, %v8664
    %v8857 = vpack.c.bf16 %v8681, %v8665
    %v8858 = vpack.c.bf16 %v8682, %v8666
    %v8859 = vpack.c.bf16 %v8683, %v8667
    %v8860 = vpack.c.bf16 %v8684, %v8668
    %v8861 = vpack.c.bf16 %v8685, %v8669
    %v8862 = vpack.c.bf16 %v8686, %v8670
    %v8863 = vpack.c.bf16 %v8687, %v8671
    %v8864 = vpack.c.bf16 %v8688, %v8672
    %v8865 = vpack.c.bf16 %v8689, %v8673
    %v8866 = vpack.c.bf16 %v8706, %v8690
    %v8867 = vpack.c.bf16 %v8707, %v8691
    %v8868 = vpack.c.bf16 %v8708, %v8692
    %v8869 = vpack.c.bf16 %v8709, %v8693
    %v8870 = vpack.c.bf16 %v8710, %v8694
    %v8871 = vpack.c.bf16 %v8711, %v8695
    %v8872 = vpack.c.bf16 %v8712, %v8696
    %v8873 = vpack.c.bf16 %v8713, %v8697
    %v8874 = vpack.c.bf16 %v8714, %v8698
    %v8875 = vpack.c.bf16 %v8715, %v8699
    %v8876 = vpack.c.bf16 %v8716, %v8700
    %v8877 = vpack.c.bf16 %v8717, %v8701
    %v8878 = vpack.c.bf16 %v8718, %v8702
    %v8879 = vpack.c.bf16 %v8719, %v8703
    %v8880 = vpack.c.bf16 %v8720, %v8704
    %v8881 = vpack.c.bf16 %v8721, %v8705
    %v8882 = vpack.c.bf16 %v8738, %v8722
    %v8883 = vpack.c.bf16 %v8739, %v8723
    %v8884 = vpack.c.bf16 %v8740, %v8724
    %v8885 = vpack.c.bf16 %v8741, %v8725
    %v8886 = vpack.c.bf16 %v8742, %v8726
    %v8887 = vpack.c.bf16 %v8743, %v8727
    %v8888 = vpack.c.bf16 %v8744, %v8728
    %v8889 = vpack.c.bf16 %v8745, %v8729
    %v8890 = vpack.c.bf16 %v8746, %v8730
    %v8891 = vpack.c.bf16 %v8747, %v8731
    %v8892 = vpack.c.bf16 %v8748, %v8732
    %v8893 = vpack.c.bf16 %v8749, %v8733
    %v8894 = vpack.c.bf16 %v8750, %v8734
    %v8895 = vpack.c.bf16 %v8751, %v8735
    %v8896 = vpack.c.bf16 %v8752, %v8736
    %v8897 = vpack.c.bf16 %v8753, %v8737
    %v8898 = vpack.c.bf16 %v8770, %v8754
    %v8899 = vpack.c.bf16 %v8771, %v8755
    %v8900 = vpack.c.bf16 %v8772, %v8756
    %v8901 = vpack.c.bf16 %v8773, %v8757
    %v8902 = vpack.c.bf16 %v8774, %v8758
    %v8903 = vpack.c.bf16 %v8775, %v8759
    %v8904 = vpack.c.bf16 %v8776, %v8760
    %v8905 = vpack.c.bf16 %v8777, %v8761
    %v8906 = vpack.c.bf16 %v8778, %v8762
    %v8907 = vpack.c.bf16 %v8779, %v8763
    %v8908 = vpack.c.bf16 %v8780, %v8764
    %v8909 = vpack.c.bf16 %v8781, %v8765
    %v8910 = vpack.c.bf16 %v8782, %v8766
    %v8911 = vpack.c.bf16 %v8783, %v8767
    %v8912 = vpack.c.bf16 %v8784, %v8768
    %v8913 = vpack.c.bf16 %v8785, %v8769
    %v8914 = vld [vmem:[%s26] sm:$0xf]
    %v8915 = vld [vmem:[%s26 + $0x4] sm:$0xf]
    %v8916 = vld [vmem:[%s26 + $0x8] sm:$0xf]
    %v8917 = vld [vmem:[%s26 + $0xc] sm:$0xf]
    %v8918 = vld [vmem:[%s26 + $0x10] sm:$0xf]
    %v8919 = vld [vmem:[%s26 + $0x14] sm:$0xf]
    %v8920 = vld [vmem:[%s26 + $0x18] sm:$0xf]
    %v8921 = vld [vmem:[%s26 + $0x1c] sm:$0xf]
    %v8922 = vld [vmem:[%s26 + $0x20] sm:$0xf]
    %v8923 = vld [vmem:[%s26 + $0x24] sm:$0xf]
    %v8924 = vld [vmem:[%s26 + $0x28] sm:$0xf]
    %v8925 = vld [vmem:[%s26 + $0x2c] sm:$0xf]
    %v8926 = vld [vmem:[%s26 + $0x30] sm:$0xf]
    %v8927 = vld [vmem:[%s26 + $0x34] sm:$0xf]
    %v8928 = vld [vmem:[%s26 + $0x38] sm:$0xf]
    %v8929 = vld [vmem:[%s26 + $0x3c] sm:$0xf]
    %v8930 = vld [vmem:[%s26 + $0x40] sm:$0xf]
    %v8931 = vld [vmem:[%s26 + $0x44] sm:$0xf]
    %v8932 = vld [vmem:[%s26 + $0x48] sm:$0xf]
    %v8933 = vld [vmem:[%s26 + $0x4c] sm:$0xf]
    %v8934 = vld [vmem:[%s26 + $0x50] sm:$0xf]
    %v8935 = vld [vmem:[%s26 + $0x54] sm:$0xf]
    %v8936 = vld [vmem:[%s26 + $0x58] sm:$0xf]
    %v8937 = vld [vmem:[%s26 + $0x5c] sm:$0xf]
    %v8938 = vld [vmem:[%s26 + $0x60] sm:$0xf]
    %v8939 = vld [vmem:[%s26 + $0x64] sm:$0xf]
    %v8940 = vld [vmem:[%s26 + $0x68] sm:$0xf]
    %v8941 = vld [vmem:[%s26 + $0x6c] sm:$0xf]
    %v8942 = vld [vmem:[%s26 + $0x70] sm:$0xf]
    %v8943 = vld [vmem:[%s26 + $0x74] sm:$0xf]
    %v8944 = vld [vmem:[%s26 + $0x78] sm:$0xf]
    %v8945 = vld [vmem:[%s26 + $0x7c] sm:$0xf]
    %v8946 = vld [vmem:[%s26 + $0x80] sm:$0xf]
    %v8947 = vld [vmem:[%s26 + $0x84] sm:$0xf]
    %v8948 = vld [vmem:[%s26 + $0x88] sm:$0xf]
    %v8949 = vld [vmem:[%s26 + $0x8c] sm:$0xf]
    %v8950 = vld [vmem:[%s26 + $0x90] sm:$0xf]
    %v8951 = vld [vmem:[%s26 + $0x94] sm:$0xf]
    %v8952 = vld [vmem:[%s26 + $0x98] sm:$0xf]
    %v8953 = vld [vmem:[%s26 + $0x9c] sm:$0xf]
    %v8954 = vld [vmem:[%s26 + $0xa0] sm:$0xf]
    %v8955 = vld [vmem:[%s26 + $0xa4] sm:$0xf]
    %v8956 = vld [vmem:[%s26 + $0xa8] sm:$0xf]
    %v8957 = vld [vmem:[%s26 + $0xac] sm:$0xf]
    %v8958 = vld [vmem:[%s26 + $0xb0] sm:$0xf]
    %v8959 = vld [vmem:[%s26 + $0xb4] sm:$0xf]
    %v8960 = vld [vmem:[%s26 + $0xb8] sm:$0xf]
    %v8961 = vld [vmem:[%s26 + $0xbc] sm:$0xf]
    %v8962 = vld [vmem:[%s26 + $0xc0] sm:$0xf]
    %v8963 = vld [vmem:[%s26 + $0xc4] sm:$0xf]
    %v8964 = vld [vmem:[%s26 + $0xc8] sm:$0xf]
    %v8965 = vld [vmem:[%s26 + $0xcc] sm:$0xf]
    %v8966 = vld [vmem:[%s26 + $0xd0] sm:$0xf]
    %v8967 = vld [vmem:[%s26 + $0xd4] sm:$0xf]
    %v8968 = vld [vmem:[%s26 + $0xd8] sm:$0xf]
    %v8969 = vld [vmem:[%s26 + $0xdc] sm:$0xf]
    %v8970 = vld [vmem:[%s26 + $0xe0] sm:$0xf]
    %v8971 = vld [vmem:[%s26 + $0xe4] sm:$0xf]
    %v8972 = vld [vmem:[%s26 + $0xe8] sm:$0xf]
    %v8973 = vld [vmem:[%s26 + $0xec] sm:$0xf]
    %v8974 = vld [vmem:[%s26 + $0xf0] sm:$0xf]
    %v8975 = vld [vmem:[%s26 + $0xf4] sm:$0xf]
    %v8976 = vld [vmem:[%s26 + $0xf8] sm:$0xf]
    %v8977 = vld [vmem:[%s26 + $0xfc] sm:$0xf]
    %v8978 = vld [vmem:[%s26 + $0x100] sm:$0xf]
    %v8979 = vld [vmem:[%s26 + $0x104] sm:$0xf]
    %v8980 = vld [vmem:[%s26 + $0x108] sm:$0xf]
    %v8981 = vld [vmem:[%s26 + $0x10c] sm:$0xf]
    %v8982 = vld [vmem:[%s26 + $0x110] sm:$0xf]
    %v8983 = vld [vmem:[%s26 + $0x114] sm:$0xf]
    %v8984 = vld [vmem:[%s26 + $0x118] sm:$0xf]
    %v8985 = vld [vmem:[%s26 + $0x11c] sm:$0xf]
    %v8986 = vld [vmem:[%s26 + $0x120] sm:$0xf]
    %v8987 = vld [vmem:[%s26 + $0x124] sm:$0xf]
    %v8988 = vld [vmem:[%s26 + $0x128] sm:$0xf]
    %v8989 = vld [vmem:[%s26 + $0x12c] sm:$0xf]
    %v8990 = vld [vmem:[%s26 + $0x130] sm:$0xf]
    %v8991 = vld [vmem:[%s26 + $0x134] sm:$0xf]
    %v8992 = vld [vmem:[%s26 + $0x138] sm:$0xf]
    %v8993 = vld [vmem:[%s26 + $0x13c] sm:$0xf]
    %v8994 = vld [vmem:[%s26 + $0x140] sm:$0xf]
    %v8995 = vld [vmem:[%s26 + $0x144] sm:$0xf]
    %v8996 = vld [vmem:[%s26 + $0x148] sm:$0xf]
    %v8997 = vld [vmem:[%s26 + $0x14c] sm:$0xf]
    %v8998 = vld [vmem:[%s26 + $0x150] sm:$0xf]
    %v8999 = vld [vmem:[%s26 + $0x154] sm:$0xf]
    %v9000 = vld [vmem:[%s26 + $0x158] sm:$0xf]
    %v9001 = vld [vmem:[%s26 + $0x15c] sm:$0xf]
    %v9002 = vld [vmem:[%s26 + $0x160] sm:$0xf]
    %v9003 = vld [vmem:[%s26 + $0x164] sm:$0xf]
    %v9004 = vld [vmem:[%s26 + $0x168] sm:$0xf]
    %v9005 = vld [vmem:[%s26 + $0x16c] sm:$0xf]
    %v9006 = vld [vmem:[%s26 + $0x170] sm:$0xf]
    %v9007 = vld [vmem:[%s26 + $0x174] sm:$0xf]
    %v9008 = vld [vmem:[%s26 + $0x178] sm:$0xf]
    %v9009 = vld [vmem:[%s26 + $0x17c] sm:$0xf]
    %v9010 = vld [vmem:[%s26 + $0x180] sm:$0xf]
    %v9011 = vld [vmem:[%s26 + $0x184] sm:$0xf]
    %v9012 = vld [vmem:[%s26 + $0x188] sm:$0xf]
    %v9013 = vld [vmem:[%s26 + $0x18c] sm:$0xf]
    %v9014 = vld [vmem:[%s26 + $0x190] sm:$0xf]
    %v9015 = vld [vmem:[%s26 + $0x194] sm:$0xf]
    %v9016 = vld [vmem:[%s26 + $0x198] sm:$0xf]
    %v9017 = vld [vmem:[%s26 + $0x19c] sm:$0xf]
    %v9018 = vld [vmem:[%s26 + $0x1a0] sm:$0xf]
    %v9019 = vld [vmem:[%s26 + $0x1a4] sm:$0xf]
    %v9020 = vld [vmem:[%s26 + $0x1a8] sm:$0xf]
    %v9021 = vld [vmem:[%s26 + $0x1ac] sm:$0xf]
    %v9022 = vld [vmem:[%s26 + $0x1b0] sm:$0xf]
    %v9023 = vld [vmem:[%s26 + $0x1b4] sm:$0xf]
    %v9024 = vld [vmem:[%s26 + $0x1b8] sm:$0xf]
    %v9025 = vld [vmem:[%s26 + $0x1bc] sm:$0xf]
    %v9026 = vld [vmem:[%s26 + $0x1c0] sm:$0xf]
    %v9027 = vld [vmem:[%s26 + $0x1c4] sm:$0xf]
    %v9028 = vld [vmem:[%s26 + $0x1c8] sm:$0xf]
    %v9029 = vld [vmem:[%s26 + $0x1cc] sm:$0xf]
    %v9030 = vld [vmem:[%s26 + $0x1d0] sm:$0xf]
    %v9031 = vld [vmem:[%s26 + $0x1d4] sm:$0xf]
    %v9032 = vld [vmem:[%s26 + $0x1d8] sm:$0xf]
    %v9033 = vld [vmem:[%s26 + $0x1dc] sm:$0xf]
    %v9034 = vld [vmem:[%s26 + $0x1e0] sm:$0xf]
    %v9035 = vld [vmem:[%s26 + $0x1e4] sm:$0xf]
    %v9036 = vld [vmem:[%s26 + $0x1e8] sm:$0xf]
    %v9037 = vld [vmem:[%s26 + $0x1ec] sm:$0xf]
    %v9038 = vld [vmem:[%s26 + $0x1f0] sm:$0xf]
    %v9039 = vld [vmem:[%s26 + $0x1f4] sm:$0xf]
    %v9040 = vld [vmem:[%s26 + $0x1f8] sm:$0xf]
    %v9041 = vld [vmem:[%s26 + $0x1fc] sm:$0xf]
    %v9042 = vld [vmem:[%s26 + $0x200] sm:$0xf]
    %v9043 = vld [vmem:[%s26 + $0x204] sm:$0xf]
    %v9044 = vld [vmem:[%s26 + $0x208] sm:$0xf]
    %v9045 = vld [vmem:[%s26 + $0x20c] sm:$0xf]
    %v9046 = vld [vmem:[%s26 + $0x210] sm:$0xf]
    %v9047 = vld [vmem:[%s26 + $0x214] sm:$0xf]
    %v9048 = vld [vmem:[%s26 + $0x218] sm:$0xf]
    %v9049 = vld [vmem:[%s26 + $0x21c] sm:$0xf]
    %v9050 = vld [vmem:[%s26 + $0x220] sm:$0xf]
    %v9051 = vld [vmem:[%s26 + $0x224] sm:$0xf]
    %v9052 = vld [vmem:[%s26 + $0x228] sm:$0xf]
    %v9053 = vld [vmem:[%s26 + $0x22c] sm:$0xf]
    %v9054 = vld [vmem:[%s26 + $0x230] sm:$0xf]
    %v9055 = vld [vmem:[%s26 + $0x234] sm:$0xf]
    %v9056 = vld [vmem:[%s26 + $0x238] sm:$0xf]
    %v9057 = vld [vmem:[%s26 + $0x23c] sm:$0xf]
    %v9058 = vld [vmem:[%s26 + $0x240] sm:$0xf]
    %v9059 = vld [vmem:[%s26 + $0x244] sm:$0xf]
    %v9060 = vld [vmem:[%s26 + $0x248] sm:$0xf]
    %v9061 = vld [vmem:[%s26 + $0x24c] sm:$0xf]
    %v9062 = vld [vmem:[%s26 + $0x250] sm:$0xf]
    %v9063 = vld [vmem:[%s26 + $0x254] sm:$0xf]
    %v9064 = vld [vmem:[%s26 + $0x258] sm:$0xf]
    %v9065 = vld [vmem:[%s26 + $0x25c] sm:$0xf]
    %v9066 = vld [vmem:[%s26 + $0x260] sm:$0xf]
    %v9067 = vld [vmem:[%s26 + $0x264] sm:$0xf]
    %v9068 = vld [vmem:[%s26 + $0x268] sm:$0xf]
    %v9069 = vld [vmem:[%s26 + $0x26c] sm:$0xf]
    %v9070 = vld [vmem:[%s26 + $0x270] sm:$0xf]
    %v9071 = vld [vmem:[%s26 + $0x274] sm:$0xf]
    %v9072 = vld [vmem:[%s26 + $0x278] sm:$0xf]
    %v9073 = vld [vmem:[%s26 + $0x27c] sm:$0xf]
    %v9074 = vld [vmem:[%s26 + $0x280] sm:$0xf]
    %v9075 = vld [vmem:[%s26 + $0x284] sm:$0xf]
    %v9076 = vld [vmem:[%s26 + $0x288] sm:$0xf]
    %v9077 = vld [vmem:[%s26 + $0x28c] sm:$0xf]
    %v9078 = vld [vmem:[%s26 + $0x290] sm:$0xf]
    %v9079 = vld [vmem:[%s26 + $0x294] sm:$0xf]
    %v9080 = vld [vmem:[%s26 + $0x298] sm:$0xf]
    %v9081 = vld [vmem:[%s26 + $0x29c] sm:$0xf]
    %v9082 = vld [vmem:[%s26 + $0x2a0] sm:$0xf]
    %v9083 = vld [vmem:[%s26 + $0x2a4] sm:$0xf]
    %v9084 = vld [vmem:[%s26 + $0x2a8] sm:$0xf]
    %v9085 = vld [vmem:[%s26 + $0x2ac] sm:$0xf]
    %v9086 = vld [vmem:[%s26 + $0x2b0] sm:$0xf]
    %v9087 = vld [vmem:[%s26 + $0x2b4] sm:$0xf]
    %v9088 = vld [vmem:[%s26 + $0x2b8] sm:$0xf]
    %v9089 = vld [vmem:[%s26 + $0x2bc] sm:$0xf]
    %v9090 = vld [vmem:[%s26 + $0x2c0] sm:$0xf]
    %v9091 = vld [vmem:[%s26 + $0x2c4] sm:$0xf]
    %v9092 = vld [vmem:[%s26 + $0x2c8] sm:$0xf]
    %v9093 = vld [vmem:[%s26 + $0x2cc] sm:$0xf]
    %v9094 = vld [vmem:[%s26 + $0x2d0] sm:$0xf]
    %v9095 = vld [vmem:[%s26 + $0x2d4] sm:$0xf]
    %v9096 = vld [vmem:[%s26 + $0x2d8] sm:$0xf]
    %v9097 = vld [vmem:[%s26 + $0x2dc] sm:$0xf]
    %v9098 = vld [vmem:[%s26 + $0x2e0] sm:$0xf]
    %v9099 = vld [vmem:[%s26 + $0x2e4] sm:$0xf]
    %v9100 = vld [vmem:[%s26 + $0x2e8] sm:$0xf]
    %v9101 = vld [vmem:[%s26 + $0x2ec] sm:$0xf]
    %v9102 = vld [vmem:[%s26 + $0x2f0] sm:$0xf]
    %v9103 = vld [vmem:[%s26 + $0x2f4] sm:$0xf]
    %v9104 = vld [vmem:[%s26 + $0x2f8] sm:$0xf]
    %v9105 = vld [vmem:[%s26 + $0x2fc] sm:$0xf]
    %v9106 = vld [vmem:[%s26 + $0x300] sm:$0xf]
    %v9107 = vld [vmem:[%s26 + $0x304] sm:$0xf]
    %v9108 = vld [vmem:[%s26 + $0x308] sm:$0xf]
    %v9109 = vld [vmem:[%s26 + $0x30c] sm:$0xf]
    %v9110 = vld [vmem:[%s26 + $0x310] sm:$0xf]
    %v9111 = vld [vmem:[%s26 + $0x314] sm:$0xf]
    %v9112 = vld [vmem:[%s26 + $0x318] sm:$0xf]
    %v9113 = vld [vmem:[%s26 + $0x31c] sm:$0xf]
    %v9114 = vld [vmem:[%s26 + $0x320] sm:$0xf]
    %v9115 = vld [vmem:[%s26 + $0x324] sm:$0xf]
    %v9116 = vld [vmem:[%s26 + $0x328] sm:$0xf]
    %v9117 = vld [vmem:[%s26 + $0x32c] sm:$0xf]
    %v9118 = vld [vmem:[%s26 + $0x330] sm:$0xf]
    %v9119 = vld [vmem:[%s26 + $0x334] sm:$0xf]
    %v9120 = vld [vmem:[%s26 + $0x338] sm:$0xf]
    %v9121 = vld [vmem:[%s26 + $0x33c] sm:$0xf]
    %v9122 = vld [vmem:[%s26 + $0x340] sm:$0xf]
    %v9123 = vld [vmem:[%s26 + $0x344] sm:$0xf]
    %v9124 = vld [vmem:[%s26 + $0x348] sm:$0xf]
    %v9125 = vld [vmem:[%s26 + $0x34c] sm:$0xf]
    %v9126 = vld [vmem:[%s26 + $0x350] sm:$0xf]
    %v9127 = vld [vmem:[%s26 + $0x354] sm:$0xf]
    %v9128 = vld [vmem:[%s26 + $0x358] sm:$0xf]
    %v9129 = vld [vmem:[%s26 + $0x35c] sm:$0xf]
    %v9130 = vld [vmem:[%s26 + $0x360] sm:$0xf]
    %v9131 = vld [vmem:[%s26 + $0x364] sm:$0xf]
    %v9132 = vld [vmem:[%s26 + $0x368] sm:$0xf]
    %v9133 = vld [vmem:[%s26 + $0x36c] sm:$0xf]
    %v9134 = vld [vmem:[%s26 + $0x370] sm:$0xf]
    %v9135 = vld [vmem:[%s26 + $0x374] sm:$0xf]
    %v9136 = vld [vmem:[%s26 + $0x378] sm:$0xf]
    %v9137 = vld [vmem:[%s26 + $0x37c] sm:$0xf]
    %v9138 = vld [vmem:[%s26 + $0x380] sm:$0xf]
    %v9139 = vld [vmem:[%s26 + $0x384] sm:$0xf]
    %v9140 = vld [vmem:[%s26 + $0x388] sm:$0xf]
    %v9141 = vld [vmem:[%s26 + $0x38c] sm:$0xf]
    %v9142 = vld [vmem:[%s26 + $0x390] sm:$0xf]
    %v9143 = vld [vmem:[%s26 + $0x394] sm:$0xf]
    %v9144 = vld [vmem:[%s26 + $0x398] sm:$0xf]
    %v9145 = vld [vmem:[%s26 + $0x39c] sm:$0xf]
    %v9146 = vld [vmem:[%s26 + $0x3a0] sm:$0xf]
    %v9147 = vld [vmem:[%s26 + $0x3a4] sm:$0xf]
    %v9148 = vld [vmem:[%s26 + $0x3a8] sm:$0xf]
    %v9149 = vld [vmem:[%s26 + $0x3ac] sm:$0xf]
    %v9150 = vld [vmem:[%s26 + $0x3b0] sm:$0xf]
    %v9151 = vld [vmem:[%s26 + $0x3b4] sm:$0xf]
    %v9152 = vld [vmem:[%s26 + $0x3b8] sm:$0xf]
    %v9153 = vld [vmem:[%s26 + $0x3bc] sm:$0xf]
    %v9154 = vld [vmem:[%s26 + $0x3c0] sm:$0xf]
    %v9155 = vld [vmem:[%s26 + $0x3c4] sm:$0xf]
    %v9156 = vld [vmem:[%s26 + $0x3c8] sm:$0xf]
    %v9157 = vld [vmem:[%s26 + $0x3cc] sm:$0xf]
    %v9158 = vld [vmem:[%s26 + $0x3d0] sm:$0xf]
    %v9159 = vld [vmem:[%s26 + $0x3d4] sm:$0xf]
    %v9160 = vld [vmem:[%s26 + $0x3d8] sm:$0xf]
    %v9161 = vld [vmem:[%s26 + $0x3dc] sm:$0xf]
    %v9162 = vld [vmem:[%s26 + $0x3e0] sm:$0xf]
    %v9163 = vld [vmem:[%s26 + $0x3e4] sm:$0xf]
    %v9164 = vld [vmem:[%s26 + $0x3e8] sm:$0xf]
    %v9165 = vld [vmem:[%s26 + $0x3ec] sm:$0xf]
    %v9166 = vld [vmem:[%s26 + $0x3f0] sm:$0xf]
    %v9167 = vld [vmem:[%s26 + $0x3f4] sm:$0xf]
    %v9168 = vld [vmem:[%s26 + $0x3f8] sm:$0xf]
    %v9169 = vld [vmem:[%s26 + $0x3fc] sm:$0xf]
    %v9170 = vld [vmem:[%s27] sm:$0x1]
    %v9172 = vlaneseq
    %v9173 = vshrl.u32 %v9172, 7
    %v9174 = vsub.s32 0, %v9173
    %v9175 = vrot.slane %v9170, %v9174
    %v9433 = vunpack.c.l.b16 %v8914
    %v9434 = vunpack.c.l.b16 %v8915
    %v9435 = vunpack.c.l.b16 %v8916
    %v9436 = vunpack.c.l.b16 %v8917
    %v9437 = vunpack.c.l.b16 %v8918
    %v9438 = vunpack.c.l.b16 %v8919
    %v9439 = vunpack.c.l.b16 %v8920
    %v9440 = vunpack.c.l.b16 %v8921
    %v9441 = vunpack.c.l.b16 %v8922
    %v9442 = vunpack.c.l.b16 %v8923
    %v9443 = vunpack.c.l.b16 %v8924
    %v9444 = vunpack.c.l.b16 %v8925
    %v9445 = vunpack.c.l.b16 %v8926
    %v9446 = vunpack.c.l.b16 %v8927
    %v9447 = vunpack.c.l.b16 %v8928
    %v9448 = vunpack.c.l.b16 %v8929
    %v9449 = vunpack.c.l.b16 %v8930
    %v9450 = vunpack.c.l.b16 %v8931
    %v9451 = vunpack.c.l.b16 %v8932
    %v9452 = vunpack.c.l.b16 %v8933
    %v9453 = vunpack.c.l.b16 %v8934
    %v9454 = vunpack.c.l.b16 %v8935
    %v9455 = vunpack.c.l.b16 %v8936
    %v9456 = vunpack.c.l.b16 %v8937
    %v9457 = vunpack.c.l.b16 %v8938
    %v9458 = vunpack.c.l.b16 %v8939
    %v9459 = vunpack.c.l.b16 %v8940
    %v9460 = vunpack.c.l.b16 %v8941
    %v9461 = vunpack.c.l.b16 %v8942
    %v9462 = vunpack.c.l.b16 %v8943
    %v9463 = vunpack.c.l.b16 %v8944
    %v9464 = vunpack.c.l.b16 %v8945
    %v9465 = vunpack.c.l.b16 %v8946
    %v9466 = vunpack.c.l.b16 %v8947
    %v9467 = vunpack.c.l.b16 %v8948
    %v9468 = vunpack.c.l.b16 %v8949
    %v9469 = vunpack.c.l.b16 %v8950
    %v9470 = vunpack.c.l.b16 %v8951
    %v9471 = vunpack.c.l.b16 %v8952
    %v9472 = vunpack.c.l.b16 %v8953
    %v9473 = vunpack.c.l.b16 %v8954
    %v9474 = vunpack.c.l.b16 %v8955
    %v9475 = vunpack.c.l.b16 %v8956
    %v9476 = vunpack.c.l.b16 %v8957
    %v9477 = vunpack.c.l.b16 %v8958
    %v9478 = vunpack.c.l.b16 %v8959
    %v9479 = vunpack.c.l.b16 %v8960
    %v9480 = vunpack.c.l.b16 %v8961
    %v9481 = vunpack.c.l.b16 %v8962
    %v9482 = vunpack.c.l.b16 %v8963
    %v9483 = vunpack.c.l.b16 %v8964
    %v9484 = vunpack.c.l.b16 %v8965
    %v9485 = vunpack.c.l.b16 %v8966
    %v9486 = vunpack.c.l.b16 %v8967
    %v9487 = vunpack.c.l.b16 %v8968
    %v9488 = vunpack.c.l.b16 %v8969
    %v9489 = vunpack.c.l.b16 %v8970
    %v9490 = vunpack.c.l.b16 %v8971
    %v9491 = vunpack.c.l.b16 %v8972
    %v9492 = vunpack.c.l.b16 %v8973
    %v9493 = vunpack.c.l.b16 %v8974
    %v9494 = vunpack.c.l.b16 %v8975
    %v9495 = vunpack.c.l.b16 %v8976
    %v9496 = vunpack.c.l.b16 %v8977
    %v9497 = vunpack.c.l.b16 %v8978
    %v9498 = vunpack.c.l.b16 %v8979
    %v9499 = vunpack.c.l.b16 %v8980
    %v9500 = vunpack.c.l.b16 %v8981
    %v9501 = vunpack.c.l.b16 %v8982
    %v9502 = vunpack.c.l.b16 %v8983
    %v9503 = vunpack.c.l.b16 %v8984
    %v9504 = vunpack.c.l.b16 %v8985
    %v9505 = vunpack.c.l.b16 %v8986
    %v9506 = vunpack.c.l.b16 %v8987
    %v9507 = vunpack.c.l.b16 %v8988
    %v9508 = vunpack.c.l.b16 %v8989
    %v9509 = vunpack.c.l.b16 %v8990
    %v9510 = vunpack.c.l.b16 %v8991
    %v9511 = vunpack.c.l.b16 %v8992
    %v9512 = vunpack.c.l.b16 %v8993
    %v9513 = vunpack.c.l.b16 %v8994
    %v9514 = vunpack.c.l.b16 %v8995
    %v9515 = vunpack.c.l.b16 %v8996
    %v9516 = vunpack.c.l.b16 %v8997
    %v9517 = vunpack.c.l.b16 %v8998
    %v9518 = vunpack.c.l.b16 %v8999
    %v9519 = vunpack.c.l.b16 %v9000
    %v9520 = vunpack.c.l.b16 %v9001
    %v9521 = vunpack.c.l.b16 %v9002
    %v9522 = vunpack.c.l.b16 %v9003
    %v9523 = vunpack.c.l.b16 %v9004
    %v9524 = vunpack.c.l.b16 %v9005
    %v9525 = vunpack.c.l.b16 %v9006
    %v9526 = vunpack.c.l.b16 %v9007
    %v9527 = vunpack.c.l.b16 %v9008
    %v9528 = vunpack.c.l.b16 %v9009
    %v9529 = vunpack.c.l.b16 %v9010
    %v9530 = vunpack.c.l.b16 %v9011
    %v9531 = vunpack.c.l.b16 %v9012
    %v9532 = vunpack.c.l.b16 %v9013
    %v9533 = vunpack.c.l.b16 %v9014
    %v9534 = vunpack.c.l.b16 %v9015
    %v9535 = vunpack.c.l.b16 %v9016
    %v9536 = vunpack.c.l.b16 %v9017
    %v9537 = vunpack.c.l.b16 %v9018
    %v9538 = vunpack.c.l.b16 %v9019
    %v9539 = vunpack.c.l.b16 %v9020
    %v9540 = vunpack.c.l.b16 %v9021
    %v9541 = vunpack.c.l.b16 %v9022
    %v9542 = vunpack.c.l.b16 %v9023
    %v9543 = vunpack.c.l.b16 %v9024
    %v9544 = vunpack.c.l.b16 %v9025
    %v9545 = vunpack.c.l.b16 %v9026
    %v9546 = vunpack.c.l.b16 %v9027
    %v9547 = vunpack.c.l.b16 %v9028
    %v9548 = vunpack.c.l.b16 %v9029
    %v9549 = vunpack.c.l.b16 %v9030
    %v9550 = vunpack.c.l.b16 %v9031
    %v9551 = vunpack.c.l.b16 %v9032
    %v9552 = vunpack.c.l.b16 %v9033
    %v9553 = vunpack.c.l.b16 %v9034
    %v9554 = vunpack.c.l.b16 %v9035
    %v9555 = vunpack.c.l.b16 %v9036
    %v9556 = vunpack.c.l.b16 %v9037
    %v9557 = vunpack.c.l.b16 %v9038
    %v9558 = vunpack.c.l.b16 %v9039
    %v9559 = vunpack.c.l.b16 %v9040
    %v9560 = vunpack.c.l.b16 %v9041
    %v9561 = vunpack.c.l.b16 %v9042
    %v9562 = vunpack.c.l.b16 %v9043
    %v9563 = vunpack.c.l.b16 %v9044
    %v9564 = vunpack.c.l.b16 %v9045
    %v9565 = vunpack.c.l.b16 %v9046
    %v9566 = vunpack.c.l.b16 %v9047
    %v9567 = vunpack.c.l.b16 %v9048
    %v9568 = vunpack.c.l.b16 %v9049
    %v9569 = vunpack.c.l.b16 %v9050
    %v9570 = vunpack.c.l.b16 %v9051
    %v9571 = vunpack.c.l.b16 %v9052
    %v9572 = vunpack.c.l.b16 %v9053
    %v9573 = vunpack.c.l.b16 %v9054
    %v9574 = vunpack.c.l.b16 %v9055
    %v9575 = vunpack.c.l.b16 %v9056
    %v9576 = vunpack.c.l.b16 %v9057
    %v9577 = vunpack.c.l.b16 %v9058
    %v9578 = vunpack.c.l.b16 %v9059
    %v9579 = vunpack.c.l.b16 %v9060
    %v9580 = vunpack.c.l.b16 %v9061
    %v9581 = vunpack.c.l.b16 %v9062
    %v9582 = vunpack.c.l.b16 %v9063
    %v9583 = vunpack.c.l.b16 %v9064
    %v9584 = vunpack.c.l.b16 %v9065
    %v9585 = vunpack.c.l.b16 %v9066
    %v9586 = vunpack.c.l.b16 %v9067
    %v9587 = vunpack.c.l.b16 %v9068
    %v9588 = vunpack.c.l.b16 %v9069
    %v9589 = vunpack.c.l.b16 %v9070
    %v9590 = vunpack.c.l.b16 %v9071
    %v9591 = vunpack.c.l.b16 %v9072
    %v9592 = vunpack.c.l.b16 %v9073
    %v9593 = vunpack.c.l.b16 %v9074
    %v9594 = vunpack.c.l.b16 %v9075
    %v9595 = vunpack.c.l.b16 %v9076
    %v9596 = vunpack.c.l.b16 %v9077
    %v9597 = vunpack.c.l.b16 %v9078
    %v9598 = vunpack.c.l.b16 %v9079
    %v9599 = vunpack.c.l.b16 %v9080
    %v9600 = vunpack.c.l.b16 %v9081
    %v9601 = vunpack.c.l.b16 %v9082
    %v9602 = vunpack.c.l.b16 %v9083
    %v9603 = vunpack.c.l.b16 %v9084
    %v9604 = vunpack.c.l.b16 %v9085
    %v9605 = vunpack.c.l.b16 %v9086
    %v9606 = vunpack.c.l.b16 %v9087
    %v9607 = vunpack.c.l.b16 %v9088
    %v9608 = vunpack.c.l.b16 %v9089
    %v9609 = vunpack.c.l.b16 %v9090
    %v9610 = vunpack.c.l.b16 %v9091
    %v9611 = vunpack.c.l.b16 %v9092
    %v9612 = vunpack.c.l.b16 %v9093
    %v9613 = vunpack.c.l.b16 %v9094
    %v9614 = vunpack.c.l.b16 %v9095
    %v9615 = vunpack.c.l.b16 %v9096
    %v9616 = vunpack.c.l.b16 %v9097
    %v9617 = vunpack.c.l.b16 %v9098
    %v9618 = vunpack.c.l.b16 %v9099
    %v9619 = vunpack.c.l.b16 %v9100
    %v9620 = vunpack.c.l.b16 %v9101
    %v9621 = vunpack.c.l.b16 %v9102
    %v9622 = vunpack.c.l.b16 %v9103
    %v9623 = vunpack.c.l.b16 %v9104
    %v9624 = vunpack.c.l.b16 %v9105
    %v9625 = vunpack.c.l.b16 %v9106
    %v9626 = vunpack.c.l.b16 %v9107
    %v9627 = vunpack.c.l.b16 %v9108
    %v9628 = vunpack.c.l.b16 %v9109
    %v9629 = vunpack.c.l.b16 %v9110
    %v9630 = vunpack.c.l.b16 %v9111
    %v9631 = vunpack.c.l.b16 %v9112
    %v9632 = vunpack.c.l.b16 %v9113
    %v9633 = vunpack.c.l.b16 %v9114
    %v9634 = vunpack.c.l.b16 %v9115
    %v9635 = vunpack.c.l.b16 %v9116
    %v9636 = vunpack.c.l.b16 %v9117
    %v9637 = vunpack.c.l.b16 %v9118
    %v9638 = vunpack.c.l.b16 %v9119
    %v9639 = vunpack.c.l.b16 %v9120
    %v9640 = vunpack.c.l.b16 %v9121
    %v9641 = vunpack.c.l.b16 %v9122
    %v9642 = vunpack.c.l.b16 %v9123
    %v9643 = vunpack.c.l.b16 %v9124
    %v9644 = vunpack.c.l.b16 %v9125
    %v9645 = vunpack.c.l.b16 %v9126
    %v9646 = vunpack.c.l.b16 %v9127
    %v9647 = vunpack.c.l.b16 %v9128
    %v9648 = vunpack.c.l.b16 %v9129
    %v9649 = vunpack.c.l.b16 %v9130
    %v9650 = vunpack.c.l.b16 %v9131
    %v9651 = vunpack.c.l.b16 %v9132
    %v9652 = vunpack.c.l.b16 %v9133
    %v9653 = vunpack.c.l.b16 %v9134
    %v9654 = vunpack.c.l.b16 %v9135
    %v9655 = vunpack.c.l.b16 %v9136
    %v9656 = vunpack.c.l.b16 %v9137
    %v9657 = vunpack.c.l.b16 %v9138
    %v9658 = vunpack.c.l.b16 %v9139
    %v9659 = vunpack.c.l.b16 %v9140
    %v9660 = vunpack.c.l.b16 %v9141
    %v9661 = vunpack.c.l.b16 %v9142
    %v9662 = vunpack.c.l.b16 %v9143
    %v9663 = vunpack.c.l.b16 %v9144
    %v9664 = vunpack.c.l.b16 %v9145
    %v9665 = vunpack.c.l.b16 %v9146
    %v9666 = vunpack.c.l.b16 %v9147
    %v9667 = vunpack.c.l.b16 %v9148
    %v9668 = vunpack.c.l.b16 %v9149
    %v9669 = vunpack.c.l.b16 %v9150
    %v9670 = vunpack.c.l.b16 %v9151
    %v9671 = vunpack.c.l.b16 %v9152
    %v9672 = vunpack.c.l.b16 %v9153
    %v9673 = vunpack.c.l.b16 %v9154
    %v9674 = vunpack.c.l.b16 %v9155
    %v9675 = vunpack.c.l.b16 %v9156
    %v9676 = vunpack.c.l.b16 %v9157
    %v9677 = vunpack.c.l.b16 %v9158
    %v9678 = vunpack.c.l.b16 %v9159
    %v9679 = vunpack.c.l.b16 %v9160
    %v9680 = vunpack.c.l.b16 %v9161
    %v9681 = vunpack.c.l.b16 %v9162
    %v9682 = vunpack.c.l.b16 %v9163
    %v9683 = vunpack.c.l.b16 %v9164
    %v9684 = vunpack.c.l.b16 %v9165
    %v9685 = vunpack.c.l.b16 %v9166
    %v9686 = vunpack.c.l.b16 %v9167
    %v9687 = vunpack.c.l.b16 %v9168
    %v9688 = vunpack.c.l.b16 %v9169
    %v9689 = vpack.c.b16 %v9434, %v9433
    %v9690 = vpack.c.b16 %v9436, %v9435
    %v9691 = vpack.c.b16 %v9438, %v9437
    %v9692 = vpack.c.b16 %v9440, %v9439
    %v9693 = vpack.c.b16 %v9442, %v9441
    %v9694 = vpack.c.b16 %v9444, %v9443
    %v9695 = vpack.c.b16 %v9446, %v9445
    %v9696 = vpack.c.b16 %v9448, %v9447
    %v9697 = vpack.c.b16 %v9450, %v9449
    %v9698 = vpack.c.b16 %v9452, %v9451
    %v9699 = vpack.c.b16 %v9454, %v9453
    %v9700 = vpack.c.b16 %v9456, %v9455
    %v9701 = vpack.c.b16 %v9458, %v9457
    %v9702 = vpack.c.b16 %v9460, %v9459
    %v9703 = vpack.c.b16 %v9462, %v9461
    %v9704 = vpack.c.b16 %v9464, %v9463
    %v9705 = vpack.c.b16 %v9466, %v9465
    %v9706 = vpack.c.b16 %v9468, %v9467
    %v9707 = vpack.c.b16 %v9470, %v9469
    %v9708 = vpack.c.b16 %v9472, %v9471
    %v9709 = vpack.c.b16 %v9474, %v9473
    %v9710 = vpack.c.b16 %v9476, %v9475
    %v9711 = vpack.c.b16 %v9478, %v9477
    %v9712 = vpack.c.b16 %v9480, %v9479
    %v9713 = vpack.c.b16 %v9482, %v9481
    %v9714 = vpack.c.b16 %v9484, %v9483
    %v9715 = vpack.c.b16 %v9486, %v9485
    %v9716 = vpack.c.b16 %v9488, %v9487
    %v9717 = vpack.c.b16 %v9490, %v9489
    %v9718 = vpack.c.b16 %v9492, %v9491
    %v9719 = vpack.c.b16 %v9494, %v9493
    %v9720 = vpack.c.b16 %v9496, %v9495
    %v9721 = vpack.c.b16 %v9498, %v9497
    %v9722 = vpack.c.b16 %v9500, %v9499
    %v9723 = vpack.c.b16 %v9502, %v9501
    %v9724 = vpack.c.b16 %v9504, %v9503
    %v9725 = vpack.c.b16 %v9506, %v9505
    %v9726 = vpack.c.b16 %v9508, %v9507
    %v9727 = vpack.c.b16 %v9510, %v9509
    %v9728 = vpack.c.b16 %v9512, %v9511
    %v9729 = vpack.c.b16 %v9514, %v9513
    %v9730 = vpack.c.b16 %v9516, %v9515
    %v9731 = vpack.c.b16 %v9518, %v9517
    %v9732 = vpack.c.b16 %v9520, %v9519
    %v9733 = vpack.c.b16 %v9522, %v9521
    %v9734 = vpack.c.b16 %v9524, %v9523
    %v9735 = vpack.c.b16 %v9526, %v9525
    %v9736 = vpack.c.b16 %v9528, %v9527
    %v9737 = vpack.c.b16 %v9530, %v9529
    %v9738 = vpack.c.b16 %v9532, %v9531
    %v9739 = vpack.c.b16 %v9534, %v9533
    %v9740 = vpack.c.b16 %v9536, %v9535
    %v9741 = vpack.c.b16 %v9538, %v9537
    %v9742 = vpack.c.b16 %v9540, %v9539
    %v9743 = vpack.c.b16 %v9542, %v9541
    %v9744 = vpack.c.b16 %v9544, %v9543
    %v9745 = vpack.c.b16 %v9546, %v9545
    %v9746 = vpack.c.b16 %v9548, %v9547
    %v9747 = vpack.c.b16 %v9550, %v9549
    %v9748 = vpack.c.b16 %v9552, %v9551
    %v9749 = vpack.c.b16 %v9554, %v9553
    %v9750 = vpack.c.b16 %v9556, %v9555
    %v9751 = vpack.c.b16 %v9558, %v9557
    %v9752 = vpack.c.b16 %v9560, %v9559
    %v9753 = vpack.c.b16 %v9562, %v9561
    %v9754 = vpack.c.b16 %v9564, %v9563
    %v9755 = vpack.c.b16 %v9566, %v9565
    %v9756 = vpack.c.b16 %v9568, %v9567
    %v9757 = vpack.c.b16 %v9570, %v9569
    %v9758 = vpack.c.b16 %v9572, %v9571
    %v9759 = vpack.c.b16 %v9574, %v9573
    %v9760 = vpack.c.b16 %v9576, %v9575
    %v9761 = vpack.c.b16 %v9578, %v9577
    %v9762 = vpack.c.b16 %v9580, %v9579
    %v9763 = vpack.c.b16 %v9582, %v9581
    %v9764 = vpack.c.b16 %v9584, %v9583
    %v9765 = vpack.c.b16 %v9586, %v9585
    %v9766 = vpack.c.b16 %v9588, %v9587
    %v9767 = vpack.c.b16 %v9590, %v9589
    %v9768 = vpack.c.b16 %v9592, %v9591
    %v9769 = vpack.c.b16 %v9594, %v9593
    %v9770 = vpack.c.b16 %v9596, %v9595
    %v9771 = vpack.c.b16 %v9598, %v9597
    %v9772 = vpack.c.b16 %v9600, %v9599
    %v9773 = vpack.c.b16 %v9602, %v9601
    %v9774 = vpack.c.b16 %v9604, %v9603
    %v9775 = vpack.c.b16 %v9606, %v9605
    %v9776 = vpack.c.b16 %v9608, %v9607
    %v9777 = vpack.c.b16 %v9610, %v9609
    %v9778 = vpack.c.b16 %v9612, %v9611
    %v9779 = vpack.c.b16 %v9614, %v9613
    %v9780 = vpack.c.b16 %v9616, %v9615
    %v9781 = vpack.c.b16 %v9618, %v9617
    %v9782 = vpack.c.b16 %v9620, %v9619
    %v9783 = vpack.c.b16 %v9622, %v9621
    %v9784 = vpack.c.b16 %v9624, %v9623
    %v9785 = vpack.c.b16 %v9626, %v9625
    %v9786 = vpack.c.b16 %v9628, %v9627
    %v9787 = vpack.c.b16 %v9630, %v9629
    %v9788 = vpack.c.b16 %v9632, %v9631
    %v9789 = vpack.c.b16 %v9634, %v9633
    %v9790 = vpack.c.b16 %v9636, %v9635
    %v9791 = vpack.c.b16 %v9638, %v9637
    %v9792 = vpack.c.b16 %v9640, %v9639
    %v9793 = vpack.c.b16 %v9642, %v9641
    %v9794 = vpack.c.b16 %v9644, %v9643
    %v9795 = vpack.c.b16 %v9646, %v9645
    %v9796 = vpack.c.b16 %v9648, %v9647
    %v9797 = vpack.c.b16 %v9650, %v9649
    %v9798 = vpack.c.b16 %v9652, %v9651
    %v9799 = vpack.c.b16 %v9654, %v9653
    %v9800 = vpack.c.b16 %v9656, %v9655
    %v9801 = vpack.c.b16 %v9658, %v9657
    %v9802 = vpack.c.b16 %v9660, %v9659
    %v9803 = vpack.c.b16 %v9662, %v9661
    %v9804 = vpack.c.b16 %v9664, %v9663
    %v9805 = vpack.c.b16 %v9666, %v9665
    %v9806 = vpack.c.b16 %v9668, %v9667
    %v9807 = vpack.c.b16 %v9670, %v9669
    %v9808 = vpack.c.b16 %v9672, %v9671
    %v9809 = vpack.c.b16 %v9674, %v9673
    %v9810 = vpack.c.b16 %v9676, %v9675
    %v9811 = vpack.c.b16 %v9678, %v9677
    %v9812 = vpack.c.b16 %v9680, %v9679
    %v9813 = vpack.c.b16 %v9682, %v9681
    %v9814 = vpack.c.b16 %v9684, %v9683
    %v9815 = vpack.c.b16 %v9686, %v9685
    %v9816 = vpack.c.b16 %v9688, %v9687
    %9945 = vmatprep.subr.bf16.mxu0 0
    %9946 = vmatpush1.bf16.msra.mxu0 %v9689
    %9947 = vmatprep.subr.bf16.mxu0 0
    %9948 = vmatpush1.bf16.msra.mxu0 %v9690
    %9949 = vmatprep.subr.bf16.mxu0 0
    %9950 = vmatpush1.bf16.msra.mxu0 %v9691
    %9951 = vmatprep.subr.bf16.mxu0 0
    %9952 = vmatpush1.bf16.msra.mxu0 %v9692
    %9953 = vmatprep.subr.bf16.mxu0 0
    %9954 = vmatpush1.bf16.msra.mxu0 %v9693
    %9955 = vmatprep.subr.bf16.mxu0 0
    %9956 = vmatpush1.bf16.msra.mxu0 %v9694
    %9957 = vmatprep.subr.bf16.mxu0 0
    %9958 = vmatpush1.bf16.msra.mxu0 %v9695
    %9959 = vmatprep.subr.bf16.mxu0 0
    %9960 = vmatpush1.bf16.msra.mxu0 %v9696
    %9961 = vmatprep.subr.bf16.mxu0 0
    %9962 = vmatpush1.bf16.msra.mxu0 %v9697
    %9963 = vmatprep.subr.bf16.mxu0 0
    %9964 = vmatpush1.bf16.msra.mxu0 %v9698
    %9965 = vmatprep.subr.bf16.mxu0 0
    %9966 = vmatpush1.bf16.msra.mxu0 %v9699
    %9967 = vmatprep.subr.bf16.mxu0 0
    %9968 = vmatpush1.bf16.msra.mxu0 %v9700
    %9969 = vmatprep.subr.bf16.mxu0 0
    %9970 = vmatpush1.bf16.msra.mxu0 %v9701
    %9971 = vmatprep.subr.bf16.mxu0 0
    %9972 = vmatpush1.bf16.msra.mxu0 %v9702
    %9973 = vmatprep.subr.bf16.mxu0 0
    %9974 = vmatpush1.bf16.msra.mxu0 %v9703
    %9975 = vmatprep.subr.bf16.mxu0 0
    %9976 = vmatpush1.bf16.msra.mxu0 %v9704
    %9977 = vmatprep.mubr.bf16.mxu0 %v8787
    %9978 = vmatmul.mubr.bf16.gmra.mrb[0].mxu0 %v8786
    %v9979 = vpop.f32.mrb[0].mxu0
    %v9980 = vadd.f32 %v9175, %v9979
    %v9981 = vpop.f32.mrb[0].mxu0
    %v9982 = vpop.f32.mrb[0].mxu0
    %v9983 = vadd.f32 %v9175, %v9982
    %v9984 = vpop.f32.mrb[0].mxu0
    %9985 = vmatprep.mubr.bf16.mxu0 %v8803
    %9986 = vmatmul.mubr.bf16.gmra.mrb[0].mxu0 %v8802
    %v9987 = vpop.f32.mrb[0].mxu0
    %v9988 = vadd.f32 %v9175, %v9987
    %v9989 = vpop.f32.mrb[0].mxu0
    %v9990 = vpop.f32.mrb[0].mxu0
    %v9991 = vadd.f32 %v9175, %v9990
    %v9992 = vpop.f32.mrb[0].mxu0
    %9993 = vmatprep.mubr.bf16.mxu0 %v8819
    %9994 = vmatmul.mubr.bf16.gmra.mrb[0].mxu0 %v8818
    %v9995 = vpop.f32.mrb[0].mxu0
    %v9996 = vadd.f32 %v9175, %v9995
    %v9997 = vpop.f32.mrb[0].mxu0
    %v9998 = vpop.f32.mrb[0].mxu0
    %v9999 = vadd.f32 %v9175, %v9998
    %v10000 = vpop.f32.mrb[0].mxu0
    %10001 = vmatprep.mubr.bf16.mxu0 %v8835
    %10002 = vmatmul.mubr.bf16.gmra.mrb[0].mxu0 %v8834
    %v10003 = vpop.f32.mrb[0].mxu0
    %v10004 = vadd.f32 %v9175, %v10003
    %v10005 = vpop.f32.mrb[0].mxu0
    %v10006 = vpop.f32.mrb[0].mxu0
    %v10007 = vadd.f32 %v9175, %v10006
    %v10008 = vpop.f32.mrb[0].mxu0
    %10009 = vmatprep.mubr.bf16.mxu0 %v8851
    %10010 = vmatmul.mubr.bf16.gmra.mrb[0].mxu0 %v8850
    %v10011 = vpop.f32.mrb[0].mxu0
    %v10012 = vadd.f32 %v9175, %v10011
    %v10013 = vpop.f32.mrb[0].mxu0
    %v10014 = vpop.f32.mrb[0].mxu0
    %v10015 = vadd.f32 %v9175, %v10014
    %v10016 = vpop.f32.mrb[0].mxu0
    %10017 = vmatprep.mubr.bf16.mxu0 %v8867
    %10018 = vmatmul.mubr.bf16.gmra.mrb[0].mxu0 %v8866
    %v10019 = vpop.f32.mrb[0].mxu0
    %v10020 = vadd.f32 %v9175, %v10019
    %v10021 = vpop.f32.mrb[0].mxu0
    %v10022 = vpop.f32.mrb[0].mxu0
    %v10023 = vadd.f32 %v9175, %v10022
    %v10024 = vpop.f32.mrb[0].mxu0
    %10025 = vmatprep.mubr.bf16.mxu0 %v8883
    %10026 = vmatmul.mubr.bf16.gmra.mrb[0].mxu0 %v8882
    %v10027 = vpop.f32.mrb[0].mxu0
    %v10028 = vadd.f32 %v9175, %v10027
    %v10029 = vpop.f32.mrb[0].mxu0
    %v10030 = vpop.f32.mrb[0].mxu0
    %v10031 = vadd.f32 %v9175, %v10030
    %v10032 = vpop.f32.mrb[0].mxu0
    %10033 = vmatprep.mubr.bf16.mxu0 %v8899
    %10034 = vmatmul.mubr.bf16.gmra.mrb[0].mxu0 %v8898
    %v10035 = vpop.f32.mrb[0].mxu0
    %v10036 = vadd.f32 %v9175, %v10035
    %v10037 = vpop.f32.mrb[0].mxu0
    %v10038 = vpop.f32.mrb[0].mxu0
    %v10039 = vadd.f32 %v9175, %v10038
    %v10040 = vpop.f32.mrb[0].mxu0
    %10041 = vdwg.mxu0
    %10042 = vmatprep.subr.bf16.mxu0 0
    %10043 = vmatpush1.bf16.msra.mxu0 %v9705
    %10044 = vmatprep.subr.bf16.mxu0 0
    %10045 = vmatpush1.bf16.msra.mxu0 %v9706
    %10046 = vmatprep.subr.bf16.mxu0 0
    %10047 = vmatpush1.bf16.msra.mxu0 %v9707
    %10048 = vmatprep.subr.bf16.mxu0 0
    %10049 = vmatpush1.bf16.msra.mxu0 %v9708
    %10050 = vmatprep.subr.bf16.mxu0 0
    %10051 = vmatpush1.bf16.msra.mxu0 %v9709
    %10052 = vmatprep.subr.bf16.mxu0 0
    %10053 = vmatpush1.bf16.msra.mxu0 %v9710
    %10054 = vmatprep.subr.bf16.mxu0 0
    %10055 = vmatpush1.bf16.msra.mxu0 %v9711
    %10056 = vmatprep.subr.bf16.mxu0 0
    %10057 = vmatpush1.bf16.msra.mxu0 %v9712
    %10058 = vmatprep.subr.bf16.mxu0 0
    %10059 = vmatpush1.bf16.msra.mxu0 %v9713
    %10060 = vmatprep.subr.bf16.mxu0 0
    %10061 = vmatpush1.bf16.msra.mxu0 %v9714
    %10062 = vmatprep.subr.bf16.mxu0 0
    %10063 = vmatpush1.bf16.msra.mxu0 %v9715
    %10064 = vmatprep.subr.bf16.mxu0 0
    %10065 = vmatpush1.bf16.msra.mxu0 %v9716
    %10066 = vmatprep.subr.bf16.mxu0 0
    %10067 = vmatpush1.bf16.msra.mxu0 %v9717
    %10068 = vmatprep.subr.bf16.mxu0 0
    %10069 = vmatpush1.bf16.msra.mxu0 %v9718
    %10070 = vmatprep.subr.bf16.mxu0 0
    %10071 = vmatpush1.bf16.msra.mxu0 %v9719
    %10072 = vmatprep.subr.bf16.mxu0 0
    %10073 = vmatpush1.bf16.msra.mxu0 %v9720
    %10074 = vmatprep.mubr.bf16.mxu0 %v8789
    %10075 = vmatmul.mubr.bf16.gmra.mrb[0].mxu0 %v8788
    %v10076 = vpop.f32.mrb[0].mxu0
    %v10077 = vadd.f32 %v9980, %v10076
    %v10078 = vpop.f32.mrb[0].mxu0
    %v10079 = vpop.f32.mrb[0].mxu0
    %v10080 = vadd.f32 %v9983, %v10079
    %v10081 = vpop.f32.mrb[0].mxu0
    %10082 = vmatprep.mubr.bf16.mxu0 %v8805
    %10083 = vmatmul.mubr.bf16.gmra.mrb[0].mxu0 %v8804
    %v10084 = vpop.f32.mrb[0].mxu0
    %v10085 = vadd.f32 %v9988, %v10084
    %v10086 = vpop.f32.mrb[0].mxu0
    %v10087 = vpop.f32.mrb[0].mxu0
    %v10088 = vadd.f32 %v9991, %v10087
    %v10089 = vpop.f32.mrb[0].mxu0
    %10090 = vmatprep.mubr.bf16.mxu0 %v8821
    %10091 = vmatmul.mubr.bf16.gmra.mrb[0].mxu0 %v8820
    %v10092 = vpop.f32.mrb[0].mxu0
    %v10093 = vadd.f32 %v9996, %v10092
    %v10094 = vpop.f32.mrb[0].mxu0
    %v10095 = vpop.f32.mrb[0].mxu0
    %v10096 = vadd.f32 %v9999, %v10095
    %v10097 = vpop.f32.mrb[0].mxu0
    %10098 = vmatprep.mubr.bf16.mxu0 %v8837
    %10099 = vmatmul.mubr.bf16.gmra.mrb[0].mxu0 %v8836
    %v10100 = vpop.f32.mrb[0].mxu0
    %v10101 = vadd.f32 %v10004, %v10100
    %v10102 = vpop.f32.mrb[0].mxu0
    %v10103 = vpop.f32.mrb[0].mxu0
    %v10104 = vadd.f32 %v10007, %v10103
    %v10105 = vpop.f32.mrb[0].mxu0
    %10106 = vmatprep.mubr.bf16.mxu0 %v8853
    %10107 = vmatmul.mubr.bf16.gmra.mrb[0].mxu0 %v8852
    %v10108 = vpop.f32.mrb[0].mxu0
    %v10109 = vadd.f32 %v10012, %v10108
    %v10110 = vpop.f32.mrb[0].mxu0
    %v10111 = vpop.f32.mrb[0].mxu0
    %v10112 = vadd.f32 %v10015, %v10111
    %v10113 = vpop.f32.mrb[0].mxu0
    %10114 = vmatprep.mubr.bf16.mxu0 %v8869
    %10115 = vmatmul.mubr.bf16.gmra.mrb[0].mxu0 %v8868
    %v10116 = vpop.f32.mrb[0].mxu0
    %v10117 = vadd.f32 %v10020, %v10116
    %v10118 = vpop.f32.mrb[0].mxu0
    %v10119 = vpop.f32.mrb[0].mxu0
    %v10120 = vadd.f32 %v10023, %v10119
    %v10121 = vpop.f32.mrb[0].mxu0
    %10122 = vmatprep.mubr.bf16.mxu0 %v8885
    %10123 = vmatmul.mubr.bf16.gmra.mrb[0].mxu0 %v8884
    %v10124 = vpop.f32.mrb[0].mxu0
    %v10125 = vadd.f32 %v10028, %v10124
    %v10126 = vpop.f32.mrb[0].mxu0
    %v10127 = vpop.f32.mrb[0].mxu0
    %v10128 = vadd.f32 %v10031, %v10127
    %v10129 = vpop.f32.mrb[0].mxu0
    %10130 = vmatprep.mubr.bf16.mxu0 %v8901
    %10131 = vmatmul.mubr.bf16.gmra.mrb[0].mxu0 %v8900
    %v10132 = vpop.f32.mrb[0].mxu0
    %v10133 = vadd.f32 %v10036, %v10132
    %v10134 = vpop.f32.mrb[0].mxu0
    %v10135 = vpop.f32.mrb[0].mxu0
    %v10136 = vadd.f32 %v10039, %v10135
    %v10137 = vpop.f32.mrb[0].mxu0
    %10138 = vdwg.mxu0
    %10139 = vmatprep.subr.bf16.mxu0 0
    %10140 = vmatpush1.bf16.msra.mxu0 %v9721
    %10141 = vmatprep.subr.bf16.mxu0 0
    %10142 = vmatpush1.bf16.msra.mxu0 %v9722
    %10143 = vmatprep.subr.bf16.mxu0 0
    %10144 = vmatpush1.bf16.msra.mxu0 %v9723
    %10145 = vmatprep.subr.bf16.mxu0 0
    %10146 = vmatpush1.bf16.msra.mxu0 %v9724
    %10147 = vmatprep.subr.bf16.mxu0 0
    %10148 = vmatpush1.bf16.msra.mxu0 %v9725
    %10149 = vmatprep.subr.bf16.mxu0 0
    %10150 = vmatpush1.bf16.msra.mxu0 %v9726
    %10151 = vmatprep.subr.bf16.mxu0 0
    %10152 = vmatpush1.bf16.msra.mxu0 %v9727
    %10153 = vmatprep.subr.bf16.mxu0 0
    %10154 = vmatpush1.bf16.msra.mxu0 %v9728
    %10155 = vmatprep.subr.bf16.mxu0 0
    %10156 = vmatpush1.bf16.msra.mxu0 %v9729
    %10157 = vmatprep.subr.bf16.mxu0 0
    %10158 = vmatpush1.bf16.msra.mxu0 %v9730
    %10159 = vmatprep.subr.bf16.mxu0 0
    %10160 = vmatpush1.bf16.msra.mxu0 %v9731
    %10161 = vmatprep.subr.bf16.mxu0 0
    %10162 = vmatpush1.bf16.msra.mxu0 %v9732
    %10163 = vmatprep.subr.bf16.mxu0 0
    %10164 = vmatpush1.bf16.msra.mxu0 %v9733
    %10165 = vmatprep.subr.bf16.mxu0 0
    %10166 = vmatpush1.bf16.msra.mxu0 %v9734
    %10167 = vmatprep.subr.bf16.mxu0 0
    %10168 = vmatpush1.bf16.msra.mxu0 %v9735
    %10169 = vmatprep.subr.bf16.mxu0 0
    %10170 = vmatpush1.bf16.msra.mxu0 %v9736
    %10171 = vmatprep.mubr.bf16.mxu0 %v8791
    %10172 = vmatmul.mubr.bf16.gmra.mrb[0].mxu0 %v8790
    %v10173 = vpop.f32.mrb[0].mxu0
    %v10174 = vadd.f32 %v10077, %v10173
    %v10175 = vpop.f32.mrb[0].mxu0
    %v10176 = vpop.f32.mrb[0].mxu0
    %v10177 = vadd.f32 %v10080, %v10176
    %v10178 = vpop.f32.mrb[0].mxu0
    %10179 = vmatprep.mubr.bf16.mxu0 %v8807
    %10180 = vmatmul.mubr.bf16.gmra.mrb[0].mxu0 %v8806
    %v10181 = vpop.f32.mrb[0].mxu0
    %v10182 = vadd.f32 %v10085, %v10181
    %v10183 = vpop.f32.mrb[0].mxu0
    %v10184 = vpop.f32.mrb[0].mxu0
    %v10185 = vadd.f32 %v10088, %v10184
    %v10186 = vpop.f32.mrb[0].mxu0
    %10187 = vmatprep.mubr.bf16.mxu0 %v8823
    %10188 = vmatmul.mubr.bf16.gmra.mrb[0].mxu0 %v8822
    %v10189 = vpop.f32.mrb[0].mxu0
    %v10190 = vadd.f32 %v10093, %v10189
    %v10191 = vpop.f32.mrb[0].mxu0
    %v10192 = vpop.f32.mrb[0].mxu0
    %v10193 = vadd.f32 %v10096, %v10192
    %v10194 = vpop.f32.mrb[0].mxu0
    %10195 = vmatprep.mubr.bf16.mxu0 %v8839
    %10196 = vmatmul.mubr.bf16.gmra.mrb[0].mxu0 %v8838
    %v10197 = vpop.f32.mrb[0].mxu0
    %v10198 = vadd.f32 %v10101, %v10197
    %v10199 = vpop.f32.mrb[0].mxu0
    %v10200 = vpop.f32.mrb[0].mxu0
    %v10201 = vadd.f32 %v10104, %v10200
    %v10202 = vpop.f32.mrb[0].mxu0
    %10203 = vmatprep.mubr.bf16.mxu0 %v8855
    %10204 = vmatmul.mubr.bf16.gmra.mrb[0].mxu0 %v8854
    %v10205 = vpop.f32.mrb[0].mxu0
    %v10206 = vadd.f32 %v10109, %v10205
    %v10207 = vpop.f32.mrb[0].mxu0
    %v10208 = vpop.f32.mrb[0].mxu0
    %v10209 = vadd.f32 %v10112, %v10208
    %v10210 = vpop.f32.mrb[0].mxu0
    %10211 = vmatprep.mubr.bf16.mxu0 %v8871
    %10212 = vmatmul.mubr.bf16.gmra.mrb[0].mxu0 %v8870
    %v10213 = vpop.f32.mrb[0].mxu0
    %v10214 = vadd.f32 %v10117, %v10213
    %v10215 = vpop.f32.mrb[0].mxu0
    %v10216 = vpop.f32.mrb[0].mxu0
    %v10217 = vadd.f32 %v10120, %v10216
    %v10218 = vpop.f32.mrb[0].mxu0
    %10219 = vmatprep.mubr.bf16.mxu0 %v8887
    %10220 = vmatmul.mubr.bf16.gmra.mrb[0].mxu0 %v8886
    %v10221 = vpop.f32.mrb[0].mxu0
    %v10222 = vadd.f32 %v10125, %v10221
    %v10223 = vpop.f32.mrb[0].mxu0
    %v10224 = vpop.f32.mrb[0].mxu0
    %v10225 = vadd.f32 %v10128, %v10224
    %v10226 = vpop.f32.mrb[0].mxu0
    %10227 = vmatprep.mubr.bf16.mxu0 %v8903
    %10228 = vmatmul.mubr.bf16.gmra.mrb[0].mxu0 %v8902
    %v10229 = vpop.f32.mrb[0].mxu0
    %v10230 = vadd.f32 %v10133, %v10229
    %v10231 = vpop.f32.mrb[0].mxu0
    %v10232 = vpop.f32.mrb[0].mxu0
    %v10233 = vadd.f32 %v10136, %v10232
    %v10234 = vpop.f32.mrb[0].mxu0
    %10235 = vdwg.mxu0
    %10236 = vmatprep.subr.bf16.mxu0 0
    %10237 = vmatpush1.bf16.msra.mxu0 %v9737
    %10238 = vmatprep.subr.bf16.mxu0 0
    %10239 = vmatpush1.bf16.msra.mxu0 %v9738
    %10240 = vmatprep.subr.bf16.mxu0 0
    %10241 = vmatpush1.bf16.msra.mxu0 %v9739
    %10242 = vmatprep.subr.bf16.mxu0 0
    %10243 = vmatpush1.bf16.msra.mxu0 %v9740
    %10244 = vmatprep.subr.bf16.mxu0 0
    %10245 = vmatpush1.bf16.msra.mxu0 %v9741
    %10246 = vmatprep.subr.bf16.mxu0 0
    %10247 = vmatpush1.bf16.msra.mxu0 %v9742
    %10248 = vmatprep.subr.bf16.mxu0 0
    %10249 = vmatpush1.bf16.msra.mxu0 %v9743
    %10250 = vmatprep.subr.bf16.mxu0 0
    %10251 = vmatpush1.bf16.msra.mxu0 %v9744
    %10252 = vmatprep.subr.bf16.mxu0 0
    %10253 = vmatpush1.bf16.msra.mxu0 %v9745
    %10254 = vmatprep.subr.bf16.mxu0 0
    %10255 = vmatpush1.bf16.msra.mxu0 %v9746
    %10256 = vmatprep.subr.bf16.mxu0 0
    %10257 = vmatpush1.bf16.msra.mxu0 %v9747
    %10258 = vmatprep.subr.bf16.mxu0 0
    %10259 = vmatpush1.bf16.msra.mxu0 %v9748
    %10260 = vmatprep.subr.bf16.mxu0 0
    %10261 = vmatpush1.bf16.msra.mxu0 %v9749
    %10262 = vmatprep.subr.bf16.mxu0 0
    %10263 = vmatpush1.bf16.msra.mxu0 %v9750
    %10264 = vmatprep.subr.bf16.mxu0 0
    %10265 = vmatpush1.bf16.msra.mxu0 %v9751
    %10266 = vmatprep.subr.bf16.mxu0 0
    %10267 = vmatpush1.bf16.msra.mxu0 %v9752
    %10268 = vmatprep.mubr.bf16.mxu0 %v8793
    %10269 = vmatmul.mubr.bf16.gmra.mrb[0].mxu0 %v8792
    %v10270 = vpop.f32.mrb[0].mxu0
    %v10271 = vadd.f32 %v10174, %v10270
    %v10272 = vpop.f32.mrb[0].mxu0
    %v10273 = vpop.f32.mrb[0].mxu0
    %v10274 = vadd.f32 %v10177, %v10273
    %v10275 = vpop.f32.mrb[0].mxu0
    %10276 = vmatprep.mubr.bf16.mxu0 %v8809
    %10277 = vmatmul.mubr.bf16.gmra.mrb[0].mxu0 %v8808
    %v10278 = vpop.f32.mrb[0].mxu0
    %v10279 = vadd.f32 %v10182, %v10278
    %v10280 = vpop.f32.mrb[0].mxu0
    %v10281 = vpop.f32.mrb[0].mxu0
    %v10282 = vadd.f32 %v10185, %v10281
    %v10283 = vpop.f32.mrb[0].mxu0
    %10284 = vmatprep.mubr.bf16.mxu0 %v8825
    %10285 = vmatmul.mubr.bf16.gmra.mrb[0].mxu0 %v8824
    %v10286 = vpop.f32.mrb[0].mxu0
    %v10287 = vadd.f32 %v10190, %v10286
    %v10288 = vpop.f32.mrb[0].mxu0
    %v10289 = vpop.f32.mrb[0].mxu0
    %v10290 = vadd.f32 %v10193, %v10289
    %v10291 = vpop.f32.mrb[0].mxu0
    %10292 = vmatprep.mubr.bf16.mxu0 %v8841
    %10293 = vmatmul.mubr.bf16.gmra.mrb[0].mxu0 %v8840
    %v10294 = vpop.f32.mrb[0].mxu0
    %v10295 = vadd.f32 %v10198, %v10294
    %v10296 = vpop.f32.mrb[0].mxu0
    %v10297 = vpop.f32.mrb[0].mxu0
    %v10298 = vadd.f32 %v10201, %v10297
    %v10299 = vpop.f32.mrb[0].mxu0
    %10300 = vmatprep.mubr.bf16.mxu0 %v8857
    %10301 = vmatmul.mubr.bf16.gmra.mrb[0].mxu0 %v8856
    %v10302 = vpop.f32.mrb[0].mxu0
    %v10303 = vadd.f32 %v10206, %v10302
    %v10304 = vpop.f32.mrb[0].mxu0
    %v10305 = vpop.f32.mrb[0].mxu0
    %v10306 = vadd.f32 %v10209, %v10305
    %v10307 = vpop.f32.mrb[0].mxu0
    %10308 = vmatprep.mubr.bf16.mxu0 %v8873
    %10309 = vmatmul.mubr.bf16.gmra.mrb[0].mxu0 %v8872
    %v10310 = vpop.f32.mrb[0].mxu0
    %v10311 = vadd.f32 %v10214, %v10310
    %v10312 = vpop.f32.mrb[0].mxu0
    %v10313 = vpop.f32.mrb[0].mxu0
    %v10314 = vadd.f32 %v10217, %v10313
    %v10315 = vpop.f32.mrb[0].mxu0
    %10316 = vmatprep.mubr.bf16.mxu0 %v8889
    %10317 = vmatmul.mubr.bf16.gmra.mrb[0].mxu0 %v8888
    %v10318 = vpop.f32.mrb[0].mxu0
    %v10319 = vadd.f32 %v10222, %v10318
    %v10320 = vpop.f32.mrb[0].mxu0
    %v10321 = vpop.f32.mrb[0].mxu0
    %v10322 = vadd.f32 %v10225, %v10321
    %v10323 = vpop.f32.mrb[0].mxu0
    %10324 = vmatprep.mubr.bf16.mxu0 %v8905
    %10325 = vmatmul.mubr.bf16.gmra.mrb[0].mxu0 %v8904
    %v10326 = vpop.f32.mrb[0].mxu0
    %v10327 = vadd.f32 %v10230, %v10326
    %v10328 = vpop.f32.mrb[0].mxu0
    %v10329 = vpop.f32.mrb[0].mxu0
    %v10330 = vadd.f32 %v10233, %v10329
    %v10331 = vpop.f32.mrb[0].mxu0
    %10332 = vdwg.mxu0
    %10333 = vmatprep.subr.bf16.mxu0 0
    %10334 = vmatpush1.bf16.msra.mxu0 %v9753
    %10335 = vmatprep.subr.bf16.mxu0 0
    %10336 = vmatpush1.bf16.msra.mxu0 %v9754
    %10337 = vmatprep.subr.bf16.mxu0 0
    %10338 = vmatpush1.bf16.msra.mxu0 %v9755
    %10339 = vmatprep.subr.bf16.mxu0 0
    %10340 = vmatpush1.bf16.msra.mxu0 %v9756
    %10341 = vmatprep.subr.bf16.mxu0 0
    %10342 = vmatpush1.bf16.msra.mxu0 %v9757
    %10343 = vmatprep.subr.bf16.mxu0 0
    %10344 = vmatpush1.bf16.msra.mxu0 %v9758
    %10345 = vmatprep.subr.bf16.mxu0 0
    %10346 = vmatpush1.bf16.msra.mxu0 %v9759
    %10347 = vmatprep.subr.bf16.mxu0 0
    %10348 = vmatpush1.bf16.msra.mxu0 %v9760
    %10349 = vmatprep.subr.bf16.mxu0 0
    %10350 = vmatpush1.bf16.msra.mxu0 %v9761
    %10351 = vmatprep.subr.bf16.mxu0 0
    %10352 = vmatpush1.bf16.msra.mxu0 %v9762
    %10353 = vmatprep.subr.bf16.mxu0 0
    %10354 = vmatpush1.bf16.msra.mxu0 %v9763
    %10355 = vmatprep.subr.bf16.mxu0 0
    %10356 = vmatpush1.bf16.msra.mxu0 %v9764
    %10357 = vmatprep.subr.bf16.mxu0 0
    %10358 = vmatpush1.bf16.msra.mxu0 %v9765
    %10359 = vmatprep.subr.bf16.mxu0 0
    %10360 = vmatpush1.bf16.msra.mxu0 %v9766
    %10361 = vmatprep.subr.bf16.mxu0 0
    %10362 = vmatpush1.bf16.msra.mxu0 %v9767
    %10363 = vmatprep.subr.bf16.mxu0 0
    %10364 = vmatpush1.bf16.msra.mxu0 %v9768
    %10365 = vmatprep.mubr.bf16.mxu0 %v8795
    %10366 = vmatmul.mubr.bf16.gmra.mrb[0].mxu0 %v8794
    %v10367 = vpop.f32.mrb[0].mxu0
    %v10368 = vadd.f32 %v10271, %v10367
    %v10369 = vpop.f32.mrb[0].mxu0
    %v10370 = vpop.f32.mrb[0].mxu0
    %v10371 = vadd.f32 %v10274, %v10370
    %v10372 = vpop.f32.mrb[0].mxu0
    %10373 = vmatprep.mubr.bf16.mxu0 %v8811
    %10374 = vmatmul.mubr.bf16.gmra.mrb[0].mxu0 %v8810
    %v10375 = vpop.f32.mrb[0].mxu0
    %v10376 = vadd.f32 %v10279, %v10375
    %v10377 = vpop.f32.mrb[0].mxu0
    %v10378 = vpop.f32.mrb[0].mxu0
    %v10379 = vadd.f32 %v10282, %v10378
    %v10380 = vpop.f32.mrb[0].mxu0
    %10381 = vmatprep.mubr.bf16.mxu0 %v8827
    %10382 = vmatmul.mubr.bf16.gmra.mrb[0].mxu0 %v8826
    %v10383 = vpop.f32.mrb[0].mxu0
    %v10384 = vadd.f32 %v10287, %v10383
    %v10385 = vpop.f32.mrb[0].mxu0
    %v10386 = vpop.f32.mrb[0].mxu0
    %v10387 = vadd.f32 %v10290, %v10386
    %v10388 = vpop.f32.mrb[0].mxu0
    %10389 = vmatprep.mubr.bf16.mxu0 %v8843
    %10390 = vmatmul.mubr.bf16.gmra.mrb[0].mxu0 %v8842
    %v10391 = vpop.f32.mrb[0].mxu0
    %v10392 = vadd.f32 %v10295, %v10391
    %v10393 = vpop.f32.mrb[0].mxu0
    %v10394 = vpop.f32.mrb[0].mxu0
    %v10395 = vadd.f32 %v10298, %v10394
    %v10396 = vpop.f32.mrb[0].mxu0
    %10397 = vmatprep.mubr.bf16.mxu0 %v8859
    %10398 = vmatmul.mubr.bf16.gmra.mrb[0].mxu0 %v8858
    %v10399 = vpop.f32.mrb[0].mxu0
    %v10400 = vadd.f32 %v10303, %v10399
    %v10401 = vpop.f32.mrb[0].mxu0
    %v10402 = vpop.f32.mrb[0].mxu0
    %v10403 = vadd.f32 %v10306, %v10402
    %v10404 = vpop.f32.mrb[0].mxu0
    %10405 = vmatprep.mubr.bf16.mxu0 %v8875
    %10406 = vmatmul.mubr.bf16.gmra.mrb[0].mxu0 %v8874
    %v10407 = vpop.f32.mrb[0].mxu0
    %v10408 = vadd.f32 %v10311, %v10407
    %v10409 = vpop.f32.mrb[0].mxu0
    %v10410 = vpop.f32.mrb[0].mxu0
    %v10411 = vadd.f32 %v10314, %v10410
    %v10412 = vpop.f32.mrb[0].mxu0
    %10413 = vmatprep.mubr.bf16.mxu0 %v8891
    %10414 = vmatmul.mubr.bf16.gmra.mrb[0].mxu0 %v8890
    %v10415 = vpop.f32.mrb[0].mxu0
    %v10416 = vadd.f32 %v10319, %v10415
    %v10417 = vpop.f32.mrb[0].mxu0
    %v10418 = vpop.f32.mrb[0].mxu0
    %v10419 = vadd.f32 %v10322, %v10418
    %v10420 = vpop.f32.mrb[0].mxu0
    %10421 = vmatprep.mubr.bf16.mxu0 %v8907
    %10422 = vmatmul.mubr.bf16.gmra.mrb[0].mxu0 %v8906
    %v10423 = vpop.f32.mrb[0].mxu0
    %v10424 = vadd.f32 %v10327, %v10423
    %v10425 = vpop.f32.mrb[0].mxu0
    %v10426 = vpop.f32.mrb[0].mxu0
    %v10427 = vadd.f32 %v10330, %v10426
    %v10428 = vpop.f32.mrb[0].mxu0
    %10429 = vdwg.mxu0
    %10430 = vmatprep.subr.bf16.mxu0 0
    %10431 = vmatpush1.bf16.msra.mxu0 %v9769
    %10432 = vmatprep.subr.bf16.mxu0 0
    %10433 = vmatpush1.bf16.msra.mxu0 %v9770
    %10434 = vmatprep.subr.bf16.mxu0 0
    %10435 = vmatpush1.bf16.msra.mxu0 %v9771
    %10436 = vmatprep.subr.bf16.mxu0 0
    %10437 = vmatpush1.bf16.msra.mxu0 %v9772
    %10438 = vmatprep.subr.bf16.mxu0 0
    %10439 = vmatpush1.bf16.msra.mxu0 %v9773
    %10440 = vmatprep.subr.bf16.mxu0 0
    %10441 = vmatpush1.bf16.msra.mxu0 %v9774
    %10442 = vmatprep.subr.bf16.mxu0 0
    %10443 = vmatpush1.bf16.msra.mxu0 %v9775
    %10444 = vmatprep.subr.bf16.mxu0 0
    %10445 = vmatpush1.bf16.msra.mxu0 %v9776
    %10446 = vmatprep.subr.bf16.mxu0 0
    %10447 = vmatpush1.bf16.msra.mxu0 %v9777
    %10448 = vmatprep.subr.bf16.mxu0 0
    %10449 = vmatpush1.bf16.msra.mxu0 %v9778
    %10450 = vmatprep.subr.bf16.mxu0 0
    %10451 = vmatpush1.bf16.msra.mxu0 %v9779
    %10452 = vmatprep.subr.bf16.mxu0 0
    %10453 = vmatpush1.bf16.msra.mxu0 %v9780
    %10454 = vmatprep.subr.bf16.mxu0 0
    %10455 = vmatpush1.bf16.msra.mxu0 %v9781
    %10456 = vmatprep.subr.bf16.mxu0 0
    %10457 = vmatpush1.bf16.msra.mxu0 %v9782
    %10458 = vmatprep.subr.bf16.mxu0 0
    %10459 = vmatpush1.bf16.msra.mxu0 %v9783
    %10460 = vmatprep.subr.bf16.mxu0 0
    %10461 = vmatpush1.bf16.msra.mxu0 %v9784
    %10462 = vmatprep.mubr.bf16.mxu0 %v8797
    %10463 = vmatmul.mubr.bf16.gmra.mrb[0].mxu0 %v8796
    %v10464 = vpop.f32.mrb[0].mxu0
    %v10465 = vadd.f32 %v10368, %v10464
    %v10466 = vpop.f32.mrb[0].mxu0
    %v10467 = vpop.f32.mrb[0].mxu0
    %v10468 = vadd.f32 %v10371, %v10467
    %v10469 = vpop.f32.mrb[0].mxu0
    %10470 = vmatprep.mubr.bf16.mxu0 %v8813
    %10471 = vmatmul.mubr.bf16.gmra.mrb[0].mxu0 %v8812
    %v10472 = vpop.f32.mrb[0].mxu0
    %v10473 = vadd.f32 %v10376, %v10472
    %v10474 = vpop.f32.mrb[0].mxu0
    %v10475 = vpop.f32.mrb[0].mxu0
    %v10476 = vadd.f32 %v10379, %v10475
    %v10477 = vpop.f32.mrb[0].mxu0
    %10478 = vmatprep.mubr.bf16.mxu0 %v8829
    %10479 = vmatmul.mubr.bf16.gmra.mrb[0].mxu0 %v8828
    %v10480 = vpop.f32.mrb[0].mxu0
    %v10481 = vadd.f32 %v10384, %v10480
    %v10482 = vpop.f32.mrb[0].mxu0
    %v10483 = vpop.f32.mrb[0].mxu0
    %v10484 = vadd.f32 %v10387, %v10483
    %v10485 = vpop.f32.mrb[0].mxu0
    %10486 = vmatprep.mubr.bf16.mxu0 %v8845
    %10487 = vmatmul.mubr.bf16.gmra.mrb[0].mxu0 %v8844
    %v10488 = vpop.f32.mrb[0].mxu0
    %v10489 = vadd.f32 %v10392, %v10488
    %v10490 = vpop.f32.mrb[0].mxu0
    %v10491 = vpop.f32.mrb[0].mxu0
    %v10492 = vadd.f32 %v10395, %v10491
    %v10493 = vpop.f32.mrb[0].mxu0
    %10494 = vmatprep.mubr.bf16.mxu0 %v8861
    %10495 = vmatmul.mubr.bf16.gmra.mrb[0].mxu0 %v8860
    %v10496 = vpop.f32.mrb[0].mxu0
    %v10497 = vadd.f32 %v10400, %v10496
    %v10498 = vpop.f32.mrb[0].mxu0
    %v10499 = vpop.f32.mrb[0].mxu0
    %v10500 = vadd.f32 %v10403, %v10499
    %v10501 = vpop.f32.mrb[0].mxu0
    %10502 = vmatprep.mubr.bf16.mxu0 %v8877
    %10503 = vmatmul.mubr.bf16.gmra.mrb[0].mxu0 %v8876
    %v10504 = vpop.f32.mrb[0].mxu0
    %v10505 = vadd.f32 %v10408, %v10504
    %v10506 = vpop.f32.mrb[0].mxu0
    %v10507 = vpop.f32.mrb[0].mxu0
    %v10508 = vadd.f32 %v10411, %v10507
    %v10509 = vpop.f32.mrb[0].mxu0
    %10510 = vmatprep.mubr.bf16.mxu0 %v8893
    %10511 = vmatmul.mubr.bf16.gmra.mrb[0].mxu0 %v8892
    %v10512 = vpop.f32.mrb[0].mxu0
    %v10513 = vadd.f32 %v10416, %v10512
    %v10514 = vpop.f32.mrb[0].mxu0
    %v10515 = vpop.f32.mrb[0].mxu0
    %v10516 = vadd.f32 %v10419, %v10515
    %v10517 = vpop.f32.mrb[0].mxu0
    %10518 = vmatprep.mubr.bf16.mxu0 %v8909
    %10519 = vmatmul.mubr.bf16.gmra.mrb[0].mxu0 %v8908
    %v10520 = vpop.f32.mrb[0].mxu0
    %v10521 = vadd.f32 %v10424, %v10520
    %v10522 = vpop.f32.mrb[0].mxu0
    %v10523 = vpop.f32.mrb[0].mxu0
    %v10524 = vadd.f32 %v10427, %v10523
    %v10525 = vpop.f32.mrb[0].mxu0
    %10526 = vdwg.mxu0
    %10527 = vmatprep.subr.bf16.mxu0 0
    %10528 = vmatpush1.bf16.msra.mxu0 %v9785
    %10529 = vmatprep.subr.bf16.mxu0 0
    %10530 = vmatpush1.bf16.msra.mxu0 %v9786
    %10531 = vmatprep.subr.bf16.mxu0 0
    %10532 = vmatpush1.bf16.msra.mxu0 %v9787
    %10533 = vmatprep.subr.bf16.mxu0 0
    %10534 = vmatpush1.bf16.msra.mxu0 %v9788
    %10535 = vmatprep.subr.bf16.mxu0 0
    %10536 = vmatpush1.bf16.msra.mxu0 %v9789
    %10537 = vmatprep.subr.bf16.mxu0 0
    %10538 = vmatpush1.bf16.msra.mxu0 %v9790
    %10539 = vmatprep.subr.bf16.mxu0 0
    %10540 = vmatpush1.bf16.msra.mxu0 %v9791
    %10541 = vmatprep.subr.bf16.mxu0 0
    %10542 = vmatpush1.bf16.msra.mxu0 %v9792
    %10543 = vmatprep.subr.bf16.mxu0 0
    %10544 = vmatpush1.bf16.msra.mxu0 %v9793
    %10545 = vmatprep.subr.bf16.mxu0 0
    %10546 = vmatpush1.bf16.msra.mxu0 %v9794
    %10547 = vmatprep.subr.bf16.mxu0 0
    %10548 = vmatpush1.bf16.msra.mxu0 %v9795
    %10549 = vmatprep.subr.bf16.mxu0 0
    %10550 = vmatpush1.bf16.msra.mxu0 %v9796
    %10551 = vmatprep.subr.bf16.mxu0 0
    %10552 = vmatpush1.bf16.msra.mxu0 %v9797
    %10553 = vmatprep.subr.bf16.mxu0 0
    %10554 = vmatpush1.bf16.msra.mxu0 %v9798
    %10555 = vmatprep.subr.bf16.mxu0 0
    %10556 = vmatpush1.bf16.msra.mxu0 %v9799
    %10557 = vmatprep.subr.bf16.mxu0 0
    %10558 = vmatpush1.bf16.msra.mxu0 %v9800
    %10559 = vmatprep.mubr.bf16.mxu0 %v8799
    %10560 = vmatmul.mubr.bf16.gmra.mrb[0].mxu0 %v8798
    %v10561 = vpop.f32.mrb[0].mxu0
    %v10562 = vadd.f32 %v10465, %v10561
    %v10563 = vpop.f32.mrb[0].mxu0
    %v10564 = vpop.f32.mrb[0].mxu0
    %v10565 = vadd.f32 %v10468, %v10564
    %v10566 = vpop.f32.mrb[0].mxu0
    %10567 = vmatprep.mubr.bf16.mxu0 %v8815
    %10568 = vmatmul.mubr.bf16.gmra.mrb[0].mxu0 %v8814
    %v10569 = vpop.f32.mrb[0].mxu0
    %v10570 = vadd.f32 %v10473, %v10569
    %v10571 = vpop.f32.mrb[0].mxu0
    %v10572 = vpop.f32.mrb[0].mxu0
    %v10573 = vadd.f32 %v10476, %v10572
    %v10574 = vpop.f32.mrb[0].mxu0
    %10575 = vmatprep.mubr.bf16.mxu0 %v8831
    %10576 = vmatmul.mubr.bf16.gmra.mrb[0].mxu0 %v8830
    %v10577 = vpop.f32.mrb[0].mxu0
    %v10578 = vadd.f32 %v10481, %v10577
    %v10579 = vpop.f32.mrb[0].mxu0
    %v10580 = vpop.f32.mrb[0].mxu0
    %v10581 = vadd.f32 %v10484, %v10580
    %v10582 = vpop.f32.mrb[0].mxu0
    %10583 = vmatprep.mubr.bf16.mxu0 %v8847
    %10584 = vmatmul.mubr.bf16.gmra.mrb[0].mxu0 %v8846
    %v10585 = vpop.f32.mrb[0].mxu0
    %v10586 = vadd.f32 %v10489, %v10585
    %v10587 = vpop.f32.mrb[0].mxu0
    %v10588 = vpop.f32.mrb[0].mxu0
    %v10589 = vadd.f32 %v10492, %v10588
    %v10590 = vpop.f32.mrb[0].mxu0
    %10591 = vmatprep.mubr.bf16.mxu0 %v8863
    %10592 = vmatmul.mubr.bf16.gmra.mrb[0].mxu0 %v8862
    %v10593 = vpop.f32.mrb[0].mxu0
    %v10594 = vadd.f32 %v10497, %v10593
    %v10595 = vpop.f32.mrb[0].mxu0
    %v10596 = vpop.f32.mrb[0].mxu0
    %v10597 = vadd.f32 %v10500, %v10596
    %v10598 = vpop.f32.mrb[0].mxu0
    %10599 = vmatprep.mubr.bf16.mxu0 %v8879
    %10600 = vmatmul.mubr.bf16.gmra.mrb[0].mxu0 %v8878
    %v10601 = vpop.f32.mrb[0].mxu0
    %v10602 = vadd.f32 %v10505, %v10601
    %v10603 = vpop.f32.mrb[0].mxu0
    %v10604 = vpop.f32.mrb[0].mxu0
    %v10605 = vadd.f32 %v10508, %v10604
    %v10606 = vpop.f32.mrb[0].mxu0
    %10607 = vmatprep.mubr.bf16.mxu0 %v8895
    %10608 = vmatmul.mubr.bf16.gmra.mrb[0].mxu0 %v8894
    %v10609 = vpop.f32.mrb[0].mxu0
    %v10610 = vadd.f32 %v10513, %v10609
    %v10611 = vpop.f32.mrb[0].mxu0
    %v10612 = vpop.f32.mrb[0].mxu0
    %v10613 = vadd.f32 %v10516, %v10612
    %v10614 = vpop.f32.mrb[0].mxu0
    %10615 = vmatprep.mubr.bf16.mxu0 %v8911
    %10616 = vmatmul.mubr.bf16.gmra.mrb[0].mxu0 %v8910
    %v10617 = vpop.f32.mrb[0].mxu0
    %v10618 = vadd.f32 %v10521, %v10617
    %v10619 = vpop.f32.mrb[0].mxu0
    %v10620 = vpop.f32.mrb[0].mxu0
    %v10621 = vadd.f32 %v10524, %v10620
    %v10622 = vpop.f32.mrb[0].mxu0
    %10623 = vdwg.mxu0
    %10624 = vmatprep.subr.bf16.mxu0 0
    %10625 = vmatpush1.bf16.msra.mxu0 %v9801
    %10626 = vmatprep.subr.bf16.mxu0 0
    %10627 = vmatpush1.bf16.msra.mxu0 %v9802
    %10628 = vmatprep.subr.bf16.mxu0 0
    %10629 = vmatpush1.bf16.msra.mxu0 %v9803
    %10630 = vmatprep.subr.bf16.mxu0 0
    %10631 = vmatpush1.bf16.msra.mxu0 %v9804
    %10632 = vmatprep.subr.bf16.mxu0 0
    %10633 = vmatpush1.bf16.msra.mxu0 %v9805
    %10634 = vmatprep.subr.bf16.mxu0 0
    %10635 = vmatpush1.bf16.msra.mxu0 %v9806
    %10636 = vmatprep.subr.bf16.mxu0 0
    %10637 = vmatpush1.bf16.msra.mxu0 %v9807
    %10638 = vmatprep.subr.bf16.mxu0 0
    %10639 = vmatpush1.bf16.msra.mxu0 %v9808
    %10640 = vmatprep.subr.bf16.mxu0 0
    %10641 = vmatpush1.bf16.msra.mxu0 %v9809
    %10642 = vmatprep.subr.bf16.mxu0 0
    %10643 = vmatpush1.bf16.msra.mxu0 %v9810
    %10644 = vmatprep.subr.bf16.mxu0 0
    %10645 = vmatpush1.bf16.msra.mxu0 %v9811
    %10646 = vmatprep.subr.bf16.mxu0 0
    %10647 = vmatpush1.bf16.msra.mxu0 %v9812
    %10648 = vmatprep.subr.bf16.mxu0 0
    %10649 = vmatpush1.bf16.msra.mxu0 %v9813
    %10650 = vmatprep.subr.bf16.mxu0 0
    %10651 = vmatpush1.bf16.msra.mxu0 %v9814
    %10652 = vmatprep.subr.bf16.mxu0 0
    %10653 = vmatpush1.bf16.msra.mxu0 %v9815
    %10654 = vmatprep.subr.bf16.mxu0 0
    %10655 = vmatpush1.bf16.msra.mxu0 %v9816
    %10656 = vmatprep.mubr.bf16.mxu0 %v8801
    %10657 = vmatmul.mubr.bf16.gmra.mrb[0].mxu0 %v8800
    %v10658 = vpop.f32.mrb[0].mxu0
    %v10659 = vadd.f32 %v10562, %v10658
    %v10660 = vpop.f32.mrb[0].mxu0
    %v10661 = vpop.f32.mrb[0].mxu0
    %v10662 = vadd.f32 %v10565, %v10661
    %v10663 = vpop.f32.mrb[0].mxu0
    %10664 = vmatprep.mubr.bf16.mxu0 %v8817
    %10665 = vmatmul.mubr.bf16.gmra.mrb[0].mxu0 %v8816
    %v10666 = vpop.f32.mrb[0].mxu0
    %v10667 = vadd.f32 %v10570, %v10666
    %v10668 = vpop.f32.mrb[0].mxu0
    %v10669 = vpop.f32.mrb[0].mxu0
    %v10670 = vadd.f32 %v10573, %v10669
    %v10671 = vpop.f32.mrb[0].mxu0
    %10672 = vmatprep.mubr.bf16.mxu0 %v8833
    %10673 = vmatmul.mubr.bf16.gmra.mrb[0].mxu0 %v8832
    %v10674 = vpop.f32.mrb[0].mxu0
    %v10675 = vadd.f32 %v10578, %v10674
    %v10676 = vpop.f32.mrb[0].mxu0
    %v10677 = vpop.f32.mrb[0].mxu0
    %v10678 = vadd.f32 %v10581, %v10677
    %v10679 = vpop.f32.mrb[0].mxu0
    %10680 = vmatprep.mubr.bf16.mxu0 %v8849
    %10681 = vmatmul.mubr.bf16.gmra.mrb[0].mxu0 %v8848
    %v10682 = vpop.f32.mrb[0].mxu0
    %v10683 = vadd.f32 %v10586, %v10682
    %v10684 = vpop.f32.mrb[0].mxu0
    %v10685 = vpop.f32.mrb[0].mxu0
    %v10686 = vadd.f32 %v10589, %v10685
    %v10687 = vpop.f32.mrb[0].mxu0
    %10688 = vmatprep.mubr.bf16.mxu0 %v8865
    %10689 = vmatmul.mubr.bf16.gmra.mrb[0].mxu0 %v8864
    %v10690 = vpop.f32.mrb[0].mxu0
    %v10691 = vadd.f32 %v10594, %v10690
    %v10692 = vpop.f32.mrb[0].mxu0
    %v10693 = vpop.f32.mrb[0].mxu0
    %v10694 = vadd.f32 %v10597, %v10693
    %v10695 = vpop.f32.mrb[0].mxu0
    %10696 = vmatprep.mubr.bf16.mxu0 %v8881
    %10697 = vmatmul.mubr.bf16.gmra.mrb[0].mxu0 %v8880
    %v10698 = vpop.f32.mrb[0].mxu0
    %v10699 = vadd.f32 %v10602, %v10698
    %v10700 = vpop.f32.mrb[0].mxu0
    %v10701 = vpop.f32.mrb[0].mxu0
    %v10702 = vadd.f32 %v10605, %v10701
    %v10703 = vpop.f32.mrb[0].mxu0
    %10704 = vmatprep.mubr.bf16.mxu0 %v8897
    %10705 = vmatmul.mubr.bf16.gmra.mrb[0].mxu0 %v8896
    %v10706 = vpop.f32.mrb[0].mxu0
    %v10707 = vadd.f32 %v10610, %v10706
    %v10708 = vpop.f32.mrb[0].mxu0
    %v10709 = vpop.f32.mrb[0].mxu0
    %v10710 = vadd.f32 %v10613, %v10709
    %v10711 = vpop.f32.mrb[0].mxu0
    %10712 = vmatprep.mubr.bf16.mxu0 %v8913
    %10713 = vmatmul.mubr.bf16.gmra.mrb[0].mxu0 %v8912
    %v10714 = vpop.f32.mrb[0].mxu0
    %v10715 = vadd.f32 %v10618, %v10714
    %v10716 = vpop.f32.mrb[0].mxu0
    %v10717 = vpop.f32.mrb[0].mxu0
    %v10718 = vadd.f32 %v10621, %v10717
    %v10719 = vpop.f32.mrb[0].mxu0
    %10720 = vdwg.mxu0
    %v10721 = vadd.f32 %v7302, %v10659
    %v10722 = vadd.f32 %v7303, %v10662
    %v10723 = vadd.f32 %v7304, %v10667
    %v10724 = vadd.f32 %v7305, %v10670
    %v10725 = vadd.f32 %v7306, %v10675
    %v10726 = vadd.f32 %v7307, %v10678
    %v10727 = vadd.f32 %v7308, %v10683
    %v10728 = vadd.f32 %v7309, %v10686
    %v10729 = vadd.f32 %v7310, %v10691
    %v10730 = vadd.f32 %v7311, %v10694
    %v10731 = vadd.f32 %v7312, %v10699
    %v10732 = vadd.f32 %v7313, %v10702
    %v10733 = vadd.f32 %v7314, %v10707
    %v10734 = vadd.f32 %v7315, %v10710
    %v10735 = vadd.f32 %v7316, %v10715
    %v10736 = vadd.f32 %v7317, %v10718
    %v10737 = vsel %vm269, %v10721, 0.0
    %10738 = vadd.xlane.f32.xlu0 %v10737
    %v10739 = vpop.xlane.xlu0 %10738
    %v10740 = vsel %vm269, %v10722, 0.0
    %10741 = vadd.xlane.f32.xlu0 %v10740
    %v10742 = vpop.xlane.xlu0 %10741
    %v10743 = vsel %vm269, %v10723, 0.0
    %10744 = vadd.xlane.f32.xlu0 %v10743
    %v10745 = vpop.xlane.xlu0 %10744
    %v10746 = vsel %vm269, %v10724, 0.0
    %10747 = vadd.xlane.f32.xlu0 %v10746
    %v10748 = vpop.xlane.xlu0 %10747
    %v10749 = vsel %vm269, %v10725, 0.0
    %10750 = vadd.xlane.f32.xlu0 %v10749
    %v10751 = vpop.xlane.xlu0 %10750
    %v10752 = vsel %vm269, %v10726, 0.0
    %10753 = vadd.xlane.f32.xlu0 %v10752
    %v10754 = vpop.xlane.xlu0 %10753
    %v10755 = vsel %vm269, %v10727, 0.0
    %10756 = vadd.xlane.f32.xlu0 %v10755
    %v10757 = vpop.xlane.xlu0 %10756
    %v10758 = vsel %vm269, %v10728, 0.0
    %10759 = vadd.xlane.f32.xlu0 %v10758
    %v10760 = vpop.xlane.xlu0 %10759
    %v10761 = vsel %vm269, %v10729, 0.0
    %10762 = vadd.xlane.f32.xlu0 %v10761
    %v10763 = vpop.xlane.xlu0 %10762
    %v10764 = vsel %vm269, %v10730, 0.0
    %10765 = vadd.xlane.f32.xlu0 %v10764
    %v10766 = vpop.xlane.xlu0 %10765
    %v10767 = vsel %vm269, %v10731, 0.0
    %10768 = vadd.xlane.f32.xlu0 %v10767
    %v10769 = vpop.xlane.xlu0 %10768
    %v10770 = vsel %vm269, %v10732, 0.0
    %10771 = vadd.xlane.f32.xlu0 %v10770
    %v10772 = vpop.xlane.xlu0 %10771
    %v10773 = vsel %vm269, %v10733, 0.0
    %10774 = vadd.xlane.f32.xlu0 %v10773
    %v10775 = vpop.xlane.xlu0 %10774
    %v10776 = vsel %vm269, %v10734, 0.0
    %10777 = vadd.xlane.f32.xlu0 %v10776
    %v10778 = vpop.xlane.xlu0 %10777
    %v10779 = vsel %vm269, %v10735, 0.0
    %10780 = vadd.xlane.f32.xlu0 %v10779
    %v10781 = vpop.xlane.xlu0 %10780
    %v10782 = vsel %vm269, %v10736, 0.0
    %10783 = vadd.xlane.f32.xlu0 %v10782
    %v10784 = vpop.xlane.xlu0 %10783
    %v10785 = vmul.f32 %v10739, %v3713
    %v10786 = vmul.f32 %v10742, %v3713
    %v10787 = vmul.f32 %v10745, %v3713
    %v10788 = vmul.f32 %v10748, %v3713
    %v10789 = vmul.f32 %v10751, %v3713
    %v10790 = vmul.f32 %v10754, %v3713
    %v10791 = vmul.f32 %v10757, %v3713
    %v10792 = vmul.f32 %v10760, %v3713
    %v10793 = vmul.f32 %v10763, %v3713
    %v10794 = vmul.f32 %v10766, %v3713
    %v10795 = vmul.f32 %v10769, %v3713
    %v10796 = vmul.f32 %v10772, %v3713
    %v10797 = vmul.f32 %v10775, %v3713
    %v10798 = vmul.f32 %v10778, %v3713
    %v10799 = vmul.f32 %v10781, %v3713
    %v10800 = vmul.f32 %v10784, %v3713
    %v10801 = vsub.f32 %v10721, %v10785
    %v10802 = vsub.f32 %v10722, %v10786
    %v10803 = vsub.f32 %v10723, %v10787
    %v10804 = vsub.f32 %v10724, %v10788
    %v10805 = vsub.f32 %v10725, %v10789
    %v10806 = vsub.f32 %v10726, %v10790
    %v10807 = vsub.f32 %v10727, %v10791
    %v10808 = vsub.f32 %v10728, %v10792
    %v10809 = vsub.f32 %v10729, %v10793
    %v10810 = vsub.f32 %v10730, %v10794
    %v10811 = vsub.f32 %v10731, %v10795
    %v10812 = vsub.f32 %v10732, %v10796
    %v10813 = vsub.f32 %v10733, %v10797
    %v10814 = vsub.f32 %v10734, %v10798
    %v10815 = vsub.f32 %v10735, %v10799
    %v10816 = vsub.f32 %v10736, %v10800
    %v10817 = vmul.f32 %v10801, %v10801
    %v10818 = vmul.f32 %v10802, %v10802
    %v10819 = vmul.f32 %v10803, %v10803
    %v10820 = vmul.f32 %v10804, %v10804
    %v10821 = vmul.f32 %v10805, %v10805
    %v10822 = vmul.f32 %v10806, %v10806
    %v10823 = vmul.f32 %v10807, %v10807
    %v10824 = vmul.f32 %v10808, %v10808
    %v10825 = vmul.f32 %v10809, %v10809
    %v10826 = vmul.f32 %v10810, %v10810
    %v10827 = vmul.f32 %v10811, %v10811
    %v10828 = vmul.f32 %v10812, %v10812
    %v10829 = vmul.f32 %v10813, %v10813
    %v10830 = vmul.f32 %v10814, %v10814
    %v10831 = vmul.f32 %v10815, %v10815
    %v10832 = vmul.f32 %v10816, %v10816
    %v10833 = vsel %vm269, %v10817, 0.0
    %10834 = vadd.xlane.f32.xlu0 %v10833
    %v10835 = vpop.xlane.xlu0 %10834
    %v10836 = vsel %vm269, %v10818, 0.0
    %10837 = vadd.xlane.f32.xlu0 %v10836
    %v10838 = vpop.xlane.xlu0 %10837
    %v10839 = vsel %vm269, %v10819, 0.0
    %10840 = vadd.xlane.f32.xlu0 %v10839
    %v10841 = vpop.xlane.xlu0 %10840
    %v10842 = vsel %vm269, %v10820, 0.0
    %10843 = vadd.xlane.f32.xlu0 %v10842
    %v10844 = vpop.xlane.xlu0 %10843
    %v10845 = vsel %vm269, %v10821, 0.0
    %10846 = vadd.xlane.f32.xlu0 %v10845
    %v10847 = vpop.xlane.xlu0 %10846
    %v10848 = vsel %vm269, %v10822, 0.0
    %10849 = vadd.xlane.f32.xlu0 %v10848
    %v10850 = vpop.xlane.xlu0 %10849
    %v10851 = vsel %vm269, %v10823, 0.0
    %10852 = vadd.xlane.f32.xlu0 %v10851
    %v10853 = vpop.xlane.xlu0 %10852
    %v10854 = vsel %vm269, %v10824, 0.0
    %10855 = vadd.xlane.f32.xlu0 %v10854
    %v10856 = vpop.xlane.xlu0 %10855
    %v10857 = vsel %vm269, %v10825, 0.0
    %10858 = vadd.xlane.f32.xlu0 %v10857
    %v10859 = vpop.xlane.xlu0 %10858
    %v10860 = vsel %vm269, %v10826, 0.0
    %10861 = vadd.xlane.f32.xlu0 %v10860
    %v10862 = vpop.xlane.xlu0 %10861
    %v10863 = vsel %vm269, %v10827, 0.0
    %10864 = vadd.xlane.f32.xlu0 %v10863
    %v10865 = vpop.xlane.xlu0 %10864
    %v10866 = vsel %vm269, %v10828, 0.0
    %10867 = vadd.xlane.f32.xlu0 %v10866
    %v10868 = vpop.xlane.xlu0 %10867
    %v10869 = vsel %vm269, %v10829, 0.0
    %10870 = vadd.xlane.f32.xlu0 %v10869
    %v10871 = vpop.xlane.xlu0 %10870
    %v10872 = vsel %vm269, %v10830, 0.0
    %10873 = vadd.xlane.f32.xlu0 %v10872
    %v10874 = vpop.xlane.xlu0 %10873
    %v10875 = vsel %vm269, %v10831, 0.0
    %10876 = vadd.xlane.f32.xlu0 %v10875
    %v10877 = vpop.xlane.xlu0 %10876
    %v10878 = vsel %vm269, %v10832, 0.0
    %10879 = vadd.xlane.f32.xlu0 %v10878
    %v10880 = vpop.xlane.xlu0 %10879
    %v10881 = vmul.f32 %v10835, %v3713
    %v10882 = vmul.f32 %v10838, %v3713
    %v10883 = vmul.f32 %v10841, %v3713
    %v10884 = vmul.f32 %v10844, %v3713
    %v10885 = vmul.f32 %v10847, %v3713
    %v10886 = vmul.f32 %v10850, %v3713
    %v10887 = vmul.f32 %v10853, %v3713
    %v10888 = vmul.f32 %v10856, %v3713
    %v10889 = vmul.f32 %v10859, %v3713
    %v10890 = vmul.f32 %v10862, %v3713
    %v10891 = vmul.f32 %v10865, %v3713
    %v10892 = vmul.f32 %v10868, %v3713
    %v10893 = vmul.f32 %v10871, %v3713
    %v10894 = vmul.f32 %v10874, %v3713
    %v10895 = vmul.f32 %v10877, %v3713
    %v10896 = vmul.f32 %v10880, %v3713
    %v10897 = vadd.f32 %v10881, 1e-05
    %v10898 = vadd.f32 %v10882, 1e-05
    %v10899 = vadd.f32 %v10883, 1e-05
    %v10900 = vadd.f32 %v10884, 1e-05
    %v10901 = vadd.f32 %v10885, 1e-05
    %v10902 = vadd.f32 %v10886, 1e-05
    %v10903 = vadd.f32 %v10887, 1e-05
    %v10904 = vadd.f32 %v10888, 1e-05
    %v10905 = vadd.f32 %v10889, 1e-05
    %v10906 = vadd.f32 %v10890, 1e-05
    %v10907 = vadd.f32 %v10891, 1e-05
    %v10908 = vadd.f32 %v10892, 1e-05
    %v10909 = vadd.f32 %v10893, 1e-05
    %v10910 = vadd.f32 %v10894, 1e-05
    %v10911 = vadd.f32 %v10895, 1e-05
    %v10912 = vadd.f32 %v10896, 1e-05
    %v10913 = vrsqrt.pop %v10897
    %v10914 = vrsqrt.pop %v10898
    %v10915 = vrsqrt.pop %v10899
    %v10916 = vrsqrt.pop %v10900
    %v10917 = vrsqrt.pop %v10901
    %v10918 = vrsqrt.pop %v10902
    %v10919 = vrsqrt.pop %v10903
    %v10920 = vrsqrt.pop %v10904
    %v10921 = vrsqrt.pop %v10905
    %v10922 = vrsqrt.pop %v10906
    %v10923 = vrsqrt.pop %v10907
    %v10924 = vrsqrt.pop %v10908
    %v10925 = vrsqrt.pop %v10909
    %v10926 = vrsqrt.pop %v10910
    %v10927 = vrsqrt.pop %v10911
    %v10928 = vrsqrt.pop %v10912
    %v10929 = vmul.f32 %v10801, %v10913
    %v10930 = vmul.f32 %v10802, %v10914
    %v10931 = vmul.f32 %v10803, %v10915
    %v10932 = vmul.f32 %v10804, %v10916
    %v10933 = vmul.f32 %v10805, %v10917
    %v10934 = vmul.f32 %v10806, %v10918
    %v10935 = vmul.f32 %v10807, %v10919
    %v10936 = vmul.f32 %v10808, %v10920
    %v10937 = vmul.f32 %v10809, %v10921
    %v10938 = vmul.f32 %v10810, %v10922
    %v10939 = vmul.f32 %v10811, %v10923
    %v10940 = vmul.f32 %v10812, %v10924
    %v10941 = vmul.f32 %v10813, %v10925
    %v10942 = vmul.f32 %v10814, %v10926
    %v10943 = vmul.f32 %v10815, %v10927
    %v10944 = vmul.f32 %v10816, %v10928
    %v10945 = vld [vmem:[%s22] sm:$0x1]
    %v10947 = vlaneseq
    %v10948 = vshrl.u32 %v10947, 7
    %v10949 = vsub.s32 0, %v10948
    %v10950 = vrot.slane %v10945, %v10949
    %v10952 = vmul.f32 %v10929, %v10950
    %v10953 = vmul.f32 %v10930, %v10950
    %v10954 = vmul.f32 %v10931, %v10950
    %v10955 = vmul.f32 %v10932, %v10950
    %v10956 = vmul.f32 %v10933, %v10950
    %v10957 = vmul.f32 %v10934, %v10950
    %v10958 = vmul.f32 %v10935, %v10950
    %v10959 = vmul.f32 %v10936, %v10950
    %v10960 = vmul.f32 %v10937, %v10950
    %v10961 = vmul.f32 %v10938, %v10950
    %v10962 = vmul.f32 %v10939, %v10950
    %v10963 = vmul.f32 %v10940, %v10950
    %v10964 = vmul.f32 %v10941, %v10950
    %v10965 = vmul.f32 %v10942, %v10950
    %v10966 = vmul.f32 %v10943, %v10950
    %v10967 = vmul.f32 %v10944, %v10950
    %v10968 = vld [vmem:[%s23] sm:$0x1]
    %v10970 = vlaneseq
    %v10971 = vshrl.u32 %v10970, 7
    %v10972 = vsub.s32 0, %v10971
    %v10973 = vrot.slane %v10968, %v10972
    %v10975 = vadd.f32 %v10952, %v10973
    %v10976 = vadd.f32 %v10953, %v10973
    %v10977 = vadd.f32 %v10954, %v10973
    %v10978 = vadd.f32 %v10955, %v10973
    %v10979 = vadd.f32 %v10956, %v10973
    %v10980 = vadd.f32 %v10957, %v10973
    %v10981 = vadd.f32 %v10958, %v10973
    %v10982 = vadd.f32 %v10959, %v10973
    %v10983 = vadd.f32 %v10960, %v10973
    %v10984 = vadd.f32 %v10961, %v10973
    %v10985 = vadd.f32 %v10962, %v10973
    %v10986 = vadd.f32 %v10963, %v10973
    %v10987 = vadd.f32 %v10964, %v10973
    %v10988 = vadd.f32 %v10965, %v10973
    %v10989 = vadd.f32 %v10966, %v10973
    %v10990 = vadd.f32 %v10967, %v10973
    %10991 = vxpose.xlu0.b32.start [1/16] %v10975, 128
    %10992 = vxpose.xlu0.b32.cont [2/16] %v10976, 128
    %10993 = vxpose.xlu0.b32.cont [3/16] %v10977, 128
    %10994 = vxpose.xlu0.b32.cont [4/16] %v10978, 128
    %10995 = vxpose.xlu0.b32.cont [5/16] %v10979, 128
    %10996 = vxpose.xlu0.b32.cont [6/16] %v10980, 128
    %10997 = vxpose.xlu0.b32.cont [7/16] %v10981, 128
    %10998 = vxpose.xlu0.b32.cont [8/16] %v10982, 128
    %10999 = vxpose.xlu0.b32.cont [9/16] 0.0, 128
    %11000 = vxpose.xlu0.b32.cont [10/16] 0.0, 128
    %11001 = vxpose.xlu0.b32.cont [11/16] 0.0, 128
    %11002 = vxpose.xlu0.b32.cont [12/16] 0.0, 128
    %11003 = vxpose.xlu0.b32.cont [13/16] 0.0, 128
    %11004 = vxpose.xlu0.b32.cont [14/16] 0.0, 128
    %11005 = vxpose.xlu0.b32.cont [15/16] 0.0, 128
    %11006 = vxpose.xlu0.b32.end [16/16] 0.0, 128
    %v11007 = vpop.trf.xlu0
    %v11008 = vpop.trf.xlu0
    %v11009 = vpop.trf.xlu0
    %v11010 = vpop.trf.xlu0
    %v11011 = vpop.trf.xlu0
    %v11012 = vpop.trf.xlu0
    %v11013 = vpop.trf.xlu0
    %v11014 = vpop.trf.xlu0
    %v11015 = vpop.trf.xlu0
    %v11016 = vpop.trf.xlu0
    %v11017 = vpop.trf.xlu0
    %v11018 = vpop.trf.xlu0
    %v11019 = vpop.trf.xlu0
    %v11020 = vpop.trf.xlu0
    %v11021 = vpop.trf.xlu0
    %v11022 = vpop.trf.xlu0
    %11023 = vst.msk [vmem:[#allocation2] sm:$0xff] %vm765, %v11007
    %11024 = vst.msk [vmem:[#allocation2 + $0x8] sm:$0xff] %vm765, %v11008
    %11025 = vst.msk [vmem:[#allocation2 + $0x10] sm:$0xff] %vm765, %v11009
    %11026 = vst.msk [vmem:[#allocation2 + $0x18] sm:$0xff] %vm765, %v11010
    %11027 = vxpose.xlu0.b32.start [1/16] %v10983, 128
    %11028 = vxpose.xlu0.b32.cont [2/16] %v10984, 128
    %11029 = vxpose.xlu0.b32.cont [3/16] %v10985, 128
    %11030 = vxpose.xlu0.b32.cont [4/16] %v10986, 128
    %11031 = vxpose.xlu0.b32.cont [5/16] %v10987, 128
    %11032 = vxpose.xlu0.b32.cont [6/16] %v10988, 128
    %11033 = vxpose.xlu0.b32.cont [7/16] %v10989, 128
    %11034 = vxpose.xlu0.b32.cont [8/16] %v10990, 128
    %11035 = vxpose.xlu0.b32.cont [9/16] 0.0, 128
    %11036 = vxpose.xlu0.b32.cont [10/16] 0.0, 128
    %11037 = vxpose.xlu0.b32.cont [11/16] 0.0, 128
    %11038 = vxpose.xlu0.b32.cont [12/16] 0.0, 128
    %11039 = vxpose.xlu0.b32.cont [13/16] 0.0, 128
    %11040 = vxpose.xlu0.b32.cont [14/16] 0.0, 128
    %11041 = vxpose.xlu0.b32.cont [15/16] 0.0, 128
    %11042 = vxpose.xlu0.b32.end [16/16] 0.0, 128
    %v11043 = vpop.trf.xlu0
    %v11044 = vpop.trf.xlu0
    %v11045 = vpop.trf.xlu0
    %v11046 = vpop.trf.xlu0
    %v11047 = vpop.trf.xlu0
    %v11048 = vpop.trf.xlu0
    %v11049 = vpop.trf.xlu0
    %v11050 = vpop.trf.xlu0
    %v11051 = vpop.trf.xlu0
    %v11052 = vpop.trf.xlu0
    %v11053 = vpop.trf.xlu0
    %v11054 = vpop.trf.xlu0
    %v11055 = vpop.trf.xlu0
    %v11056 = vpop.trf.xlu0
    %v11057 = vpop.trf.xlu0
    %v11058 = vpop.trf.xlu0
    %s11059 = scalar_lea.vmem [#allocation2], 32
    %11060 = vst.msk [vmem:[%s11059] sm:$0xff] %vm765, %v11043
    %11061 = vst.msk [vmem:[%s11059 + $0x8] sm:$0xff] %vm765, %v11044
    %11062 = vst.msk [vmem:[%s11059 + $0x10] sm:$0xff] %vm765, %v11045
    %11063 = vst.msk [vmem:[%s11059 + $0x18] sm:$0xff] %vm765, %v11046
    // Predicated region
    $region114: #{tpu_custom_call.1} parent=1 // pred_check
      _
    $region115: #{tpu_custom_call.1} parent=1 // pred_check_branch
      %11065 = sbr.rel (0) target = $region117
    $region116: #{tpu_custom_call.1} parent=1 // pred_region
      %s11067 = ssub.s32 1024, 1024
      %11068 = vsyncadd [#allocation3], %s11067
      %s11069 = sshll.u32 [#allocation2], 4
      %s11070 = int_to_ptr.vmem [resolvable:$true] %s11069
      %11075 = dma.vmem_to_hbm [thread:$0]  %s11070, 1024, %s28, [#allocation3], 128, 128, 8
    $region117: #{tpu_custom_call.1} parent=1 // pred_fallthru
      _
    // Predicated region
    $region118: #{tpu_custom_call.1} parent=1 // pred_check
      _
    $region119: #{tpu_custom_call.1} parent=1 // pred_check_branch
      %11077 = sbr.rel (0) target = $region121
    $region120: #{tpu_custom_call.1} parent=1 // pred_region
      %11078 = dma.done [#allocation3], 1024
    $region121: #{tpu_custom_call.1} parent=1 // pred_fallthru
      _
    %11079 = vsyncpa [#allocation3], 1

</llo_original>
